<compile_context>
chip_gen: v7x
topology: tpu7x:2x2x1
jax: 0.10.0
libtpu: 0.0.40
codegen_flags: <defaults>
</compile_context>

<pallas_src>
import functools

import jax
import jax.numpy as jnp
from jax.experimental import pallas as pl
from jax.experimental.pallas import tpu as pltpu


# -----------------------------------------------------------------------------
# Pallas kernel: one time CHUNK (Tc sequential GRU steps) per grid iteration
# -----------------------------------------------------------------------------
def copy_rnn_decoder_kernel(
    gi_emb_ref,     # (Tc, B, 3H)  emb @ W_ie + b_ih for this time chunk (precomputed)
    enc_ref,        # (B, Sp, H)   encoder outputs (S padded to lane multiple)
    encproj_ref,    # (B, Sp, H)   enc @ W_att_e + b_att (time-invariant, precomputed)
    maskb_ref,      # (B, Sp)      additive mask bias: 0 keep / -1e18 pad (f32)
    hidden0_ref,    # (B, H)       initial GRU hidden state (f32)
    feed0_ref,      # (B, H)       initial input-feed (context) vector (f32)
    w_if_ref,       # (H, 3H)      GRU input weights, input-feed half (gate order r,z,n)
    w_hh_ref,       # (H, 3H)      GRU hidden weights
    b_hh_ref,       # (1, 3H)
    w_att_d_ref,    # (H, H)       concat-attn weight (decoder-hidden half)
    v_att_ref,      # (1, H)
    h_out_ref,      # (Tc, B, H)   GRU outputs for this chunk
    ctx_out_ref,    # (Tc, B, H)   attention context vectors for this chunk
    attn_out_ref,   # (Tc, B, Sp)  attention distributions for this chunk
    hidden_scratch, # VMEM (B, H)  GRU hidden carry (f32)
    feed_scratch,   # VMEM (B, H)  input-feed carry (f32)
    *,
    hidden_size,
    time_chunk,
    compute_dtype,
):
    H = hidden_size
    f32 = jnp.float32
    wdt = w_if_ref.dtype     # MXU operand dtype (f32 or bf16, f32 accumulation either way)
    cdt = compute_dtype      # elementwise energy/context dtype (f32 on v5e, bf16 on v6e/v7x)

    @pl.when(pl.program_id(0) == 0)
    def _():
        hidden_scratch[...] = hidden0_ref[...].astype(f32)
        feed_scratch[...] = feed0_ref[...].astype(f32)

    mask_bias = maskb_ref[...]                 # (B, Sp) additive mask (f32)
    b_hh = b_hh_ref[...].astype(f32)           # (1, 3H)
    v_att = v_att_ref[...].astype(cdt)         # (1, H)

    h_prev = hidden_scratch[...]               # (B, H) f32
    feed = feed_scratch[...]                   # (B, H) f32

    # Tc recurrent steps per grid step.  Statically unrolled (Tc is small and static), which
    # is equivalent to lax.fori_loop(..., unroll=True) and amortizes the per-grid-step
    # overhead ~T/Tc-fold versus grid=(T,).
    for i in range(time_chunk):
        # --- GRU cell (PyTorch gate order r, z, n); embedding half precomputed outside ---
        gi = gi_emb_ref[i].astype(f32) + jnp.dot(
            feed.astype(wdt), w_if_ref[...], preferred_element_type=f32)       # (B, 3H)
        gh = jnp.dot(h_prev.astype(wdt), w_hh_ref[...],
                     preferred_element_type=f32) + b_hh                        # (B, 3H)
        r = jax.nn.sigmoid(gi[:, 0:H] + gh[:, 0:H])
        z = jax.nn.sigmoid(gi[:, H:2 * H] + gh[:, H:2 * H])
        n = jnp.tanh(gi[:, 2 * H:3 * H] + r * gh[:, 2 * H:3 * H])
        h_new = (1.0 - z) * n + z * h_prev                                     # (B, H)

        # --- concat attention (encoder half precomputed; only decoder half on MXU) ---
        a_dec = jnp.dot(h_new.astype(wdt), w_att_d_ref[...],
                        preferred_element_type=f32)                            # (B, H)
        energy = jnp.tanh(a_dec.astype(cdt)[:, None, :] + encproj_ref[...].astype(cdt))
        score = jnp.sum((energy * v_att).astype(f32), axis=-1) + mask_bias     # (B, Sp)
        score = score - jnp.max(score, axis=-1, keepdims=True)
        p = jnp.exp(score)
        attn = p * pl.reciprocal(jnp.sum(p, axis=-1, keepdims=True), approx=True)

        # Context as a VPU weighted sum with f32 accumulation (no M=1 MXU matvec).
        context = jnp.sum(
            (attn.astype(cdt)[:, :, None] * enc_ref[...].astype(cdt)).astype(f32),
            axis=1)                                                            # (B, H)

        h_out_ref[i] = h_new.astype(h_out_ref.dtype)
        ctx_out_ref[i] = context.astype(ctx_out_ref.dtype)
        attn_out_ref[i] = attn.astype(attn_out_ref.dtype)

        h_prev = h_new
        feed = context

    # --- carry recurrent state to the next time chunk ---
    hidden_scratch[...] = h_prev
    feed_scratch[...] = feed


# -----------------------------------------------------------------------------
# Helpers
# -----------------------------------------------------------------------------
def _vmem_limit_bytes():
    """Explicit scoped-VMEM limit (the 16/32 MiB default is far below physical)."""
    try:
        cap = int(pltpu.get_tpu_info().vmem_capacity_bytes)
    except Exception:
        cap = 64 * 1024 * 1024            # v7x-safe fallback
    return max(32 * 1024 * 1024, (cap * 7) // 8)


def _invariant_spec(shape, pinned):
    if pinned:
        # Whole array lives in VMEM as a single copy for the duration of the kernel
        # (no per-grid-step double buffering of time-invariant operands).
        return pl.BlockSpec(memory_space=pltpu.MemorySpace.VMEM)
    # Fallback (older jax): full-shape block with constant index map (double-buffered).
    zeros = (0,) * len(shape)
    return pl.BlockSpec(shape, lambda t, _z=zeros: _z)


# -----------------------------------------------------------------------------
# Wrapper: hoisted projections + pallas_call + hoisted vocab/gen/copy epilogue
# -----------------------------------------------------------------------------
def copy_rnn_decoder_forward(decoder_input, params, encoder_outputs_sbh, encoder_mask,
                             encoder_token_with_oov, extra_vocab_size, hidden0, feed0,
                             param_dtype=jnp.float32, compute_dtype=jnp.float32,
                             time_chunk=4):
    """Pallas-backed forward. Returns final_dist [B, T, V + extra_vocab_size]."""
    B, T = decoder_input.shape
    S, _, H = encoder_outputs_sbh.shape
    V, E = params['embedding'].shape
    f32 = jnp.float32

    # ---- shape prep: time chunking + lane-dense attention axis ----
    Tc = int(max(1, min(time_chunk, T)))
    Tp = ((T + Tc - 1) // Tc) * Tc          # padded time (padded steps sliced off below)
    nT = Tp // Tc
    Sp = ((S + 127) // 128) * 128           # lane-aligned attention axis
    # TODO(synk): for production sizes H should also be a multiple of 128 so the GRU gate
    # slices fall on lane-tile boundaries; not enforced here to keep the demo shapes intact.

    # ---- one-shot XLA glue (hoisted out of the sequential recurrence) ----
    emb_tbe = params['embedding'][decoder_input.T]                    # (T, B, E), time-major
    enc_bsh = jnp.transpose(encoder_outputs_sbh, (1, 0, 2))           # (B, S, H)

    # GRU weights: torch weight_ih is (3H, E+H) over cat([embed, input_feed]).
    w_ih, w_hh = params['gru_w_ih'], params['gru_w_hh']
    w_ie = jnp.transpose(w_ih[:, :E])                                 # (E, 3H)  (stays outside)
    w_if = jnp.transpose(w_ih[:, E:]).astype(param_dtype)             # (H, 3H)
    w_hh_k = jnp.transpose(w_hh).astype(param_dtype)                  # (H, 3H)
    b_ih = params['gru_b_ih'].reshape(1, 3 * H)
    b_hh = params['gru_b_hh'].reshape(1, 3 * H).astype(f32)

    # Hoisted embedding half of the GRU input projection: one batched matmul over T*B.
    gi_emb = (emb_tbe.reshape(T * B, E) @ w_ie + b_ih).reshape(T, B, 3 * H)
    if Tp != T:
        gi_emb = jnp.concatenate(
            [gi_emb, jnp.zeros((Tp - T, B, 3 * H), gi_emb.dtype)], axis=0)

    # Concat attention: torch Linear(2H, H) over cat([decoder_hidden, encoder]).
    w_att = params['attn_w']                                          # (H, 2H)
    w_att_d = jnp.transpose(w_att[:, :H]).astype(param_dtype)         # (H, H)
    w_att_e = jnp.transpose(w_att[:, H:])                             # (H, H)  (stays outside)
    b_att = params['attn_b'].reshape(1, 1, H)
    enc_proj = jnp.einsum('bsh,hk->bsk', enc_bsh, w_att_e) + b_att    # (B, S, H), computed once
    v_att = params['attn_v'].reshape(1, H).astype(f32)

    mask = encoder_mask.astype(f32)
    if Sp != S:
        pad3 = ((0, 0), (0, Sp - S), (0, 0))
        enc_pad = jnp.pad(enc_bsh, pad3)
        enc_proj = jnp.pad(enc_proj, pad3)
        mask = jnp.pad(mask, ((0, 0), (0, Sp - S)))                   # pad columns masked off
    else:
        enc_pad = enc_bsh
    mask_bias = (mask - 1.0) * 1e18                                   # 0 keep / -1e18 pad

    enc_in = enc_pad.astype(compute_dtype)
    enc_proj = enc_proj.astype(compute_dtype)
    hidden0_f = hidden0.astype(f32)
    feed0_f = feed0.astype(f32)

    kernel = functools.partial(copy_rnn_decoder_kernel, hidden_size=H,
                               time_chunk=Tc, compute_dtype=compute_dtype)
    tslice = lambda t: (t, 0, 0)

    def run(pinned):
        return pl.pallas_call(
            kernel,
            out_shape=(jax.ShapeDtypeStruct((Tp, B, H), f32),
                       jax.ShapeDtypeStruct((Tp, B, H), f32),
                       jax.ShapeDtypeStruct((Tp, B, Sp), f32)),
            grid=(nT,),
            in_specs=[
                pl.BlockSpec((Tc, B, 3 * H), tslice),          # gi_emb (time-sliced)
                _invariant_spec((B, Sp, H), pinned),           # encoder outputs
                _invariant_spec((B, Sp, H), pinned),           # encoder attention projection
                _invariant_spec((B, Sp), pinned),              # additive mask bias
                _invariant_spec((B, H), pinned),               # hidden0
                _invariant_spec((B, H), pinned),               # feed0
                _invariant_spec((H, 3 * H), pinned),           # w_if
                _invariant_spec((H, 3 * H), pinned),           # w_hh
                _invariant_spec((1, 3 * H), pinned),           # b_hh
                _invariant_spec((H, H), pinned),               # w_att_d
                _invariant_spec((1, H), pinned),               # v_att
            ],
            out_specs=(pl.BlockSpec((Tc, B, H), tslice),
                       pl.BlockSpec((Tc, B, H), tslice),
                       pl.BlockSpec((Tc, B, Sp), tslice)),
            scratch_shapes=[
                pltpu.VMEM((B, H), f32),   # GRU hidden state carry
                pltpu.VMEM((B, H), f32),   # input-feed (context) carry
            ],
            compiler_params=pltpu.CompilerParams(
                dimension_semantics=("arbitrary",),
                vmem_limit_bytes=_vmem_limit_bytes()),
        )(gi_emb, enc_in, enc_proj, mask_bias, hidden0_f, feed0_f,
          w_if, w_hh_k, b_hh, w_att_d, v_att)

    # TODO(synk): add a leading "parallel" batch-tile grid axis to use both v7x TensorCores
    # (the time recurrence is inherently sequential; only the batch can be split).
    try:
        h_tbh, ctx_tbh, attn_tbs = run(pinned=True)
    except Exception:   # older jax without whole-array VMEM operands: blocked fallback
        h_tbh, ctx_tbh, attn_tbs = run(pinned=False)

    # ---- hoisted epilogue: one batched pass over all T*B tokens, done by XLA ----
    h_tb = h_tbh[:T]                                                  # (T, B, H)
    ctx_tb = ctx_tbh[:T]                                              # (T, B, H)
    attn_tb = attn_tbs[:T, :, :S]                                     # (T, B, S)
    h_flat = h_tb.reshape(T * B, H)

    # gen_layer: torch Linear(3H+E, 1) over cat([context, embed, input_feed, gru_out]).
    wg = params['gen_w']                                              # (1, 3H+E)
    wg_ctx, wg_emb = wg[:, 0:H], wg[:, H:H + E]
    wg_feed, wg_h = wg[:, H + E:2 * H + E], wg[:, 2 * H + E:3 * H + E]
    b_gen = params['gen_b'].reshape(1, 1)
    feed_prev = jnp.concatenate([feed0_f[None], ctx_tb[:-1]], axis=0)  # input_feed pre-update
    gen_logit = (emb_tbe.reshape(T * B, E) @ wg_emb.T
                 + ctx_tb.reshape(T * B, H) @ wg_ctx.T
                 + feed_prev.reshape(T * B, H) @ wg_feed.T
                 + h_flat @ wg_h.T + b_gen)                           # (T*B, 1)
    gen_point = jax.nn.sigmoid(gen_logit).reshape(T, B, 1)

    # Vocabulary projection + softmax over all T*B tokens at once (M = T*B fills the MXU).
    logits = h_flat @ jnp.transpose(params['out_w']) + params['out_b']
    vocab_dist = jax.nn.softmax(logits.astype(f32), axis=-1).reshape(T, B, V)

    vocab_btv = jnp.transpose(vocab_dist * gen_point, (1, 0, 2))      # (B, T, V)
    attn_bts = jnp.transpose(attn_tb * (1.0 - gen_point), (1, 0, 2))  # (B, T, S)

    # ---- copy mechanism: pad + scatter_add_ done by XLA outside the kernel ----
    # (For very large B*T*S a segment-sum formulation would avoid scatter serialization.)
    final = jnp.concatenate(
        [vocab_btv, jnp.zeros((B, T, extra_vocab_size), f32)], axis=-1)
    idx = jnp.broadcast_to(encoder_token_with_oov[:, None, :], (B, T, S))
    b_idx = jnp.arange(B)[:, None, None]
    t_idx = jnp.arange(T)[None, :, None]
    final = final.at[b_idx, t_idx, idx].add(attn_bts)
    return final                                                      # (B, T, V + extra)


# -----------------------------------------------------------------------------
# Pure-JAX reference (mirrors the PyTorch forward, eval mode) for validation
# -----------------------------------------------------------------------------
def reference_forward(decoder_input, params, enc_sbh, enc_mask, tok_oov,
                      extra_vocab_size, hidden0, feed0):
    B, T = decoder_input.shape
    H = hidden0.shape[-1]
    V, E = params['embedding'].shape
    emb_bte = params['embedding'][decoder_input]          # (B, T, E)
    enc_bsh = jnp.transpose(enc_sbh, (1, 0, 2))            # (B, S, H)

    h, feed = hidden0, feed0
    dists, attns = [], []
    for t in range(T):
        x = jnp.concatenate([emb_bte[:, t, :], feed], axis=-1)          # (B, E+H)
        gi = x @ params['gru_w_ih'].T + params['gru_b_ih']
        gh = h @ params['gru_w_hh'].T + params['gru_b_hh']
        r = jax.nn.sigmoid(gi[:, :H] + gh[:, :H])
        z = jax.nn.sigmoid(gi[:, H:2 * H] + gh[:, H:2 * H])
        n = jnp.tanh(gi[:, 2 * H:] + r * gh[:, 2 * H:])
        h = (1.0 - z) * n + z * h

        cat = jnp.concatenate(
            [jnp.broadcast_to(h[:, None, :], enc_bsh.shape), enc_bsh], axis=-1)
        energy = jnp.tanh(cat @ params['attn_w'].T + params['attn_b'])  # (B, S, H)
        score = jnp.einsum('bsh,h->bs', energy, params['attn_v'])
        score = jnp.where(enc_mask == 0, -1e18, score)
        attn = jax.nn.softmax(score, axis=-1)
        context = jnp.einsum('bs,bsh->bh', attn, enc_bsh)
        feed_new = context

        gen_in = jnp.concatenate([context, x, h], axis=-1)
        gen_point = jax.nn.sigmoid(gen_in @ params['gen_w'].T + params['gen_b'])
        vocab_dist = jax.nn.softmax(h @ params['out_w'].T + params['out_b'], axis=-1)
        dists.append(vocab_dist * gen_point)
        attns.append(attn * (1.0 - gen_point))
        feed = feed_new

    final_dist = jnp.stack(dists, axis=1)                  # (B, T, V)
    final_attn = jnp.stack(attns, axis=1)                  # (B, T, S)
    final = jnp.concatenate(
        [final_dist, jnp.zeros((B, T, extra_vocab_size), jnp.float32)], axis=-1)
    idx = jnp.broadcast_to(tok_oov[:, None, :], final_attn.shape)
    b_idx = jnp.arange(B)[:, None, None]
    t_idx = jnp.arange(T)[None, :, None]
    final = final.at[b_idx, t_idx, idx].add(final_attn)
    return final


# -----------------------------------------------------------------------------
# Deterministic synthetic parameter init (shapes from CopyRnnDecoder.__init__)
# -----------------------------------------------------------------------------
def init_params(key, vocab_size, embed_size, hidden_size):
    ks = jax.random.split(key, 12)
    s = 0.1
    H, E, V = hidden_size, embed_size, vocab_size
    return {
        'embedding': jax.random.normal(ks[0], (V, E), jnp.float32) * s,
        'gru_w_ih': jax.random.normal(ks[1], (3 * H, E + H), jnp.float32) * s,
        'gru_w_hh': jax.random.normal(ks[2], (3 * H, H), jnp.float32) * s,
        'gru_b_ih': jax.random.normal(ks[3], (3 * H,), jnp.float32) * s,
        'gru_b_hh': jax.random.normal(ks[4], (3 * H,), jnp.float32) * s,
        'attn_w': jax.random.normal(ks[5], (H, 2 * H), jnp.float32) * s,
        'attn_b': jax.random.normal(ks[6], (H,), jnp.float32) * s,
        'attn_v': jax.random.normal(ks[7], (H,), jnp.float32) * s,
        'out_w': jax.random.normal(ks[8], (V, H), jnp.float32) * s,
        'out_b': jax.random.normal(ks[9], (V,), jnp.float32) * s,
        'gen_w': jax.random.normal(ks[10], (1, 3 * H + E), jnp.float32) * s,
        'gen_b': jax.random.normal(ks[11], (1,), jnp.float32) * s,
    }


if __name__ == "__main__":
    B, T, S = 2, 4, 8
    H, E, V = 32, 32, 64
    extra_vocab_size = 8

    root = jax.random.PRNGKey(0)
    k_par, k_dec, k_enc, k_oov, k_h0, k_f0 = jax.random.split(root, 6)

    params = init_params(k_par, V, E, H)

    decoder_input = jax.random.randint(k_dec, (B, T), 0, V)                    # [B, Tgt_len]
    encoder_outputs = jax.random.normal(k_enc, (S, B, H), jnp.float32) * 0.5   # [Src_len, B, H]
    encoder_mask = jnp.ones((B, S), jnp.float32).at[1, 6:].set(0.0)            # [B, Src_len]
    encoder_token_with_oov = jax.random.randint(k_oov, (B, S), 0, V + extra_vocab_size)
    hidden0 = jax.random.normal(k_h0, (B, H), jnp.float32) * 0.5               # state.hidden[0]
    feed0 = jax.random.normal(k_f0, (B, H), jnp.float32) * 0.5                 # state.input_feed

    ref = reference_forward(decoder_input, params, encoder_outputs, encoder_mask,
                            encoder_token_with_oov, extra_vocab_size, hidden0, feed0)
    ref = jax.block_until_ready(ref)

    # f32 path (v5e default; also the validation path).  time_chunk=2 -> grid of 2 chunks,
    # exercising both the in-chunk unrolled loop and the cross-chunk carry.
    out = copy_rnn_decoder_forward(decoder_input, params, encoder_outputs, encoder_mask,
                                   encoder_token_with_oov, extra_vocab_size, hidden0, feed0,
                                   param_dtype=jnp.float32, compute_dtype=jnp.float32,
                                   time_chunk=2)
    out = jax.block_until_ready(out)
    assert out.shape == (B, T, V + extra_vocab_size), out.shape
    err = float(jnp.max(jnp.abs(out - ref)))
    # tolerance slightly relaxed vs. exact-f32 to accommodate the approx EUP reciprocal.
    assert jnp.allclose(out, ref, rtol=5e-3, atol=5e-3), f"max|diff|={err}"

    # bf16 path (v6e / v7x): bf16 MXU operands + bf16 energy/context math, f32 accumulation,
    # state, softmax and gating.
    out_bf16 = copy_rnn_decoder_forward(decoder_input, params, encoder_outputs, encoder_mask,
                                        encoder_token_with_oov, extra_vocab_size, hidden0,
                                        feed0, param_dtype=jnp.bfloat16,
                                        compute_dtype=jnp.bfloat16, time_chunk=2)
    out_bf16 = jax.block_until_ready(out_bf16)
    err_bf16 = float(jnp.max(jnp.abs(out_bf16 - ref)))
    assert err_bf16 < 5e-2, f"bf16 max|diff|={err_bf16}"

    print("KERNEL_OK")
</pallas_src>

<mosaic_0001>
module attributes {stable_mosaic.version = 11 : i64} {
  func.func @copy_rnn_decoder_kernel(%arg0: i32, %arg1: memref<2x2x96xf32, #tpu.memory_space<vmem>>, %arg2: memref<2x128x32xf32, #tpu.memory_space<vmem>>, %arg3: memref<2x128x32xf32, #tpu.memory_space<vmem>>, %arg4: memref<2x128xf32, #tpu.memory_space<vmem>>, %arg5: memref<2x32xf32, #tpu.memory_space<vmem>>, %arg6: memref<2x32xf32, #tpu.memory_space<vmem>>, %arg7: memref<32x96xf32, #tpu.memory_space<vmem>>, %arg8: memref<32x96xf32, #tpu.memory_space<vmem>>, %arg9: memref<1x96xf32, #tpu.memory_space<vmem>>, %arg10: memref<32x32xf32, #tpu.memory_space<vmem>>, %arg11: memref<1x32xf32, #tpu.memory_space<vmem>>, %arg12: memref<2x2x32xf32, #tpu.memory_space<vmem>>, %arg13: memref<2x2x32xf32, #tpu.memory_space<vmem>>, %arg14: memref<2x2x128xf32, #tpu.memory_space<vmem>>, %arg15: memref<2x32xf32, #tpu.memory_space<vmem>>, %arg16: memref<2x32xf32, #tpu.memory_space<vmem>>) attributes {dimension_semantics = [#tpu.dimension_semantics<arbitrary>], iteration_bounds = array<i64: 2>, scalar_prefetch = 0 : i64, scratch_operands = 2 : i64, tpu.core_type = #tpu.core_type<tc>, window_params = [{transform_indices = @transform_0, window_bounds = array<i64: 2, 2, 96>}, {pipeline_mode = #tpu.pipeline_mode<synchronous>, transform_indices = @transform_1, window_bounds = array<i64: 2, 128, 32>}, {pipeline_mode = #tpu.pipeline_mode<synchronous>, transform_indices = @transform_2, window_bounds = array<i64: 2, 128, 32>}, {pipeline_mode = #tpu.pipeline_mode<synchronous>, transform_indices = @transform_3, window_bounds = array<i64: 2, 128>}, {pipeline_mode = #tpu.pipeline_mode<synchronous>, transform_indices = @transform_4, window_bounds = array<i64: 2, 32>}, {pipeline_mode = #tpu.pipeline_mode<synchronous>, transform_indices = @transform_5, window_bounds = array<i64: 2, 32>}, {pipeline_mode = #tpu.pipeline_mode<synchronous>, transform_indices = @transform_6, window_bounds = array<i64: 32, 96>}, {pipeline_mode = #tpu.pipeline_mode<synchronous>, transform_indices = @transform_7, window_bounds = array<i64: 32, 96>}, {pipeline_mode = #tpu.pipeline_mode<synchronous>, transform_indices = @transform_8, window_bounds = array<i64: 1, 96>}, {pipeline_mode = #tpu.pipeline_mode<synchronous>, transform_indices = @transform_9, window_bounds = array<i64: 32, 32>}, {pipeline_mode = #tpu.pipeline_mode<synchronous>, transform_indices = @transform_10, window_bounds = array<i64: 1, 32>}, {transform_indices = @transform_11, window_bounds = array<i64: 2, 2, 32>}, {transform_indices = @transform_12, window_bounds = array<i64: 2, 2, 32>}, {transform_indices = @transform_13, window_bounds = array<i64: 2, 2, 128>}]} {
    %c0_i32 = arith.constant 0 : i32
    %0 = arith.cmpi eq, %arg0, %c0_i32 : i32
    %1 = arith.extui %0 : i1 to i32
    %c0_i32_0 = arith.constant 0 : i32
    %2 = arith.cmpi ne, %1, %c0_i32_0 : i32
    scf.if %2 {
      %c0_80 = arith.constant 0 : index
      %c0_81 = arith.constant 0 : index
      %152 = vector.load %arg5[%c0_80, %c0_81] : memref<2x32xf32, #tpu.memory_space<vmem>>, vector<2x32xf32>
      %c0_82 = arith.constant 0 : index
      %c0_83 = arith.constant 0 : index
      %153 = vector.load %arg15[%c0_82, %c0_83] : memref<2x32xf32, #tpu.memory_space<vmem>>, vector<2x32xf32>
      tpu.vector_store %arg15[%c0_82, %c0_83], %152 {strides = array<i32>} : memref<2x32xf32, #tpu.memory_space<vmem>>, vector<2x32xf32>,
      %c0_84 = arith.constant 0 : index
      %c0_85 = arith.constant 0 : index
      %154 = vector.load %arg6[%c0_84, %c0_85] : memref<2x32xf32, #tpu.memory_space<vmem>>, vector<2x32xf32>
      %c0_86 = arith.constant 0 : index
      %c0_87 = arith.constant 0 : index
      %155 = vector.load %arg16[%c0_86, %c0_87] : memref<2x32xf32, #tpu.memory_space<vmem>>, vector<2x32xf32>
      tpu.vector_store %arg16[%c0_86, %c0_87], %154 {strides = array<i32>} : memref<2x32xf32, #tpu.memory_space<vmem>>, vector<2x32xf32>,
    } else {
    }
    %c0 = arith.constant 0 : index
    %c0_1 = arith.constant 0 : index
    %3 = vector.load %arg4[%c0, %c0_1] : memref<2x128xf32, #tpu.memory_space<vmem>>, vector<2x128xf32>
    %c0_2 = arith.constant 0 : index
    %c0_3 = arith.constant 0 : index
    %4 = vector.load %arg9[%c0_2, %c0_3] : memref<1x96xf32, #tpu.memory_space<vmem>>, vector<1x96xf32>
    %c0_4 = arith.constant 0 : index
    %c0_5 = arith.constant 0 : index
    %5 = vector.load %arg11[%c0_4, %c0_5] : memref<1x32xf32, #tpu.memory_space<vmem>>, vector<1x32xf32>
    %c0_6 = arith.constant 0 : index
    %c0_7 = arith.constant 0 : index
    %6 = vector.load %arg15[%c0_6, %c0_7] : memref<2x32xf32, #tpu.memory_space<vmem>>, vector<2x32xf32>
    %c0_8 = arith.constant 0 : index
    %c0_9 = arith.constant 0 : index
    %7 = vector.load %arg16[%c0_8, %c0_9] : memref<2x32xf32, #tpu.memory_space<vmem>>, vector<2x32xf32>
    %c0_10 = arith.constant 0 : index
    %c0_11 = arith.constant 0 : index
    %c0_12 = arith.constant 0 : index
    %8 = vector.load %arg1[%c0_10, %c0_11, %c0_12] : memref<2x2x96xf32, #tpu.memory_space<vmem>>, vector<1x2x96xf32>
    %9 = vector.shape_cast %8 : vector<1x2x96xf32> to vector<2x96xf32>
    %c0_13 = arith.constant 0 : index
    %c0_14 = arith.constant 0 : index
    %10 = vector.load %arg7[%c0_13, %c0_14] : memref<32x96xf32, #tpu.memory_space<vmem>>, vector<32x96xf32>
    %cst = arith.constant dense<0.000000e+00> : vector<2x96xf32>
    %11 = tpu.matmul %7, %10, %cst {dimension_numbers = #tpu.dot_dimension_numbers<[1], [0], [0], [1], [0, 0, 1, 1], [], []>} : vector<2x32xf32>, vector<32x96xf32>, vector<2x96xf32> -> vector<2x96xf32>
    %12 = arith.addf %9, %11 : vector<2x96xf32>
    %c0_15 = arith.constant 0 : index
    %c0_16 = arith.constant 0 : index
    %13 = vector.load %arg8[%c0_15, %c0_16] : memref<32x96xf32, #tpu.memory_space<vmem>>, vector<32x96xf32>
    %cst_17 = arith.constant dense<0.000000e+00> : vector<2x96xf32>
    %14 = tpu.matmul %6, %13, %cst_17 {dimension_numbers = #tpu.dot_dimension_numbers<[1], [0], [0], [1], [0, 0, 1, 1], [], []>} : vector<2x32xf32>, vector<32x96xf32>, vector<2x96xf32> -> vector<2x96xf32>
    %15 = vector.broadcast %4 : vector<1x96xf32> to vector<2x96xf32>
    %16 = arith.addf %14, %15 : vector<2x96xf32>
    %17 = vector.extract_strided_slice %12 {offsets = [0, 0], sizes = [2, 32], strides = [1, 1]} : vector<2x96xf32> to vector<2x32xf32>
    %18 = vector.extract_strided_slice %16 {offsets = [0, 0], sizes = [2, 32], strides = [1, 1]} : vector<2x96xf32> to vector<2x32xf32>
    %19 = arith.addf %17, %18 : vector<2x32xf32>
    %20 = arith.negf %19 : vector<2x32xf32>
    %21 = math.exp %20 : vector<2x32xf32>
    %cst_18 = arith.constant 1.000000e+00 : f32
    %22 = vector.broadcast %cst_18 : f32 to vector<2x32xf32>
    %23 = arith.addf %22, %21 : vector<2x32xf32>
    %24 = arith.divf %22, %23 : vector<2x32xf32>
    %25 = vector.extract_strided_slice %12 {offsets = [0, 32], sizes = [2, 32], strides = [1, 1]} : vector<2x96xf32> to vector<2x32xf32>
    %26 = vector.extract_strided_slice %16 {offsets = [0, 32], sizes = [2, 32], strides = [1, 1]} : vector<2x96xf32> to vector<2x32xf32>
    %27 = arith.addf %25, %26 : vector<2x32xf32>
    %28 = arith.negf %27 : vector<2x32xf32>
    %29 = math.exp %28 : vector<2x32xf32>
    %cst_19 = arith.constant 1.000000e+00 : f32
    %30 = vector.broadcast %cst_19 : f32 to vector<2x32xf32>
    %31 = arith.addf %30, %29 : vector<2x32xf32>
    %32 = arith.divf %30, %31 : vector<2x32xf32>
    %33 = vector.extract_strided_slice %12 {offsets = [0, 64], sizes = [2, 32], strides = [1, 1]} : vector<2x96xf32> to vector<2x32xf32>
    %34 = vector.extract_strided_slice %16 {offsets = [0, 64], sizes = [2, 32], strides = [1, 1]} : vector<2x96xf32> to vector<2x32xf32>
    %35 = arith.mulf %24, %34 : vector<2x32xf32>
    %36 = arith.addf %33, %35 : vector<2x32xf32>
    %37 = math.tanh %36 : vector<2x32xf32>
    %cst_20 = arith.constant 1.000000e+00 : f32
    %38 = vector.broadcast %cst_20 : f32 to vector<2x32xf32>
    %39 = arith.subf %38, %32 : vector<2x32xf32>
    %40 = arith.mulf %39, %37 : vector<2x32xf32>
    %41 = arith.mulf %32, %6 : vector<2x32xf32>
    %42 = arith.addf %40, %41 : vector<2x32xf32>
    %c0_21 = arith.constant 0 : index
    %c0_22 = arith.constant 0 : index
    %43 = vector.load %arg10[%c0_21, %c0_22] : memref<32x32xf32, #tpu.memory_space<vmem>>, vector<32x32xf32>
    %cst_23 = arith.constant dense<0.000000e+00> : vector<2x32xf32>
    %44 = tpu.matmul %42, %43, %cst_23 {dimension_numbers = #tpu.dot_dimension_numbers<[1], [0], [0], [1], [0, 0, 1, 1], [], []>} : vector<2x32xf32>, vector<32x32xf32>, vector<2x32xf32> -> vector<2x32xf32>
    %45 = vector.shape_cast %44 : vector<2x32xf32> to vector<2x1x32xf32>
    %c0_24 = arith.constant 0 : index
    %c0_25 = arith.constant 0 : index
    %c0_26 = arith.constant 0 : index
    %46 = vector.load %arg3[%c0_24, %c0_25, %c0_26] : memref<2x128x32xf32, #tpu.memory_space<vmem>>, vector<2x128x32xf32>
    %47 = vector.broadcast %45 : vector<2x1x32xf32> to vector<2x128x32xf32>
    %48 = arith.addf %47, %46 : vector<2x128x32xf32>
    %49 = math.tanh %48 : vector<2x128x32xf32>
    %50 = vector.shape_cast %5 : vector<1x32xf32> to vector<1x1x32xf32>
    %51 = vector.broadcast %50 : vector<1x1x32xf32> to vector<2x128x32xf32>
    %52 = arith.mulf %49, %51 : vector<2x128x32xf32>
    %cst_27 = arith.constant dense<0.000000e+00> : vector<2x128xf32>
    %53 = vector.multi_reduction <add>, %52, %cst_27 [2] : vector<2x128x32xf32> to vector<2x128xf32>
    %54 = arith.addf %53, %3 : vector<2x128xf32>
    %cst_28 = arith.constant dense<0xFF800000> : vector<2xf32>
    %55 = vector.multi_reduction <maximumf>, %54, %cst_28 [1] : vector<2x128xf32> to vector<2xf32>
    %56 = vector.shape_cast %55 : vector<2xf32> to vector<2x1xf32>
    %57 = vector.broadcast %56 : vector<2x1xf32> to vector<2x128xf32>
    %58 = arith.subf %54, %57 : vector<2x128xf32>
    %59 = math.exp %58 : vector<2x128xf32>
    %cst_29 = arith.constant dense<0.000000e+00> : vector<2xf32>
    %60 = vector.multi_reduction <add>, %59, %cst_29 [1] : vector<2x128xf32> to vector<2xf32>
    %61 = vector.shape_cast %60 : vector<2xf32> to vector<2x1xf32>
    %62 = tpu.reciprocal %61 {approx = true} : vector<2x1xf32> -> vector<2x1xf32>
    %63 = vector.broadcast %62 : vector<2x1xf32> to vector<2x128xf32>
    %64 = arith.mulf %59, %63 : vector<2x128xf32>
    %65 = vector.shape_cast %64 : vector<2x128xf32> to vector<2x128x1xf32>
    %c0_30 = arith.constant 0 : index
    %c0_31 = arith.constant 0 : index
    %c0_32 = arith.constant 0 : index
    %66 = vector.load %arg2[%c0_30, %c0_31, %c0_32] : memref<2x128x32xf32, #tpu.memory_space<vmem>>, vector<2x128x32xf32>
    %67 = vector.broadcast %65 : vector<2x128x1xf32> to vector<2x128x32xf32>
    %68 = arith.mulf %67, %66 : vector<2x128x32xf32>
    %cst_33 = arith.constant dense<0.000000e+00> : vector<2x32xf32>
    %69 = vector.multi_reduction <add>, %68, %cst_33 [1] : vector<2x128x32xf32> to vector<2x32xf32>
    %c0_34 = arith.constant 0 : index
    %c0_35 = arith.constant 0 : index
    %c0_36 = arith.constant 0 : index
    %70 = vector.load %arg12[%c0_34, %c0_35, %c0_36] : memref<2x2x32xf32, #tpu.memory_space<vmem>>, vector<1x2x32xf32>
    %71 = vector.shape_cast %70 : vector<1x2x32xf32> to vector<2x32xf32>
    %72 = vector.shape_cast %42 : vector<2x32xf32> to vector<1x2x32xf32>
    tpu.vector_store %arg12[%c0_34, %c0_35, %c0_36], %72 {strides = array<i32>} : memref<2x2x32xf32, #tpu.memory_space<vmem>>, vector<1x2x32xf32>,
    %c0_37 = arith.constant 0 : index
    %c0_38 = arith.constant 0 : index
    %c0_39 = arith.constant 0 : index
    %73 = vector.load %arg13[%c0_37, %c0_38, %c0_39] : memref<2x2x32xf32, #tpu.memory_space<vmem>>, vector<1x2x32xf32>
    %74 = vector.shape_cast %73 : vector<1x2x32xf32> to vector<2x32xf32>
    %75 = vector.shape_cast %69 : vector<2x32xf32> to vector<1x2x32xf32>
    tpu.vector_store %arg13[%c0_37, %c0_38, %c0_39], %75 {strides = array<i32>} : memref<2x2x32xf32, #tpu.memory_space<vmem>>, vector<1x2x32xf32>,
    %c0_40 = arith.constant 0 : index
    %c0_41 = arith.constant 0 : index
    %c0_42 = arith.constant 0 : index
    %76 = vector.load %arg14[%c0_40, %c0_41, %c0_42] : memref<2x2x128xf32, #tpu.memory_space<vmem>>, vector<1x2x128xf32>
    %77 = vector.shape_cast %76 : vector<1x2x128xf32> to vector<2x128xf32>
    %78 = vector.shape_cast %64 : vector<2x128xf32> to vector<1x2x128xf32>
    tpu.vector_store %arg14[%c0_40, %c0_41, %c0_42], %78 {strides = array<i32>} : memref<2x2x128xf32, #tpu.memory_space<vmem>>, vector<1x2x128xf32>,
    %c1 = arith.constant 1 : index
    %c0_43 = arith.constant 0 : index
    %c0_44 = arith.constant 0 : index
    %79 = vector.load %arg1[%c1, %c0_43, %c0_44] : memref<2x2x96xf32, #tpu.memory_space<vmem>>, vector<1x2x96xf32>
    %80 = vector.shape_cast %79 : vector<1x2x96xf32> to vector<2x96xf32>
    %c0_45 = arith.constant 0 : index
    %c0_46 = arith.constant 0 : index
    %81 = vector.load %arg7[%c0_45, %c0_46] : memref<32x96xf32, #tpu.memory_space<vmem>>, vector<32x96xf32>
    %cst_47 = arith.constant dense<0.000000e+00> : vector<2x96xf32>
    %82 = tpu.matmul %69, %81, %cst_47 {dimension_numbers = #tpu.dot_dimension_numbers<[1], [0], [0], [1], [0, 0, 1, 1], [], []>} : vector<2x32xf32>, vector<32x96xf32>, vector<2x96xf32> -> vector<2x96xf32>
    %83 = arith.addf %80, %82 : vector<2x96xf32>
    %c0_48 = arith.constant 0 : index
    %c0_49 = arith.constant 0 : index
    %84 = vector.load %arg8[%c0_48, %c0_49] : memref<32x96xf32, #tpu.memory_space<vmem>>, vector<32x96xf32>
    %cst_50 = arith.constant dense<0.000000e+00> : vector<2x96xf32>
    %85 = tpu.matmul %42, %84, %cst_50 {dimension_numbers = #tpu.dot_dimension_numbers<[1], [0], [0], [1], [0, 0, 1, 1], [], []>} : vector<2x32xf32>, vector<32x96xf32>, vector<2x96xf32> -> vector<2x96xf32>
    %86 = vector.broadcast %4 : vector<1x96xf32> to vector<2x96xf32>
    %87 = arith.addf %85, %86 : vector<2x96xf32>
    %88 = vector.extract_strided_slice %83 {offsets = [0, 0], sizes = [2, 32], strides = [1, 1]} : vector<2x96xf32> to vector<2x32xf32>
    %89 = vector.extract_strided_slice %87 {offsets = [0, 0], sizes = [2, 32], strides = [1, 1]} : vector<2x96xf32> to vector<2x32xf32>
    %90 = arith.addf %88, %89 : vector<2x32xf32>
    %91 = arith.negf %90 : vector<2x32xf32>
    %92 = math.exp %91 : vector<2x32xf32>
    %cst_51 = arith.constant 1.000000e+00 : f32
    %93 = vector.broadcast %cst_51 : f32 to vector<2x32xf32>
    %94 = arith.addf %93, %92 : vector<2x32xf32>
    %95 = arith.divf %93, %94 : vector<2x32xf32>
    %96 = vector.extract_strided_slice %83 {offsets = [0, 32], sizes = [2, 32], strides = [1, 1]} : vector<2x96xf32> to vector<2x32xf32>
    %97 = vector.extract_strided_slice %87 {offsets = [0, 32], sizes = [2, 32], strides = [1, 1]} : vector<2x96xf32> to vector<2x32xf32>
    %98 = arith.addf %96, %97 : vector<2x32xf32>
    %99 = arith.negf %98 : vector<2x32xf32>
    %100 = math.exp %99 : vector<2x32xf32>
    %cst_52 = arith.constant 1.000000e+00 : f32
    %101 = vector.broadcast %cst_52 : f32 to vector<2x32xf32>
    %102 = arith.addf %101, %100 : vector<2x32xf32>
    %103 = arith.divf %101, %102 : vector<2x32xf32>
    %104 = vector.extract_strided_slice %83 {offsets = [0, 64], sizes = [2, 32], strides = [1, 1]} : vector<2x96xf32> to vector<2x32xf32>
    %105 = vector.extract_strided_slice %87 {offsets = [0, 64], sizes = [2, 32], strides = [1, 1]} : vector<2x96xf32> to vector<2x32xf32>
    %106 = arith.mulf %95, %105 : vector<2x32xf32>
    %107 = arith.addf %104, %106 : vector<2x32xf32>
    %108 = math.tanh %107 : vector<2x32xf32>
    %cst_53 = arith.constant 1.000000e+00 : f32
    %109 = vector.broadcast %cst_53 : f32 to vector<2x32xf32>
    %110 = arith.subf %109, %103 : vector<2x32xf32>
    %111 = arith.mulf %110, %108 : vector<2x32xf32>
    %112 = arith.mulf %103, %42 : vector<2x32xf32>
    %113 = arith.addf %111, %112 : vector<2x32xf32>
    %c0_54 = arith.constant 0 : index
    %c0_55 = arith.constant 0 : index
    %114 = vector.load %arg10[%c0_54, %c0_55] : memref<32x32xf32, #tpu.memory_space<vmem>>, vector<32x32xf32>
    %cst_56 = arith.constant dense<0.000000e+00> : vector<2x32xf32>
    %115 = tpu.matmul %113, %114, %cst_56 {dimension_numbers = #tpu.dot_dimension_numbers<[1], [0], [0], [1], [0, 0, 1, 1], [], []>} : vector<2x32xf32>, vector<32x32xf32>, vector<2x32xf32> -> vector<2x32xf32>
    %116 = vector.shape_cast %115 : vector<2x32xf32> to vector<2x1x32xf32>
    %c0_57 = arith.constant 0 : index
    %c0_58 = arith.constant 0 : index
    %c0_59 = arith.constant 0 : index
    %117 = vector.load %arg3[%c0_57, %c0_58, %c0_59] : memref<2x128x32xf32, #tpu.memory_space<vmem>>, vector<2x128x32xf32>
    %118 = vector.broadcast %116 : vector<2x1x32xf32> to vector<2x128x32xf32>
    %119 = arith.addf %118, %117 : vector<2x128x32xf32>
    %120 = math.tanh %119 : vector<2x128x32xf32>
    %121 = vector.shape_cast %5 : vector<1x32xf32> to vector<1x1x32xf32>
    %122 = vector.broadcast %121 : vector<1x1x32xf32> to vector<2x128x32xf32>
    %123 = arith.mulf %120, %122 : vector<2x128x32xf32>
    %cst_60 = arith.constant dense<0.000000e+00> : vector<2x128xf32>
    %124 = vector.multi_reduction <add>, %123, %cst_60 [2] : vector<2x128x32xf32> to vector<2x128xf32>
    %125 = arith.addf %124, %3 : vector<2x128xf32>
    %cst_61 = arith.constant dense<0xFF800000> : vector<2xf32>
    %126 = vector.multi_reduction <maximumf>, %125, %cst_61 [1] : vector<2x128xf32> to vector<2xf32>
    %127 = vector.shape_cast %126 : vector<2xf32> to vector<2x1xf32>
    %128 = vector.broadcast %127 : vector<2x1xf32> to vector<2x128xf32>
    %129 = arith.subf %125, %128 : vector<2x128xf32>
    %130 = math.exp %129 : vector<2x128xf32>
    %cst_62 = arith.constant dense<0.000000e+00> : vector<2xf32>
    %131 = vector.multi_reduction <add>, %130, %cst_62 [1] : vector<2x128xf32> to vector<2xf32>
    %132 = vector.shape_cast %131 : vector<2xf32> to vector<2x1xf32>
    %133 = tpu.reciprocal %132 {approx = true} : vector<2x1xf32> -> vector<2x1xf32>
    %134 = vector.broadcast %133 : vector<2x1xf32> to vector<2x128xf32>
    %135 = arith.mulf %130, %134 : vector<2x128xf32>
    %136 = vector.shape_cast %135 : vector<2x128xf32> to vector<2x128x1xf32>
    %c0_63 = arith.constant 0 : index
    %c0_64 = arith.constant 0 : index
    %c0_65 = arith.constant 0 : index
    %137 = vector.load %arg2[%c0_63, %c0_64, %c0_65] : memref<2x128x32xf32, #tpu.memory_space<vmem>>, vector<2x128x32xf32>
    %138 = vector.broadcast %136 : vector<2x128x1xf32> to vector<2x128x32xf32>
    %139 = arith.mulf %138, %137 : vector<2x128x32xf32>
    %cst_66 = arith.constant dense<0.000000e+00> : vector<2x32xf32>
    %140 = vector.multi_reduction <add>, %139, %cst_66 [1] : vector<2x128x32xf32> to vector<2x32xf32>
    %c1_67 = arith.constant 1 : index
    %c0_68 = arith.constant 0 : index
    %c0_69 = arith.constant 0 : index
    %141 = vector.load %arg12[%c1_67, %c0_68, %c0_69] : memref<2x2x32xf32, #tpu.memory_space<vmem>>, vector<1x2x32xf32>
    %142 = vector.shape_cast %141 : vector<1x2x32xf32> to vector<2x32xf32>
    %143 = vector.shape_cast %113 : vector<2x32xf32> to vector<1x2x32xf32>
    tpu.vector_store %arg12[%c1_67, %c0_68, %c0_69], %143 {strides = array<i32>} : memref<2x2x32xf32, #tpu.memory_space<vmem>>, vector<1x2x32xf32>,
    %c1_70 = arith.constant 1 : index
    %c0_71 = arith.constant 0 : index
    %c0_72 = arith.constant 0 : index
    %144 = vector.load %arg13[%c1_70, %c0_71, %c0_72] : memref<2x2x32xf32, #tpu.memory_space<vmem>>, vector<1x2x32xf32>
    %145 = vector.shape_cast %144 : vector<1x2x32xf32> to vector<2x32xf32>
    %146 = vector.shape_cast %140 : vector<2x32xf32> to vector<1x2x32xf32>
    tpu.vector_store %arg13[%c1_70, %c0_71, %c0_72], %146 {strides = array<i32>} : memref<2x2x32xf32, #tpu.memory_space<vmem>>, vector<1x2x32xf32>,
    %c1_73 = arith.constant 1 : index
    %c0_74 = arith.constant 0 : index
    %c0_75 = arith.constant 0 : index
    %147 = vector.load %arg14[%c1_73, %c0_74, %c0_75] : memref<2x2x128xf32, #tpu.memory_space<vmem>>, vector<1x2x128xf32>
    %148 = vector.shape_cast %147 : vector<1x2x128xf32> to vector<2x128xf32>
    %149 = vector.shape_cast %135 : vector<2x128xf32> to vector<1x2x128xf32>
    tpu.vector_store %arg14[%c1_73, %c0_74, %c0_75], %149 {strides = array<i32>} : memref<2x2x128xf32, #tpu.memory_space<vmem>>, vector<1x2x128xf32>,
    %c0_76 = arith.constant 0 : index
    %c0_77 = arith.constant 0 : index
    %150 = vector.load %arg15[%c0_76, %c0_77] : memref<2x32xf32, #tpu.memory_space<vmem>>, vector<2x32xf32>
    tpu.vector_store %arg15[%c0_76, %c0_77], %113 {strides = array<i32>} : memref<2x32xf32, #tpu.memory_space<vmem>>, vector<2x32xf32>,
    %c0_78 = arith.constant 0 : index
    %c0_79 = arith.constant 0 : index
    %151 = vector.load %arg16[%c0_78, %c0_79] : memref<2x32xf32, #tpu.memory_space<vmem>>, vector<2x32xf32>
    tpu.vector_store %arg16[%c0_78, %c0_79], %140 {strides = array<i32>} : memref<2x32xf32, #tpu.memory_space<vmem>>, vector<2x32xf32>,
    return
  }
  func.func @transform_0(%arg0: i32) -> (i32, i32, i32) {
    %c0_i32 = arith.constant 0 : i32
    %c0_i32_0 = arith.constant 0 : i32
    %c0_i32_1 = arith.constant 0 : i32
    return %arg0, %c0_i32, %c0_i32_0 : i32, i32, i32
  }
  func.func @transform_1(%arg0: i32) -> (i32, i32, i32) {
    %c0_i32 = arith.constant 0 : i32
    %c0_i32_0 = arith.constant 0 : i32
    %c0_i32_1 = arith.constant 0 : i32
    %c0_i32_2 = arith.constant 0 : i32
    return %c0_i32, %c0_i32_0, %c0_i32_1 : i32, i32, i32
  }
  func.func @transform_2(%arg0: i32) -> (i32, i32, i32) {
    %c0_i32 = arith.constant 0 : i32
    %c0_i32_0 = arith.constant 0 : i32
    %c0_i32_1 = arith.constant 0 : i32
    %c0_i32_2 = arith.constant 0 : i32
    return %c0_i32, %c0_i32_0, %c0_i32_1 : i32, i32, i32
  }
  func.func @transform_3(%arg0: i32) -> (i32, i32) {
    %c0_i32 = arith.constant 0 : i32
    %c0_i32_0 = arith.constant 0 : i32
    %c0_i32_1 = arith.constant 0 : i32
    return %c0_i32, %c0_i32_0 : i32, i32
  }
  func.func @transform_4(%arg0: i32) -> (i32, i32) {
    %c0_i32 = arith.constant 0 : i32
    %c0_i32_0 = arith.constant 0 : i32
    %c0_i32_1 = arith.constant 0 : i32
    return %c0_i32, %c0_i32_0 : i32, i32
  }
  func.func @transform_5(%arg0: i32) -> (i32, i32) {
    %c0_i32 = arith.constant 0 : i32
    %c0_i32_0 = arith.constant 0 : i32
    %c0_i32_1 = arith.constant 0 : i32
    return %c0_i32, %c0_i32_0 : i32, i32
  }
  func.func @transform_6(%arg0: i32) -> (i32, i32) {
    %c0_i32 = arith.constant 0 : i32
    %c0_i32_0 = arith.constant 0 : i32
    %c0_i32_1 = arith.constant 0 : i32
    return %c0_i32, %c0_i32_0 : i32, i32
  }
  func.func @transform_7(%arg0: i32) -> (i32, i32) {
    %c0_i32 = arith.constant 0 : i32
    %c0_i32_0 = arith.constant 0 : i32
    %c0_i32_1 = arith.constant 0 : i32
    return %c0_i32, %c0_i32_0 : i32, i32
  }
  func.func @transform_8(%arg0: i32) -> (i32, i32) {
    %c0_i32 = arith.constant 0 : i32
    %c0_i32_0 = arith.constant 0 : i32
    %c0_i32_1 = arith.constant 0 : i32
    return %c0_i32, %c0_i32_0 : i32, i32
  }
  func.func @transform_9(%arg0: i32) -> (i32, i32) {
    %c0_i32 = arith.constant 0 : i32
    %c0_i32_0 = arith.constant 0 : i32
    %c0_i32_1 = arith.constant 0 : i32
    return %c0_i32, %c0_i32_0 : i32, i32
  }
  func.func @transform_10(%arg0: i32) -> (i32, i32) {
    %c0_i32 = arith.constant 0 : i32
    %c0_i32_0 = arith.constant 0 : i32
    %c0_i32_1 = arith.constant 0 : i32
    return %c0_i32, %c0_i32_0 : i32, i32
  }
  func.func @transform_11(%arg0: i32) -> (i32, i32, i32) {
    %c0_i32 = arith.constant 0 : i32
    %c0_i32_0 = arith.constant 0 : i32
    %c0_i32_1 = arith.constant 0 : i32
    return %arg0, %c0_i32, %c0_i32_0 : i32, i32, i32
  }
  func.func @transform_12(%arg0: i32) -> (i32, i32, i32) {
    %c0_i32 = arith.constant 0 : i32
    %c0_i32_0 = arith.constant 0 : i32
    %c0_i32_1 = arith.constant 0 : i32
    return %arg0, %c0_i32, %c0_i32_0 : i32, i32, i32
  }
  func.func @transform_13(%arg0: i32) -> (i32, i32, i32) {
    %c0_i32 = arith.constant 0 : i32
    %c0_i32_0 = arith.constant 0 : i32
    %c0_i32_1 = arith.constant 0 : i32
    return %arg0, %c0_i32, %c0_i32_0 : i32, i32, i32
  }
}

module attributes {stable_mosaic.version = 11 : i64} {
  func.func @copy_rnn_decoder_kernel(%arg0: i32, %arg1: memref<2x2x96xf32, #tpu.memory_space<vmem>>, %arg2: memref<2x128x32xf32, #tpu.memory_space<vmem>>, %arg3: memref<2x128x32xf32, #tpu.memory_space<vmem>>, %arg4: memref<2x128xf32, #tpu.memory_space<vmem>>, %arg5: memref<2x32xf32, #tpu.memory_space<vmem>>, %arg6: memref<2x32xf32, #tpu.memory_space<vmem>>, %arg7: memref<32x96xf32, #tpu.memory_space<vmem>>, %arg8: memref<32x96xf32, #tpu.memory_space<vmem>>, %arg9: memref<1x96xf32, #tpu.memory_space<vmem>>, %arg10: memref<32x32xf32, #tpu.memory_space<vmem>>, %arg11: memref<1x32xf32, #tpu.memory_space<vmem>>, %arg12: memref<2x2x32xf32, #tpu.memory_space<vmem>>, %arg13: memref<2x2x32xf32, #tpu.memory_space<vmem>>, %arg14: memref<2x2x128xf32, #tpu.memory_space<vmem>>, %arg15: memref<2x32xf32, #tpu.memory_space<vmem>>, %arg16: memref<2x32xf32, #tpu.memory_space<vmem>>) attributes {dimension_semantics = [#tpu.dimension_semantics<arbitrary>], iteration_bounds = array<i64: 2>, scalar_prefetch = 0 : i64, scratch_operands = 2 : i64, tpu.core_type = #tpu.core_type<tc>, window_params = [{transform_indices = @transform_0, window_bounds = array<i64: 2, 2, 96>}, {pipeline_mode = #tpu.pipeline_mode<synchronous>, transform_indices = @transform_1, window_bounds = array<i64: 2, 128, 32>}, {pipeline_mode = #tpu.pipeline_mode<synchronous>, transform_indices = @transform_2, window_bounds = array<i64: 2, 128, 32>}, {pipeline_mode = #tpu.pipeline_mode<synchronous>, transform_indices = @transform_3, window_bounds = array<i64: 2, 128>}, {pipeline_mode = #tpu.pipeline_mode<synchronous>, transform_indices = @transform_4, window_bounds = array<i64: 2, 32>}, {pipeline_mode = #tpu.pipeline_mode<synchronous>, transform_indices = @transform_5, window_bounds = array<i64: 2, 32>}, {pipeline_mode = #tpu.pipeline_mode<synchronous>, transform_indices = @transform_6, window_bounds = array<i64: 32, 96>}, {pipeline_mode = #tpu.pipeline_mode<synchronous>, transform_indices = @transform_7, window_bounds = array<i64: 32, 96>}, {pipeline_mode = #tpu.pipeline_mode<synchronous>, transform_indices = @transform_8, window_bounds = array<i64: 1, 96>}, {pipeline_mode = #tpu.pipeline_mode<synchronous>, transform_indices = @transform_9, window_bounds = array<i64: 32, 32>}, {pipeline_mode = #tpu.pipeline_mode<synchronous>, transform_indices = @transform_10, window_bounds = array<i64: 1, 32>}, {transform_indices = @transform_11, window_bounds = array<i64: 2, 2, 32>}, {transform_indices = @transform_12, window_bounds = array<i64: 2, 2, 32>}, {transform_indices = @transform_13, window_bounds = array<i64: 2, 2, 128>}]} {
    %c0_i32 = arith.constant 0 : i32
    %0 = arith.cmpi eq, %arg0, %c0_i32 : i32
    %1 = arith.extui %0 : i1 to i32
    %c0_i32_0 = arith.constant 0 : i32
    %2 = arith.cmpi ne, %1, %c0_i32_0 : i32
    scf.if %2 {
      %c0_80 = arith.constant 0 : index
      %c0_81 = arith.constant 0 : index
      %152 = vector.load %arg5[%c0_80, %c0_81] : memref<2x32xf32, #tpu.memory_space<vmem>>, vector<2x32xf32>
      %c0_82 = arith.constant 0 : index
      %c0_83 = arith.constant 0 : index
      %153 = vector.load %arg15[%c0_82, %c0_83] : memref<2x32xf32, #tpu.memory_space<vmem>>, vector<2x32xf32>
      tpu.vector_store %arg15[%c0_82, %c0_83], %152 {strides = array<i32>} : memref<2x32xf32, #tpu.memory_space<vmem>>, vector<2x32xf32>,
      %c0_84 = arith.constant 0 : index
      %c0_85 = arith.constant 0 : index
      %154 = vector.load %arg6[%c0_84, %c0_85] : memref<2x32xf32, #tpu.memory_space<vmem>>, vector<2x32xf32>
      %c0_86 = arith.constant 0 : index
      %c0_87 = arith.constant 0 : index
      %155 = vector.load %arg16[%c0_86, %c0_87] : memref<2x32xf32, #tpu.memory_space<vmem>>, vector<2x32xf32>
      tpu.vector_store %arg16[%c0_86, %c0_87], %154 {strides = array<i32>} : memref<2x32xf32, #tpu.memory_space<vmem>>, vector<2x32xf32>,
    } else {
    }
    %c0 = arith.constant 0 : index
    %c0_1 = arith.constant 0 : index
    %3 = vector.load %arg4[%c0, %c0_1] : memref<2x128xf32, #tpu.memory_space<vmem>>, vector<2x128xf32>
    %c0_2 = arith.constant 0 : index
    %c0_3 = arith.constant 0 : index
    %4 = vector.load %arg9[%c0_2, %c0_3] : memref<1x96xf32, #tpu.memory_space<vmem>>, vector<1x96xf32>
    %c0_4 = arith.constant 0 : index
    %c0_5 = arith.constant 0 : index
    %5 = vector.load %arg11[%c0_4, %c0_5] : memref<1x32xf32, #tpu.memory_space<vmem>>, vector<1x32xf32>
    %c0_6 = arith.constant 0 : index
    %c0_7 = arith.constant 0 : index
    %6 = vector.load %arg15[%c0_6, %c0_7] : memref<2x32xf32, #tpu.memory_space<vmem>>, vector<2x32xf32>
    %c0_8 = arith.constant 0 : index
    %c0_9 = arith.constant 0 : index
    %7 = vector.load %arg16[%c0_8, %c0_9] : memref<2x32xf32, #tpu.memory_space<vmem>>, vector<2x32xf32>
    %c0_10 = arith.constant 0 : index
    %c0_11 = arith.constant 0 : index
    %c0_12 = arith.constant 0 : index
    %8 = vector.load %arg1[%c0_10, %c0_11, %c0_12] : memref<2x2x96xf32, #tpu.memory_space<vmem>>, vector<1x2x96xf32>
    %9 = vector.shape_cast %8 : vector<1x2x96xf32> to vector<2x96xf32>
    %c0_13 = arith.constant 0 : index
    %c0_14 = arith.constant 0 : index
    %10 = vector.load %arg7[%c0_13, %c0_14] : memref<32x96xf32, #tpu.memory_space<vmem>>, vector<32x96xf32>
    %cst = arith.constant dense<0.000000e+00> : vector<2x96xf32>
    %11 = tpu.matmul %7, %10, %cst {dimension_numbers = #tpu.dot_dimension_numbers<[1], [0], [0], [1], [0, 0, 1, 1], [], []>} : vector<2x32xf32>, vector<32x96xf32>, vector<2x96xf32> -> vector<2x96xf32>
    %12 = arith.addf %9, %11 : vector<2x96xf32>
    %c0_15 = arith.constant 0 : index
    %c0_16 = arith.constant 0 : index
    %13 = vector.load %arg8[%c0_15, %c0_16] : memref<32x96xf32, #tpu.memory_space<vmem>>, vector<32x96xf32>
    %cst_17 = arith.constant dense<0.000000e+00> : vector<2x96xf32>
    %14 = tpu.matmul %6, %13, %cst_17 {dimension_numbers = #tpu.dot_dimension_numbers<[1], [0], [0], [1], [0, 0, 1, 1], [], []>} : vector<2x32xf32>, vector<32x96xf32>, vector<2x96xf32> -> vector<2x96xf32>
    %15 = vector.broadcast %4 : vector<1x96xf32> to vector<2x96xf32>
    %16 = arith.addf %14, %15 : vector<2x96xf32>
    %17 = vector.extract_strided_slice %12 {offsets = [0, 0], sizes = [2, 32], strides = [1, 1]} : vector<2x96xf32> to vector<2x32xf32>
    %18 = vector.extract_strided_slice %16 {offsets = [0, 0], sizes = [2, 32], strides = [1, 1]} : vector<2x96xf32> to vector<2x32xf32>
    %19 = arith.addf %17, %18 : vector<2x32xf32>
    %20 = arith.negf %19 : vector<2x32xf32>
    %21 = math.exp %20 : vector<2x32xf32>
    %cst_18 = arith.constant 1.000000e+00 : f32
    %22 = vector.broadcast %cst_18 : f32 to vector<2x32xf32>
    %23 = arith.addf %22, %21 : vector<2x32xf32>
    %24 = arith.divf %22, %23 : vector<2x32xf32>
    %25 = vector.extract_strided_slice %12 {offsets = [0, 32], sizes = [2, 32], strides = [1, 1]} : vector<2x96xf32> to vector<2x32xf32>
    %26 = vector.extract_strided_slice %16 {offsets = [0, 32], sizes = [2, 32], strides = [1, 1]} : vector<2x96xf32> to vector<2x32xf32>
    %27 = arith.addf %25, %26 : vector<2x32xf32>
    %28 = arith.negf %27 : vector<2x32xf32>
    %29 = math.exp %28 : vector<2x32xf32>
    %cst_19 = arith.constant 1.000000e+00 : f32
    %30 = vector.broadcast %cst_19 : f32 to vector<2x32xf32>
    %31 = arith.addf %30, %29 : vector<2x32xf32>
    %32 = arith.divf %30, %31 : vector<2x32xf32>
    %33 = vector.extract_strided_slice %12 {offsets = [0, 64], sizes = [2, 32], strides = [1, 1]} : vector<2x96xf32> to vector<2x32xf32>
    %34 = vector.extract_strided_slice %16 {offsets = [0, 64], sizes = [2, 32], strides = [1, 1]} : vector<2x96xf32> to vector<2x32xf32>
    %35 = arith.mulf %24, %34 : vector<2x32xf32>
    %36 = arith.addf %33, %35 : vector<2x32xf32>
    %37 = math.tanh %36 : vector<2x32xf32>
    %cst_20 = arith.constant 1.000000e+00 : f32
    %38 = vector.broadcast %cst_20 : f32 to vector<2x32xf32>
    %39 = arith.subf %38, %32 : vector<2x32xf32>
    %40 = arith.mulf %39, %37 : vector<2x32xf32>
    %41 = arith.mulf %32, %6 : vector<2x32xf32>
    %42 = arith.addf %40, %41 : vector<2x32xf32>
    %c0_21 = arith.constant 0 : index
    %c0_22 = arith.constant 0 : index
    %43 = vector.load %arg10[%c0_21, %c0_22] : memref<32x32xf32, #tpu.memory_space<vmem>>, vector<32x32xf32>
    %cst_23 = arith.constant dense<0.000000e+00> : vector<2x32xf32>
    %44 = tpu.matmul %42, %43, %cst_23 {dimension_numbers = #tpu.dot_dimension_numbers<[1], [0], [0], [1], [0, 0, 1, 1], [], []>} : vector<2x32xf32>, vector<32x32xf32>, vector<2x32xf32> -> vector<2x32xf32>
    %45 = vector.shape_cast %44 : vector<2x32xf32> to vector<2x1x32xf32>
    %c0_24 = arith.constant 0 : index
    %c0_25 = arith.constant 0 : index
    %c0_26 = arith.constant 0 : index
    %46 = vector.load %arg3[%c0_24, %c0_25, %c0_26] : memref<2x128x32xf32, #tpu.memory_space<vmem>>, vector<2x128x32xf32>
    %47 = vector.broadcast %45 : vector<2x1x32xf32> to vector<2x128x32xf32>
    %48 = arith.addf %47, %46 : vector<2x128x32xf32>
    %49 = math.tanh %48 : vector<2x128x32xf32>
    %50 = vector.shape_cast %5 : vector<1x32xf32> to vector<1x1x32xf32>
    %51 = vector.broadcast %50 : vector<1x1x32xf32> to vector<2x128x32xf32>
    %52 = arith.mulf %49, %51 : vector<2x128x32xf32>
    %cst_27 = arith.constant dense<0.000000e+00> : vector<2x128xf32>
    %53 = vector.multi_reduction <add>, %52, %cst_27 [2] : vector<2x128x32xf32> to vector<2x128xf32>
    %54 = arith.addf %53, %3 : vector<2x128xf32>
    %cst_28 = arith.constant dense<0xFF800000> : vector<2xf32>
    %55 = vector.multi_reduction <maximumf>, %54, %cst_28 [1] : vector<2x128xf32> to vector<2xf32>
    %56 = vector.shape_cast %55 : vector<2xf32> to vector<2x1xf32>
    %57 = vector.broadcast %56 : vector<2x1xf32> to vector<2x128xf32>
    %58 = arith.subf %54, %57 : vector<2x128xf32>
    %59 = math.exp %58 : vector<2x128xf32>
    %cst_29 = arith.constant dense<0.000000e+00> : vector<2xf32>
    %60 = vector.multi_reduction <add>, %59, %cst_29 [1] : vector<2x128xf32> to vector<2xf32>
    %61 = vector.shape_cast %60 : vector<2xf32> to vector<2x1xf32>
    %62 = tpu.reciprocal %61 {approx = true} : vector<2x1xf32> -> vector<2x1xf32>
    %63 = vector.broadcast %62 : vector<2x1xf32> to vector<2x128xf32>
    %64 = arith.mulf %59, %63 : vector<2x128xf32>
    %65 = vector.shape_cast %64 : vector<2x128xf32> to vector<2x128x1xf32>
    %c0_30 = arith.constant 0 : index
    %c0_31 = arith.constant 0 : index
    %c0_32 = arith.constant 0 : index
    %66 = vector.load %arg2[%c0_30, %c0_31, %c0_32] : memref<2x128x32xf32, #tpu.memory_space<vmem>>, vector<2x128x32xf32>
    %67 = vector.broadcast %65 : vector<2x128x1xf32> to vector<2x128x32xf32>
    %68 = arith.mulf %67, %66 : vector<2x128x32xf32>
    %cst_33 = arith.constant dense<0.000000e+00> : vector<2x32xf32>
    %69 = vector.multi_reduction <add>, %68, %cst_33 [1] : vector<2x128x32xf32> to vector<2x32xf32>
    %c0_34 = arith.constant 0 : index
    %c0_35 = arith.constant 0 : index
    %c0_36 = arith.constant 0 : index
    %70 = vector.load %arg12[%c0_34, %c0_35, %c0_36] : memref<2x2x32xf32, #tpu.memory_space<vmem>>, vector<1x2x32xf32>
    %71 = vector.shape_cast %70 : vector<1x2x32xf32> to vector<2x32xf32>
    %72 = vector.shape_cast %42 : vector<2x32xf32> to vector<1x2x32xf32>
    tpu.vector_store %arg12[%c0_34, %c0_35, %c0_36], %72 {strides = array<i32>} : memref<2x2x32xf32, #tpu.memory_space<vmem>>, vector<1x2x32xf32>,
    %c0_37 = arith.constant 0 : index
    %c0_38 = arith.constant 0 : index
    %c0_39 = arith.constant 0 : index
    %73 = vector.load %arg13[%c0_37, %c0_38, %c0_39] : memref<2x2x32xf32, #tpu.memory_space<vmem>>, vector<1x2x32xf32>
    %74 = vector.shape_cast %73 : vector<1x2x32xf32> to vector<2x32xf32>
    %75 = vector.shape_cast %69 : vector<2x32xf32> to vector<1x2x32xf32>
    tpu.vector_store %arg13[%c0_37, %c0_38, %c0_39], %75 {strides = array<i32>} : memref<2x2x32xf32, #tpu.memory_space<vmem>>, vector<1x2x32xf32>,
    %c0_40 = arith.constant 0 : index
    %c0_41 = arith.constant 0 : index
    %c0_42 = arith.constant 0 : index
    %76 = vector.load %arg14[%c0_40, %c0_41, %c0_42] : memref<2x2x128xf32, #tpu.memory_space<vmem>>, vector<1x2x128xf32>
    %77 = vector.shape_cast %76 : vector<1x2x128xf32> to vector<2x128xf32>
    %78 = vector.shape_cast %64 : vector<2x128xf32> to vector<1x2x128xf32>
    tpu.vector_store %arg14[%c0_40, %c0_41, %c0_42], %78 {strides = array<i32>} : memref<2x2x128xf32, #tpu.memory_space<vmem>>, vector<1x2x128xf32>,
    %c1 = arith.constant 1 : index
    %c0_43 = arith.constant 0 : index
    %c0_44 = arith.constant 0 : index
    %79 = vector.load %arg1[%c1, %c0_43, %c0_44] : memref<2x2x96xf32, #tpu.memory_space<vmem>>, vector<1x2x96xf32>
    %80 = vector.shape_cast %79 : vector<1x2x96xf32> to vector<2x96xf32>
    %c0_45 = arith.constant 0 : index
    %c0_46 = arith.constant 0 : index
    %81 = vector.load %arg7[%c0_45, %c0_46] : memref<32x96xf32, #tpu.memory_space<vmem>>, vector<32x96xf32>
    %cst_47 = arith.constant dense<0.000000e+00> : vector<2x96xf32>
    %82 = tpu.matmul %69, %81, %cst_47 {dimension_numbers = #tpu.dot_dimension_numbers<[1], [0], [0], [1], [0, 0, 1, 1], [], []>} : vector<2x32xf32>, vector<32x96xf32>, vector<2x96xf32> -> vector<2x96xf32>
    %83 = arith.addf %80, %82 : vector<2x96xf32>
    %c0_48 = arith.constant 0 : index
    %c0_49 = arith.constant 0 : index
    %84 = vector.load %arg8[%c0_48, %c0_49] : memref<32x96xf32, #tpu.memory_space<vmem>>, vector<32x96xf32>
    %cst_50 = arith.constant dense<0.000000e+00> : vector<2x96xf32>
    %85 = tpu.matmul %42, %84, %cst_50 {dimension_numbers = #tpu.dot_dimension_numbers<[1], [0], [0], [1], [0, 0, 1, 1], [], []>} : vector<2x32xf32>, vector<32x96xf32>, vector<2x96xf32> -> vector<2x96xf32>
    %86 = vector.broadcast %4 : vector<1x96xf32> to vector<2x96xf32>
    %87 = arith.addf %85, %86 : vector<2x96xf32>
    %88 = vector.extract_strided_slice %83 {offsets = [0, 0], sizes = [2, 32], strides = [1, 1]} : vector<2x96xf32> to vector<2x32xf32>
    %89 = vector.extract_strided_slice %87 {offsets = [0, 0], sizes = [2, 32], strides = [1, 1]} : vector<2x96xf32> to vector<2x32xf32>
    %90 = arith.addf %88, %89 : vector<2x32xf32>
    %91 = arith.negf %90 : vector<2x32xf32>
    %92 = math.exp %91 : vector<2x32xf32>
    %cst_51 = arith.constant 1.000000e+00 : f32
    %93 = vector.broadcast %cst_51 : f32 to vector<2x32xf32>
    %94 = arith.addf %93, %92 : vector<2x32xf32>
    %95 = arith.divf %93, %94 : vector<2x32xf32>
    %96 = vector.extract_strided_slice %83 {offsets = [0, 32], sizes = [2, 32], strides = [1, 1]} : vector<2x96xf32> to vector<2x32xf32>
    %97 = vector.extract_strided_slice %87 {offsets = [0, 32], sizes = [2, 32], strides = [1, 1]} : vector<2x96xf32> to vector<2x32xf32>
    %98 = arith.addf %96, %97 : vector<2x32xf32>
    %99 = arith.negf %98 : vector<2x32xf32>
    %100 = math.exp %99 : vector<2x32xf32>
    %cst_52 = arith.constant 1.000000e+00 : f32
    %101 = vector.broadcast %cst_52 : f32 to vector<2x32xf32>
    %102 = arith.addf %101, %100 : vector<2x32xf32>
    %103 = arith.divf %101, %102 : vector<2x32xf32>
    %104 = vector.extract_strided_slice %83 {offsets = [0, 64], sizes = [2, 32], strides = [1, 1]} : vector<2x96xf32> to vector<2x32xf32>
    %105 = vector.extract_strided_slice %87 {offsets = [0, 64], sizes = [2, 32], strides = [1, 1]} : vector<2x96xf32> to vector<2x32xf32>
    %106 = arith.mulf %95, %105 : vector<2x32xf32>
    %107 = arith.addf %104, %106 : vector<2x32xf32>
    %108 = math.tanh %107 : vector<2x32xf32>
    %cst_53 = arith.constant 1.000000e+00 : f32
    %109 = vector.broadcast %cst_53 : f32 to vector<2x32xf32>
    %110 = arith.subf %109, %103 : vector<2x32xf32>
    %111 = arith.mulf %110, %108 : vector<2x32xf32>
    %112 = arith.mulf %103, %42 : vector<2x32xf32>
    %113 = arith.addf %111, %112 : vector<2x32xf32>
    %c0_54 = arith.constant 0 : index
    %c0_55 = arith.constant 0 : index
    %114 = vector.load %arg10[%c0_54, %c0_55] : memref<32x32xf32, #tpu.memory_space<vmem>>, vector<32x32xf32>
    %cst_56 = arith.constant dense<0.000000e+00> : vector<2x32xf32>
    %115 = tpu.matmul %113, %114, %cst_56 {dimension_numbers = #tpu.dot_dimension_numbers<[1], [0], [0], [1], [0, 0, 1, 1], [], []>} : vector<2x32xf32>, vector<32x32xf32>, vector<2x32xf32> -> vector<2x32xf32>
    %116 = vector.shape_cast %115 : vector<2x32xf32> to vector<2x1x32xf32>
    %c0_57 = arith.constant 0 : index
    %c0_58 = arith.constant 0 : index
    %c0_59 = arith.constant 0 : index
    %117 = vector.load %arg3[%c0_57, %c0_58, %c0_59] : memref<2x128x32xf32, #tpu.memory_space<vmem>>, vector<2x128x32xf32>
    %118 = vector.broadcast %116 : vector<2x1x32xf32> to vector<2x128x32xf32>
    %119 = arith.addf %118, %117 : vector<2x128x32xf32>
    %120 = math.tanh %119 : vector<2x128x32xf32>
    %121 = vector.shape_cast %5 : vector<1x32xf32> to vector<1x1x32xf32>
    %122 = vector.broadcast %121 : vector<1x1x32xf32> to vector<2x128x32xf32>
    %123 = arith.mulf %120, %122 : vector<2x128x32xf32>
    %cst_60 = arith.constant dense<0.000000e+00> : vector<2x128xf32>
    %124 = vector.multi_reduction <add>, %123, %cst_60 [2] : vector<2x128x32xf32> to vector<2x128xf32>
    %125 = arith.addf %124, %3 : vector<2x128xf32>
    %cst_61 = arith.constant dense<0xFF800000> : vector<2xf32>
    %126 = vector.multi_reduction <maximumf>, %125, %cst_61 [1] : vector<2x128xf32> to vector<2xf32>
    %127 = vector.shape_cast %126 : vector<2xf32> to vector<2x1xf32>
    %128 = vector.broadcast %127 : vector<2x1xf32> to vector<2x128xf32>
    %129 = arith.subf %125, %128 : vector<2x128xf32>
    %130 = math.exp %129 : vector<2x128xf32>
    %cst_62 = arith.constant dense<0.000000e+00> : vector<2xf32>
    %131 = vector.multi_reduction <add>, %130, %cst_62 [1] : vector<2x128xf32> to vector<2xf32>
    %132 = vector.shape_cast %131 : vector<2xf32> to vector<2x1xf32>
    %133 = tpu.reciprocal %132 {approx = true} : vector<2x1xf32> -> vector<2x1xf32>
    %134 = vector.broadcast %133 : vector<2x1xf32> to vector<2x128xf32>
    %135 = arith.mulf %130, %134 : vector<2x128xf32>
    %136 = vector.shape_cast %135 : vector<2x128xf32> to vector<2x128x1xf32>
    %c0_63 = arith.constant 0 : index
    %c0_64 = arith.constant 0 : index
    %c0_65 = arith.constant 0 : index
    %137 = vector.load %arg2[%c0_63, %c0_64, %c0_65] : memref<2x128x32xf32, #tpu.memory_space<vmem>>, vector<2x128x32xf32>
    %138 = vector.broadcast %136 : vector<2x128x1xf32> to vector<2x128x32xf32>
    %139 = arith.mulf %138, %137 : vector<2x128x32xf32>
    %cst_66 = arith.constant dense<0.000000e+00> : vector<2x32xf32>
    %140 = vector.multi_reduction <add>, %139, %cst_66 [1] : vector<2x128x32xf32> to vector<2x32xf32>
    %c1_67 = arith.constant 1 : index
    %c0_68 = arith.constant 0 : index
    %c0_69 = arith.constant 0 : index
    %141 = vector.load %arg12[%c1_67, %c0_68, %c0_69] : memref<2x2x32xf32, #tpu.memory_space<vmem>>, vector<1x2x32xf32>
    %142 = vector.shape_cast %141 : vector<1x2x32xf32> to vector<2x32xf32>
    %143 = vector.shape_cast %113 : vector<2x32xf32> to vector<1x2x32xf32>
    tpu.vector_store %arg12[%c1_67, %c0_68, %c0_69], %143 {strides = array<i32>} : memref<2x2x32xf32, #tpu.memory_space<vmem>>, vector<1x2x32xf32>,
    %c1_70 = arith.constant 1 : index
    %c0_71 = arith.constant 0 : index
    %c0_72 = arith.constant 0 : index
    %144 = vector.load %arg13[%c1_70, %c0_71, %c0_72] : memref<2x2x32xf32, #tpu.memory_space<vmem>>, vector<1x2x32xf32>
    %145 = vector.shape_cast %144 : vector<1x2x32xf32> to vector<2x32xf32>
    %146 = vector.shape_cast %140 : vector<2x32xf32> to vector<1x2x32xf32>
    tpu.vector_store %arg13[%c1_70, %c0_71, %c0_72], %146 {strides = array<i32>} : memref<2x2x32xf32, #tpu.memory_space<vmem>>, vector<1x2x32xf32>,
    %c1_73 = arith.constant 1 : index
    %c0_74 = arith.constant 0 : index
    %c0_75 = arith.constant 0 : index
    %147 = vector.load %arg14[%c1_73, %c0_74, %c0_75] : memref<2x2x128xf32, #tpu.memory_space<vmem>>, vector<1x2x128xf32>
    %148 = vector.shape_cast %147 : vector<1x2x128xf32> to vector<2x128xf32>
    %149 = vector.shape_cast %135 : vector<2x128xf32> to vector<1x2x128xf32>
    tpu.vector_store %arg14[%c1_73, %c0_74, %c0_75], %149 {strides = array<i32>} : memref<2x2x128xf32, #tpu.memory_space<vmem>>, vector<1x2x128xf32>,
    %c0_76 = arith.constant 0 : index
    %c0_77 = arith.constant 0 : index
    %150 = vector.load %arg15[%c0_76, %c0_77] : memref<2x32xf32, #tpu.memory_space<vmem>>, vector<2x32xf32>
    tpu.vector_store %arg15[%c0_76, %c0_77], %113 {strides = array<i32>} : memref<2x32xf32, #tpu.memory_space<vmem>>, vector<2x32xf32>,
    %c0_78 = arith.constant 0 : index
    %c0_79 = arith.constant 0 : index
    %151 = vector.load %arg16[%c0_78, %c0_79] : memref<2x32xf32, #tpu.memory_space<vmem>>, vector<2x32xf32>
    tpu.vector_store %arg16[%c0_78, %c0_79], %140 {strides = array<i32>} : memref<2x32xf32, #tpu.memory_space<vmem>>, vector<2x32xf32>,
    return
  }
  func.func @transform_0(%arg0: i32) -> (i32, i32, i32) {
    %c0_i32 = arith.constant 0 : i32
    %c0_i32_0 = arith.constant 0 : i32
    %c0_i32_1 = arith.constant 0 : i32
    return %arg0, %c0_i32, %c0_i32_0 : i32, i32, i32
  }
  func.func @transform_1(%arg0: i32) -> (i32, i32, i32) {
    %c0_i32 = arith.constant 0 : i32
    %c0_i32_0 = arith.constant 0 : i32
    %c0_i32_1 = arith.constant 0 : i32
    %c0_i32_2 = arith.constant 0 : i32
    return %c0_i32, %c0_i32_0, %c0_i32_1 : i32, i32, i32
  }
  func.func @transform_2(%arg0: i32) -> (i32, i32, i32) {
    %c0_i32 = arith.constant 0 : i32
    %c0_i32_0 = arith.constant 0 : i32
    %c0_i32_1 = arith.constant 0 : i32
    %c0_i32_2 = arith.constant 0 : i32
    return %c0_i32, %c0_i32_0, %c0_i32_1 : i32, i32, i32
  }
  func.func @transform_3(%arg0: i32) -> (i32, i32) {
    %c0_i32 = arith.constant 0 : i32
    %c0_i32_0 = arith.constant 0 : i32
    %c0_i32_1 = arith.constant 0 : i32
    return %c0_i32, %c0_i32_0 : i32, i32
  }
  func.func @transform_4(%arg0: i32) -> (i32, i32) {
    %c0_i32 = arith.constant 0 : i32
    %c0_i32_0 = arith.constant 0 : i32
    %c0_i32_1 = arith.constant 0 : i32
    return %c0_i32, %c0_i32_0 : i32, i32
  }
  func.func @transform_5(%arg0: i32) -> (i32, i32) {
    %c0_i32 = arith.constant 0 : i32
    %c0_i32_0 = arith.constant 0 : i32
    %c0_i32_1 = arith.constant 0 : i32
    return %c0_i32, %c0_i32_0 : i32, i32
  }
  func.func @transform_6(%arg0: i32) -> (i32, i32) {
    %c0_i32 = arith.constant 0 : i32
    %c0_i32_0 = arith.constant 0 : i32
    %c0_i32_1 = arith.constant 0 : i32
    return %c0_i32, %c0_i32_0 : i32, i32
  }
  func.func @transform_7(%arg0: i32) -> (i32, i32) {
    %c0_i32 = arith.constant 0 : i32
    %c0_i32_0 = arith.constant 0 : i32
    %c0_i32_1 = arith.constant 0 : i32
    return %c0_i32, %c0_i32_0 : i32, i32
  }
  func.func @transform_8(%arg0: i32) -> (i32, i32) {
    %c0_i32 = arith.constant 0 : i32
    %c0_i32_0 = arith.constant 0 : i32
    %c0_i32_1 = arith.constant 0 : i32
    return %c0_i32, %c0_i32_0 : i32, i32
  }
  func.func @transform_9(%arg0: i32) -> (i32, i32) {
    %c0_i32 = arith.constant 0 : i32
    %c0_i32_0 = arith.constant 0 : i32
    %c0_i32_1 = arith.constant 0 : i32
    return %c0_i32, %c0_i32_0 : i32, i32
  }
  func.func @transform_10(%arg0: i32) -> (i32, i32) {
    %c0_i32 = arith.constant 0 : i32
    %c0_i32_0 = arith.constant 0 : i32
    %c0_i32_1 = arith.constant 0 : i32
    return %c0_i32, %c0_i32_0 : i32, i32
  }
  func.func @transform_11(%arg0: i32) -> (i32, i32, i32) {
    %c0_i32 = arith.constant 0 : i32
    %c0_i32_0 = arith.constant 0 : i32
    %c0_i32_1 = arith.constant 0 : i32
    return %arg0, %c0_i32, %c0_i32_0 : i32, i32, i32
  }
  func.func @transform_12(%arg0: i32) -> (i32, i32, i32) {
    %c0_i32 = arith.constant 0 : i32
    %c0_i32_0 = arith.constant 0 : i32
    %c0_i32_1 = arith.constant 0 : i32
    return %arg0, %c0_i32, %c0_i32_0 : i32, i32, i32
  }
  func.func @transform_13(%arg0: i32) -> (i32, i32, i32) {
    %c0_i32 = arith.constant 0 : i32
    %c0_i32_0 = arith.constant 0 : i32
    %c0_i32_1 = arith.constant 0 : i32
    return %arg0, %c0_i32, %c0_i32_0 : i32, i32, i32
  }
}

</mosaic_0001>

<llo_original>
// kernel: tpu_custom_call.1
$region0: #{tpu_custom_call.1}
  #allocation0 [shape = 'u32[]', space=smem, size = 0x4, offset = 0x4, fixed_abs, tag = 'smem constant byte address 0x4 - core index']
  #allocation1 [shape = 'u32[144,128]{1,0:T(1,128)}', space=vmem, size = 0x12000, scoped, tag = 'internal scratch']
  #allocation2 [shape = 'f32[2,32]{1,0:T(2,128)}', space=vmem, size = 0x400, scoped, tag = 'scratch operand']
  #allocation3 [shape = 'f32[2,32]{1,0:T(2,128)}', space=vmem, size = 0x400, scoped, tag = 'scratch operand']
  %s0 = inlined_call_operand.vmem [shape: f32[4,2,96], index: 0, kind: input, shape index: {}]
  %s1 = inlined_call_operand.vmem [shape: f32[2,128,32], index: 1, kind: input, shape index: {}]
  %s2 = inlined_call_operand.vmem [shape: f32[2,128,32], index: 2, kind: input, shape index: {}]
  %s3 = inlined_call_operand.vmem [shape: f32[2,128], index: 3, kind: input, shape index: {}]
  %s4 = inlined_call_operand.vmem [shape: f32[2,32], index: 4, kind: input, shape index: {}]
  %s5 = inlined_call_operand.vmem [shape: f32[2,32], index: 5, kind: input, shape index: {}]
  %s6 = inlined_call_operand.vmem [shape: f32[32,96], index: 6, kind: input, shape index: {}]
  %s7 = inlined_call_operand.vmem [shape: f32[32,96], index: 7, kind: input, shape index: {}]
  %s8 = inlined_call_operand.vmem [shape: f32[1,96], index: 8, kind: input, shape index: {}]
  %s9 = inlined_call_operand.vmem [shape: f32[32,32], index: 9, kind: input, shape index: {}]
  %s10 = inlined_call_operand.vmem [shape: f32[1,32], index: 10, kind: input, shape index: {}]
  %s11 = inlined_call_operand.hbm [shape: f32[4,2,32], index: 11, kind: output, shape index: {0}]
  %s12 = inlined_call_operand.hbm [shape: f32[4,2,32], index: 12, kind: output, shape index: {1}]
  %s13 = inlined_call_operand.hbm [shape: f32[4,2,128], index: 13, kind: output, shape index: {2}]
  %14 = xla_tuple %s11, %s12, %s13
  %s15 = sld [smem:[#allocation0]]
  $region97: #{tpu_custom_call.1} parent=0
    _
  %s17 = ssub.s32 1, %s15
  %s18 = scalar_select 0, %s17, %s15
  $region1: #{tpu_custom_call.1} parent=0
    #allocation4 [shape = 'u8[4096]{0}', space=vmem, size = 0x1000, scoped, tag = 'output window, operand 0']
    #allocation5 [shape = 's32[2]{0}', space=sflag, size = 0x8, scoped, tag = 'scoped memory for tpu_custom_call.1']
    #allocation6 [shape = 'u8[4096]{0}', space=vmem, size = 0x1000, scoped, tag = 'output window, operand 1']
    #allocation7 [shape = 's32[2]{0}', space=sflag, size = 0x8, scoped, tag = 'scoped memory for tpu_custom_call.1']
    #allocation8 [shape = 'u8[4096]{0}', space=vmem, size = 0x1000, scoped, tag = 'output window, operand 2']
    %19 = vsyncpa [#allocation5], 0
    %s20 = scalar_lea.sflag [#allocation5], 1
    %21 = vsyncpa %s20, 0
    %22 = vsyncpa [#allocation7], 0
    %s23 = scalar_lea.sflag [#allocation7], 1
    %24 = vsyncpa %s23, 0
    loop: start=0, step=1, limit=4
    $region2: #{tpu_custom_call.1} parent=1 // loop_pre_header
      _
    $region3: #{tpu_custom_call.1} parent=1 // loop_header
      %s26 = sphi 0, %s30
      %p27 = scmp.ge.s32.totalorder %s26, 4
      %s36 = sphi 0, %s38
      %s39 = sphi 0, %s36
      %s40 = sphi 0, %s39
      %s56 = sphi 0, %s40
      %s60 = sphi 0, %s60
      %s62 = sphi 0, %s60
      %s63 = sphi 0, %s62
      %s77 = sphi 0, %s63
      %s81 = sphi 0, %s81
      %s83 = sphi 0, %s81
      %s84 = sphi 0, %s83
      %s98 = sphi 0, %s84
      %s102 = sphi 0, %s102
      %s104 = sphi 0, %s102
      %s105 = sphi 0, %s104
      %s119 = sphi 0, %s105
      %s123 = sphi 0, %s123
      %s125 = sphi 0, %s123
      %s126 = sphi 0, %s125
      %s140 = sphi 0, %s126
      %s144 = sphi 0, %s144
      %s146 = sphi 0, %s144
      %s147 = sphi 0, %s146
      %s161 = sphi 0, %s147
      %s165 = sphi 0, %s165
      %s167 = sphi 0, %s165
      %s168 = sphi 0, %s167
      %s182 = sphi 0, %s168
      %s186 = sphi 0, %s186
      %s188 = sphi 0, %s186
      %s189 = sphi 0, %s188
      %s203 = sphi 0, %s189
      %s207 = sphi 0, %s207
      %s209 = sphi 0, %s207
      %s210 = sphi 0, %s209
      %s224 = sphi 0, %s210
      %s228 = sphi 0, %s228
      %s230 = sphi 0, %s228
      %s231 = sphi 0, %s230
      %s245 = sphi 0, %s231
      %s249 = sphi 0, %s249
      %s251 = sphi 0, %s249
      %s252 = sphi 0, %s251
      %s266 = sphi 0, %s252
      %s272 = sphi 0, %s274
      %s275 = sphi 0, %s272
      %s276 = sphi 0, %s275
      %s292 = sphi 0, %s276
      %s298 = sphi 0, %s300
      %s301 = sphi 0, %s298
      %s302 = sphi 0, %s301
      %s318 = sphi 0, %s302
      %s324 = sphi 0, %s326
      %s327 = sphi 0, %s324
      %s328 = sphi 0, %s327
      %s344 = sphi 0, %s328
    $region4: #{tpu_custom_call.1} parent=1 // loop_header_branch
      %29 = sbr.rel (%p27) target = $region8
    $region5: #{tpu_custom_call.1} parent=1 // loop_body
      %s31 = ssub.s32 %s26, 1
      %s32 = ssub.s32 %s26, 2
      %s33 = sadd.s32 %s26, 1
      %s34 = ssub.s32 %s26, %s33
      %p35 = scmp.eq.s32.totalorder %s34, 0
      %s37 = sadd.s32 %s36, 1
      %s38 = scalar_select %p35, %s36, %s37
      %p41 = pneg %p35
      %p42 = scmp.eq.s32.totalorder %s26, 1
      %p43 = por %p41, %p42
      %p44 = scmp.ne.s32.totalorder %s36, %s39
      %p45 = scmp.eq.s32.totalorder %s26, 0
      %p46 = por %p44, %p45
      %p47 = scmp.ne.s32.totalorder %s36, %s39
      %p48 = scmp.eq.s32.totalorder %s31, 1
      %p49 = por %p47, %p48
      %p50 = scmp.ne.s32.totalorder %s39, %s40
      %p51 = scmp.eq.s32.totalorder %s31, 0
      %p52 = por %p50, %p51
      %p53 = scmp.ne.s32.totalorder %s39, %s40
      %p54 = scmp.eq.s32.totalorder %s32, 1
      %p55 = por %p53, %p54
      %p57 = scmp.ne.s32.totalorder %s40, %s56
      %p58 = scmp.eq.s32.totalorder %s32, 0
      %p59 = por %p57, %p58
      %s61 = sadd.s32 %s60, 1
      %p64 = scmp.eq.s32.totalorder %s26, 1
      %p65 = scmp.ne.s32.totalorder %s60, %s62
      %p66 = scmp.eq.s32.totalorder %s26, 0
      %p67 = por %p65, %p66
      %p68 = scmp.ne.s32.totalorder %s60, %s62
      %p69 = scmp.eq.s32.totalorder %s31, 1
      %p70 = por %p68, %p69
      %p71 = scmp.ne.s32.totalorder %s62, %s63
      %p72 = scmp.eq.s32.totalorder %s31, 0
      %p73 = por %p71, %p72
      %p74 = scmp.ne.s32.totalorder %s62, %s63
      %p75 = scmp.eq.s32.totalorder %s32, 1
      %p76 = por %p74, %p75
      %p78 = scmp.ne.s32.totalorder %s63, %s77
      %p79 = scmp.eq.s32.totalorder %s32, 0
      %p80 = por %p78, %p79
      %s82 = sadd.s32 %s81, 1
      %p85 = scmp.eq.s32.totalorder %s26, 1
      %p86 = scmp.ne.s32.totalorder %s81, %s83
      %p87 = scmp.eq.s32.totalorder %s26, 0
      %p88 = por %p86, %p87
      %p89 = scmp.ne.s32.totalorder %s81, %s83
      %p90 = scmp.eq.s32.totalorder %s31, 1
      %p91 = por %p89, %p90
      %p92 = scmp.ne.s32.totalorder %s83, %s84
      %p93 = scmp.eq.s32.totalorder %s31, 0
      %p94 = por %p92, %p93
      %p95 = scmp.ne.s32.totalorder %s83, %s84
      %p96 = scmp.eq.s32.totalorder %s32, 1
      %p97 = por %p95, %p96
      %p99 = scmp.ne.s32.totalorder %s84, %s98
      %p100 = scmp.eq.s32.totalorder %s32, 0
      %p101 = por %p99, %p100
      %s103 = sadd.s32 %s102, 1
      %p106 = scmp.eq.s32.totalorder %s26, 1
      %p107 = scmp.ne.s32.totalorder %s102, %s104
      %p108 = scmp.eq.s32.totalorder %s26, 0
      %p109 = por %p107, %p108
      %p110 = scmp.ne.s32.totalorder %s102, %s104
      %p111 = scmp.eq.s32.totalorder %s31, 1
      %p112 = por %p110, %p111
      %p113 = scmp.ne.s32.totalorder %s104, %s105
      %p114 = scmp.eq.s32.totalorder %s31, 0
      %p115 = por %p113, %p114
      %p116 = scmp.ne.s32.totalorder %s104, %s105
      %p117 = scmp.eq.s32.totalorder %s32, 1
      %p118 = por %p116, %p117
      %p120 = scmp.ne.s32.totalorder %s105, %s119
      %p121 = scmp.eq.s32.totalorder %s32, 0
      %p122 = por %p120, %p121
      %s124 = sadd.s32 %s123, 1
      %p127 = scmp.eq.s32.totalorder %s26, 1
      %p128 = scmp.ne.s32.totalorder %s123, %s125
      %p129 = scmp.eq.s32.totalorder %s26, 0
      %p130 = por %p128, %p129
      %p131 = scmp.ne.s32.totalorder %s123, %s125
      %p132 = scmp.eq.s32.totalorder %s31, 1
      %p133 = por %p131, %p132
      %p134 = scmp.ne.s32.totalorder %s125, %s126
      %p135 = scmp.eq.s32.totalorder %s31, 0
      %p136 = por %p134, %p135
      %p137 = scmp.ne.s32.totalorder %s125, %s126
      %p138 = scmp.eq.s32.totalorder %s32, 1
      %p139 = por %p137, %p138
      %p141 = scmp.ne.s32.totalorder %s126, %s140
      %p142 = scmp.eq.s32.totalorder %s32, 0
      %p143 = por %p141, %p142
      %s145 = sadd.s32 %s144, 1
      %p148 = scmp.eq.s32.totalorder %s26, 1
      %p149 = scmp.ne.s32.totalorder %s144, %s146
      %p150 = scmp.eq.s32.totalorder %s26, 0
      %p151 = por %p149, %p150
      %p152 = scmp.ne.s32.totalorder %s144, %s146
      %p153 = scmp.eq.s32.totalorder %s31, 1
      %p154 = por %p152, %p153
      %p155 = scmp.ne.s32.totalorder %s146, %s147
      %p156 = scmp.eq.s32.totalorder %s31, 0
      %p157 = por %p155, %p156
      %p158 = scmp.ne.s32.totalorder %s146, %s147
      %p159 = scmp.eq.s32.totalorder %s32, 1
      %p160 = por %p158, %p159
      %p162 = scmp.ne.s32.totalorder %s147, %s161
      %p163 = scmp.eq.s32.totalorder %s32, 0
      %p164 = por %p162, %p163
      %s166 = sadd.s32 %s165, 1
      %p169 = scmp.eq.s32.totalorder %s26, 1
      %p170 = scmp.ne.s32.totalorder %s165, %s167
      %p171 = scmp.eq.s32.totalorder %s26, 0
      %p172 = por %p170, %p171
      %p173 = scmp.ne.s32.totalorder %s165, %s167
      %p174 = scmp.eq.s32.totalorder %s31, 1
      %p175 = por %p173, %p174
      %p176 = scmp.ne.s32.totalorder %s167, %s168
      %p177 = scmp.eq.s32.totalorder %s31, 0
      %p178 = por %p176, %p177
      %p179 = scmp.ne.s32.totalorder %s167, %s168
      %p180 = scmp.eq.s32.totalorder %s32, 1
      %p181 = por %p179, %p180
      %p183 = scmp.ne.s32.totalorder %s168, %s182
      %p184 = scmp.eq.s32.totalorder %s32, 0
      %p185 = por %p183, %p184
      %s187 = sadd.s32 %s186, 1
      %p190 = scmp.eq.s32.totalorder %s26, 1
      %p191 = scmp.ne.s32.totalorder %s186, %s188
      %p192 = scmp.eq.s32.totalorder %s26, 0
      %p193 = por %p191, %p192
      %p194 = scmp.ne.s32.totalorder %s186, %s188
      %p195 = scmp.eq.s32.totalorder %s31, 1
      %p196 = por %p194, %p195
      %p197 = scmp.ne.s32.totalorder %s188, %s189
      %p198 = scmp.eq.s32.totalorder %s31, 0
      %p199 = por %p197, %p198
      %p200 = scmp.ne.s32.totalorder %s188, %s189
      %p201 = scmp.eq.s32.totalorder %s32, 1
      %p202 = por %p200, %p201
      %p204 = scmp.ne.s32.totalorder %s189, %s203
      %p205 = scmp.eq.s32.totalorder %s32, 0
      %p206 = por %p204, %p205
      %s208 = sadd.s32 %s207, 1
      %p211 = scmp.eq.s32.totalorder %s26, 1
      %p212 = scmp.ne.s32.totalorder %s207, %s209
      %p213 = scmp.eq.s32.totalorder %s26, 0
      %p214 = por %p212, %p213
      %p215 = scmp.ne.s32.totalorder %s207, %s209
      %p216 = scmp.eq.s32.totalorder %s31, 1
      %p217 = por %p215, %p216
      %p218 = scmp.ne.s32.totalorder %s209, %s210
      %p219 = scmp.eq.s32.totalorder %s31, 0
      %p220 = por %p218, %p219
      %p221 = scmp.ne.s32.totalorder %s209, %s210
      %p222 = scmp.eq.s32.totalorder %s32, 1
      %p223 = por %p221, %p222
      %p225 = scmp.ne.s32.totalorder %s210, %s224
      %p226 = scmp.eq.s32.totalorder %s32, 0
      %p227 = por %p225, %p226
      %s229 = sadd.s32 %s228, 1
      %p232 = scmp.eq.s32.totalorder %s26, 1
      %p233 = scmp.ne.s32.totalorder %s228, %s230
      %p234 = scmp.eq.s32.totalorder %s26, 0
      %p235 = por %p233, %p234
      %p236 = scmp.ne.s32.totalorder %s228, %s230
      %p237 = scmp.eq.s32.totalorder %s31, 1
      %p238 = por %p236, %p237
      %p239 = scmp.ne.s32.totalorder %s230, %s231
      %p240 = scmp.eq.s32.totalorder %s31, 0
      %p241 = por %p239, %p240
      %p242 = scmp.ne.s32.totalorder %s230, %s231
      %p243 = scmp.eq.s32.totalorder %s32, 1
      %p244 = por %p242, %p243
      %p246 = scmp.ne.s32.totalorder %s231, %s245
      %p247 = scmp.eq.s32.totalorder %s32, 0
      %p248 = por %p246, %p247
      %s250 = sadd.s32 %s249, 1
      %p253 = scmp.eq.s32.totalorder %s26, 1
      %p254 = scmp.ne.s32.totalorder %s249, %s251
      %p255 = scmp.eq.s32.totalorder %s26, 0
      %p256 = por %p254, %p255
      %p257 = scmp.ne.s32.totalorder %s249, %s251
      %p258 = scmp.eq.s32.totalorder %s31, 1
      %p259 = por %p257, %p258
      %p260 = scmp.ne.s32.totalorder %s251, %s252
      %p261 = scmp.eq.s32.totalorder %s31, 0
      %p262 = por %p260, %p261
      %p263 = scmp.ne.s32.totalorder %s251, %s252
      %p264 = scmp.eq.s32.totalorder %s32, 1
      %p265 = por %p263, %p264
      %p267 = scmp.ne.s32.totalorder %s252, %s266
      %p268 = scmp.eq.s32.totalorder %s32, 0
      %p269 = por %p267, %p268
      %s270 = ssub.s32 %s26, %s33
      %p271 = scmp.eq.s32.totalorder %s270, 0
      %s273 = sadd.s32 %s272, 1
      %s274 = scalar_select %p271, %s272, %s273
      %p277 = pneg %p271
      %p278 = scmp.eq.s32.totalorder %s26, 1
      %p279 = por %p277, %p278
      %p280 = scmp.ne.s32.totalorder %s272, %s275
      %p281 = scmp.eq.s32.totalorder %s26, 0
      %p282 = por %p280, %p281
      %p283 = scmp.ne.s32.totalorder %s272, %s275
      %p284 = scmp.eq.s32.totalorder %s31, 1
      %p285 = por %p283, %p284
      %p286 = scmp.ne.s32.totalorder %s275, %s276
      %p287 = scmp.eq.s32.totalorder %s31, 0
      %p288 = por %p286, %p287
      %p289 = scmp.ne.s32.totalorder %s275, %s276
      %p290 = scmp.eq.s32.totalorder %s32, 1
      %p291 = por %p289, %p290
      %p293 = scmp.ne.s32.totalorder %s276, %s292
      %p294 = scmp.eq.s32.totalorder %s32, 0
      %p295 = por %p293, %p294
      %s296 = ssub.s32 %s26, %s33
      %p297 = scmp.eq.s32.totalorder %s296, 0
      %s299 = sadd.s32 %s298, 1
      %s300 = scalar_select %p297, %s298, %s299
      %p303 = pneg %p297
      %p304 = scmp.eq.s32.totalorder %s26, 1
      %p305 = por %p303, %p304
      %p306 = scmp.ne.s32.totalorder %s298, %s301
      %p307 = scmp.eq.s32.totalorder %s26, 0
      %p308 = por %p306, %p307
      %p309 = scmp.ne.s32.totalorder %s298, %s301
      %p310 = scmp.eq.s32.totalorder %s31, 1
      %p311 = por %p309, %p310
      %p312 = scmp.ne.s32.totalorder %s301, %s302
      %p313 = scmp.eq.s32.totalorder %s31, 0
      %p314 = por %p312, %p313
      %p315 = scmp.ne.s32.totalorder %s301, %s302
      %p316 = scmp.eq.s32.totalorder %s32, 1
      %p317 = por %p315, %p316
      %p319 = scmp.ne.s32.totalorder %s302, %s318
      %p320 = scmp.eq.s32.totalorder %s32, 0
      %p321 = por %p319, %p320
      %s322 = ssub.s32 %s26, %s33
      %p323 = scmp.eq.s32.totalorder %s322, 0
      %s325 = sadd.s32 %s324, 1
      %s326 = scalar_select %p323, %s324, %s325
      %p329 = pneg %p323
      %p330 = scmp.eq.s32.totalorder %s26, 1
      %p331 = por %p329, %p330
      %p332 = scmp.ne.s32.totalorder %s324, %s327
      %p333 = scmp.eq.s32.totalorder %s26, 0
      %p334 = por %p332, %p333
      %p335 = scmp.ne.s32.totalorder %s324, %s327
      %p336 = scmp.eq.s32.totalorder %s31, 1
      %p337 = por %p335, %p336
      %p338 = scmp.ne.s32.totalorder %s327, %s328
      %p339 = scmp.eq.s32.totalorder %s31, 0
      %p340 = por %p338, %p339
      %p341 = scmp.ne.s32.totalorder %s327, %s328
      %p342 = scmp.eq.s32.totalorder %s32, 1
      %p343 = por %p341, %p342
      %p345 = scmp.ne.s32.totalorder %s328, %s344
      %p346 = scmp.eq.s32.totalorder %s32, 0
      %p347 = por %p345, %p346
      %p348 = scmp.le.s32.totalorder 1, %s26
      %p349 = scmp.lt.s32.totalorder %s26, 3
      %p350 = pnand %p348, %p349
      %p351 = pneg %p350
      // Predicated region
      $region9: #{tpu_custom_call.1} parent=5 // pred_check
        _
      $region10: #{tpu_custom_call.1} parent=5 // pred_check_branch
        %353 = sbr.rel (%p350) target = $region12
      $region11: #{tpu_custom_call.1} parent=5 // pred_region
        %s354 = ssub.s32 %s26, 1
        // Predicated region
        $region13: #{tpu_custom_call.1} parent=11 // pred_check
          %p355 = pneg %p73
        $region14: #{tpu_custom_call.1} parent=11 // pred_check_branch
          %357 = sbr.rel (%p355) target = $region16
        $region15: #{tpu_custom_call.1} parent=11 // pred_region
          _
        $region16: #{tpu_custom_call.1} parent=11 // pred_fallthru
          _
        // Predicated region
        $region17: #{tpu_custom_call.1} parent=11 // pred_check
          %p358 = pneg %p94
        $region18: #{tpu_custom_call.1} parent=11 // pred_check_branch
          %360 = sbr.rel (%p358) target = $region20
        $region19: #{tpu_custom_call.1} parent=11 // pred_region
          _
        $region20: #{tpu_custom_call.1} parent=11 // pred_fallthru
          _
        // Predicated region
        $region21: #{tpu_custom_call.1} parent=11 // pred_check
          %p361 = pneg %p115
        $region22: #{tpu_custom_call.1} parent=11 // pred_check_branch
          %363 = sbr.rel (%p361) target = $region24
        $region23: #{tpu_custom_call.1} parent=11 // pred_region
          _
        $region24: #{tpu_custom_call.1} parent=11 // pred_fallthru
          _
        // Predicated region
        $region25: #{tpu_custom_call.1} parent=11 // pred_check
          %p364 = pneg %p136
        $region26: #{tpu_custom_call.1} parent=11 // pred_check_branch
          %366 = sbr.rel (%p364) target = $region28
        $region27: #{tpu_custom_call.1} parent=11 // pred_region
          _
        $region28: #{tpu_custom_call.1} parent=11 // pred_fallthru
          _
        // Predicated region
        $region29: #{tpu_custom_call.1} parent=11 // pred_check
          %p367 = pneg %p157
        $region30: #{tpu_custom_call.1} parent=11 // pred_check_branch
          %369 = sbr.rel (%p367) target = $region32
        $region31: #{tpu_custom_call.1} parent=11 // pred_region
          _
        $region32: #{tpu_custom_call.1} parent=11 // pred_fallthru
          _
        // Predicated region
        $region33: #{tpu_custom_call.1} parent=11 // pred_check
          %p370 = pneg %p178
        $region34: #{tpu_custom_call.1} parent=11 // pred_check_branch
          %372 = sbr.rel (%p370) target = $region36
        $region35: #{tpu_custom_call.1} parent=11 // pred_region
          _
        $region36: #{tpu_custom_call.1} parent=11 // pred_fallthru
          _
        // Predicated region
        $region37: #{tpu_custom_call.1} parent=11 // pred_check
          %p373 = pneg %p199
        $region38: #{tpu_custom_call.1} parent=11 // pred_check_branch
          %375 = sbr.rel (%p373) target = $region40
        $region39: #{tpu_custom_call.1} parent=11 // pred_region
          _
        $region40: #{tpu_custom_call.1} parent=11 // pred_fallthru
          _
        // Predicated region
        $region41: #{tpu_custom_call.1} parent=11 // pred_check
          %p376 = pneg %p220
        $region42: #{tpu_custom_call.1} parent=11 // pred_check_branch
          %378 = sbr.rel (%p376) target = $region44
        $region43: #{tpu_custom_call.1} parent=11 // pred_region
          _
        $region44: #{tpu_custom_call.1} parent=11 // pred_fallthru
          _
        // Predicated region
        $region45: #{tpu_custom_call.1} parent=11 // pred_check
          %p379 = pneg %p241
        $region46: #{tpu_custom_call.1} parent=11 // pred_check_branch
          %381 = sbr.rel (%p379) target = $region48
        $region47: #{tpu_custom_call.1} parent=11 // pred_region
          _
        $region48: #{tpu_custom_call.1} parent=11 // pred_fallthru
          _
        // Predicated region
        $region49: #{tpu_custom_call.1} parent=11 // pred_check
          %p382 = pneg %p262
        $region50: #{tpu_custom_call.1} parent=11 // pred_check_branch
          %384 = sbr.rel (%p382) target = $region52
        $region51: #{tpu_custom_call.1} parent=11 // pred_region
          _
        $region52: #{tpu_custom_call.1} parent=11 // pred_fallthru
          _
      $region12: #{tpu_custom_call.1} parent=5 // pred_fallthru
        _
      %p385 = scmp.lt.s32.totalorder %s26, 2
      // Predicated region
      $region53: #{tpu_custom_call.1} parent=5 // pred_check
        %p386 = pneg %p385
      $region54: #{tpu_custom_call.1} parent=5 // pred_check_branch
        %388 = sbr.rel (%p386) target = $region56
      $region55: #{tpu_custom_call.1} parent=5 // pred_region
        // Predicated region
        $region57: #{tpu_custom_call.1} parent=55 // pred_check
          %p389 = pneg %p46
        $region58: #{tpu_custom_call.1} parent=55 // pred_check_branch
          %391 = sbr.rel (%p389) target = $region60
        $region59: #{tpu_custom_call.1} parent=55 // pred_region
          %s392 = smul.u32 2, %s26
          %p393 = scmp.lt.s32.totalorder %s392, 3
          %s394 = scalar_select %p393, %s392, 3
          %s395 = smul.addr %s394, 2
          %s396 = scalar_lea.vmem %s0, %s395
          %s397 = smul.u32 2, %s26
        $region60: #{tpu_custom_call.1} parent=55 // pred_fallthru
          _
      $region56: #{tpu_custom_call.1} parent=5 // pred_fallthru
        _
      %p398 = scmp.le.s32.totalorder 1, %s26
      %p399 = scmp.lt.s32.totalorder %s26, 3
      %p400 = pnand %p398, %p399
      %p401 = pneg %p400
      // Predicated region
      $region61: #{tpu_custom_call.1} parent=5 // pred_check
        _
      $region62: #{tpu_custom_call.1} parent=5 // pred_check_branch
        %403 = sbr.rel (%p400) target = $region64
      $region63: #{tpu_custom_call.1} parent=5 // pred_region
        %s404 = ssub.s32 %s26, 1
        %s405 = smul.u32 2, %s31
        %p406 = scmp.lt.s32.totalorder %s405, 3
        %s407 = scalar_select %p406, %s405, 3
        %s408 = smul.addr %s407, 2
        %s409 = scalar_lea.vmem %s0, %s408
        %p410 = pneg %p52
        %p411 = pneg %p49
        %p412 = pneg %p73
        %p413 = pneg %p70
        %p414 = pneg %p94
        %p415 = pneg %p91
        %p416 = pneg %p115
        %p417 = pneg %p112
        %p418 = pneg %p136
        %p419 = pneg %p133
        %p420 = pneg %p157
        %p421 = pneg %p154
        %p422 = pneg %p178
        %p423 = pneg %p175
        %p424 = pneg %p199
        %p425 = pneg %p196
        %p426 = pneg %p220
        %p427 = pneg %p217
        %p428 = pneg %p241
        %p429 = pneg %p238
        %p430 = pneg %p262
        %p431 = pneg %p259
        %p432 = pneg %p288
        %p433 = pneg %p285
        %s434 = sand.u32 %s275, 1
        %s435 = scalar_lea.sflag [#allocation5], %s434
        %s436 = sand.u32 %s275, 1
        %s437 = smul.addr %s436, 4
        %s438 = scalar_lea.vmem [#allocation4], %s437
        %p439 = pneg %p314
        %p440 = pneg %p311
        %s441 = sand.u32 %s31, 1
        %s442 = scalar_lea.sflag [#allocation7], %s441
        %s443 = sand.u32 %s301, 1
        %s444 = smul.addr %s443, 4
        %s445 = scalar_lea.vmem [#allocation6], %s444
        %p446 = pneg %p340
        %p447 = pneg %p337
        %s448 = sand.u32 %s31, 1
        %s449 = scalar_lea.sflag [#allocation7], %s448
        %s450 = sand.u32 %s327, 1
        %s451 = smul.addr %s450, 4
        %s452 = scalar_lea.vmem [#allocation8], %s451
        %s453 = smul.u32 2, %s31
        %p454 = scmp.lt.s32.totalorder %s453, 3
        %s455 = scalar_select %p454, %s453, 3
        %s456 = smul.addr %s455, 2
        %s457 = scalar_lea.vmem %s0, %s456
        %s458 = smul.u32 2, %s31
        %s459 = smul.u32 2, %s31
        %s460 = smul.u32 2, %s31
        %s461 = smul.u32 2, %s31
        %p462 = scmp.eq.s32.totalorder %s31, 0
        // Predicated region
        $region65: #{tpu_custom_call.1} parent=63 // pred_check
          %p463 = pneg %p462
        $region66: #{tpu_custom_call.1} parent=63 // pred_check_branch
          %465 = sbr.rel (%p463) target = $region68
        $region67: #{tpu_custom_call.1} parent=63 // pred_region
          %v466 = vld [vmem:[%s4] sm:$0x3]
          %vm467 = vcmask 254976
          %468 = vst.msk [vmem:[#allocation2] sm:$0x3] %vm467, %v466
          %v469 = vld [vmem:[%s5] sm:$0x3]
          %470 = vst.msk [vmem:[#allocation3] sm:$0x3] %vm467, %v469
        $region68: #{tpu_custom_call.1} parent=63 // pred_fallthru
          _
        %v471 = vld [vmem:[%s3] sm:$0x3]
        %v472 = vld [vmem:[%s8] sm:$0x1]
        %v473 = vld [vmem:[%s10] sm:$0x1]
        %v474 = vld [vmem:[#allocation2] sm:$0x3]
        %v475 = vld [vmem:[#allocation3] sm:$0x3]
        %v476 = vld [vmem:[%s457] sm:$0x3]
        %v477 = vld [vmem:[%s6] sm:$0xff]
        %v478 = vld [vmem:[%s6 + $0x8] sm:$0xff]
        %v479 = vld [vmem:[%s6 + $0x10] sm:$0xff]
        %v480 = vld [vmem:[%s6 + $0x18] sm:$0xff]
        %vm481 = vcmask 261120
        %v483 = vsel %vm481, %v475, 0
        %485 = vmatprep.subr.mxu0 0.0
        %486 = vmatpush1.msra.mxu0 %v477
        %487 = vmatprep.subr.mxu0 0.0
        %488 = vmatpush1.msra.mxu0 %v478
        %489 = vmatprep.subr.mxu0 0.0
        %490 = vmatpush1.msra.mxu0 %v479
        %491 = vmatprep.subr.mxu0 0.0
        %492 = vmatpush1.msra.mxu0 %v480
        %493 = vmatprep.subr.mxu0 0.0
        %494 = vmatpush1.msra.mxu0 0.0
        %495 = vmatprep.subr.mxu0 0.0
        %496 = vmatpush1.msra.mxu0 0.0
        %497 = vmatprep.subr.mxu0 0.0
        %498 = vmatpush1.msra.mxu0 0.0
        %499 = vmatprep.subr.mxu0 0.0
        %500 = vmatpush1.msra.mxu0 0.0
        %501 = vmatprep.subr.mxu0 0.0
        %502 = vmatpush1.msra.mxu0 0.0
        %503 = vmatprep.subr.mxu0 0.0
        %504 = vmatpush1.msra.mxu0 0.0
        %505 = vmatprep.subr.mxu0 0.0
        %506 = vmatpush1.msra.mxu0 0.0
        %507 = vmatprep.subr.mxu0 0.0
        %508 = vmatpush1.msra.mxu0 0.0
        %509 = vmatprep.subr.mxu0 0.0
        %510 = vmatpush1.msra.mxu0 0.0
        %511 = vmatprep.subr.mxu0 0.0
        %512 = vmatpush1.msra.mxu0 0.0
        %513 = vmatprep.subr.mxu0 0.0
        %514 = vmatpush1.msra.mxu0 0.0
        %515 = vmatprep.subr.mxu0 0.0
        %516 = vmatpush1.msra.mxu0 0.0
        %517 = vmatprep.subr.mxu0 0.0
        %518 = vmatpush1.msra.mxu0 0.0
        %519 = vmatprep.subr.mxu0 0.0
        %520 = vmatpush1.msra.mxu0 0.0
        %521 = vmatprep.subr.mxu0 0.0
        %522 = vmatpush1.msra.mxu0 0.0
        %523 = vmatprep.subr.mxu0 0.0
        %524 = vmatpush1.msra.mxu0 0.0
        %525 = vmatprep.subr.mxu0 0.0
        %526 = vmatpush1.msra.mxu0 0.0
        %527 = vmatprep.subr.mxu0 0.0
        %528 = vmatpush1.msra.mxu0 0.0
        %529 = vmatprep.subr.mxu0 0.0
        %530 = vmatpush1.msra.mxu0 0.0
        %531 = vmatprep.subr.mxu0 0.0
        %532 = vmatpush1.msra.mxu0 0.0
        %533 = vmatprep.subr.mxu0 0.0
        %534 = vmatpush1.msra.mxu0 0.0
        %535 = vmatprep.subr.mxu0 0.0
        %536 = vmatpush1.msra.mxu0 0.0
        %537 = vmatprep.subr.mxu0 0.0
        %538 = vmatpush1.msra.mxu0 0.0
        %539 = vmatprep.subr.mxu0 0.0
        %540 = vmatpush1.msra.mxu0 0.0
        %541 = vmatprep.subr.mxu0 0.0
        %542 = vmatpush1.msra.mxu0 0.0
        %543 = vmatprep.subr.mxu0 0.0
        %544 = vmatpush1.msra.mxu0 0.0
        %545 = vmatprep.subr.mxu0 0.0
        %546 = vmatpush1.msra.mxu0 0.0
        %547 = vmatprep.subr.mxu0 0.0
        %548 = vmatpush1.msra.mxu0 0.0
        %549 = vmatprep.mubr.f32.mxu0 0.0
        %550 = vmatmul.mubr.f32.gmra.mrb[0].mxu0 %v483
        %v551 = vpop.f32.mrb[0].mxu0
        %v552 = vadd.f32 0.0, %v551
        %v553 = vpop.f32.mrb[0].mxu0
        %554 = vdwg.mxu0
        %v555 = vadd.f32 %v476, %v552
        %v556 = vld [vmem:[%s7] sm:$0xff]
        %v557 = vld [vmem:[%s7 + $0x8] sm:$0xff]
        %v558 = vld [vmem:[%s7 + $0x10] sm:$0xff]
        %v559 = vld [vmem:[%s7 + $0x18] sm:$0xff]
        %v561 = vlaneseq
        %v562 = vshrl.u32 %v561, 7
        %v563 = vsub.s32 0, %v562
        %v564 = vrot.slane %v472, %v563
        %v567 = vsel %vm481, %v474, 0
        %569 = vmatprep.subr.mxu0 0.0
        %570 = vmatpush1.msra.mxu0 %v556
        %571 = vmatprep.subr.mxu0 0.0
        %572 = vmatpush1.msra.mxu0 %v557
        %573 = vmatprep.subr.mxu0 0.0
        %574 = vmatpush1.msra.mxu0 %v558
        %575 = vmatprep.subr.mxu0 0.0
        %576 = vmatpush1.msra.mxu0 %v559
        %577 = vmatprep.subr.mxu0 0.0
        %578 = vmatpush1.msra.mxu0 0.0
        %579 = vmatprep.subr.mxu0 0.0
        %580 = vmatpush1.msra.mxu0 0.0
        %581 = vmatprep.subr.mxu0 0.0
        %582 = vmatpush1.msra.mxu0 0.0
        %583 = vmatprep.subr.mxu0 0.0
        %584 = vmatpush1.msra.mxu0 0.0
        %585 = vmatprep.subr.mxu0 0.0
        %586 = vmatpush1.msra.mxu0 0.0
        %587 = vmatprep.subr.mxu0 0.0
        %588 = vmatpush1.msra.mxu0 0.0
        %589 = vmatprep.subr.mxu0 0.0
        %590 = vmatpush1.msra.mxu0 0.0
        %591 = vmatprep.subr.mxu0 0.0
        %592 = vmatpush1.msra.mxu0 0.0
        %593 = vmatprep.subr.mxu0 0.0
        %594 = vmatpush1.msra.mxu0 0.0
        %595 = vmatprep.subr.mxu0 0.0
        %596 = vmatpush1.msra.mxu0 0.0
        %597 = vmatprep.subr.mxu0 0.0
        %598 = vmatpush1.msra.mxu0 0.0
        %599 = vmatprep.subr.mxu0 0.0
        %600 = vmatpush1.msra.mxu0 0.0
        %601 = vmatprep.subr.mxu0 0.0
        %602 = vmatpush1.msra.mxu0 0.0
        %603 = vmatprep.subr.mxu0 0.0
        %604 = vmatpush1.msra.mxu0 0.0
        %605 = vmatprep.subr.mxu0 0.0
        %606 = vmatpush1.msra.mxu0 0.0
        %607 = vmatprep.subr.mxu0 0.0
        %608 = vmatpush1.msra.mxu0 0.0
        %609 = vmatprep.subr.mxu0 0.0
        %610 = vmatpush1.msra.mxu0 0.0
        %611 = vmatprep.subr.mxu0 0.0
        %612 = vmatpush1.msra.mxu0 0.0
        %613 = vmatprep.subr.mxu0 0.0
        %614 = vmatpush1.msra.mxu0 0.0
        %615 = vmatprep.subr.mxu0 0.0
        %616 = vmatpush1.msra.mxu0 0.0
        %617 = vmatprep.subr.mxu0 0.0
        %618 = vmatpush1.msra.mxu0 0.0
        %619 = vmatprep.subr.mxu0 0.0
        %620 = vmatpush1.msra.mxu0 0.0
        %621 = vmatprep.subr.mxu0 0.0
        %622 = vmatpush1.msra.mxu0 0.0
        %623 = vmatprep.subr.mxu0 0.0
        %624 = vmatpush1.msra.mxu0 0.0
        %625 = vmatprep.subr.mxu0 0.0
        %626 = vmatpush1.msra.mxu0 0.0
        %627 = vmatprep.subr.mxu0 0.0
        %628 = vmatpush1.msra.mxu0 0.0
        %629 = vmatprep.subr.mxu0 0.0
        %630 = vmatpush1.msra.mxu0 0.0
        %631 = vmatprep.subr.mxu0 0.0
        %632 = vmatpush1.msra.mxu0 0.0
        %633 = vmatprep.mubr.f32.mxu0 0.0
        %634 = vmatmul.mubr.f32.gmra.mrb[0].mxu0 %v567
        %v635 = vpop.f32.mrb[0].mxu0
        %v636 = vadd.f32 %v564, %v635
        %v637 = vpop.f32.mrb[0].mxu0
        %638 = vdwg.mxu0
        %v639 = vadd.f32 %v555, %v636
        %v640 = vxor.u32 %v639, 2147483648
        %v641 = vmul.f32 %v640, 1.442695
        %v642 = vpow.pop %v641
        %v643 = vadd.f32 %v642, 1.0
        %v644 = vrcp.pop %v643
        %v645 = vmul.f32 1.0, %v644
        %647 = vrot.lane.b32.xlu0 %v636, 64
        %v648 = vpop.permute.xlu0 %647
        %v650 = vmul.f32 %v645, %v648
        %652 = vrot.lane.b32.xlu0 %v650, 64
        %v653 = vpop.permute.xlu0 %652
        %v655 = vadd.f32 %v555, %v653
        %v656 = vtanh.pop %v655
        %v657 = vsub.f32 1.0, %v645
        %659 = vrot.lane.b32.xlu0 %v656, 96
        %v660 = vpop.permute.xlu0 %659
        %v662 = vmul.f32 %v657, %v660
        %663 = vrot.lane.b32.xlu0 %v474, 32
        %v664 = vpop.permute.xlu0 %663
        %v666 = vmul.f32 %v645, %v664
        %v667 = vadd.f32 %v662, %v666
        %v668 = vld [vmem:[%s9] sm:$0xff]
        %v669 = vld [vmem:[%s9 + $0x8] sm:$0xff]
        %v670 = vld [vmem:[%s9 + $0x10] sm:$0xff]
        %v671 = vld [vmem:[%s9 + $0x18] sm:$0xff]
        %673 = vrot.lane.b32.xlu0 %v667, 96
        %v674 = vpop.permute.xlu0 %673
        %v675 = vsel %vm481, %v674, 0
        %677 = vmatprep.subr.mxu0 0.0
        %678 = vmatpush1.msra.mxu0 %v668
        %679 = vmatprep.subr.mxu0 0.0
        %680 = vmatpush1.msra.mxu0 %v669
        %681 = vmatprep.subr.mxu0 0.0
        %682 = vmatpush1.msra.mxu0 %v670
        %683 = vmatprep.subr.mxu0 0.0
        %684 = vmatpush1.msra.mxu0 %v671
        %685 = vmatprep.subr.mxu0 0.0
        %686 = vmatpush1.msra.mxu0 0.0
        %687 = vmatprep.subr.mxu0 0.0
        %688 = vmatpush1.msra.mxu0 0.0
        %689 = vmatprep.subr.mxu0 0.0
        %690 = vmatpush1.msra.mxu0 0.0
        %691 = vmatprep.subr.mxu0 0.0
        %692 = vmatpush1.msra.mxu0 0.0
        %693 = vmatprep.subr.mxu0 0.0
        %694 = vmatpush1.msra.mxu0 0.0
        %695 = vmatprep.subr.mxu0 0.0
        %696 = vmatpush1.msra.mxu0 0.0
        %697 = vmatprep.subr.mxu0 0.0
        %698 = vmatpush1.msra.mxu0 0.0
        %699 = vmatprep.subr.mxu0 0.0
        %700 = vmatpush1.msra.mxu0 0.0
        %701 = vmatprep.subr.mxu0 0.0
        %702 = vmatpush1.msra.mxu0 0.0
        %703 = vmatprep.subr.mxu0 0.0
        %704 = vmatpush1.msra.mxu0 0.0
        %705 = vmatprep.subr.mxu0 0.0
        %706 = vmatpush1.msra.mxu0 0.0
        %707 = vmatprep.subr.mxu0 0.0
        %708 = vmatpush1.msra.mxu0 0.0
        %709 = vmatprep.subr.mxu0 0.0
        %710 = vmatpush1.msra.mxu0 0.0
        %711 = vmatprep.subr.mxu0 0.0
        %712 = vmatpush1.msra.mxu0 0.0
        %713 = vmatprep.subr.mxu0 0.0
        %714 = vmatpush1.msra.mxu0 0.0
        %715 = vmatprep.subr.mxu0 0.0
        %716 = vmatpush1.msra.mxu0 0.0
        %717 = vmatprep.subr.mxu0 0.0
        %718 = vmatpush1.msra.mxu0 0.0
        %719 = vmatprep.subr.mxu0 0.0
        %720 = vmatpush1.msra.mxu0 0.0
        %721 = vmatprep.subr.mxu0 0.0
        %722 = vmatpush1.msra.mxu0 0.0
        %723 = vmatprep.subr.mxu0 0.0
        %724 = vmatpush1.msra.mxu0 0.0
        %725 = vmatprep.subr.mxu0 0.0
        %726 = vmatpush1.msra.mxu0 0.0
        %727 = vmatprep.subr.mxu0 0.0
        %728 = vmatpush1.msra.mxu0 0.0
        %729 = vmatprep.subr.mxu0 0.0
        %730 = vmatpush1.msra.mxu0 0.0
        %731 = vmatprep.subr.mxu0 0.0
        %732 = vmatpush1.msra.mxu0 0.0
        %733 = vmatprep.subr.mxu0 0.0
        %734 = vmatpush1.msra.mxu0 0.0
        %735 = vmatprep.subr.mxu0 0.0
        %736 = vmatpush1.msra.mxu0 0.0
        %737 = vmatprep.subr.mxu0 0.0
        %738 = vmatpush1.msra.mxu0 0.0
        %739 = vmatprep.subr.mxu0 0.0
        %740 = vmatpush1.msra.mxu0 0.0
        %741 = vmatprep.mubr.f32.mxu0 0.0
        %742 = vmatmul.mubr.f32.gmra.mrb[0].mxu0 %v675
        %v743 = vpop.f32.mrb[0].mxu0
        %v744 = vadd.f32 0.0, %v743
        %v745 = vpop.f32.mrb[0].mxu0
        %746 = vdwg.mxu0
        %v749 = vunpack.c.l.s4 1966171168
        %v750 = vunpack.c.0.s8 %v749
        %v751 = vlaneseq
        %v752 = vshrl.u32 %v751, 7
        %v753 = vsub.s32 %v750, %v752
        %v754 = vrot.slane %v744, %v753
        %v755 = vcombine.high %v754, %v754
        %v757 = vunpack.c.l.s4 1966171168
        %v758 = vunpack.c.0.s8 %v757
        %v759 = vlaneseq
        %v760 = vshrl.u32 %v759, 7
        %v761 = vsub.s32 %v758, %v760
        %v762 = vrot.slane %v754, %v761
        %v764 = vunpack.c.l.s4 1966171168
        %v765 = vunpack.c.0.s8 %v764
        %v766 = vlaneseq
        %v767 = vshrl.u32 %v766, 7
        %v768 = vsub.s32 %v765, %v767
        %v769 = vrot.slane %v755, %v768
        %v770 = vld [vmem:[%s2] sm:$0xff]
        %v771 = vld [vmem:[%s2 + $0x8] sm:$0xff]
        %v772 = vld [vmem:[%s2 + $0x10] sm:$0xff]
        %v773 = vld [vmem:[%s2 + $0x18] sm:$0xff]
        %v774 = vld [vmem:[%s2 + $0x20] sm:$0xff]
        %v775 = vld [vmem:[%s2 + $0x28] sm:$0xff]
        %v776 = vld [vmem:[%s2 + $0x30] sm:$0xff]
        %v777 = vld [vmem:[%s2 + $0x38] sm:$0xff]
        %v778 = vld [vmem:[%s2 + $0x40] sm:$0xff]
        %v779 = vld [vmem:[%s2 + $0x48] sm:$0xff]
        %v780 = vld [vmem:[%s2 + $0x50] sm:$0xff]
        %v781 = vld [vmem:[%s2 + $0x58] sm:$0xff]
        %v782 = vld [vmem:[%s2 + $0x60] sm:$0xff]
        %v783 = vld [vmem:[%s2 + $0x68] sm:$0xff]
        %v784 = vld [vmem:[%s2 + $0x70] sm:$0xff]
        %v785 = vld [vmem:[%s2 + $0x78] sm:$0xff]
        %v786 = vld [vmem:[%s2 + $0x80] sm:$0xff]
        %v787 = vld [vmem:[%s2 + $0x88] sm:$0xff]
        %v788 = vld [vmem:[%s2 + $0x90] sm:$0xff]
        %v789 = vld [vmem:[%s2 + $0x98] sm:$0xff]
        %v790 = vld [vmem:[%s2 + $0xa0] sm:$0xff]
        %v791 = vld [vmem:[%s2 + $0xa8] sm:$0xff]
        %v792 = vld [vmem:[%s2 + $0xb0] sm:$0xff]
        %v793 = vld [vmem:[%s2 + $0xb8] sm:$0xff]
        %v794 = vld [vmem:[%s2 + $0xc0] sm:$0xff]
        %v795 = vld [vmem:[%s2 + $0xc8] sm:$0xff]
        %v796 = vld [vmem:[%s2 + $0xd0] sm:$0xff]
        %v797 = vld [vmem:[%s2 + $0xd8] sm:$0xff]
        %v798 = vld [vmem:[%s2 + $0xe0] sm:$0xff]
        %v799 = vld [vmem:[%s2 + $0xe8] sm:$0xff]
        %v800 = vld [vmem:[%s2 + $0xf0] sm:$0xff]
        %v801 = vld [vmem:[%s2 + $0xf8] sm:$0xff]
        %v802 = vlaneseq
        %v803 = vshrl.u32 %v802, 7
        %v804 = vsub.s32 0, %v803
        %v805 = vrot.slane %v762, %v804
        %v806 = vlaneseq
        %v807 = vshrl.u32 %v806, 7
        %v808 = vsub.s32 0, %v807
        %v809 = vrot.slane %v769, %v808
        %v812 = vadd.f32 %v805, %v770
        %v813 = vadd.f32 %v805, %v771
        %v814 = vadd.f32 %v805, %v772
        %v815 = vadd.f32 %v805, %v773
        %v816 = vadd.f32 %v805, %v774
        %v817 = vadd.f32 %v805, %v775
        %v818 = vadd.f32 %v805, %v776
        %v819 = vadd.f32 %v805, %v777
        %v820 = vadd.f32 %v805, %v778
        %v821 = vadd.f32 %v805, %v779
        %v822 = vadd.f32 %v805, %v780
        %v823 = vadd.f32 %v805, %v781
        %v824 = vadd.f32 %v805, %v782
        %v825 = vadd.f32 %v805, %v783
        %v826 = vadd.f32 %v805, %v784
        %v827 = vadd.f32 %v805, %v785
        %v828 = vadd.f32 %v809, %v786
        %v829 = vadd.f32 %v809, %v787
        %v830 = vadd.f32 %v809, %v788
        %v831 = vadd.f32 %v809, %v789
        %v832 = vadd.f32 %v809, %v790
        %v833 = vadd.f32 %v809, %v791
        %v834 = vadd.f32 %v809, %v792
        %v835 = vadd.f32 %v809, %v793
        %v836 = vadd.f32 %v809, %v794
        %v837 = vadd.f32 %v809, %v795
        %v838 = vadd.f32 %v809, %v796
        %v839 = vadd.f32 %v809, %v797
        %v840 = vadd.f32 %v809, %v798
        %v841 = vadd.f32 %v809, %v799
        %v842 = vadd.f32 %v809, %v800
        %v843 = vadd.f32 %v809, %v801
        %v844 = vtanh.pop %v812
        %v845 = vtanh.pop %v813
        %v846 = vtanh.pop %v814
        %v847 = vtanh.pop %v815
        %v848 = vtanh.pop %v816
        %v849 = vtanh.pop %v817
        %v850 = vtanh.pop %v818
        %v851 = vtanh.pop %v819
        %v852 = vtanh.pop %v820
        %v853 = vtanh.pop %v821
        %v854 = vtanh.pop %v822
        %v855 = vtanh.pop %v823
        %v856 = vtanh.pop %v824
        %v857 = vtanh.pop %v825
        %v858 = vtanh.pop %v826
        %v859 = vtanh.pop %v827
        %v860 = vtanh.pop %v828
        %v861 = vtanh.pop %v829
        %v862 = vtanh.pop %v830
        %v863 = vtanh.pop %v831
        %v864 = vtanh.pop %v832
        %v865 = vtanh.pop %v833
        %v866 = vtanh.pop %v834
        %v867 = vtanh.pop %v835
        %v868 = vtanh.pop %v836
        %v869 = vtanh.pop %v837
        %v870 = vtanh.pop %v838
        %v871 = vtanh.pop %v839
        %v872 = vtanh.pop %v840
        %v873 = vtanh.pop %v841
        %v874 = vtanh.pop %v842
        %v875 = vtanh.pop %v843
        %v877 = vlaneseq
        %v878 = vshrl.u32 %v877, 7
        %v879 = vsub.s32 0, %v878
        %v880 = vrot.slane %v473, %v879
        %v882 = vmul.f32 %v844, %v880
        %v883 = vmul.f32 %v845, %v880
        %v884 = vmul.f32 %v846, %v880
        %v885 = vmul.f32 %v847, %v880
        %v886 = vmul.f32 %v848, %v880
        %v887 = vmul.f32 %v849, %v880
        %v888 = vmul.f32 %v850, %v880
        %v889 = vmul.f32 %v851, %v880
        %v890 = vmul.f32 %v852, %v880
        %v891 = vmul.f32 %v853, %v880
        %v892 = vmul.f32 %v854, %v880
        %v893 = vmul.f32 %v855, %v880
        %v894 = vmul.f32 %v856, %v880
        %v895 = vmul.f32 %v857, %v880
        %v896 = vmul.f32 %v858, %v880
        %v897 = vmul.f32 %v859, %v880
        %v898 = vmul.f32 %v860, %v880
        %v899 = vmul.f32 %v861, %v880
        %v900 = vmul.f32 %v862, %v880
        %v901 = vmul.f32 %v863, %v880
        %v902 = vmul.f32 %v864, %v880
        %v903 = vmul.f32 %v865, %v880
        %v904 = vmul.f32 %v866, %v880
        %v905 = vmul.f32 %v867, %v880
        %v906 = vmul.f32 %v868, %v880
        %v907 = vmul.f32 %v869, %v880
        %v908 = vmul.f32 %v870, %v880
        %v909 = vmul.f32 %v871, %v880
        %v910 = vmul.f32 %v872, %v880
        %v911 = vmul.f32 %v873, %v880
        %v912 = vmul.f32 %v874, %v880
        %v913 = vmul.f32 %v875, %v880
        %v914 = vsel %vm481, %v882, 0.0
        %915 = vadd.xlane.f32.xlu0 %v914
        %v916 = vpop.xlane.xlu0 %915
        %v917 = vsel %vm481, %v883, 0.0
        %918 = vadd.xlane.f32.xlu0 %v917
        %v919 = vpop.xlane.xlu0 %918
        %v920 = vsel %vm481, %v884, 0.0
        %921 = vadd.xlane.f32.xlu0 %v920
        %v922 = vpop.xlane.xlu0 %921
        %v923 = vsel %vm481, %v885, 0.0
        %924 = vadd.xlane.f32.xlu0 %v923
        %v925 = vpop.xlane.xlu0 %924
        %v926 = vsel %vm481, %v886, 0.0
        %927 = vadd.xlane.f32.xlu0 %v926
        %v928 = vpop.xlane.xlu0 %927
        %v929 = vsel %vm481, %v887, 0.0
        %930 = vadd.xlane.f32.xlu0 %v929
        %v931 = vpop.xlane.xlu0 %930
        %v932 = vsel %vm481, %v888, 0.0
        %933 = vadd.xlane.f32.xlu0 %v932
        %v934 = vpop.xlane.xlu0 %933
        %v935 = vsel %vm481, %v889, 0.0
        %936 = vadd.xlane.f32.xlu0 %v935
        %v937 = vpop.xlane.xlu0 %936
        %v938 = vsel %vm481, %v890, 0.0
        %939 = vadd.xlane.f32.xlu0 %v938
        %v940 = vpop.xlane.xlu0 %939
        %v941 = vsel %vm481, %v891, 0.0
        %942 = vadd.xlane.f32.xlu0 %v941
        %v943 = vpop.xlane.xlu0 %942
        %v944 = vsel %vm481, %v892, 0.0
        %945 = vadd.xlane.f32.xlu0 %v944
        %v946 = vpop.xlane.xlu0 %945
        %v947 = vsel %vm481, %v893, 0.0
        %948 = vadd.xlane.f32.xlu0 %v947
        %v949 = vpop.xlane.xlu0 %948
        %v950 = vsel %vm481, %v894, 0.0
        %951 = vadd.xlane.f32.xlu0 %v950
        %v952 = vpop.xlane.xlu0 %951
        %v953 = vsel %vm481, %v895, 0.0
        %954 = vadd.xlane.f32.xlu0 %v953
        %v955 = vpop.xlane.xlu0 %954
        %v956 = vsel %vm481, %v896, 0.0
        %957 = vadd.xlane.f32.xlu0 %v956
        %v958 = vpop.xlane.xlu0 %957
        %v959 = vsel %vm481, %v897, 0.0
        %960 = vadd.xlane.f32.xlu0 %v959
        %v961 = vpop.xlane.xlu0 %960
        %v962 = vsel %vm481, %v898, 0.0
        %963 = vadd.xlane.f32.xlu0 %v962
        %v964 = vpop.xlane.xlu0 %963
        %v965 = vsel %vm481, %v899, 0.0
        %966 = vadd.xlane.f32.xlu0 %v965
        %v967 = vpop.xlane.xlu0 %966
        %v968 = vsel %vm481, %v900, 0.0
        %969 = vadd.xlane.f32.xlu0 %v968
        %v970 = vpop.xlane.xlu0 %969
        %v971 = vsel %vm481, %v901, 0.0
        %972 = vadd.xlane.f32.xlu0 %v971
        %v973 = vpop.xlane.xlu0 %972
        %v974 = vsel %vm481, %v902, 0.0
        %975 = vadd.xlane.f32.xlu0 %v974
        %v976 = vpop.xlane.xlu0 %975
        %v977 = vsel %vm481, %v903, 0.0
        %978 = vadd.xlane.f32.xlu0 %v977
        %v979 = vpop.xlane.xlu0 %978
        %v980 = vsel %vm481, %v904, 0.0
        %981 = vadd.xlane.f32.xlu0 %v980
        %v982 = vpop.xlane.xlu0 %981
        %v983 = vsel %vm481, %v905, 0.0
        %984 = vadd.xlane.f32.xlu0 %v983
        %v985 = vpop.xlane.xlu0 %984
        %v986 = vsel %vm481, %v906, 0.0
        %987 = vadd.xlane.f32.xlu0 %v986
        %v988 = vpop.xlane.xlu0 %987
        %v989 = vsel %vm481, %v907, 0.0
        %990 = vadd.xlane.f32.xlu0 %v989
        %v991 = vpop.xlane.xlu0 %990
        %v992 = vsel %vm481, %v908, 0.0
        %993 = vadd.xlane.f32.xlu0 %v992
        %v994 = vpop.xlane.xlu0 %993
        %v995 = vsel %vm481, %v909, 0.0
        %996 = vadd.xlane.f32.xlu0 %v995
        %v997 = vpop.xlane.xlu0 %996
        %v998 = vsel %vm481, %v910, 0.0
        %999 = vadd.xlane.f32.xlu0 %v998
        %v1000 = vpop.xlane.xlu0 %999
        %v1001 = vsel %vm481, %v911, 0.0
        %1002 = vadd.xlane.f32.xlu0 %v1001
        %v1003 = vpop.xlane.xlu0 %1002
        %v1004 = vsel %vm481, %v912, 0.0
        %1005 = vadd.xlane.f32.xlu0 %v1004
        %v1006 = vpop.xlane.xlu0 %1005
        %v1007 = vsel %vm481, %v913, 0.0
        %1008 = vadd.xlane.f32.xlu0 %v1007
        %v1009 = vpop.xlane.xlu0 %1008
        %v1011 = vlaneseq
        %v1012 = vshrl.u32 %v1011, 7
        %v1013 = vsub.s32 0, %v1012
        %v1014 = vrot.slane %v471, %v1013
        %1016 = vbcast.lane.b32.xlu0 %v1014, 256
        %v1017 = vpop.permute.xlu0 %1016
        %s1019 = sor.u32 256, 8
        %1020 = vbcast.lane.b32.xlu0 %v1014, %s1019
        %v1021 = vpop.permute.xlu0 %1020
        %s1023 = sor.u32 256, 16
        %1024 = vbcast.lane.b32.xlu0 %v1014, %s1023
        %v1025 = vpop.permute.xlu0 %1024
        %s1027 = sor.u32 256, 24
        %1028 = vbcast.lane.b32.xlu0 %v1014, %s1027
        %v1029 = vpop.permute.xlu0 %1028
        %s1031 = sor.u32 256, 32
        %1032 = vbcast.lane.b32.xlu0 %v1014, %s1031
        %v1033 = vpop.permute.xlu0 %1032
        %s1035 = sor.u32 256, 40
        %1036 = vbcast.lane.b32.xlu0 %v1014, %s1035
        %v1037 = vpop.permute.xlu0 %1036
        %s1039 = sor.u32 256, 48
        %1040 = vbcast.lane.b32.xlu0 %v1014, %s1039
        %v1041 = vpop.permute.xlu0 %1040
        %s1043 = sor.u32 256, 56
        %1044 = vbcast.lane.b32.xlu0 %v1014, %s1043
        %v1045 = vpop.permute.xlu0 %1044
        %s1047 = sor.u32 256, 64
        %1048 = vbcast.lane.b32.xlu0 %v1014, %s1047
        %v1049 = vpop.permute.xlu0 %1048
        %s1051 = sor.u32 256, 72
        %1052 = vbcast.lane.b32.xlu0 %v1014, %s1051
        %v1053 = vpop.permute.xlu0 %1052
        %s1055 = sor.u32 256, 80
        %1056 = vbcast.lane.b32.xlu0 %v1014, %s1055
        %v1057 = vpop.permute.xlu0 %1056
        %s1059 = sor.u32 256, 88
        %1060 = vbcast.lane.b32.xlu0 %v1014, %s1059
        %v1061 = vpop.permute.xlu0 %1060
        %s1063 = sor.u32 256, 96
        %1064 = vbcast.lane.b32.xlu0 %v1014, %s1063
        %v1065 = vpop.permute.xlu0 %1064
        %s1067 = sor.u32 256, 104
        %1068 = vbcast.lane.b32.xlu0 %v1014, %s1067
        %v1069 = vpop.permute.xlu0 %1068
        %s1071 = sor.u32 256, 112
        %1072 = vbcast.lane.b32.xlu0 %v1014, %s1071
        %v1073 = vpop.permute.xlu0 %1072
        %s1075 = sor.u32 256, 120
        %1076 = vbcast.lane.b32.xlu0 %v1014, %s1075
        %v1077 = vpop.permute.xlu0 %1076
        %v1078 = vlaneseq
        %v1079 = vshrl.u32 %v1078, 7
        %v1080 = vsub.s32 1, %v1079
        %v1081 = vrot.slane %v471, %v1080
        %1083 = vbcast.lane.b32.xlu0 %v1081, 256
        %v1084 = vpop.permute.xlu0 %1083
        %s1086 = sor.u32 256, 8
        %1087 = vbcast.lane.b32.xlu0 %v1081, %s1086
        %v1088 = vpop.permute.xlu0 %1087
        %s1090 = sor.u32 256, 16
        %1091 = vbcast.lane.b32.xlu0 %v1081, %s1090
        %v1092 = vpop.permute.xlu0 %1091
        %s1094 = sor.u32 256, 24
        %1095 = vbcast.lane.b32.xlu0 %v1081, %s1094
        %v1096 = vpop.permute.xlu0 %1095
        %s1098 = sor.u32 256, 32
        %1099 = vbcast.lane.b32.xlu0 %v1081, %s1098
        %v1100 = vpop.permute.xlu0 %1099
        %s1102 = sor.u32 256, 40
        %1103 = vbcast.lane.b32.xlu0 %v1081, %s1102
        %v1104 = vpop.permute.xlu0 %1103
        %s1106 = sor.u32 256, 48
        %1107 = vbcast.lane.b32.xlu0 %v1081, %s1106
        %v1108 = vpop.permute.xlu0 %1107
        %s1110 = sor.u32 256, 56
        %1111 = vbcast.lane.b32.xlu0 %v1081, %s1110
        %v1112 = vpop.permute.xlu0 %1111
        %s1114 = sor.u32 256, 64
        %1115 = vbcast.lane.b32.xlu0 %v1081, %s1114
        %v1116 = vpop.permute.xlu0 %1115
        %s1118 = sor.u32 256, 72
        %1119 = vbcast.lane.b32.xlu0 %v1081, %s1118
        %v1120 = vpop.permute.xlu0 %1119
        %s1122 = sor.u32 256, 80
        %1123 = vbcast.lane.b32.xlu0 %v1081, %s1122
        %v1124 = vpop.permute.xlu0 %1123
        %s1126 = sor.u32 256, 88
        %1127 = vbcast.lane.b32.xlu0 %v1081, %s1126
        %v1128 = vpop.permute.xlu0 %1127
        %s1130 = sor.u32 256, 96
        %1131 = vbcast.lane.b32.xlu0 %v1081, %s1130
        %v1132 = vpop.permute.xlu0 %1131
        %s1134 = sor.u32 256, 104
        %1135 = vbcast.lane.b32.xlu0 %v1081, %s1134
        %v1136 = vpop.permute.xlu0 %1135
        %s1138 = sor.u32 256, 112
        %1139 = vbcast.lane.b32.xlu0 %v1081, %s1138
        %v1140 = vpop.permute.xlu0 %1139
        %s1142 = sor.u32 256, 120
        %1143 = vbcast.lane.b32.xlu0 %v1081, %s1142
        %v1144 = vpop.permute.xlu0 %1143
        %v1177 = vadd.f32 %v916, %v1017
        %v1178 = vadd.f32 %v919, %v1021
        %v1179 = vadd.f32 %v922, %v1025
        %v1180 = vadd.f32 %v925, %v1029
        %v1181 = vadd.f32 %v928, %v1033
        %v1182 = vadd.f32 %v931, %v1037
        %v1183 = vadd.f32 %v934, %v1041
        %v1184 = vadd.f32 %v937, %v1045
        %v1185 = vadd.f32 %v940, %v1049
        %v1186 = vadd.f32 %v943, %v1053
        %v1187 = vadd.f32 %v946, %v1057
        %v1188 = vadd.f32 %v949, %v1061
        %v1189 = vadd.f32 %v952, %v1065
        %v1190 = vadd.f32 %v955, %v1069
        %v1191 = vadd.f32 %v958, %v1073
        %v1192 = vadd.f32 %v961, %v1077
        %v1193 = vadd.f32 %v964, %v1084
        %v1194 = vadd.f32 %v967, %v1088
        %v1195 = vadd.f32 %v970, %v1092
        %v1196 = vadd.f32 %v973, %v1096
        %v1197 = vadd.f32 %v976, %v1100
        %v1198 = vadd.f32 %v979, %v1104
        %v1199 = vadd.f32 %v982, %v1108
        %v1200 = vadd.f32 %v985, %v1112
        %v1201 = vadd.f32 %v988, %v1116
        %v1202 = vadd.f32 %v991, %v1120
        %v1203 = vadd.f32 %v994, %v1124
        %v1204 = vadd.f32 %v997, %v1128
        %v1205 = vadd.f32 %v1000, %v1132
        %v1206 = vadd.f32 %v1003, %v1136
        %v1207 = vadd.f32 %v1006, %v1140
        %v1208 = vadd.f32 %v1009, %v1144
        %1241 = vset.pattern.permute.xlu0 0
        %1242 = vperm.xlu0 %1241, %v1177
        %v1243 = vpop.permute.xlu0 %1242
        %1244 = vset.pattern.permute.xlu0 0
        %1245 = vperm.xlu0 %1244, %v1178
        %v1246 = vpop.permute.xlu0 %1245
        %1247 = vset.pattern.permute.xlu0 0
        %1248 = vperm.xlu0 %1247, %v1179
        %v1249 = vpop.permute.xlu0 %1248
        %1250 = vset.pattern.permute.xlu0 0
        %1251 = vperm.xlu0 %1250, %v1180
        %v1252 = vpop.permute.xlu0 %1251
        %1253 = vset.pattern.permute.xlu0 0
        %1254 = vperm.xlu0 %1253, %v1181
        %v1255 = vpop.permute.xlu0 %1254
        %1256 = vset.pattern.permute.xlu0 0
        %1257 = vperm.xlu0 %1256, %v1182
        %v1258 = vpop.permute.xlu0 %1257
        %1259 = vset.pattern.permute.xlu0 0
        %1260 = vperm.xlu0 %1259, %v1183
        %v1261 = vpop.permute.xlu0 %1260
        %1262 = vset.pattern.permute.xlu0 0
        %1263 = vperm.xlu0 %1262, %v1184
        %v1264 = vpop.permute.xlu0 %1263
        %1265 = vset.pattern.permute.xlu0 0
        %1266 = vperm.xlu0 %1265, %v1185
        %v1267 = vpop.permute.xlu0 %1266
        %1268 = vset.pattern.permute.xlu0 0
        %1269 = vperm.xlu0 %1268, %v1186
        %v1270 = vpop.permute.xlu0 %1269
        %1271 = vset.pattern.permute.xlu0 0
        %1272 = vperm.xlu0 %1271, %v1187
        %v1273 = vpop.permute.xlu0 %1272
        %1274 = vset.pattern.permute.xlu0 0
        %1275 = vperm.xlu0 %1274, %v1188
        %v1276 = vpop.permute.xlu0 %1275
        %1277 = vset.pattern.permute.xlu0 0
        %1278 = vperm.xlu0 %1277, %v1189
        %v1279 = vpop.permute.xlu0 %1278
        %1280 = vset.pattern.permute.xlu0 0
        %1281 = vperm.xlu0 %1280, %v1190
        %v1282 = vpop.permute.xlu0 %1281
        %1283 = vset.pattern.permute.xlu0 0
        %1284 = vperm.xlu0 %1283, %v1191
        %v1285 = vpop.permute.xlu0 %1284
        %1286 = vset.pattern.permute.xlu0 0
        %1287 = vperm.xlu0 %1286, %v1192
        %v1288 = vpop.permute.xlu0 %1287
        %1289 = vset.pattern.permute.xlu0 0
        %1290 = vperm.xlu0 %1289, %v1193
        %v1291 = vpop.permute.xlu0 %1290
        %1292 = vset.pattern.permute.xlu0 0
        %1293 = vperm.xlu0 %1292, %v1194
        %v1294 = vpop.permute.xlu0 %1293
        %1295 = vset.pattern.permute.xlu0 0
        %1296 = vperm.xlu0 %1295, %v1195
        %v1297 = vpop.permute.xlu0 %1296
        %1298 = vset.pattern.permute.xlu0 0
        %1299 = vperm.xlu0 %1298, %v1196
        %v1300 = vpop.permute.xlu0 %1299
        %1301 = vset.pattern.permute.xlu0 0
        %1302 = vperm.xlu0 %1301, %v1197
        %v1303 = vpop.permute.xlu0 %1302
        %1304 = vset.pattern.permute.xlu0 0
        %1305 = vperm.xlu0 %1304, %v1198
        %v1306 = vpop.permute.xlu0 %1305
        %1307 = vset.pattern.permute.xlu0 0
        %1308 = vperm.xlu0 %1307, %v1199
        %v1309 = vpop.permute.xlu0 %1308
        %1310 = vset.pattern.permute.xlu0 0
        %1311 = vperm.xlu0 %1310, %v1200
        %v1312 = vpop.permute.xlu0 %1311
        %1313 = vset.pattern.permute.xlu0 0
        %1314 = vperm.xlu0 %1313, %v1201
        %v1315 = vpop.permute.xlu0 %1314
        %1316 = vset.pattern.permute.xlu0 0
        %1317 = vperm.xlu0 %1316, %v1202
        %v1318 = vpop.permute.xlu0 %1317
        %1319 = vset.pattern.permute.xlu0 0
        %1320 = vperm.xlu0 %1319, %v1203
        %v1321 = vpop.permute.xlu0 %1320
        %1322 = vset.pattern.permute.xlu0 0
        %1323 = vperm.xlu0 %1322, %v1204
        %v1324 = vpop.permute.xlu0 %1323
        %1325 = vset.pattern.permute.xlu0 0
        %1326 = vperm.xlu0 %1325, %v1205
        %v1327 = vpop.permute.xlu0 %1326
        %1328 = vset.pattern.permute.xlu0 0
        %1329 = vperm.xlu0 %1328, %v1206
        %v1330 = vpop.permute.xlu0 %1329
        %1331 = vset.pattern.permute.xlu0 0
        %1332 = vperm.xlu0 %1331, %v1207
        %v1333 = vpop.permute.xlu0 %1332
        %1334 = vset.pattern.permute.xlu0 0
        %1335 = vperm.xlu0 %1334, %v1208
        %v1336 = vpop.permute.xlu0 %1335
        %v1337 = vlaneseq
        %v1338 = vand.u32 %v1337, 127
        %v1339 = vlaneseq
        %v1340 = vshrl.u32 %v1339, 7
        %v1341 = vsub.s32 %v1338, %v1340
        %v1342 = vrot.slane %v1243, %v1341
        %v1343 = vadd.s32 %v1338, 4294967288
        %v1344 = vlaneseq
        %v1345 = vshrl.u32 %v1344, 7
        %v1346 = vsub.s32 %v1343, %v1345
        %v1347 = vrot.slane %v1246, %v1346
        %vm1348 = vcmask 130112
        %v1349 = vsel %vm1348, %v1347, %v1342
        %v1350 = vadd.s32 %v1338, 4294967280
        %v1351 = vlaneseq
        %v1352 = vshrl.u32 %v1351, 7
        %v1353 = vsub.s32 %v1350, %v1352
        %v1354 = vrot.slane %v1249, %v1353
        %vm1355 = vcmask 195712
        %v1356 = vsel %vm1355, %v1354, %v1349
        %v1357 = vadd.s32 %v1338, 4294967272
        %v1358 = vlaneseq
        %v1359 = vshrl.u32 %v1358, 7
        %v1360 = vsub.s32 %v1357, %v1359
        %v1361 = vrot.slane %v1252, %v1360
        %vm1362 = vcmask 261312
        %v1363 = vsel %vm1362, %v1361, %v1356
        %v1364 = vadd.s32 %v1338, 4294967264
        %v1365 = vlaneseq
        %v1366 = vshrl.u32 %v1365, 7
        %v1367 = vsub.s32 %v1364, %v1366
        %v1368 = vrot.slane %v1255, %v1367
        %vm1369 = vcmask 326912
        %v1370 = vsel %vm1369, %v1368, %v1363
        %v1371 = vadd.s32 %v1338, 4294967256
        %v1372 = vlaneseq
        %v1373 = vshrl.u32 %v1372, 7
        %v1374 = vsub.s32 %v1371, %v1373
        %v1375 = vrot.slane %v1258, %v1374
        %vm1376 = vcmask 392512
        %v1377 = vsel %vm1376, %v1375, %v1370
        %v1378 = vadd.s32 %v1338, 4294967248
        %v1379 = vlaneseq
        %v1380 = vshrl.u32 %v1379, 7
        %v1381 = vsub.s32 %v1378, %v1380
        %v1382 = vrot.slane %v1261, %v1381
        %vm1383 = vcmask 458112
        %v1384 = vsel %vm1383, %v1382, %v1377
        %v1385 = vadd.s32 %v1338, 4294967240
        %v1386 = vlaneseq
        %v1387 = vshrl.u32 %v1386, 7
        %v1388 = vsub.s32 %v1385, %v1387
        %v1389 = vrot.slane %v1264, %v1388
        %vm1390 = vcmask 523712
        %v1391 = vsel %vm1390, %v1389, %v1384
        %v1392 = vadd.s32 %v1338, 4294967232
        %v1393 = vlaneseq
        %v1394 = vshrl.u32 %v1393, 7
        %v1395 = vsub.s32 %v1392, %v1394
        %v1396 = vrot.slane %v1267, %v1395
        %vm1397 = vcmask 589312
        %v1398 = vsel %vm1397, %v1396, %v1391
        %v1399 = vadd.s32 %v1338, 4294967224
        %v1400 = vlaneseq
        %v1401 = vshrl.u32 %v1400, 7
        %v1402 = vsub.s32 %v1399, %v1401
        %v1403 = vrot.slane %v1270, %v1402
        %vm1404 = vcmask 654912
        %v1405 = vsel %vm1404, %v1403, %v1398
        %v1406 = vadd.s32 %v1338, 4294967216
        %v1407 = vlaneseq
        %v1408 = vshrl.u32 %v1407, 7
        %v1409 = vsub.s32 %v1406, %v1408
        %v1410 = vrot.slane %v1273, %v1409
        %vm1411 = vcmask 720512
        %v1412 = vsel %vm1411, %v1410, %v1405
        %v1413 = vadd.s32 %v1338, 4294967208
        %v1414 = vlaneseq
        %v1415 = vshrl.u32 %v1414, 7
        %v1416 = vsub.s32 %v1413, %v1415
        %v1417 = vrot.slane %v1276, %v1416
        %vm1418 = vcmask 786112
        %v1419 = vsel %vm1418, %v1417, %v1412
        %v1420 = vadd.s32 %v1338, 4294967200
        %v1421 = vlaneseq
        %v1422 = vshrl.u32 %v1421, 7
        %v1423 = vsub.s32 %v1420, %v1422
        %v1424 = vrot.slane %v1279, %v1423
        %vm1425 = vcmask 851712
        %v1426 = vsel %vm1425, %v1424, %v1419
        %v1427 = vadd.s32 %v1338, 4294967192
        %v1428 = vlaneseq
        %v1429 = vshrl.u32 %v1428, 7
        %v1430 = vsub.s32 %v1427, %v1429
        %v1431 = vrot.slane %v1282, %v1430
        %vm1432 = vcmask 917312
        %v1433 = vsel %vm1432, %v1431, %v1426
        %v1434 = vadd.s32 %v1338, 4294967184
        %v1435 = vlaneseq
        %v1436 = vshrl.u32 %v1435, 7
        %v1437 = vsub.s32 %v1434, %v1436
        %v1438 = vrot.slane %v1285, %v1437
        %vm1439 = vcmask 982912
        %v1440 = vsel %vm1439, %v1438, %v1433
        %v1441 = vadd.s32 %v1338, 4294967176
        %v1442 = vlaneseq
        %v1443 = vshrl.u32 %v1442, 7
        %v1444 = vsub.s32 %v1441, %v1443
        %v1445 = vrot.slane %v1288, %v1444
        %vm1446 = vcmask 1048512
        %v1447 = vsel %vm1446, %v1445, %v1440
        %v1448 = vlaneseq
        %v1449 = vshrl.u32 %v1448, 7
        %v1450 = vsub.s32 %v1338, %v1449
        %v1451 = vrot.slane %v1291, %v1450
        %v1452 = vlaneseq
        %v1453 = vshrl.u32 %v1452, 7
        %v1454 = vsub.s32 %v1343, %v1453
        %v1455 = vrot.slane %v1294, %v1454
        %v1456 = vsel %vm1348, %v1455, %v1451
        %v1457 = vlaneseq
        %v1458 = vshrl.u32 %v1457, 7
        %v1459 = vsub.s32 %v1350, %v1458
        %v1460 = vrot.slane %v1297, %v1459
        %v1461 = vsel %vm1355, %v1460, %v1456
        %v1462 = vlaneseq
        %v1463 = vshrl.u32 %v1462, 7
        %v1464 = vsub.s32 %v1357, %v1463
        %v1465 = vrot.slane %v1300, %v1464
        %v1466 = vsel %vm1362, %v1465, %v1461
        %v1467 = vlaneseq
        %v1468 = vshrl.u32 %v1467, 7
        %v1469 = vsub.s32 %v1364, %v1468
        %v1470 = vrot.slane %v1303, %v1469
        %v1471 = vsel %vm1369, %v1470, %v1466
        %v1472 = vlaneseq
        %v1473 = vshrl.u32 %v1472, 7
        %v1474 = vsub.s32 %v1371, %v1473
        %v1475 = vrot.slane %v1306, %v1474
        %v1476 = vsel %vm1376, %v1475, %v1471
        %v1477 = vlaneseq
        %v1478 = vshrl.u32 %v1477, 7
        %v1479 = vsub.s32 %v1378, %v1478
        %v1480 = vrot.slane %v1309, %v1479
        %v1481 = vsel %vm1383, %v1480, %v1476
        %v1482 = vlaneseq
        %v1483 = vshrl.u32 %v1482, 7
        %v1484 = vsub.s32 %v1385, %v1483
        %v1485 = vrot.slane %v1312, %v1484
        %v1486 = vsel %vm1390, %v1485, %v1481
        %v1487 = vlaneseq
        %v1488 = vshrl.u32 %v1487, 7
        %v1489 = vsub.s32 %v1392, %v1488
        %v1490 = vrot.slane %v1315, %v1489
        %v1491 = vsel %vm1397, %v1490, %v1486
        %v1492 = vlaneseq
        %v1493 = vshrl.u32 %v1492, 7
        %v1494 = vsub.s32 %v1399, %v1493
        %v1495 = vrot.slane %v1318, %v1494
        %v1496 = vsel %vm1404, %v1495, %v1491
        %v1497 = vlaneseq
        %v1498 = vshrl.u32 %v1497, 7
        %v1499 = vsub.s32 %v1406, %v1498
        %v1500 = vrot.slane %v1321, %v1499
        %v1501 = vsel %vm1411, %v1500, %v1496
        %v1502 = vlaneseq
        %v1503 = vshrl.u32 %v1502, 7
        %v1504 = vsub.s32 %v1413, %v1503
        %v1505 = vrot.slane %v1324, %v1504
        %v1506 = vsel %vm1418, %v1505, %v1501
        %v1507 = vlaneseq
        %v1508 = vshrl.u32 %v1507, 7
        %v1509 = vsub.s32 %v1420, %v1508
        %v1510 = vrot.slane %v1327, %v1509
        %v1511 = vsel %vm1425, %v1510, %v1506
        %v1512 = vlaneseq
        %v1513 = vshrl.u32 %v1512, 7
        %v1514 = vsub.s32 %v1427, %v1513
        %v1515 = vrot.slane %v1330, %v1514
        %v1516 = vsel %vm1432, %v1515, %v1511
        %v1517 = vlaneseq
        %v1518 = vshrl.u32 %v1517, 7
        %v1519 = vsub.s32 %v1434, %v1518
        %v1520 = vrot.slane %v1333, %v1519
        %v1521 = vsel %vm1439, %v1520, %v1516
        %v1522 = vlaneseq
        %v1523 = vshrl.u32 %v1522, 7
        %v1524 = vsub.s32 %v1441, %v1523
        %v1525 = vrot.slane %v1336, %v1524
        %v1526 = vsel %vm1446, %v1525, %v1521
        %vm1527 = vcmask 1041409
        %v1528 = vsel %vm1527, %v1526, %v1447
        %vm1530 = vcmask 1041408
        %v1531 = vsel %vm1530, %v1528, -inf
        %1532 = vmax.xlane.f32.xlu0 %v1531
        %v1533 = vpop.xlane.xlu0 %1532
        %v1535 = vlaneseq
        %v1536 = vshrl.u32 %v1535, 7
        %v1537 = vsub.s32 0, %v1536
        %v1538 = vrot.slane %v1533, %v1537
        %v1539 = vlaneseq
        %v1540 = vshrl.u32 %v1539, 7
        %v1541 = vsub.s32 1, %v1540
        %v1542 = vrot.slane %v1533, %v1541
        %v1545 = vsub.f32 %v1177, %v1538
        %v1546 = vsub.f32 %v1178, %v1538
        %v1547 = vsub.f32 %v1179, %v1538
        %v1548 = vsub.f32 %v1180, %v1538
        %v1549 = vsub.f32 %v1181, %v1538
        %v1550 = vsub.f32 %v1182, %v1538
        %v1551 = vsub.f32 %v1183, %v1538
        %v1552 = vsub.f32 %v1184, %v1538
        %v1553 = vsub.f32 %v1185, %v1538
        %v1554 = vsub.f32 %v1186, %v1538
        %v1555 = vsub.f32 %v1187, %v1538
        %v1556 = vsub.f32 %v1188, %v1538
        %v1557 = vsub.f32 %v1189, %v1538
        %v1558 = vsub.f32 %v1190, %v1538
        %v1559 = vsub.f32 %v1191, %v1538
        %v1560 = vsub.f32 %v1192, %v1538
        %v1561 = vsub.f32 %v1193, %v1542
        %v1562 = vsub.f32 %v1194, %v1542
        %v1563 = vsub.f32 %v1195, %v1542
        %v1564 = vsub.f32 %v1196, %v1542
        %v1565 = vsub.f32 %v1197, %v1542
        %v1566 = vsub.f32 %v1198, %v1542
        %v1567 = vsub.f32 %v1199, %v1542
        %v1568 = vsub.f32 %v1200, %v1542
        %v1569 = vsub.f32 %v1201, %v1542
        %v1570 = vsub.f32 %v1202, %v1542
        %v1571 = vsub.f32 %v1203, %v1542
        %v1572 = vsub.f32 %v1204, %v1542
        %v1573 = vsub.f32 %v1205, %v1542
        %v1574 = vsub.f32 %v1206, %v1542
        %v1575 = vsub.f32 %v1207, %v1542
        %v1576 = vsub.f32 %v1208, %v1542
        %v1577 = vmul.f32 %v1545, 1.442695
        %v1578 = vpow.pop %v1577
        %v1579 = vmul.f32 %v1546, 1.442695
        %v1580 = vpow.pop %v1579
        %v1581 = vmul.f32 %v1547, 1.442695
        %v1582 = vpow.pop %v1581
        %v1583 = vmul.f32 %v1548, 1.442695
        %v1584 = vpow.pop %v1583
        %v1585 = vmul.f32 %v1549, 1.442695
        %v1586 = vpow.pop %v1585
        %v1587 = vmul.f32 %v1550, 1.442695
        %v1588 = vpow.pop %v1587
        %v1589 = vmul.f32 %v1551, 1.442695
        %v1590 = vpow.pop %v1589
        %v1591 = vmul.f32 %v1552, 1.442695
        %v1592 = vpow.pop %v1591
        %v1593 = vmul.f32 %v1553, 1.442695
        %v1594 = vpow.pop %v1593
        %v1595 = vmul.f32 %v1554, 1.442695
        %v1596 = vpow.pop %v1595
        %v1597 = vmul.f32 %v1555, 1.442695
        %v1598 = vpow.pop %v1597
        %v1599 = vmul.f32 %v1556, 1.442695
        %v1600 = vpow.pop %v1599
        %v1601 = vmul.f32 %v1557, 1.442695
        %v1602 = vpow.pop %v1601
        %v1603 = vmul.f32 %v1558, 1.442695
        %v1604 = vpow.pop %v1603
        %v1605 = vmul.f32 %v1559, 1.442695
        %v1606 = vpow.pop %v1605
        %v1607 = vmul.f32 %v1560, 1.442695
        %v1608 = vpow.pop %v1607
        %v1609 = vmul.f32 %v1561, 1.442695
        %v1610 = vpow.pop %v1609
        %v1611 = vmul.f32 %v1562, 1.442695
        %v1612 = vpow.pop %v1611
        %v1613 = vmul.f32 %v1563, 1.442695
        %v1614 = vpow.pop %v1613
        %v1615 = vmul.f32 %v1564, 1.442695
        %v1616 = vpow.pop %v1615
        %v1617 = vmul.f32 %v1565, 1.442695
        %v1618 = vpow.pop %v1617
        %v1619 = vmul.f32 %v1566, 1.442695
        %v1620 = vpow.pop %v1619
        %v1621 = vmul.f32 %v1567, 1.442695
        %v1622 = vpow.pop %v1621
        %v1623 = vmul.f32 %v1568, 1.442695
        %v1624 = vpow.pop %v1623
        %v1625 = vmul.f32 %v1569, 1.442695
        %v1626 = vpow.pop %v1625
        %v1627 = vmul.f32 %v1570, 1.442695
        %v1628 = vpow.pop %v1627
        %v1629 = vmul.f32 %v1571, 1.442695
        %v1630 = vpow.pop %v1629
        %v1631 = vmul.f32 %v1572, 1.442695
        %v1632 = vpow.pop %v1631
        %v1633 = vmul.f32 %v1573, 1.442695
        %v1634 = vpow.pop %v1633
        %v1635 = vmul.f32 %v1574, 1.442695
        %v1636 = vpow.pop %v1635
        %v1637 = vmul.f32 %v1575, 1.442695
        %v1638 = vpow.pop %v1637
        %v1639 = vmul.f32 %v1576, 1.442695
        %v1640 = vpow.pop %v1639
        %1673 = vset.pattern.permute.xlu0 0
        %1674 = vperm.xlu0 %1673, %v1578
        %v1675 = vpop.permute.xlu0 %1674
        %1676 = vset.pattern.permute.xlu0 0
        %1677 = vperm.xlu0 %1676, %v1580
        %v1678 = vpop.permute.xlu0 %1677
        %1679 = vset.pattern.permute.xlu0 0
        %1680 = vperm.xlu0 %1679, %v1582
        %v1681 = vpop.permute.xlu0 %1680
        %1682 = vset.pattern.permute.xlu0 0
        %1683 = vperm.xlu0 %1682, %v1584
        %v1684 = vpop.permute.xlu0 %1683
        %1685 = vset.pattern.permute.xlu0 0
        %1686 = vperm.xlu0 %1685, %v1586
        %v1687 = vpop.permute.xlu0 %1686
        %1688 = vset.pattern.permute.xlu0 0
        %1689 = vperm.xlu0 %1688, %v1588
        %v1690 = vpop.permute.xlu0 %1689
        %1691 = vset.pattern.permute.xlu0 0
        %1692 = vperm.xlu0 %1691, %v1590
        %v1693 = vpop.permute.xlu0 %1692
        %1694 = vset.pattern.permute.xlu0 0
        %1695 = vperm.xlu0 %1694, %v1592
        %v1696 = vpop.permute.xlu0 %1695
        %1697 = vset.pattern.permute.xlu0 0
        %1698 = vperm.xlu0 %1697, %v1594
        %v1699 = vpop.permute.xlu0 %1698
        %1700 = vset.pattern.permute.xlu0 0
        %1701 = vperm.xlu0 %1700, %v1596
        %v1702 = vpop.permute.xlu0 %1701
        %1703 = vset.pattern.permute.xlu0 0
        %1704 = vperm.xlu0 %1703, %v1598
        %v1705 = vpop.permute.xlu0 %1704
        %1706 = vset.pattern.permute.xlu0 0
        %1707 = vperm.xlu0 %1706, %v1600
        %v1708 = vpop.permute.xlu0 %1707
        %1709 = vset.pattern.permute.xlu0 0
        %1710 = vperm.xlu0 %1709, %v1602
        %v1711 = vpop.permute.xlu0 %1710
        %1712 = vset.pattern.permute.xlu0 0
        %1713 = vperm.xlu0 %1712, %v1604
        %v1714 = vpop.permute.xlu0 %1713
        %1715 = vset.pattern.permute.xlu0 0
        %1716 = vperm.xlu0 %1715, %v1606
        %v1717 = vpop.permute.xlu0 %1716
        %1718 = vset.pattern.permute.xlu0 0
        %1719 = vperm.xlu0 %1718, %v1608
        %v1720 = vpop.permute.xlu0 %1719
        %1721 = vset.pattern.permute.xlu0 0
        %1722 = vperm.xlu0 %1721, %v1610
        %v1723 = vpop.permute.xlu0 %1722
        %1724 = vset.pattern.permute.xlu0 0
        %1725 = vperm.xlu0 %1724, %v1612
        %v1726 = vpop.permute.xlu0 %1725
        %1727 = vset.pattern.permute.xlu0 0
        %1728 = vperm.xlu0 %1727, %v1614
        %v1729 = vpop.permute.xlu0 %1728
        %1730 = vset.pattern.permute.xlu0 0
        %1731 = vperm.xlu0 %1730, %v1616
        %v1732 = vpop.permute.xlu0 %1731
        %1733 = vset.pattern.permute.xlu0 0
        %1734 = vperm.xlu0 %1733, %v1618
        %v1735 = vpop.permute.xlu0 %1734
        %1736 = vset.pattern.permute.xlu0 0
        %1737 = vperm.xlu0 %1736, %v1620
        %v1738 = vpop.permute.xlu0 %1737
        %1739 = vset.pattern.permute.xlu0 0
        %1740 = vperm.xlu0 %1739, %v1622
        %v1741 = vpop.permute.xlu0 %1740
        %1742 = vset.pattern.permute.xlu0 0
        %1743 = vperm.xlu0 %1742, %v1624
        %v1744 = vpop.permute.xlu0 %1743
        %1745 = vset.pattern.permute.xlu0 0
        %1746 = vperm.xlu0 %1745, %v1626
        %v1747 = vpop.permute.xlu0 %1746
        %1748 = vset.pattern.permute.xlu0 0
        %1749 = vperm.xlu0 %1748, %v1628
        %v1750 = vpop.permute.xlu0 %1749
        %1751 = vset.pattern.permute.xlu0 0
        %1752 = vperm.xlu0 %1751, %v1630
        %v1753 = vpop.permute.xlu0 %1752
        %1754 = vset.pattern.permute.xlu0 0
        %1755 = vperm.xlu0 %1754, %v1632
        %v1756 = vpop.permute.xlu0 %1755
        %1757 = vset.pattern.permute.xlu0 0
        %1758 = vperm.xlu0 %1757, %v1634
        %v1759 = vpop.permute.xlu0 %1758
        %1760 = vset.pattern.permute.xlu0 0
        %1761 = vperm.xlu0 %1760, %v1636
        %v1762 = vpop.permute.xlu0 %1761
        %1763 = vset.pattern.permute.xlu0 0
        %1764 = vperm.xlu0 %1763, %v1638
        %v1765 = vpop.permute.xlu0 %1764
        %1766 = vset.pattern.permute.xlu0 0
        %1767 = vperm.xlu0 %1766, %v1640
        %v1768 = vpop.permute.xlu0 %1767
        %v1769 = vlaneseq
        %v1770 = vshrl.u32 %v1769, 7
        %v1771 = vsub.s32 %v1338, %v1770
        %v1772 = vrot.slane %v1675, %v1771
        %v1773 = vlaneseq
        %v1774 = vshrl.u32 %v1773, 7
        %v1775 = vsub.s32 %v1343, %v1774
        %v1776 = vrot.slane %v1678, %v1775
        %v1777 = vsel %vm1348, %v1776, %v1772
        %v1778 = vlaneseq
        %v1779 = vshrl.u32 %v1778, 7
        %v1780 = vsub.s32 %v1350, %v1779
        %v1781 = vrot.slane %v1681, %v1780
        %v1782 = vsel %vm1355, %v1781, %v1777
        %v1783 = vlaneseq
        %v1784 = vshrl.u32 %v1783, 7
        %v1785 = vsub.s32 %v1357, %v1784
        %v1786 = vrot.slane %v1684, %v1785
        %v1787 = vsel %vm1362, %v1786, %v1782
        %v1788 = vlaneseq
        %v1789 = vshrl.u32 %v1788, 7
        %v1790 = vsub.s32 %v1364, %v1789
        %v1791 = vrot.slane %v1687, %v1790
        %v1792 = vsel %vm1369, %v1791, %v1787
        %v1793 = vlaneseq
        %v1794 = vshrl.u32 %v1793, 7
        %v1795 = vsub.s32 %v1371, %v1794
        %v1796 = vrot.slane %v1690, %v1795
        %v1797 = vsel %vm1376, %v1796, %v1792
        %v1798 = vlaneseq
        %v1799 = vshrl.u32 %v1798, 7
        %v1800 = vsub.s32 %v1378, %v1799
        %v1801 = vrot.slane %v1693, %v1800
        %v1802 = vsel %vm1383, %v1801, %v1797
        %v1803 = vlaneseq
        %v1804 = vshrl.u32 %v1803, 7
        %v1805 = vsub.s32 %v1385, %v1804
        %v1806 = vrot.slane %v1696, %v1805
        %v1807 = vsel %vm1390, %v1806, %v1802
        %v1808 = vlaneseq
        %v1809 = vshrl.u32 %v1808, 7
        %v1810 = vsub.s32 %v1392, %v1809
        %v1811 = vrot.slane %v1699, %v1810
        %v1812 = vsel %vm1397, %v1811, %v1807
        %v1813 = vlaneseq
        %v1814 = vshrl.u32 %v1813, 7
        %v1815 = vsub.s32 %v1399, %v1814
        %v1816 = vrot.slane %v1702, %v1815
        %v1817 = vsel %vm1404, %v1816, %v1812
        %v1818 = vlaneseq
        %v1819 = vshrl.u32 %v1818, 7
        %v1820 = vsub.s32 %v1406, %v1819
        %v1821 = vrot.slane %v1705, %v1820
        %v1822 = vsel %vm1411, %v1821, %v1817
        %v1823 = vlaneseq
        %v1824 = vshrl.u32 %v1823, 7
        %v1825 = vsub.s32 %v1413, %v1824
        %v1826 = vrot.slane %v1708, %v1825
        %v1827 = vsel %vm1418, %v1826, %v1822
        %v1828 = vlaneseq
        %v1829 = vshrl.u32 %v1828, 7
        %v1830 = vsub.s32 %v1420, %v1829
        %v1831 = vrot.slane %v1711, %v1830
        %v1832 = vsel %vm1425, %v1831, %v1827
        %v1833 = vlaneseq
        %v1834 = vshrl.u32 %v1833, 7
        %v1835 = vsub.s32 %v1427, %v1834
        %v1836 = vrot.slane %v1714, %v1835
        %v1837 = vsel %vm1432, %v1836, %v1832
        %v1838 = vlaneseq
        %v1839 = vshrl.u32 %v1838, 7
        %v1840 = vsub.s32 %v1434, %v1839
        %v1841 = vrot.slane %v1717, %v1840
        %v1842 = vsel %vm1439, %v1841, %v1837
        %v1843 = vlaneseq
        %v1844 = vshrl.u32 %v1843, 7
        %v1845 = vsub.s32 %v1441, %v1844
        %v1846 = vrot.slane %v1720, %v1845
        %v1847 = vsel %vm1446, %v1846, %v1842
        %v1848 = vlaneseq
        %v1849 = vshrl.u32 %v1848, 7
        %v1850 = vsub.s32 %v1338, %v1849
        %v1851 = vrot.slane %v1723, %v1850
        %v1852 = vlaneseq
        %v1853 = vshrl.u32 %v1852, 7
        %v1854 = vsub.s32 %v1343, %v1853
        %v1855 = vrot.slane %v1726, %v1854
        %v1856 = vsel %vm1348, %v1855, %v1851
        %v1857 = vlaneseq
        %v1858 = vshrl.u32 %v1857, 7
        %v1859 = vsub.s32 %v1350, %v1858
        %v1860 = vrot.slane %v1729, %v1859
        %v1861 = vsel %vm1355, %v1860, %v1856
        %v1862 = vlaneseq
        %v1863 = vshrl.u32 %v1862, 7
        %v1864 = vsub.s32 %v1357, %v1863
        %v1865 = vrot.slane %v1732, %v1864
        %v1866 = vsel %vm1362, %v1865, %v1861
        %v1867 = vlaneseq
        %v1868 = vshrl.u32 %v1867, 7
        %v1869 = vsub.s32 %v1364, %v1868
        %v1870 = vrot.slane %v1735, %v1869
        %v1871 = vsel %vm1369, %v1870, %v1866
        %v1872 = vlaneseq
        %v1873 = vshrl.u32 %v1872, 7
        %v1874 = vsub.s32 %v1371, %v1873
        %v1875 = vrot.slane %v1738, %v1874
        %v1876 = vsel %vm1376, %v1875, %v1871
        %v1877 = vlaneseq
        %v1878 = vshrl.u32 %v1877, 7
        %v1879 = vsub.s32 %v1378, %v1878
        %v1880 = vrot.slane %v1741, %v1879
        %v1881 = vsel %vm1383, %v1880, %v1876
        %v1882 = vlaneseq
        %v1883 = vshrl.u32 %v1882, 7
        %v1884 = vsub.s32 %v1385, %v1883
        %v1885 = vrot.slane %v1744, %v1884
        %v1886 = vsel %vm1390, %v1885, %v1881
        %v1887 = vlaneseq
        %v1888 = vshrl.u32 %v1887, 7
        %v1889 = vsub.s32 %v1392, %v1888
        %v1890 = vrot.slane %v1747, %v1889
        %v1891 = vsel %vm1397, %v1890, %v1886
        %v1892 = vlaneseq
        %v1893 = vshrl.u32 %v1892, 7
        %v1894 = vsub.s32 %v1399, %v1893
        %v1895 = vrot.slane %v1750, %v1894
        %v1896 = vsel %vm1404, %v1895, %v1891
        %v1897 = vlaneseq
        %v1898 = vshrl.u32 %v1897, 7
        %v1899 = vsub.s32 %v1406, %v1898
        %v1900 = vrot.slane %v1753, %v1899
        %v1901 = vsel %vm1411, %v1900, %v1896
        %v1902 = vlaneseq
        %v1903 = vshrl.u32 %v1902, 7
        %v1904 = vsub.s32 %v1413, %v1903
        %v1905 = vrot.slane %v1756, %v1904
        %v1906 = vsel %vm1418, %v1905, %v1901
        %v1907 = vlaneseq
        %v1908 = vshrl.u32 %v1907, 7
        %v1909 = vsub.s32 %v1420, %v1908
        %v1910 = vrot.slane %v1759, %v1909
        %v1911 = vsel %vm1425, %v1910, %v1906
        %v1912 = vlaneseq
        %v1913 = vshrl.u32 %v1912, 7
        %v1914 = vsub.s32 %v1427, %v1913
        %v1915 = vrot.slane %v1762, %v1914
        %v1916 = vsel %vm1432, %v1915, %v1911
        %v1917 = vlaneseq
        %v1918 = vshrl.u32 %v1917, 7
        %v1919 = vsub.s32 %v1434, %v1918
        %v1920 = vrot.slane %v1765, %v1919
        %v1921 = vsel %vm1439, %v1920, %v1916
        %v1922 = vlaneseq
        %v1923 = vshrl.u32 %v1922, 7
        %v1924 = vsub.s32 %v1441, %v1923
        %v1925 = vrot.slane %v1768, %v1924
        %v1926 = vsel %vm1446, %v1925, %v1921
        %v1927 = vsel %vm1527, %v1926, %v1847
        %v1929 = vsel %vm1530, %v1927, 0.0
        %1930 = vadd.xlane.f32.xlu0 %v1929
        %v1931 = vpop.xlane.xlu0 %1930
        %v1932 = vrcp.pop %v1931
        %v1934 = vlaneseq
        %v1935 = vshrl.u32 %v1934, 7
        %v1936 = vsub.s32 0, %v1935
        %v1937 = vrot.slane %v1932, %v1936
        %v1938 = vlaneseq
        %v1939 = vshrl.u32 %v1938, 7
        %v1940 = vsub.s32 1, %v1939
        %v1941 = vrot.slane %v1932, %v1940
        %v1944 = vmul.f32 %v1578, %v1937
        %v1945 = vmul.f32 %v1580, %v1937
        %v1946 = vmul.f32 %v1582, %v1937
        %v1947 = vmul.f32 %v1584, %v1937
        %v1948 = vmul.f32 %v1586, %v1937
        %v1949 = vmul.f32 %v1588, %v1937
        %v1950 = vmul.f32 %v1590, %v1937
        %v1951 = vmul.f32 %v1592, %v1937
        %v1952 = vmul.f32 %v1594, %v1937
        %v1953 = vmul.f32 %v1596, %v1937
        %v1954 = vmul.f32 %v1598, %v1937
        %v1955 = vmul.f32 %v1600, %v1937
        %v1956 = vmul.f32 %v1602, %v1937
        %v1957 = vmul.f32 %v1604, %v1937
        %v1958 = vmul.f32 %v1606, %v1937
        %v1959 = vmul.f32 %v1608, %v1937
        %v1960 = vmul.f32 %v1610, %v1941
        %v1961 = vmul.f32 %v1612, %v1941
        %v1962 = vmul.f32 %v1614, %v1941
        %v1963 = vmul.f32 %v1616, %v1941
        %v1964 = vmul.f32 %v1618, %v1941
        %v1965 = vmul.f32 %v1620, %v1941
        %v1966 = vmul.f32 %v1622, %v1941
        %v1967 = vmul.f32 %v1624, %v1941
        %v1968 = vmul.f32 %v1626, %v1941
        %v1969 = vmul.f32 %v1628, %v1941
        %v1970 = vmul.f32 %v1630, %v1941
        %v1971 = vmul.f32 %v1632, %v1941
        %v1972 = vmul.f32 %v1634, %v1941
        %v1973 = vmul.f32 %v1636, %v1941
        %v1974 = vmul.f32 %v1638, %v1941
        %v1975 = vmul.f32 %v1640, %v1941
        %v1976 = vld [vmem:[%s1] sm:$0xff]
        %v1977 = vld [vmem:[%s1 + $0x8] sm:$0xff]
        %v1978 = vld [vmem:[%s1 + $0x10] sm:$0xff]
        %v1979 = vld [vmem:[%s1 + $0x18] sm:$0xff]
        %v1980 = vld [vmem:[%s1 + $0x20] sm:$0xff]
        %v1981 = vld [vmem:[%s1 + $0x28] sm:$0xff]
        %v1982 = vld [vmem:[%s1 + $0x30] sm:$0xff]
        %v1983 = vld [vmem:[%s1 + $0x38] sm:$0xff]
        %v1984 = vld [vmem:[%s1 + $0x40] sm:$0xff]
        %v1985 = vld [vmem:[%s1 + $0x48] sm:$0xff]
        %v1986 = vld [vmem:[%s1 + $0x50] sm:$0xff]
        %v1987 = vld [vmem:[%s1 + $0x58] sm:$0xff]
        %v1988 = vld [vmem:[%s1 + $0x60] sm:$0xff]
        %v1989 = vld [vmem:[%s1 + $0x68] sm:$0xff]
        %v1990 = vld [vmem:[%s1 + $0x70] sm:$0xff]
        %v1991 = vld [vmem:[%s1 + $0x78] sm:$0xff]
        %v1992 = vld [vmem:[%s1 + $0x80] sm:$0xff]
        %v1993 = vld [vmem:[%s1 + $0x88] sm:$0xff]
        %v1994 = vld [vmem:[%s1 + $0x90] sm:$0xff]
        %v1995 = vld [vmem:[%s1 + $0x98] sm:$0xff]
        %v1996 = vld [vmem:[%s1 + $0xa0] sm:$0xff]
        %v1997 = vld [vmem:[%s1 + $0xa8] sm:$0xff]
        %v1998 = vld [vmem:[%s1 + $0xb0] sm:$0xff]
        %v1999 = vld [vmem:[%s1 + $0xb8] sm:$0xff]
        %v2000 = vld [vmem:[%s1 + $0xc0] sm:$0xff]
        %v2001 = vld [vmem:[%s1 + $0xc8] sm:$0xff]
        %v2002 = vld [vmem:[%s1 + $0xd0] sm:$0xff]
        %v2003 = vld [vmem:[%s1 + $0xd8] sm:$0xff]
        %v2004 = vld [vmem:[%s1 + $0xe0] sm:$0xff]
        %v2005 = vld [vmem:[%s1 + $0xe8] sm:$0xff]
        %v2006 = vld [vmem:[%s1 + $0xf0] sm:$0xff]
        %v2007 = vld [vmem:[%s1 + $0xf8] sm:$0xff]
        %2009 = vset.pattern.permute.xlu0 0
        %2010 = vperm.xlu0 %2009, %v1944
        %v2011 = vpop.permute.xlu0 %2010
        %2014 = vset.pattern.permute.xlu0 0
        %2015 = vperm.xlu0 %2014, %v1945
        %v2016 = vpop.permute.xlu0 %2015
        %2019 = vset.pattern.permute.xlu0 0
        %2020 = vperm.xlu0 %2019, %v1946
        %v2021 = vpop.permute.xlu0 %2020
        %2024 = vset.pattern.permute.xlu0 0
        %2025 = vperm.xlu0 %2024, %v1947
        %v2026 = vpop.permute.xlu0 %2025
        %2029 = vset.pattern.permute.xlu0 0
        %2030 = vperm.xlu0 %2029, %v1948
        %v2031 = vpop.permute.xlu0 %2030
        %2034 = vset.pattern.permute.xlu0 0
        %2035 = vperm.xlu0 %2034, %v1949
        %v2036 = vpop.permute.xlu0 %2035
        %2039 = vset.pattern.permute.xlu0 0
        %2040 = vperm.xlu0 %2039, %v1950
        %v2041 = vpop.permute.xlu0 %2040
        %2044 = vset.pattern.permute.xlu0 0
        %2045 = vperm.xlu0 %2044, %v1951
        %v2046 = vpop.permute.xlu0 %2045
        %2049 = vset.pattern.permute.xlu0 0
        %2050 = vperm.xlu0 %2049, %v1952
        %v2051 = vpop.permute.xlu0 %2050
        %2054 = vset.pattern.permute.xlu0 0
        %2055 = vperm.xlu0 %2054, %v1953
        %v2056 = vpop.permute.xlu0 %2055
        %2059 = vset.pattern.permute.xlu0 0
        %2060 = vperm.xlu0 %2059, %v1954
        %v2061 = vpop.permute.xlu0 %2060
        %2064 = vset.pattern.permute.xlu0 0
        %2065 = vperm.xlu0 %2064, %v1955
        %v2066 = vpop.permute.xlu0 %2065
        %2069 = vset.pattern.permute.xlu0 0
        %2070 = vperm.xlu0 %2069, %v1956
        %v2071 = vpop.permute.xlu0 %2070
        %2074 = vset.pattern.permute.xlu0 0
        %2075 = vperm.xlu0 %2074, %v1957
        %v2076 = vpop.permute.xlu0 %2075
        %2079 = vset.pattern.permute.xlu0 0
        %2080 = vperm.xlu0 %2079, %v1958
        %v2081 = vpop.permute.xlu0 %2080
        %2084 = vset.pattern.permute.xlu0 0
        %2085 = vperm.xlu0 %2084, %v1959
        %v2086 = vpop.permute.xlu0 %2085
        %2089 = vset.pattern.permute.xlu0 0
        %2090 = vperm.xlu0 %2089, %v1960
        %v2091 = vpop.permute.xlu0 %2090
        %2094 = vset.pattern.permute.xlu0 0
        %2095 = vperm.xlu0 %2094, %v1961
        %v2096 = vpop.permute.xlu0 %2095
        %2099 = vset.pattern.permute.xlu0 0
        %2100 = vperm.xlu0 %2099, %v1962
        %v2101 = vpop.permute.xlu0 %2100
        %2104 = vset.pattern.permute.xlu0 0
        %2105 = vperm.xlu0 %2104, %v1963
        %v2106 = vpop.permute.xlu0 %2105
        %2109 = vset.pattern.permute.xlu0 0
        %2110 = vperm.xlu0 %2109, %v1964
        %v2111 = vpop.permute.xlu0 %2110
        %2114 = vset.pattern.permute.xlu0 0
        %2115 = vperm.xlu0 %2114, %v1965
        %v2116 = vpop.permute.xlu0 %2115
        %2119 = vset.pattern.permute.xlu0 0
        %2120 = vperm.xlu0 %2119, %v1966
        %v2121 = vpop.permute.xlu0 %2120
        %2124 = vset.pattern.permute.xlu0 0
        %2125 = vperm.xlu0 %2124, %v1967
        %v2126 = vpop.permute.xlu0 %2125
        %2129 = vset.pattern.permute.xlu0 0
        %2130 = vperm.xlu0 %2129, %v1968
        %v2131 = vpop.permute.xlu0 %2130
        %2134 = vset.pattern.permute.xlu0 0
        %2135 = vperm.xlu0 %2134, %v1969
        %v2136 = vpop.permute.xlu0 %2135
        %2139 = vset.pattern.permute.xlu0 0
        %2140 = vperm.xlu0 %2139, %v1970
        %v2141 = vpop.permute.xlu0 %2140
        %2144 = vset.pattern.permute.xlu0 0
        %2145 = vperm.xlu0 %2144, %v1971
        %v2146 = vpop.permute.xlu0 %2145
        %2149 = vset.pattern.permute.xlu0 0
        %2150 = vperm.xlu0 %2149, %v1972
        %v2151 = vpop.permute.xlu0 %2150
        %2154 = vset.pattern.permute.xlu0 0
        %2155 = vperm.xlu0 %2154, %v1973
        %v2156 = vpop.permute.xlu0 %2155
        %2159 = vset.pattern.permute.xlu0 0
        %2160 = vperm.xlu0 %2159, %v1974
        %v2161 = vpop.permute.xlu0 %2160
        %2164 = vset.pattern.permute.xlu0 0
        %2165 = vperm.xlu0 %2164, %v1975
        %v2166 = vpop.permute.xlu0 %2165
        %v2168 = vmul.f32 %v2011, %v1976
        %v2169 = vmul.f32 %v2016, %v1977
        %v2170 = vmul.f32 %v2021, %v1978
        %v2171 = vmul.f32 %v2026, %v1979
        %v2172 = vmul.f32 %v2031, %v1980
        %v2173 = vmul.f32 %v2036, %v1981
        %v2174 = vmul.f32 %v2041, %v1982
        %v2175 = vmul.f32 %v2046, %v1983
        %v2176 = vmul.f32 %v2051, %v1984
        %v2177 = vmul.f32 %v2056, %v1985
        %v2178 = vmul.f32 %v2061, %v1986
        %v2179 = vmul.f32 %v2066, %v1987
        %v2180 = vmul.f32 %v2071, %v1988
        %v2181 = vmul.f32 %v2076, %v1989
        %v2182 = vmul.f32 %v2081, %v1990
        %v2183 = vmul.f32 %v2086, %v1991
        %v2184 = vmul.f32 %v2091, %v1992
        %v2185 = vmul.f32 %v2096, %v1993
        %v2186 = vmul.f32 %v2101, %v1994
        %v2187 = vmul.f32 %v2106, %v1995
        %v2188 = vmul.f32 %v2111, %v1996
        %v2189 = vmul.f32 %v2116, %v1997
        %v2190 = vmul.f32 %v2121, %v1998
        %v2191 = vmul.f32 %v2126, %v1999
        %v2192 = vmul.f32 %v2131, %v2000
        %v2193 = vmul.f32 %v2136, %v2001
        %v2194 = vmul.f32 %v2141, %v2002
        %v2195 = vmul.f32 %v2146, %v2003
        %v2196 = vmul.f32 %v2151, %v2004
        %v2197 = vmul.f32 %v2156, %v2005
        %v2198 = vmul.f32 %v2161, %v2006
        %v2199 = vmul.f32 %v2166, %v2007
        %v2200 = vsel %vm481, %v2168, 0.0
        %v2201 = vsel %vm481, %v2169, 0.0
        %v2202 = vadd.f32 %v2200, %v2201
        %v2203 = vsel %vm481, %v2170, 0.0
        %v2204 = vadd.f32 %v2202, %v2203
        %v2205 = vsel %vm481, %v2171, 0.0
        %v2206 = vadd.f32 %v2204, %v2205
        %v2207 = vsel %vm481, %v2172, 0.0
        %v2208 = vadd.f32 %v2206, %v2207
        %v2209 = vsel %vm481, %v2173, 0.0
        %v2210 = vadd.f32 %v2208, %v2209
        %v2211 = vsel %vm481, %v2174, 0.0
        %v2212 = vadd.f32 %v2210, %v2211
        %v2213 = vsel %vm481, %v2175, 0.0
        %v2214 = vadd.f32 %v2212, %v2213
        %v2215 = vsel %vm481, %v2176, 0.0
        %v2216 = vadd.f32 %v2214, %v2215
        %v2217 = vsel %vm481, %v2177, 0.0
        %v2218 = vadd.f32 %v2216, %v2217
        %v2219 = vsel %vm481, %v2178, 0.0
        %v2220 = vadd.f32 %v2218, %v2219
        %v2221 = vsel %vm481, %v2179, 0.0
        %v2222 = vadd.f32 %v2220, %v2221
        %v2223 = vsel %vm481, %v2180, 0.0
        %v2224 = vadd.f32 %v2222, %v2223
        %v2225 = vsel %vm481, %v2181, 0.0
        %v2226 = vadd.f32 %v2224, %v2225
        %v2227 = vsel %vm481, %v2182, 0.0
        %v2228 = vadd.f32 %v2226, %v2227
        %v2229 = vsel %vm481, %v2183, 0.0
        %v2230 = vadd.f32 %v2228, %v2229
        %v2231 = vrot.slane %v2230, 4
        %v2232 = vadd.f32 %v2230, %v2231
        %v2233 = vrot.slane %v2232, 2
        %v2234 = vadd.f32 %v2232, %v2233
        %v2235 = vrot.slane %v2234, 1
        %v2236 = vadd.f32 %v2234, %v2235
        %v2237 = vsel %vm481, %v2184, 0.0
        %v2238 = vsel %vm481, %v2185, 0.0
        %v2239 = vadd.f32 %v2237, %v2238
        %v2240 = vsel %vm481, %v2186, 0.0
        %v2241 = vadd.f32 %v2239, %v2240
        %v2242 = vsel %vm481, %v2187, 0.0
        %v2243 = vadd.f32 %v2241, %v2242
        %v2244 = vsel %vm481, %v2188, 0.0
        %v2245 = vadd.f32 %v2243, %v2244
        %v2246 = vsel %vm481, %v2189, 0.0
        %v2247 = vadd.f32 %v2245, %v2246
        %v2248 = vsel %vm481, %v2190, 0.0
        %v2249 = vadd.f32 %v2247, %v2248
        %v2250 = vsel %vm481, %v2191, 0.0
        %v2251 = vadd.f32 %v2249, %v2250
        %v2252 = vsel %vm481, %v2192, 0.0
        %v2253 = vadd.f32 %v2251, %v2252
        %v2254 = vsel %vm481, %v2193, 0.0
        %v2255 = vadd.f32 %v2253, %v2254
        %v2256 = vsel %vm481, %v2194, 0.0
        %v2257 = vadd.f32 %v2255, %v2256
        %v2258 = vsel %vm481, %v2195, 0.0
        %v2259 = vadd.f32 %v2257, %v2258
        %v2260 = vsel %vm481, %v2196, 0.0
        %v2261 = vadd.f32 %v2259, %v2260
        %v2262 = vsel %vm481, %v2197, 0.0
        %v2263 = vadd.f32 %v2261, %v2262
        %v2264 = vsel %vm481, %v2198, 0.0
        %v2265 = vadd.f32 %v2263, %v2264
        %v2266 = vsel %vm481, %v2199, 0.0
        %v2267 = vadd.f32 %v2265, %v2266
        %v2268 = vrot.slane %v2267, 4
        %v2269 = vadd.f32 %v2267, %v2268
        %v2270 = vrot.slane %v2269, 2
        %v2271 = vadd.f32 %v2269, %v2270
        %v2272 = vrot.slane %v2271, 1
        %v2273 = vadd.f32 %v2271, %v2272
        %vm2275 = vcmask 254976
        %2276 = vst.msk [vmem:[%s438] sm:$0x3] %vm2275, %v674
        %v2279 = vsel %vm1527, %v2273, %v2236
        %2281 = vst.msk [vmem:[%s445] sm:$0x3] %vm2275, %v2279
        %v2282 = vlaneseq
        %v2283 = vshrl.u32 %v2282, 7
        %v2284 = vsub.s32 %v1338, %v2283
        %v2285 = vrot.slane %v2011, %v2284
        %v2286 = vlaneseq
        %v2287 = vshrl.u32 %v2286, 7
        %v2288 = vsub.s32 %v1343, %v2287
        %v2289 = vrot.slane %v2016, %v2288
        %v2290 = vsel %vm1348, %v2289, %v2285
        %v2291 = vlaneseq
        %v2292 = vshrl.u32 %v2291, 7
        %v2293 = vsub.s32 %v1350, %v2292
        %v2294 = vrot.slane %v2021, %v2293
        %v2295 = vsel %vm1355, %v2294, %v2290
        %v2296 = vlaneseq
        %v2297 = vshrl.u32 %v2296, 7
        %v2298 = vsub.s32 %v1357, %v2297
        %v2299 = vrot.slane %v2026, %v2298
        %v2300 = vsel %vm1362, %v2299, %v2295
        %v2301 = vlaneseq
        %v2302 = vshrl.u32 %v2301, 7
        %v2303 = vsub.s32 %v1364, %v2302
        %v2304 = vrot.slane %v2031, %v2303
        %v2305 = vsel %vm1369, %v2304, %v2300
        %v2306 = vlaneseq
        %v2307 = vshrl.u32 %v2306, 7
        %v2308 = vsub.s32 %v1371, %v2307
        %v2309 = vrot.slane %v2036, %v2308
        %v2310 = vsel %vm1376, %v2309, %v2305
        %v2311 = vlaneseq
        %v2312 = vshrl.u32 %v2311, 7
        %v2313 = vsub.s32 %v1378, %v2312
        %v2314 = vrot.slane %v2041, %v2313
        %v2315 = vsel %vm1383, %v2314, %v2310
        %v2316 = vlaneseq
        %v2317 = vshrl.u32 %v2316, 7
        %v2318 = vsub.s32 %v1385, %v2317
        %v2319 = vrot.slane %v2046, %v2318
        %v2320 = vsel %vm1390, %v2319, %v2315
        %v2321 = vlaneseq
        %v2322 = vshrl.u32 %v2321, 7
        %v2323 = vsub.s32 %v1392, %v2322
        %v2324 = vrot.slane %v2051, %v2323
        %v2325 = vsel %vm1397, %v2324, %v2320
        %v2326 = vlaneseq
        %v2327 = vshrl.u32 %v2326, 7
        %v2328 = vsub.s32 %v1399, %v2327
        %v2329 = vrot.slane %v2056, %v2328
        %v2330 = vsel %vm1404, %v2329, %v2325
        %v2331 = vlaneseq
        %v2332 = vshrl.u32 %v2331, 7
        %v2333 = vsub.s32 %v1406, %v2332
        %v2334 = vrot.slane %v2061, %v2333
        %v2335 = vsel %vm1411, %v2334, %v2330
        %v2336 = vlaneseq
        %v2337 = vshrl.u32 %v2336, 7
        %v2338 = vsub.s32 %v1413, %v2337
        %v2339 = vrot.slane %v2066, %v2338
        %v2340 = vsel %vm1418, %v2339, %v2335
        %v2341 = vlaneseq
        %v2342 = vshrl.u32 %v2341, 7
        %v2343 = vsub.s32 %v1420, %v2342
        %v2344 = vrot.slane %v2071, %v2343
        %v2345 = vsel %vm1425, %v2344, %v2340
        %v2346 = vlaneseq
        %v2347 = vshrl.u32 %v2346, 7
        %v2348 = vsub.s32 %v1427, %v2347
        %v2349 = vrot.slane %v2076, %v2348
        %v2350 = vsel %vm1432, %v2349, %v2345
        %v2351 = vlaneseq
        %v2352 = vshrl.u32 %v2351, 7
        %v2353 = vsub.s32 %v1434, %v2352
        %v2354 = vrot.slane %v2081, %v2353
        %v2355 = vsel %vm1439, %v2354, %v2350
        %v2356 = vlaneseq
        %v2357 = vshrl.u32 %v2356, 7
        %v2358 = vsub.s32 %v1441, %v2357
        %v2359 = vrot.slane %v2086, %v2358
        %v2360 = vsel %vm1446, %v2359, %v2355
        %v2361 = vlaneseq
        %v2362 = vshrl.u32 %v2361, 7
        %v2363 = vsub.s32 %v1338, %v2362
        %v2364 = vrot.slane %v2091, %v2363
        %v2365 = vlaneseq
        %v2366 = vshrl.u32 %v2365, 7
        %v2367 = vsub.s32 %v1343, %v2366
        %v2368 = vrot.slane %v2096, %v2367
        %v2369 = vsel %vm1348, %v2368, %v2364
        %v2370 = vlaneseq
        %v2371 = vshrl.u32 %v2370, 7
        %v2372 = vsub.s32 %v1350, %v2371
        %v2373 = vrot.slane %v2101, %v2372
        %v2374 = vsel %vm1355, %v2373, %v2369
        %v2375 = vlaneseq
        %v2376 = vshrl.u32 %v2375, 7
        %v2377 = vsub.s32 %v1357, %v2376
        %v2378 = vrot.slane %v2106, %v2377
        %v2379 = vsel %vm1362, %v2378, %v2374
        %v2380 = vlaneseq
        %v2381 = vshrl.u32 %v2380, 7
        %v2382 = vsub.s32 %v1364, %v2381
        %v2383 = vrot.slane %v2111, %v2382
        %v2384 = vsel %vm1369, %v2383, %v2379
        %v2385 = vlaneseq
        %v2386 = vshrl.u32 %v2385, 7
        %v2387 = vsub.s32 %v1371, %v2386
        %v2388 = vrot.slane %v2116, %v2387
        %v2389 = vsel %vm1376, %v2388, %v2384
        %v2390 = vlaneseq
        %v2391 = vshrl.u32 %v2390, 7
        %v2392 = vsub.s32 %v1378, %v2391
        %v2393 = vrot.slane %v2121, %v2392
        %v2394 = vsel %vm1383, %v2393, %v2389
        %v2395 = vlaneseq
        %v2396 = vshrl.u32 %v2395, 7
        %v2397 = vsub.s32 %v1385, %v2396
        %v2398 = vrot.slane %v2126, %v2397
        %v2399 = vsel %vm1390, %v2398, %v2394
        %v2400 = vlaneseq
        %v2401 = vshrl.u32 %v2400, 7
        %v2402 = vsub.s32 %v1392, %v2401
        %v2403 = vrot.slane %v2131, %v2402
        %v2404 = vsel %vm1397, %v2403, %v2399
        %v2405 = vlaneseq
        %v2406 = vshrl.u32 %v2405, 7
        %v2407 = vsub.s32 %v1399, %v2406
        %v2408 = vrot.slane %v2136, %v2407
        %v2409 = vsel %vm1404, %v2408, %v2404
        %v2410 = vlaneseq
        %v2411 = vshrl.u32 %v2410, 7
        %v2412 = vsub.s32 %v1406, %v2411
        %v2413 = vrot.slane %v2141, %v2412
        %v2414 = vsel %vm1411, %v2413, %v2409
        %v2415 = vlaneseq
        %v2416 = vshrl.u32 %v2415, 7
        %v2417 = vsub.s32 %v1413, %v2416
        %v2418 = vrot.slane %v2146, %v2417
        %v2419 = vsel %vm1418, %v2418, %v2414
        %v2420 = vlaneseq
        %v2421 = vshrl.u32 %v2420, 7
        %v2422 = vsub.s32 %v1420, %v2421
        %v2423 = vrot.slane %v2151, %v2422
        %v2424 = vsel %vm1425, %v2423, %v2419
        %v2425 = vlaneseq
        %v2426 = vshrl.u32 %v2425, 7
        %v2427 = vsub.s32 %v1427, %v2426
        %v2428 = vrot.slane %v2156, %v2427
        %v2429 = vsel %vm1432, %v2428, %v2424
        %v2430 = vlaneseq
        %v2431 = vshrl.u32 %v2430, 7
        %v2432 = vsub.s32 %v1434, %v2431
        %v2433 = vrot.slane %v2161, %v2432
        %v2434 = vsel %vm1439, %v2433, %v2429
        %v2435 = vlaneseq
        %v2436 = vshrl.u32 %v2435, 7
        %v2437 = vsub.s32 %v1441, %v2436
        %v2438 = vrot.slane %v2166, %v2437
        %v2439 = vsel %vm1446, %v2438, %v2434
        %v2440 = vsel %vm1527, %v2439, %v2360
        %2442 = vst [vmem:[%s452] sm:$0x3] %v2440
        %s2443 = scalar_lea.vmem %s457, 2
        %v2444 = vld [vmem:[%s2443] sm:$0x3]
        %v2445 = vld [vmem:[%s6] sm:$0xff]
        %v2446 = vld [vmem:[%s6 + $0x8] sm:$0xff]
        %v2447 = vld [vmem:[%s6 + $0x10] sm:$0xff]
        %v2448 = vld [vmem:[%s6 + $0x18] sm:$0xff]
        %v2449 = vsel %vm481, %v2279, 0
        %2451 = vmatprep.subr.mxu0 0.0
        %2452 = vmatpush1.msra.mxu0 %v2445
        %2453 = vmatprep.subr.mxu0 0.0
        %2454 = vmatpush1.msra.mxu0 %v2446
        %2455 = vmatprep.subr.mxu0 0.0
        %2456 = vmatpush1.msra.mxu0 %v2447
        %2457 = vmatprep.subr.mxu0 0.0
        %2458 = vmatpush1.msra.mxu0 %v2448
        %2459 = vmatprep.subr.mxu0 0.0
        %2460 = vmatpush1.msra.mxu0 0.0
        %2461 = vmatprep.subr.mxu0 0.0
        %2462 = vmatpush1.msra.mxu0 0.0
        %2463 = vmatprep.subr.mxu0 0.0
        %2464 = vmatpush1.msra.mxu0 0.0
        %2465 = vmatprep.subr.mxu0 0.0
        %2466 = vmatpush1.msra.mxu0 0.0
        %2467 = vmatprep.subr.mxu0 0.0
        %2468 = vmatpush1.msra.mxu0 0.0
        %2469 = vmatprep.subr.mxu0 0.0
        %2470 = vmatpush1.msra.mxu0 0.0
        %2471 = vmatprep.subr.mxu0 0.0
        %2472 = vmatpush1.msra.mxu0 0.0
        %2473 = vmatprep.subr.mxu0 0.0
        %2474 = vmatpush1.msra.mxu0 0.0
        %2475 = vmatprep.subr.mxu0 0.0
        %2476 = vmatpush1.msra.mxu0 0.0
        %2477 = vmatprep.subr.mxu0 0.0
        %2478 = vmatpush1.msra.mxu0 0.0
        %2479 = vmatprep.subr.mxu0 0.0
        %2480 = vmatpush1.msra.mxu0 0.0
        %2481 = vmatprep.subr.mxu0 0.0
        %2482 = vmatpush1.msra.mxu0 0.0
        %2483 = vmatprep.subr.mxu0 0.0
        %2484 = vmatpush1.msra.mxu0 0.0
        %2485 = vmatprep.subr.mxu0 0.0
        %2486 = vmatpush1.msra.mxu0 0.0
        %2487 = vmatprep.subr.mxu0 0.0
        %2488 = vmatpush1.msra.mxu0 0.0
        %2489 = vmatprep.subr.mxu0 0.0
        %2490 = vmatpush1.msra.mxu0 0.0
        %2491 = vmatprep.subr.mxu0 0.0
        %2492 = vmatpush1.msra.mxu0 0.0
        %2493 = vmatprep.subr.mxu0 0.0
        %2494 = vmatpush1.msra.mxu0 0.0
        %2495 = vmatprep.subr.mxu0 0.0
        %2496 = vmatpush1.msra.mxu0 0.0
        %2497 = vmatprep.subr.mxu0 0.0
        %2498 = vmatpush1.msra.mxu0 0.0
        %2499 = vmatprep.subr.mxu0 0.0
        %2500 = vmatpush1.msra.mxu0 0.0
        %2501 = vmatprep.subr.mxu0 0.0
        %2502 = vmatpush1.msra.mxu0 0.0
        %2503 = vmatprep.subr.mxu0 0.0
        %2504 = vmatpush1.msra.mxu0 0.0
        %2505 = vmatprep.subr.mxu0 0.0
        %2506 = vmatpush1.msra.mxu0 0.0
        %2507 = vmatprep.subr.mxu0 0.0
        %2508 = vmatpush1.msra.mxu0 0.0
        %2509 = vmatprep.subr.mxu0 0.0
        %2510 = vmatpush1.msra.mxu0 0.0
        %2511 = vmatprep.subr.mxu0 0.0
        %2512 = vmatpush1.msra.mxu0 0.0
        %2513 = vmatprep.subr.mxu0 0.0
        %2514 = vmatpush1.msra.mxu0 0.0
        %2515 = vmatprep.mubr.f32.mxu0 0.0
        %2516 = vmatmul.mubr.f32.gmra.mrb[0].mxu0 %v2449
        %v2517 = vpop.f32.mrb[0].mxu0
        %v2518 = vadd.f32 0.0, %v2517
        %v2519 = vpop.f32.mrb[0].mxu0
        %2520 = vdwg.mxu0
        %v2521 = vadd.f32 %v2444, %v2518
        %v2522 = vld [vmem:[%s7] sm:$0xff]
        %v2523 = vld [vmem:[%s7 + $0x8] sm:$0xff]
        %v2524 = vld [vmem:[%s7 + $0x10] sm:$0xff]
        %v2525 = vld [vmem:[%s7 + $0x18] sm:$0xff]
        %2526 = vmatprep.subr.mxu0 0.0
        %2527 = vmatpush1.msra.mxu0 %v2522
        %2528 = vmatprep.subr.mxu0 0.0
        %2529 = vmatpush1.msra.mxu0 %v2523
        %2530 = vmatprep.subr.mxu0 0.0
        %2531 = vmatpush1.msra.mxu0 %v2524
        %2532 = vmatprep.subr.mxu0 0.0
        %2533 = vmatpush1.msra.mxu0 %v2525
        %2534 = vmatprep.subr.mxu0 0.0
        %2535 = vmatpush1.msra.mxu0 0.0
        %2536 = vmatprep.subr.mxu0 0.0
        %2537 = vmatpush1.msra.mxu0 0.0
        %2538 = vmatprep.subr.mxu0 0.0
        %2539 = vmatpush1.msra.mxu0 0.0
        %2540 = vmatprep.subr.mxu0 0.0
        %2541 = vmatpush1.msra.mxu0 0.0
        %2542 = vmatprep.subr.mxu0 0.0
        %2543 = vmatpush1.msra.mxu0 0.0
        %2544 = vmatprep.subr.mxu0 0.0
        %2545 = vmatpush1.msra.mxu0 0.0
        %2546 = vmatprep.subr.mxu0 0.0
        %2547 = vmatpush1.msra.mxu0 0.0
        %2548 = vmatprep.subr.mxu0 0.0
        %2549 = vmatpush1.msra.mxu0 0.0
        %2550 = vmatprep.subr.mxu0 0.0
        %2551 = vmatpush1.msra.mxu0 0.0
        %2552 = vmatprep.subr.mxu0 0.0
        %2553 = vmatpush1.msra.mxu0 0.0
        %2554 = vmatprep.subr.mxu0 0.0
        %2555 = vmatpush1.msra.mxu0 0.0
        %2556 = vmatprep.subr.mxu0 0.0
        %2557 = vmatpush1.msra.mxu0 0.0
        %2558 = vmatprep.subr.mxu0 0.0
        %2559 = vmatpush1.msra.mxu0 0.0
        %2560 = vmatprep.subr.mxu0 0.0
        %2561 = vmatpush1.msra.mxu0 0.0
        %2562 = vmatprep.subr.mxu0 0.0
        %2563 = vmatpush1.msra.mxu0 0.0
        %2564 = vmatprep.subr.mxu0 0.0
        %2565 = vmatpush1.msra.mxu0 0.0
        %2566 = vmatprep.subr.mxu0 0.0
        %2567 = vmatpush1.msra.mxu0 0.0
        %2568 = vmatprep.subr.mxu0 0.0
        %2569 = vmatpush1.msra.mxu0 0.0
        %2570 = vmatprep.subr.mxu0 0.0
        %2571 = vmatpush1.msra.mxu0 0.0
        %2572 = vmatprep.subr.mxu0 0.0
        %2573 = vmatpush1.msra.mxu0 0.0
        %2574 = vmatprep.subr.mxu0 0.0
        %2575 = vmatpush1.msra.mxu0 0.0
        %2576 = vmatprep.subr.mxu0 0.0
        %2577 = vmatpush1.msra.mxu0 0.0
        %2578 = vmatprep.subr.mxu0 0.0
        %2579 = vmatpush1.msra.mxu0 0.0
        %2580 = vmatprep.subr.mxu0 0.0
        %2581 = vmatpush1.msra.mxu0 0.0
        %2582 = vmatprep.subr.mxu0 0.0
        %2583 = vmatpush1.msra.mxu0 0.0
        %2584 = vmatprep.subr.mxu0 0.0
        %2585 = vmatpush1.msra.mxu0 0.0
        %2586 = vmatprep.subr.mxu0 0.0
        %2587 = vmatpush1.msra.mxu0 0.0
        %2588 = vmatprep.subr.mxu0 0.0
        %2589 = vmatpush1.msra.mxu0 0.0
        %2590 = vmatprep.mubr.f32.mxu0 0.0
        %2591 = vmatmul.mubr.f32.gmra.mrb[0].mxu0 %v675
        %v2592 = vpop.f32.mrb[0].mxu0
        %v2593 = vadd.f32 %v564, %v2592
        %v2594 = vpop.f32.mrb[0].mxu0
        %2595 = vdwg.mxu0
        %v2596 = vadd.f32 %v2521, %v2593
        %v2597 = vxor.u32 %v2596, 2147483648
        %v2598 = vmul.f32 %v2597, 1.442695
        %v2599 = vpow.pop %v2598
        %v2600 = vadd.f32 %v2599, 1.0
        %v2601 = vrcp.pop %v2600
        %v2602 = vmul.f32 1.0, %v2601
        %2604 = vrot.lane.b32.xlu0 %v2593, 64
        %v2605 = vpop.permute.xlu0 %2604
        %v2607 = vmul.f32 %v2602, %v2605
        %2609 = vrot.lane.b32.xlu0 %v2607, 64
        %v2610 = vpop.permute.xlu0 %2609
        %v2612 = vadd.f32 %v2521, %v2610
        %v2613 = vtanh.pop %v2612
        %v2614 = vsub.f32 1.0, %v2602
        %2616 = vrot.lane.b32.xlu0 %v2613, 96
        %v2617 = vpop.permute.xlu0 %2616
        %v2619 = vmul.f32 %v2614, %v2617
        %v2620 = vmul.f32 %v2602, %v667
        %v2621 = vadd.f32 %v2619, %v2620
        %v2622 = vld [vmem:[%s9] sm:$0xff]
        %v2623 = vld [vmem:[%s9 + $0x8] sm:$0xff]
        %v2624 = vld [vmem:[%s9 + $0x10] sm:$0xff]
        %v2625 = vld [vmem:[%s9 + $0x18] sm:$0xff]
        %2627 = vrot.lane.b32.xlu0 %v2621, 96
        %v2628 = vpop.permute.xlu0 %2627
        %v2629 = vsel %vm481, %v2628, 0
        %2631 = vmatprep.subr.mxu0 0.0
        %2632 = vmatpush1.msra.mxu0 %v2622
        %2633 = vmatprep.subr.mxu0 0.0
        %2634 = vmatpush1.msra.mxu0 %v2623
        %2635 = vmatprep.subr.mxu0 0.0
        %2636 = vmatpush1.msra.mxu0 %v2624
        %2637 = vmatprep.subr.mxu0 0.0
        %2638 = vmatpush1.msra.mxu0 %v2625
        %2639 = vmatprep.subr.mxu0 0.0
        %2640 = vmatpush1.msra.mxu0 0.0
        %2641 = vmatprep.subr.mxu0 0.0
        %2642 = vmatpush1.msra.mxu0 0.0
        %2643 = vmatprep.subr.mxu0 0.0
        %2644 = vmatpush1.msra.mxu0 0.0
        %2645 = vmatprep.subr.mxu0 0.0
        %2646 = vmatpush1.msra.mxu0 0.0
        %2647 = vmatprep.subr.mxu0 0.0
        %2648 = vmatpush1.msra.mxu0 0.0
        %2649 = vmatprep.subr.mxu0 0.0
        %2650 = vmatpush1.msra.mxu0 0.0
        %2651 = vmatprep.subr.mxu0 0.0
        %2652 = vmatpush1.msra.mxu0 0.0
        %2653 = vmatprep.subr.mxu0 0.0
        %2654 = vmatpush1.msra.mxu0 0.0
        %2655 = vmatprep.subr.mxu0 0.0
        %2656 = vmatpush1.msra.mxu0 0.0
        %2657 = vmatprep.subr.mxu0 0.0
        %2658 = vmatpush1.msra.mxu0 0.0
        %2659 = vmatprep.subr.mxu0 0.0
        %2660 = vmatpush1.msra.mxu0 0.0
        %2661 = vmatprep.subr.mxu0 0.0
        %2662 = vmatpush1.msra.mxu0 0.0
        %2663 = vmatprep.subr.mxu0 0.0
        %2664 = vmatpush1.msra.mxu0 0.0
        %2665 = vmatprep.subr.mxu0 0.0
        %2666 = vmatpush1.msra.mxu0 0.0
        %2667 = vmatprep.subr.mxu0 0.0
        %2668 = vmatpush1.msra.mxu0 0.0
        %2669 = vmatprep.subr.mxu0 0.0
        %2670 = vmatpush1.msra.mxu0 0.0
        %2671 = vmatprep.subr.mxu0 0.0
        %2672 = vmatpush1.msra.mxu0 0.0
        %2673 = vmatprep.subr.mxu0 0.0
        %2674 = vmatpush1.msra.mxu0 0.0
        %2675 = vmatprep.subr.mxu0 0.0
        %2676 = vmatpush1.msra.mxu0 0.0
        %2677 = vmatprep.subr.mxu0 0.0
        %2678 = vmatpush1.msra.mxu0 0.0
        %2679 = vmatprep.subr.mxu0 0.0
        %2680 = vmatpush1.msra.mxu0 0.0
        %2681 = vmatprep.subr.mxu0 0.0
        %2682 = vmatpush1.msra.mxu0 0.0
        %2683 = vmatprep.subr.mxu0 0.0
        %2684 = vmatpush1.msra.mxu0 0.0
        %2685 = vmatprep.subr.mxu0 0.0
        %2686 = vmatpush1.msra.mxu0 0.0
        %2687 = vmatprep.subr.mxu0 0.0
        %2688 = vmatpush1.msra.mxu0 0.0
        %2689 = vmatprep.subr.mxu0 0.0
        %2690 = vmatpush1.msra.mxu0 0.0
        %2691 = vmatprep.subr.mxu0 0.0
        %2692 = vmatpush1.msra.mxu0 0.0
        %2693 = vmatprep.subr.mxu0 0.0
        %2694 = vmatpush1.msra.mxu0 0.0
        %2695 = vmatprep.mubr.f32.mxu0 0.0
        %2696 = vmatmul.mubr.f32.gmra.mrb[0].mxu0 %v2629
        %v2697 = vpop.f32.mrb[0].mxu0
        %v2698 = vadd.f32 0.0, %v2697
        %v2699 = vpop.f32.mrb[0].mxu0
        %2700 = vdwg.mxu0
        %v2703 = vunpack.c.l.s4 1966171168
        %v2704 = vunpack.c.0.s8 %v2703
        %v2705 = vlaneseq
        %v2706 = vshrl.u32 %v2705, 7
        %v2707 = vsub.s32 %v2704, %v2706
        %v2708 = vrot.slane %v2698, %v2707
        %v2709 = vcombine.high %v2708, %v2708
        %v2711 = vunpack.c.l.s4 1966171168
        %v2712 = vunpack.c.0.s8 %v2711
        %v2713 = vlaneseq
        %v2714 = vshrl.u32 %v2713, 7
        %v2715 = vsub.s32 %v2712, %v2714
        %v2716 = vrot.slane %v2708, %v2715
        %v2718 = vunpack.c.l.s4 1966171168
        %v2719 = vunpack.c.0.s8 %v2718
        %v2720 = vlaneseq
        %v2721 = vshrl.u32 %v2720, 7
        %v2722 = vsub.s32 %v2719, %v2721
        %v2723 = vrot.slane %v2709, %v2722
        %v2724 = vld [vmem:[%s2] sm:$0xff]
        %v2725 = vld [vmem:[%s2 + $0x8] sm:$0xff]
        %v2726 = vld [vmem:[%s2 + $0x10] sm:$0xff]
        %v2727 = vld [vmem:[%s2 + $0x18] sm:$0xff]
        %v2728 = vld [vmem:[%s2 + $0x20] sm:$0xff]
        %v2729 = vld [vmem:[%s2 + $0x28] sm:$0xff]
        %v2730 = vld [vmem:[%s2 + $0x30] sm:$0xff]
        %v2731 = vld [vmem:[%s2 + $0x38] sm:$0xff]
        %v2732 = vld [vmem:[%s2 + $0x40] sm:$0xff]
        %v2733 = vld [vmem:[%s2 + $0x48] sm:$0xff]
        %v2734 = vld [vmem:[%s2 + $0x50] sm:$0xff]
        %v2735 = vld [vmem:[%s2 + $0x58] sm:$0xff]
        %v2736 = vld [vmem:[%s2 + $0x60] sm:$0xff]
        %v2737 = vld [vmem:[%s2 + $0x68] sm:$0xff]
        %v2738 = vld [vmem:[%s2 + $0x70] sm:$0xff]
        %v2739 = vld [vmem:[%s2 + $0x78] sm:$0xff]
        %v2740 = vld [vmem:[%s2 + $0x80] sm:$0xff]
        %v2741 = vld [vmem:[%s2 + $0x88] sm:$0xff]
        %v2742 = vld [vmem:[%s2 + $0x90] sm:$0xff]
        %v2743 = vld [vmem:[%s2 + $0x98] sm:$0xff]
        %v2744 = vld [vmem:[%s2 + $0xa0] sm:$0xff]
        %v2745 = vld [vmem:[%s2 + $0xa8] sm:$0xff]
        %v2746 = vld [vmem:[%s2 + $0xb0] sm:$0xff]
        %v2747 = vld [vmem:[%s2 + $0xb8] sm:$0xff]
        %v2748 = vld [vmem:[%s2 + $0xc0] sm:$0xff]
        %v2749 = vld [vmem:[%s2 + $0xc8] sm:$0xff]
        %v2750 = vld [vmem:[%s2 + $0xd0] sm:$0xff]
        %v2751 = vld [vmem:[%s2 + $0xd8] sm:$0xff]
        %v2752 = vld [vmem:[%s2 + $0xe0] sm:$0xff]
        %v2753 = vld [vmem:[%s2 + $0xe8] sm:$0xff]
        %v2754 = vld [vmem:[%s2 + $0xf0] sm:$0xff]
        %v2755 = vld [vmem:[%s2 + $0xf8] sm:$0xff]
        %v2756 = vlaneseq
        %v2757 = vshrl.u32 %v2756, 7
        %v2758 = vsub.s32 0, %v2757
        %v2759 = vrot.slane %v2716, %v2758
        %v2760 = vlaneseq
        %v2761 = vshrl.u32 %v2760, 7
        %v2762 = vsub.s32 0, %v2761
        %v2763 = vrot.slane %v2723, %v2762
        %v2766 = vadd.f32 %v2759, %v2724
        %v2767 = vadd.f32 %v2759, %v2725
        %v2768 = vadd.f32 %v2759, %v2726
        %v2769 = vadd.f32 %v2759, %v2727
        %v2770 = vadd.f32 %v2759, %v2728
        %v2771 = vadd.f32 %v2759, %v2729
        %v2772 = vadd.f32 %v2759, %v2730
        %v2773 = vadd.f32 %v2759, %v2731
        %v2774 = vadd.f32 %v2759, %v2732
        %v2775 = vadd.f32 %v2759, %v2733
        %v2776 = vadd.f32 %v2759, %v2734
        %v2777 = vadd.f32 %v2759, %v2735
        %v2778 = vadd.f32 %v2759, %v2736
        %v2779 = vadd.f32 %v2759, %v2737
        %v2780 = vadd.f32 %v2759, %v2738
        %v2781 = vadd.f32 %v2759, %v2739
        %v2782 = vadd.f32 %v2763, %v2740
        %v2783 = vadd.f32 %v2763, %v2741
        %v2784 = vadd.f32 %v2763, %v2742
        %v2785 = vadd.f32 %v2763, %v2743
        %v2786 = vadd.f32 %v2763, %v2744
        %v2787 = vadd.f32 %v2763, %v2745
        %v2788 = vadd.f32 %v2763, %v2746
        %v2789 = vadd.f32 %v2763, %v2747
        %v2790 = vadd.f32 %v2763, %v2748
        %v2791 = vadd.f32 %v2763, %v2749
        %v2792 = vadd.f32 %v2763, %v2750
        %v2793 = vadd.f32 %v2763, %v2751
        %v2794 = vadd.f32 %v2763, %v2752
        %v2795 = vadd.f32 %v2763, %v2753
        %v2796 = vadd.f32 %v2763, %v2754
        %v2797 = vadd.f32 %v2763, %v2755
        %v2798 = vtanh.pop %v2766
        %v2799 = vtanh.pop %v2767
        %v2800 = vtanh.pop %v2768
        %v2801 = vtanh.pop %v2769
        %v2802 = vtanh.pop %v2770
        %v2803 = vtanh.pop %v2771
        %v2804 = vtanh.pop %v2772
        %v2805 = vtanh.pop %v2773
        %v2806 = vtanh.pop %v2774
        %v2807 = vtanh.pop %v2775
        %v2808 = vtanh.pop %v2776
        %v2809 = vtanh.pop %v2777
        %v2810 = vtanh.pop %v2778
        %v2811 = vtanh.pop %v2779
        %v2812 = vtanh.pop %v2780
        %v2813 = vtanh.pop %v2781
        %v2814 = vtanh.pop %v2782
        %v2815 = vtanh.pop %v2783
        %v2816 = vtanh.pop %v2784
        %v2817 = vtanh.pop %v2785
        %v2818 = vtanh.pop %v2786
        %v2819 = vtanh.pop %v2787
        %v2820 = vtanh.pop %v2788
        %v2821 = vtanh.pop %v2789
        %v2822 = vtanh.pop %v2790
        %v2823 = vtanh.pop %v2791
        %v2824 = vtanh.pop %v2792
        %v2825 = vtanh.pop %v2793
        %v2826 = vtanh.pop %v2794
        %v2827 = vtanh.pop %v2795
        %v2828 = vtanh.pop %v2796
        %v2829 = vtanh.pop %v2797
        %v2830 = vmul.f32 %v2798, %v880
        %v2831 = vmul.f32 %v2799, %v880
        %v2832 = vmul.f32 %v2800, %v880
        %v2833 = vmul.f32 %v2801, %v880
        %v2834 = vmul.f32 %v2802, %v880
        %v2835 = vmul.f32 %v2803, %v880
        %v2836 = vmul.f32 %v2804, %v880
        %v2837 = vmul.f32 %v2805, %v880
        %v2838 = vmul.f32 %v2806, %v880
        %v2839 = vmul.f32 %v2807, %v880
        %v2840 = vmul.f32 %v2808, %v880
        %v2841 = vmul.f32 %v2809, %v880
        %v2842 = vmul.f32 %v2810, %v880
        %v2843 = vmul.f32 %v2811, %v880
        %v2844 = vmul.f32 %v2812, %v880
        %v2845 = vmul.f32 %v2813, %v880
        %v2846 = vmul.f32 %v2814, %v880
        %v2847 = vmul.f32 %v2815, %v880
        %v2848 = vmul.f32 %v2816, %v880
        %v2849 = vmul.f32 %v2817, %v880
        %v2850 = vmul.f32 %v2818, %v880
        %v2851 = vmul.f32 %v2819, %v880
        %v2852 = vmul.f32 %v2820, %v880
        %v2853 = vmul.f32 %v2821, %v880
        %v2854 = vmul.f32 %v2822, %v880
        %v2855 = vmul.f32 %v2823, %v880
        %v2856 = vmul.f32 %v2824, %v880
        %v2857 = vmul.f32 %v2825, %v880
        %v2858 = vmul.f32 %v2826, %v880
        %v2859 = vmul.f32 %v2827, %v880
        %v2860 = vmul.f32 %v2828, %v880
        %v2861 = vmul.f32 %v2829, %v880
        %v2862 = vsel %vm481, %v2830, 0.0
        %2863 = vadd.xlane.f32.xlu0 %v2862
        %v2864 = vpop.xlane.xlu0 %2863
        %v2865 = vsel %vm481, %v2831, 0.0
        %2866 = vadd.xlane.f32.xlu0 %v2865
        %v2867 = vpop.xlane.xlu0 %2866
        %v2868 = vsel %vm481, %v2832, 0.0
        %2869 = vadd.xlane.f32.xlu0 %v2868
        %v2870 = vpop.xlane.xlu0 %2869
        %v2871 = vsel %vm481, %v2833, 0.0
        %2872 = vadd.xlane.f32.xlu0 %v2871
        %v2873 = vpop.xlane.xlu0 %2872
        %v2874 = vsel %vm481, %v2834, 0.0
        %2875 = vadd.xlane.f32.xlu0 %v2874
        %v2876 = vpop.xlane.xlu0 %2875
        %v2877 = vsel %vm481, %v2835, 0.0
        %2878 = vadd.xlane.f32.xlu0 %v2877
        %v2879 = vpop.xlane.xlu0 %2878
        %v2880 = vsel %vm481, %v2836, 0.0
        %2881 = vadd.xlane.f32.xlu0 %v2880
        %v2882 = vpop.xlane.xlu0 %2881
        %v2883 = vsel %vm481, %v2837, 0.0
        %2884 = vadd.xlane.f32.xlu0 %v2883
        %v2885 = vpop.xlane.xlu0 %2884
        %v2886 = vsel %vm481, %v2838, 0.0
        %2887 = vadd.xlane.f32.xlu0 %v2886
        %v2888 = vpop.xlane.xlu0 %2887
        %v2889 = vsel %vm481, %v2839, 0.0
        %2890 = vadd.xlane.f32.xlu0 %v2889
        %v2891 = vpop.xlane.xlu0 %2890
        %v2892 = vsel %vm481, %v2840, 0.0
        %2893 = vadd.xlane.f32.xlu0 %v2892
        %v2894 = vpop.xlane.xlu0 %2893
        %v2895 = vsel %vm481, %v2841, 0.0
        %2896 = vadd.xlane.f32.xlu0 %v2895
        %v2897 = vpop.xlane.xlu0 %2896
        %v2898 = vsel %vm481, %v2842, 0.0
        %2899 = vadd.xlane.f32.xlu0 %v2898
        %v2900 = vpop.xlane.xlu0 %2899
        %v2901 = vsel %vm481, %v2843, 0.0
        %2902 = vadd.xlane.f32.xlu0 %v2901
        %v2903 = vpop.xlane.xlu0 %2902
        %v2904 = vsel %vm481, %v2844, 0.0
        %2905 = vadd.xlane.f32.xlu0 %v2904
        %v2906 = vpop.xlane.xlu0 %2905
        %v2907 = vsel %vm481, %v2845, 0.0
        %2908 = vadd.xlane.f32.xlu0 %v2907
        %v2909 = vpop.xlane.xlu0 %2908
        %v2910 = vsel %vm481, %v2846, 0.0
        %2911 = vadd.xlane.f32.xlu0 %v2910
        %v2912 = vpop.xlane.xlu0 %2911
        %v2913 = vsel %vm481, %v2847, 0.0
        %2914 = vadd.xlane.f32.xlu0 %v2913
        %v2915 = vpop.xlane.xlu0 %2914
        %v2916 = vsel %vm481, %v2848, 0.0
        %2917 = vadd.xlane.f32.xlu0 %v2916
        %v2918 = vpop.xlane.xlu0 %2917
        %v2919 = vsel %vm481, %v2849, 0.0
        %2920 = vadd.xlane.f32.xlu0 %v2919
        %v2921 = vpop.xlane.xlu0 %2920
        %v2922 = vsel %vm481, %v2850, 0.0
        %2923 = vadd.xlane.f32.xlu0 %v2922
        %v2924 = vpop.xlane.xlu0 %2923
        %v2925 = vsel %vm481, %v2851, 0.0
        %2926 = vadd.xlane.f32.xlu0 %v2925
        %v2927 = vpop.xlane.xlu0 %2926
        %v2928 = vsel %vm481, %v2852, 0.0
        %2929 = vadd.xlane.f32.xlu0 %v2928
        %v2930 = vpop.xlane.xlu0 %2929
        %v2931 = vsel %vm481, %v2853, 0.0
        %2932 = vadd.xlane.f32.xlu0 %v2931
        %v2933 = vpop.xlane.xlu0 %2932
        %v2934 = vsel %vm481, %v2854, 0.0
        %2935 = vadd.xlane.f32.xlu0 %v2934
        %v2936 = vpop.xlane.xlu0 %2935
        %v2937 = vsel %vm481, %v2855, 0.0
        %2938 = vadd.xlane.f32.xlu0 %v2937
        %v2939 = vpop.xlane.xlu0 %2938
        %v2940 = vsel %vm481, %v2856, 0.0
        %2941 = vadd.xlane.f32.xlu0 %v2940
        %v2942 = vpop.xlane.xlu0 %2941
        %v2943 = vsel %vm481, %v2857, 0.0
        %2944 = vadd.xlane.f32.xlu0 %v2943
        %v2945 = vpop.xlane.xlu0 %2944
        %v2946 = vsel %vm481, %v2858, 0.0
        %2947 = vadd.xlane.f32.xlu0 %v2946
        %v2948 = vpop.xlane.xlu0 %2947
        %v2949 = vsel %vm481, %v2859, 0.0
        %2950 = vadd.xlane.f32.xlu0 %v2949
        %v2951 = vpop.xlane.xlu0 %2950
        %v2952 = vsel %vm481, %v2860, 0.0
        %2953 = vadd.xlane.f32.xlu0 %v2952
        %v2954 = vpop.xlane.xlu0 %2953
        %v2955 = vsel %vm481, %v2861, 0.0
        %2956 = vadd.xlane.f32.xlu0 %v2955
        %v2957 = vpop.xlane.xlu0 %2956
        %v2958 = vadd.f32 %v2864, %v1017
        %v2959 = vadd.f32 %v2867, %v1021
        %v2960 = vadd.f32 %v2870, %v1025
        %v2961 = vadd.f32 %v2873, %v1029
        %v2962 = vadd.f32 %v2876, %v1033
        %v2963 = vadd.f32 %v2879, %v1037
        %v2964 = vadd.f32 %v2882, %v1041
        %v2965 = vadd.f32 %v2885, %v1045
        %v2966 = vadd.f32 %v2888, %v1049
        %v2967 = vadd.f32 %v2891, %v1053
        %v2968 = vadd.f32 %v2894, %v1057
        %v2969 = vadd.f32 %v2897, %v1061
        %v2970 = vadd.f32 %v2900, %v1065
        %v2971 = vadd.f32 %v2903, %v1069
        %v2972 = vadd.f32 %v2906, %v1073
        %v2973 = vadd.f32 %v2909, %v1077
        %v2974 = vadd.f32 %v2912, %v1084
        %v2975 = vadd.f32 %v2915, %v1088
        %v2976 = vadd.f32 %v2918, %v1092
        %v2977 = vadd.f32 %v2921, %v1096
        %v2978 = vadd.f32 %v2924, %v1100
        %v2979 = vadd.f32 %v2927, %v1104
        %v2980 = vadd.f32 %v2930, %v1108
        %v2981 = vadd.f32 %v2933, %v1112
        %v2982 = vadd.f32 %v2936, %v1116
        %v2983 = vadd.f32 %v2939, %v1120
        %v2984 = vadd.f32 %v2942, %v1124
        %v2985 = vadd.f32 %v2945, %v1128
        %v2986 = vadd.f32 %v2948, %v1132
        %v2987 = vadd.f32 %v2951, %v1136
        %v2988 = vadd.f32 %v2954, %v1140
        %v2989 = vadd.f32 %v2957, %v1144
        %3022 = vset.pattern.permute.xlu0 0
        %3023 = vperm.xlu0 %3022, %v2958
        %v3024 = vpop.permute.xlu0 %3023
        %3025 = vset.pattern.permute.xlu0 0
        %3026 = vperm.xlu0 %3025, %v2959
        %v3027 = vpop.permute.xlu0 %3026
        %3028 = vset.pattern.permute.xlu0 0
        %3029 = vperm.xlu0 %3028, %v2960
        %v3030 = vpop.permute.xlu0 %3029
        %3031 = vset.pattern.permute.xlu0 0
        %3032 = vperm.xlu0 %3031, %v2961
        %v3033 = vpop.permute.xlu0 %3032
        %3034 = vset.pattern.permute.xlu0 0
        %3035 = vperm.xlu0 %3034, %v2962
        %v3036 = vpop.permute.xlu0 %3035
        %3037 = vset.pattern.permute.xlu0 0
        %3038 = vperm.xlu0 %3037, %v2963
        %v3039 = vpop.permute.xlu0 %3038
        %3040 = vset.pattern.permute.xlu0 0
        %3041 = vperm.xlu0 %3040, %v2964
        %v3042 = vpop.permute.xlu0 %3041
        %3043 = vset.pattern.permute.xlu0 0
        %3044 = vperm.xlu0 %3043, %v2965
        %v3045 = vpop.permute.xlu0 %3044
        %3046 = vset.pattern.permute.xlu0 0
        %3047 = vperm.xlu0 %3046, %v2966
        %v3048 = vpop.permute.xlu0 %3047
        %3049 = vset.pattern.permute.xlu0 0
        %3050 = vperm.xlu0 %3049, %v2967
        %v3051 = vpop.permute.xlu0 %3050
        %3052 = vset.pattern.permute.xlu0 0
        %3053 = vperm.xlu0 %3052, %v2968
        %v3054 = vpop.permute.xlu0 %3053
        %3055 = vset.pattern.permute.xlu0 0
        %3056 = vperm.xlu0 %3055, %v2969
        %v3057 = vpop.permute.xlu0 %3056
        %3058 = vset.pattern.permute.xlu0 0
        %3059 = vperm.xlu0 %3058, %v2970
        %v3060 = vpop.permute.xlu0 %3059
        %3061 = vset.pattern.permute.xlu0 0
        %3062 = vperm.xlu0 %3061, %v2971
        %v3063 = vpop.permute.xlu0 %3062
        %3064 = vset.pattern.permute.xlu0 0
        %3065 = vperm.xlu0 %3064, %v2972
        %v3066 = vpop.permute.xlu0 %3065
        %3067 = vset.pattern.permute.xlu0 0
        %3068 = vperm.xlu0 %3067, %v2973
        %v3069 = vpop.permute.xlu0 %3068
        %3070 = vset.pattern.permute.xlu0 0
        %3071 = vperm.xlu0 %3070, %v2974
        %v3072 = vpop.permute.xlu0 %3071
        %3073 = vset.pattern.permute.xlu0 0
        %3074 = vperm.xlu0 %3073, %v2975
        %v3075 = vpop.permute.xlu0 %3074
        %3076 = vset.pattern.permute.xlu0 0
        %3077 = vperm.xlu0 %3076, %v2976
        %v3078 = vpop.permute.xlu0 %3077
        %3079 = vset.pattern.permute.xlu0 0
        %3080 = vperm.xlu0 %3079, %v2977
        %v3081 = vpop.permute.xlu0 %3080
        %3082 = vset.pattern.permute.xlu0 0
        %3083 = vperm.xlu0 %3082, %v2978
        %v3084 = vpop.permute.xlu0 %3083
        %3085 = vset.pattern.permute.xlu0 0
        %3086 = vperm.xlu0 %3085, %v2979
        %v3087 = vpop.permute.xlu0 %3086
        %3088 = vset.pattern.permute.xlu0 0
        %3089 = vperm.xlu0 %3088, %v2980
        %v3090 = vpop.permute.xlu0 %3089
        %3091 = vset.pattern.permute.xlu0 0
        %3092 = vperm.xlu0 %3091, %v2981
        %v3093 = vpop.permute.xlu0 %3092
        %3094 = vset.pattern.permute.xlu0 0
        %3095 = vperm.xlu0 %3094, %v2982
        %v3096 = vpop.permute.xlu0 %3095
        %3097 = vset.pattern.permute.xlu0 0
        %3098 = vperm.xlu0 %3097, %v2983
        %v3099 = vpop.permute.xlu0 %3098
        %3100 = vset.pattern.permute.xlu0 0
        %3101 = vperm.xlu0 %3100, %v2984
        %v3102 = vpop.permute.xlu0 %3101
        %3103 = vset.pattern.permute.xlu0 0
        %3104 = vperm.xlu0 %3103, %v2985
        %v3105 = vpop.permute.xlu0 %3104
        %3106 = vset.pattern.permute.xlu0 0
        %3107 = vperm.xlu0 %3106, %v2986
        %v3108 = vpop.permute.xlu0 %3107
        %3109 = vset.pattern.permute.xlu0 0
        %3110 = vperm.xlu0 %3109, %v2987
        %v3111 = vpop.permute.xlu0 %3110
        %3112 = vset.pattern.permute.xlu0 0
        %3113 = vperm.xlu0 %3112, %v2988
        %v3114 = vpop.permute.xlu0 %3113
        %3115 = vset.pattern.permute.xlu0 0
        %3116 = vperm.xlu0 %3115, %v2989
        %v3117 = vpop.permute.xlu0 %3116
        %v3118 = vlaneseq
        %v3119 = vshrl.u32 %v3118, 7
        %v3120 = vsub.s32 %v1338, %v3119
        %v3121 = vrot.slane %v3024, %v3120
        %v3122 = vlaneseq
        %v3123 = vshrl.u32 %v3122, 7
        %v3124 = vsub.s32 %v1343, %v3123
        %v3125 = vrot.slane %v3027, %v3124
        %v3126 = vsel %vm1348, %v3125, %v3121
        %v3127 = vlaneseq
        %v3128 = vshrl.u32 %v3127, 7
        %v3129 = vsub.s32 %v1350, %v3128
        %v3130 = vrot.slane %v3030, %v3129
        %v3131 = vsel %vm1355, %v3130, %v3126
        %v3132 = vlaneseq
        %v3133 = vshrl.u32 %v3132, 7
        %v3134 = vsub.s32 %v1357, %v3133
        %v3135 = vrot.slane %v3033, %v3134
        %v3136 = vsel %vm1362, %v3135, %v3131
        %v3137 = vlaneseq
        %v3138 = vshrl.u32 %v3137, 7
        %v3139 = vsub.s32 %v1364, %v3138
        %v3140 = vrot.slane %v3036, %v3139
        %v3141 = vsel %vm1369, %v3140, %v3136
        %v3142 = vlaneseq
        %v3143 = vshrl.u32 %v3142, 7
        %v3144 = vsub.s32 %v1371, %v3143
        %v3145 = vrot.slane %v3039, %v3144
        %v3146 = vsel %vm1376, %v3145, %v3141
        %v3147 = vlaneseq
        %v3148 = vshrl.u32 %v3147, 7
        %v3149 = vsub.s32 %v1378, %v3148
        %v3150 = vrot.slane %v3042, %v3149
        %v3151 = vsel %vm1383, %v3150, %v3146
        %v3152 = vlaneseq
        %v3153 = vshrl.u32 %v3152, 7
        %v3154 = vsub.s32 %v1385, %v3153
        %v3155 = vrot.slane %v3045, %v3154
        %v3156 = vsel %vm1390, %v3155, %v3151
        %v3157 = vlaneseq
        %v3158 = vshrl.u32 %v3157, 7
        %v3159 = vsub.s32 %v1392, %v3158
        %v3160 = vrot.slane %v3048, %v3159
        %v3161 = vsel %vm1397, %v3160, %v3156
        %v3162 = vlaneseq
        %v3163 = vshrl.u32 %v3162, 7
        %v3164 = vsub.s32 %v1399, %v3163
        %v3165 = vrot.slane %v3051, %v3164
        %v3166 = vsel %vm1404, %v3165, %v3161
        %v3167 = vlaneseq
        %v3168 = vshrl.u32 %v3167, 7
        %v3169 = vsub.s32 %v1406, %v3168
        %v3170 = vrot.slane %v3054, %v3169
        %v3171 = vsel %vm1411, %v3170, %v3166
        %v3172 = vlaneseq
        %v3173 = vshrl.u32 %v3172, 7
        %v3174 = vsub.s32 %v1413, %v3173
        %v3175 = vrot.slane %v3057, %v3174
        %v3176 = vsel %vm1418, %v3175, %v3171
        %v3177 = vlaneseq
        %v3178 = vshrl.u32 %v3177, 7
        %v3179 = vsub.s32 %v1420, %v3178
        %v3180 = vrot.slane %v3060, %v3179
        %v3181 = vsel %vm1425, %v3180, %v3176
        %v3182 = vlaneseq
        %v3183 = vshrl.u32 %v3182, 7
        %v3184 = vsub.s32 %v1427, %v3183
        %v3185 = vrot.slane %v3063, %v3184
        %v3186 = vsel %vm1432, %v3185, %v3181
        %v3187 = vlaneseq
        %v3188 = vshrl.u32 %v3187, 7
        %v3189 = vsub.s32 %v1434, %v3188
        %v3190 = vrot.slane %v3066, %v3189
        %v3191 = vsel %vm1439, %v3190, %v3186
        %v3192 = vlaneseq
        %v3193 = vshrl.u32 %v3192, 7
        %v3194 = vsub.s32 %v1441, %v3193
        %v3195 = vrot.slane %v3069, %v3194
        %v3196 = vsel %vm1446, %v3195, %v3191
        %v3197 = vlaneseq
        %v3198 = vshrl.u32 %v3197, 7
        %v3199 = vsub.s32 %v1338, %v3198
        %v3200 = vrot.slane %v3072, %v3199
        %v3201 = vlaneseq
        %v3202 = vshrl.u32 %v3201, 7
        %v3203 = vsub.s32 %v1343, %v3202
        %v3204 = vrot.slane %v3075, %v3203
        %v3205 = vsel %vm1348, %v3204, %v3200
        %v3206 = vlaneseq
        %v3207 = vshrl.u32 %v3206, 7
        %v3208 = vsub.s32 %v1350, %v3207
        %v3209 = vrot.slane %v3078, %v3208
        %v3210 = vsel %vm1355, %v3209, %v3205
        %v3211 = vlaneseq
        %v3212 = vshrl.u32 %v3211, 7
        %v3213 = vsub.s32 %v1357, %v3212
        %v3214 = vrot.slane %v3081, %v3213
        %v3215 = vsel %vm1362, %v3214, %v3210
        %v3216 = vlaneseq
        %v3217 = vshrl.u32 %v3216, 7
        %v3218 = vsub.s32 %v1364, %v3217
        %v3219 = vrot.slane %v3084, %v3218
        %v3220 = vsel %vm1369, %v3219, %v3215
        %v3221 = vlaneseq
        %v3222 = vshrl.u32 %v3221, 7
        %v3223 = vsub.s32 %v1371, %v3222
        %v3224 = vrot.slane %v3087, %v3223
        %v3225 = vsel %vm1376, %v3224, %v3220
        %v3226 = vlaneseq
        %v3227 = vshrl.u32 %v3226, 7
        %v3228 = vsub.s32 %v1378, %v3227
        %v3229 = vrot.slane %v3090, %v3228
        %v3230 = vsel %vm1383, %v3229, %v3225
        %v3231 = vlaneseq
        %v3232 = vshrl.u32 %v3231, 7
        %v3233 = vsub.s32 %v1385, %v3232
        %v3234 = vrot.slane %v3093, %v3233
        %v3235 = vsel %vm1390, %v3234, %v3230
        %v3236 = vlaneseq
        %v3237 = vshrl.u32 %v3236, 7
        %v3238 = vsub.s32 %v1392, %v3237
        %v3239 = vrot.slane %v3096, %v3238
        %v3240 = vsel %vm1397, %v3239, %v3235
        %v3241 = vlaneseq
        %v3242 = vshrl.u32 %v3241, 7
        %v3243 = vsub.s32 %v1399, %v3242
        %v3244 = vrot.slane %v3099, %v3243
        %v3245 = vsel %vm1404, %v3244, %v3240
        %v3246 = vlaneseq
        %v3247 = vshrl.u32 %v3246, 7
        %v3248 = vsub.s32 %v1406, %v3247
        %v3249 = vrot.slane %v3102, %v3248
        %v3250 = vsel %vm1411, %v3249, %v3245
        %v3251 = vlaneseq
        %v3252 = vshrl.u32 %v3251, 7
        %v3253 = vsub.s32 %v1413, %v3252
        %v3254 = vrot.slane %v3105, %v3253
        %v3255 = vsel %vm1418, %v3254, %v3250
        %v3256 = vlaneseq
        %v3257 = vshrl.u32 %v3256, 7
        %v3258 = vsub.s32 %v1420, %v3257
        %v3259 = vrot.slane %v3108, %v3258
        %v3260 = vsel %vm1425, %v3259, %v3255
        %v3261 = vlaneseq
        %v3262 = vshrl.u32 %v3261, 7
        %v3263 = vsub.s32 %v1427, %v3262
        %v3264 = vrot.slane %v3111, %v3263
        %v3265 = vsel %vm1432, %v3264, %v3260
        %v3266 = vlaneseq
        %v3267 = vshrl.u32 %v3266, 7
        %v3268 = vsub.s32 %v1434, %v3267
        %v3269 = vrot.slane %v3114, %v3268
        %v3270 = vsel %vm1439, %v3269, %v3265
        %v3271 = vlaneseq
        %v3272 = vshrl.u32 %v3271, 7
        %v3273 = vsub.s32 %v1441, %v3272
        %v3274 = vrot.slane %v3117, %v3273
        %v3275 = vsel %vm1446, %v3274, %v3270
        %v3276 = vsel %vm1527, %v3275, %v3196
        %v3278 = vsel %vm1530, %v3276, -inf
        %3279 = vmax.xlane.f32.xlu0 %v3278
        %v3280 = vpop.xlane.xlu0 %3279
        %v3282 = vlaneseq
        %v3283 = vshrl.u32 %v3282, 7
        %v3284 = vsub.s32 0, %v3283
        %v3285 = vrot.slane %v3280, %v3284
        %v3286 = vlaneseq
        %v3287 = vshrl.u32 %v3286, 7
        %v3288 = vsub.s32 1, %v3287
        %v3289 = vrot.slane %v3280, %v3288
        %v3292 = vsub.f32 %v2958, %v3285
        %v3293 = vsub.f32 %v2959, %v3285
        %v3294 = vsub.f32 %v2960, %v3285
        %v3295 = vsub.f32 %v2961, %v3285
        %v3296 = vsub.f32 %v2962, %v3285
        %v3297 = vsub.f32 %v2963, %v3285
        %v3298 = vsub.f32 %v2964, %v3285
        %v3299 = vsub.f32 %v2965, %v3285
        %v3300 = vsub.f32 %v2966, %v3285
        %v3301 = vsub.f32 %v2967, %v3285
        %v3302 = vsub.f32 %v2968, %v3285
        %v3303 = vsub.f32 %v2969, %v3285
        %v3304 = vsub.f32 %v2970, %v3285
        %v3305 = vsub.f32 %v2971, %v3285
        %v3306 = vsub.f32 %v2972, %v3285
        %v3307 = vsub.f32 %v2973, %v3285
        %v3308 = vsub.f32 %v2974, %v3289
        %v3309 = vsub.f32 %v2975, %v3289
        %v3310 = vsub.f32 %v2976, %v3289
        %v3311 = vsub.f32 %v2977, %v3289
        %v3312 = vsub.f32 %v2978, %v3289
        %v3313 = vsub.f32 %v2979, %v3289
        %v3314 = vsub.f32 %v2980, %v3289
        %v3315 = vsub.f32 %v2981, %v3289
        %v3316 = vsub.f32 %v2982, %v3289
        %v3317 = vsub.f32 %v2983, %v3289
        %v3318 = vsub.f32 %v2984, %v3289
        %v3319 = vsub.f32 %v2985, %v3289
        %v3320 = vsub.f32 %v2986, %v3289
        %v3321 = vsub.f32 %v2987, %v3289
        %v3322 = vsub.f32 %v2988, %v3289
        %v3323 = vsub.f32 %v2989, %v3289
        %v3324 = vmul.f32 %v3292, 1.442695
        %v3325 = vpow.pop %v3324
        %v3326 = vmul.f32 %v3293, 1.442695
        %v3327 = vpow.pop %v3326
        %v3328 = vmul.f32 %v3294, 1.442695
        %v3329 = vpow.pop %v3328
        %v3330 = vmul.f32 %v3295, 1.442695
        %v3331 = vpow.pop %v3330
        %v3332 = vmul.f32 %v3296, 1.442695
        %v3333 = vpow.pop %v3332
        %v3334 = vmul.f32 %v3297, 1.442695
        %v3335 = vpow.pop %v3334
        %v3336 = vmul.f32 %v3298, 1.442695
        %v3337 = vpow.pop %v3336
        %v3338 = vmul.f32 %v3299, 1.442695
        %v3339 = vpow.pop %v3338
        %v3340 = vmul.f32 %v3300, 1.442695
        %v3341 = vpow.pop %v3340
        %v3342 = vmul.f32 %v3301, 1.442695
        %v3343 = vpow.pop %v3342
        %v3344 = vmul.f32 %v3302, 1.442695
        %v3345 = vpow.pop %v3344
        %v3346 = vmul.f32 %v3303, 1.442695
        %v3347 = vpow.pop %v3346
        %v3348 = vmul.f32 %v3304, 1.442695
        %v3349 = vpow.pop %v3348
        %v3350 = vmul.f32 %v3305, 1.442695
        %v3351 = vpow.pop %v3350
        %v3352 = vmul.f32 %v3306, 1.442695
        %v3353 = vpow.pop %v3352
        %v3354 = vmul.f32 %v3307, 1.442695
        %v3355 = vpow.pop %v3354
        %v3356 = vmul.f32 %v3308, 1.442695
        %v3357 = vpow.pop %v3356
        %v3358 = vmul.f32 %v3309, 1.442695
        %v3359 = vpow.pop %v3358
        %v3360 = vmul.f32 %v3310, 1.442695
        %v3361 = vpow.pop %v3360
        %v3362 = vmul.f32 %v3311, 1.442695
        %v3363 = vpow.pop %v3362
        %v3364 = vmul.f32 %v3312, 1.442695
        %v3365 = vpow.pop %v3364
        %v3366 = vmul.f32 %v3313, 1.442695
        %v3367 = vpow.pop %v3366
        %v3368 = vmul.f32 %v3314, 1.442695
        %v3369 = vpow.pop %v3368
        %v3370 = vmul.f32 %v3315, 1.442695
        %v3371 = vpow.pop %v3370
        %v3372 = vmul.f32 %v3316, 1.442695
        %v3373 = vpow.pop %v3372
        %v3374 = vmul.f32 %v3317, 1.442695
        %v3375 = vpow.pop %v3374
        %v3376 = vmul.f32 %v3318, 1.442695
        %v3377 = vpow.pop %v3376
        %v3378 = vmul.f32 %v3319, 1.442695
        %v3379 = vpow.pop %v3378
        %v3380 = vmul.f32 %v3320, 1.442695
        %v3381 = vpow.pop %v3380
        %v3382 = vmul.f32 %v3321, 1.442695
        %v3383 = vpow.pop %v3382
        %v3384 = vmul.f32 %v3322, 1.442695
        %v3385 = vpow.pop %v3384
        %v3386 = vmul.f32 %v3323, 1.442695
        %v3387 = vpow.pop %v3386
        %3420 = vset.pattern.permute.xlu0 0
        %3421 = vperm.xlu0 %3420, %v3325
        %v3422 = vpop.permute.xlu0 %3421
        %3423 = vset.pattern.permute.xlu0 0
        %3424 = vperm.xlu0 %3423, %v3327
        %v3425 = vpop.permute.xlu0 %3424
        %3426 = vset.pattern.permute.xlu0 0
        %3427 = vperm.xlu0 %3426, %v3329
        %v3428 = vpop.permute.xlu0 %3427
        %3429 = vset.pattern.permute.xlu0 0
        %3430 = vperm.xlu0 %3429, %v3331
        %v3431 = vpop.permute.xlu0 %3430
        %3432 = vset.pattern.permute.xlu0 0
        %3433 = vperm.xlu0 %3432, %v3333
        %v3434 = vpop.permute.xlu0 %3433
        %3435 = vset.pattern.permute.xlu0 0
        %3436 = vperm.xlu0 %3435, %v3335
        %v3437 = vpop.permute.xlu0 %3436
        %3438 = vset.pattern.permute.xlu0 0
        %3439 = vperm.xlu0 %3438, %v3337
        %v3440 = vpop.permute.xlu0 %3439
        %3441 = vset.pattern.permute.xlu0 0
        %3442 = vperm.xlu0 %3441, %v3339
        %v3443 = vpop.permute.xlu0 %3442
        %3444 = vset.pattern.permute.xlu0 0
        %3445 = vperm.xlu0 %3444, %v3341
        %v3446 = vpop.permute.xlu0 %3445
        %3447 = vset.pattern.permute.xlu0 0
        %3448 = vperm.xlu0 %3447, %v3343
        %v3449 = vpop.permute.xlu0 %3448
        %3450 = vset.pattern.permute.xlu0 0
        %3451 = vperm.xlu0 %3450, %v3345
        %v3452 = vpop.permute.xlu0 %3451
        %3453 = vset.pattern.permute.xlu0 0
        %3454 = vperm.xlu0 %3453, %v3347
        %v3455 = vpop.permute.xlu0 %3454
        %3456 = vset.pattern.permute.xlu0 0
        %3457 = vperm.xlu0 %3456, %v3349
        %v3458 = vpop.permute.xlu0 %3457
        %3459 = vset.pattern.permute.xlu0 0
        %3460 = vperm.xlu0 %3459, %v3351
        %v3461 = vpop.permute.xlu0 %3460
        %3462 = vset.pattern.permute.xlu0 0
        %3463 = vperm.xlu0 %3462, %v3353
        %v3464 = vpop.permute.xlu0 %3463
        %3465 = vset.pattern.permute.xlu0 0
        %3466 = vperm.xlu0 %3465, %v3355
        %v3467 = vpop.permute.xlu0 %3466
        %3468 = vset.pattern.permute.xlu0 0
        %3469 = vperm.xlu0 %3468, %v3357
        %v3470 = vpop.permute.xlu0 %3469
        %3471 = vset.pattern.permute.xlu0 0
        %3472 = vperm.xlu0 %3471, %v3359
        %v3473 = vpop.permute.xlu0 %3472
        %3474 = vset.pattern.permute.xlu0 0
        %3475 = vperm.xlu0 %3474, %v3361
        %v3476 = vpop.permute.xlu0 %3475
        %3477 = vset.pattern.permute.xlu0 0
        %3478 = vperm.xlu0 %3477, %v3363
        %v3479 = vpop.permute.xlu0 %3478
        %3480 = vset.pattern.permute.xlu0 0
        %3481 = vperm.xlu0 %3480, %v3365
        %v3482 = vpop.permute.xlu0 %3481
        %3483 = vset.pattern.permute.xlu0 0
        %3484 = vperm.xlu0 %3483, %v3367
        %v3485 = vpop.permute.xlu0 %3484
        %3486 = vset.pattern.permute.xlu0 0
        %3487 = vperm.xlu0 %3486, %v3369
        %v3488 = vpop.permute.xlu0 %3487
        %3489 = vset.pattern.permute.xlu0 0
        %3490 = vperm.xlu0 %3489, %v3371
        %v3491 = vpop.permute.xlu0 %3490
        %3492 = vset.pattern.permute.xlu0 0
        %3493 = vperm.xlu0 %3492, %v3373
        %v3494 = vpop.permute.xlu0 %3493
        %3495 = vset.pattern.permute.xlu0 0
        %3496 = vperm.xlu0 %3495, %v3375
        %v3497 = vpop.permute.xlu0 %3496
        %3498 = vset.pattern.permute.xlu0 0
        %3499 = vperm.xlu0 %3498, %v3377
        %v3500 = vpop.permute.xlu0 %3499
        %3501 = vset.pattern.permute.xlu0 0
        %3502 = vperm.xlu0 %3501, %v3379
        %v3503 = vpop.permute.xlu0 %3502
        %3504 = vset.pattern.permute.xlu0 0
        %3505 = vperm.xlu0 %3504, %v3381
        %v3506 = vpop.permute.xlu0 %3505
        %3507 = vset.pattern.permute.xlu0 0
        %3508 = vperm.xlu0 %3507, %v3383
        %v3509 = vpop.permute.xlu0 %3508
        %3510 = vset.pattern.permute.xlu0 0
        %3511 = vperm.xlu0 %3510, %v3385
        %v3512 = vpop.permute.xlu0 %3511
        %3513 = vset.pattern.permute.xlu0 0
        %3514 = vperm.xlu0 %3513, %v3387
        %v3515 = vpop.permute.xlu0 %3514
        %v3516 = vlaneseq
        %v3517 = vshrl.u32 %v3516, 7
        %v3518 = vsub.s32 %v1338, %v3517
        %v3519 = vrot.slane %v3422, %v3518
        %v3520 = vlaneseq
        %v3521 = vshrl.u32 %v3520, 7
        %v3522 = vsub.s32 %v1343, %v3521
        %v3523 = vrot.slane %v3425, %v3522
        %v3524 = vsel %vm1348, %v3523, %v3519
        %v3525 = vlaneseq
        %v3526 = vshrl.u32 %v3525, 7
        %v3527 = vsub.s32 %v1350, %v3526
        %v3528 = vrot.slane %v3428, %v3527
        %v3529 = vsel %vm1355, %v3528, %v3524
        %v3530 = vlaneseq
        %v3531 = vshrl.u32 %v3530, 7
        %v3532 = vsub.s32 %v1357, %v3531
        %v3533 = vrot.slane %v3431, %v3532
        %v3534 = vsel %vm1362, %v3533, %v3529
        %v3535 = vlaneseq
        %v3536 = vshrl.u32 %v3535, 7
        %v3537 = vsub.s32 %v1364, %v3536
        %v3538 = vrot.slane %v3434, %v3537
        %v3539 = vsel %vm1369, %v3538, %v3534
        %v3540 = vlaneseq
        %v3541 = vshrl.u32 %v3540, 7
        %v3542 = vsub.s32 %v1371, %v3541
        %v3543 = vrot.slane %v3437, %v3542
        %v3544 = vsel %vm1376, %v3543, %v3539
        %v3545 = vlaneseq
        %v3546 = vshrl.u32 %v3545, 7
        %v3547 = vsub.s32 %v1378, %v3546
        %v3548 = vrot.slane %v3440, %v3547
        %v3549 = vsel %vm1383, %v3548, %v3544
        %v3550 = vlaneseq
        %v3551 = vshrl.u32 %v3550, 7
        %v3552 = vsub.s32 %v1385, %v3551
        %v3553 = vrot.slane %v3443, %v3552
        %v3554 = vsel %vm1390, %v3553, %v3549
        %v3555 = vlaneseq
        %v3556 = vshrl.u32 %v3555, 7
        %v3557 = vsub.s32 %v1392, %v3556
        %v3558 = vrot.slane %v3446, %v3557
        %v3559 = vsel %vm1397, %v3558, %v3554
        %v3560 = vlaneseq
        %v3561 = vshrl.u32 %v3560, 7
        %v3562 = vsub.s32 %v1399, %v3561
        %v3563 = vrot.slane %v3449, %v3562
        %v3564 = vsel %vm1404, %v3563, %v3559
        %v3565 = vlaneseq
        %v3566 = vshrl.u32 %v3565, 7
        %v3567 = vsub.s32 %v1406, %v3566
        %v3568 = vrot.slane %v3452, %v3567
        %v3569 = vsel %vm1411, %v3568, %v3564
        %v3570 = vlaneseq
        %v3571 = vshrl.u32 %v3570, 7
        %v3572 = vsub.s32 %v1413, %v3571
        %v3573 = vrot.slane %v3455, %v3572
        %v3574 = vsel %vm1418, %v3573, %v3569
        %v3575 = vlaneseq
        %v3576 = vshrl.u32 %v3575, 7
        %v3577 = vsub.s32 %v1420, %v3576
        %v3578 = vrot.slane %v3458, %v3577
        %v3579 = vsel %vm1425, %v3578, %v3574
        %v3580 = vlaneseq
        %v3581 = vshrl.u32 %v3580, 7
        %v3582 = vsub.s32 %v1427, %v3581
        %v3583 = vrot.slane %v3461, %v3582
        %v3584 = vsel %vm1432, %v3583, %v3579
        %v3585 = vlaneseq
        %v3586 = vshrl.u32 %v3585, 7
        %v3587 = vsub.s32 %v1434, %v3586
        %v3588 = vrot.slane %v3464, %v3587
        %v3589 = vsel %vm1439, %v3588, %v3584
        %v3590 = vlaneseq
        %v3591 = vshrl.u32 %v3590, 7
        %v3592 = vsub.s32 %v1441, %v3591
        %v3593 = vrot.slane %v3467, %v3592
        %v3594 = vsel %vm1446, %v3593, %v3589
        %v3595 = vlaneseq
        %v3596 = vshrl.u32 %v3595, 7
        %v3597 = vsub.s32 %v1338, %v3596
        %v3598 = vrot.slane %v3470, %v3597
        %v3599 = vlaneseq
        %v3600 = vshrl.u32 %v3599, 7
        %v3601 = vsub.s32 %v1343, %v3600
        %v3602 = vrot.slane %v3473, %v3601
        %v3603 = vsel %vm1348, %v3602, %v3598
        %v3604 = vlaneseq
        %v3605 = vshrl.u32 %v3604, 7
        %v3606 = vsub.s32 %v1350, %v3605
        %v3607 = vrot.slane %v3476, %v3606
        %v3608 = vsel %vm1355, %v3607, %v3603
        %v3609 = vlaneseq
        %v3610 = vshrl.u32 %v3609, 7
        %v3611 = vsub.s32 %v1357, %v3610
        %v3612 = vrot.slane %v3479, %v3611
        %v3613 = vsel %vm1362, %v3612, %v3608
        %v3614 = vlaneseq
        %v3615 = vshrl.u32 %v3614, 7
        %v3616 = vsub.s32 %v1364, %v3615
        %v3617 = vrot.slane %v3482, %v3616
        %v3618 = vsel %vm1369, %v3617, %v3613
        %v3619 = vlaneseq
        %v3620 = vshrl.u32 %v3619, 7
        %v3621 = vsub.s32 %v1371, %v3620
        %v3622 = vrot.slane %v3485, %v3621
        %v3623 = vsel %vm1376, %v3622, %v3618
        %v3624 = vlaneseq
        %v3625 = vshrl.u32 %v3624, 7
        %v3626 = vsub.s32 %v1378, %v3625
        %v3627 = vrot.slane %v3488, %v3626
        %v3628 = vsel %vm1383, %v3627, %v3623
        %v3629 = vlaneseq
        %v3630 = vshrl.u32 %v3629, 7
        %v3631 = vsub.s32 %v1385, %v3630
        %v3632 = vrot.slane %v3491, %v3631
        %v3633 = vsel %vm1390, %v3632, %v3628
        %v3634 = vlaneseq
        %v3635 = vshrl.u32 %v3634, 7
        %v3636 = vsub.s32 %v1392, %v3635
        %v3637 = vrot.slane %v3494, %v3636
        %v3638 = vsel %vm1397, %v3637, %v3633
        %v3639 = vlaneseq
        %v3640 = vshrl.u32 %v3639, 7
        %v3641 = vsub.s32 %v1399, %v3640
        %v3642 = vrot.slane %v3497, %v3641
        %v3643 = vsel %vm1404, %v3642, %v3638
        %v3644 = vlaneseq
        %v3645 = vshrl.u32 %v3644, 7
        %v3646 = vsub.s32 %v1406, %v3645
        %v3647 = vrot.slane %v3500, %v3646
        %v3648 = vsel %vm1411, %v3647, %v3643
        %v3649 = vlaneseq
        %v3650 = vshrl.u32 %v3649, 7
        %v3651 = vsub.s32 %v1413, %v3650
        %v3652 = vrot.slane %v3503, %v3651
        %v3653 = vsel %vm1418, %v3652, %v3648
        %v3654 = vlaneseq
        %v3655 = vshrl.u32 %v3654, 7
        %v3656 = vsub.s32 %v1420, %v3655
        %v3657 = vrot.slane %v3506, %v3656
        %v3658 = vsel %vm1425, %v3657, %v3653
        %v3659 = vlaneseq
        %v3660 = vshrl.u32 %v3659, 7
        %v3661 = vsub.s32 %v1427, %v3660
        %v3662 = vrot.slane %v3509, %v3661
        %v3663 = vsel %vm1432, %v3662, %v3658
        %v3664 = vlaneseq
        %v3665 = vshrl.u32 %v3664, 7
        %v3666 = vsub.s32 %v1434, %v3665
        %v3667 = vrot.slane %v3512, %v3666
        %v3668 = vsel %vm1439, %v3667, %v3663
        %v3669 = vlaneseq
        %v3670 = vshrl.u32 %v3669, 7
        %v3671 = vsub.s32 %v1441, %v3670
        %v3672 = vrot.slane %v3515, %v3671
        %v3673 = vsel %vm1446, %v3672, %v3668
        %v3674 = vsel %vm1527, %v3673, %v3594
        %v3676 = vsel %vm1530, %v3674, 0.0
        %3677 = vadd.xlane.f32.xlu0 %v3676
        %v3678 = vpop.xlane.xlu0 %3677
        %v3679 = vrcp.pop %v3678
        %v3681 = vlaneseq
        %v3682 = vshrl.u32 %v3681, 7
        %v3683 = vsub.s32 0, %v3682
        %v3684 = vrot.slane %v3679, %v3683
        %v3685 = vlaneseq
        %v3686 = vshrl.u32 %v3685, 7
        %v3687 = vsub.s32 1, %v3686
        %v3688 = vrot.slane %v3679, %v3687
        %v3691 = vmul.f32 %v3325, %v3684
        %v3692 = vmul.f32 %v3327, %v3684
        %v3693 = vmul.f32 %v3329, %v3684
        %v3694 = vmul.f32 %v3331, %v3684
        %v3695 = vmul.f32 %v3333, %v3684
        %v3696 = vmul.f32 %v3335, %v3684
        %v3697 = vmul.f32 %v3337, %v3684
        %v3698 = vmul.f32 %v3339, %v3684
        %v3699 = vmul.f32 %v3341, %v3684
        %v3700 = vmul.f32 %v3343, %v3684
        %v3701 = vmul.f32 %v3345, %v3684
        %v3702 = vmul.f32 %v3347, %v3684
        %v3703 = vmul.f32 %v3349, %v3684
        %v3704 = vmul.f32 %v3351, %v3684
        %v3705 = vmul.f32 %v3353, %v3684
        %v3706 = vmul.f32 %v3355, %v3684
        %v3707 = vmul.f32 %v3357, %v3688
        %v3708 = vmul.f32 %v3359, %v3688
        %v3709 = vmul.f32 %v3361, %v3688
        %v3710 = vmul.f32 %v3363, %v3688
        %v3711 = vmul.f32 %v3365, %v3688
        %v3712 = vmul.f32 %v3367, %v3688
        %v3713 = vmul.f32 %v3369, %v3688
        %v3714 = vmul.f32 %v3371, %v3688
        %v3715 = vmul.f32 %v3373, %v3688
        %v3716 = vmul.f32 %v3375, %v3688
        %v3717 = vmul.f32 %v3377, %v3688
        %v3718 = vmul.f32 %v3379, %v3688
        %v3719 = vmul.f32 %v3381, %v3688
        %v3720 = vmul.f32 %v3383, %v3688
        %v3721 = vmul.f32 %v3385, %v3688
        %v3722 = vmul.f32 %v3387, %v3688
        %v3723 = vld [vmem:[%s1] sm:$0xff]
        %v3724 = vld [vmem:[%s1 + $0x8] sm:$0xff]
        %v3725 = vld [vmem:[%s1 + $0x10] sm:$0xff]
        %v3726 = vld [vmem:[%s1 + $0x18] sm:$0xff]
        %v3727 = vld [vmem:[%s1 + $0x20] sm:$0xff]
        %v3728 = vld [vmem:[%s1 + $0x28] sm:$0xff]
        %v3729 = vld [vmem:[%s1 + $0x30] sm:$0xff]
        %v3730 = vld [vmem:[%s1 + $0x38] sm:$0xff]
        %v3731 = vld [vmem:[%s1 + $0x40] sm:$0xff]
        %v3732 = vld [vmem:[%s1 + $0x48] sm:$0xff]
        %v3733 = vld [vmem:[%s1 + $0x50] sm:$0xff]
        %v3734 = vld [vmem:[%s1 + $0x58] sm:$0xff]
        %v3735 = vld [vmem:[%s1 + $0x60] sm:$0xff]
        %v3736 = vld [vmem:[%s1 + $0x68] sm:$0xff]
        %v3737 = vld [vmem:[%s1 + $0x70] sm:$0xff]
        %v3738 = vld [vmem:[%s1 + $0x78] sm:$0xff]
        %v3739 = vld [vmem:[%s1 + $0x80] sm:$0xff]
        %v3740 = vld [vmem:[%s1 + $0x88] sm:$0xff]
        %v3741 = vld [vmem:[%s1 + $0x90] sm:$0xff]
        %v3742 = vld [vmem:[%s1 + $0x98] sm:$0xff]
        %v3743 = vld [vmem:[%s1 + $0xa0] sm:$0xff]
        %v3744 = vld [vmem:[%s1 + $0xa8] sm:$0xff]
        %v3745 = vld [vmem:[%s1 + $0xb0] sm:$0xff]
        %v3746 = vld [vmem:[%s1 + $0xb8] sm:$0xff]
        %v3747 = vld [vmem:[%s1 + $0xc0] sm:$0xff]
        %v3748 = vld [vmem:[%s1 + $0xc8] sm:$0xff]
        %v3749 = vld [vmem:[%s1 + $0xd0] sm:$0xff]
        %v3750 = vld [vmem:[%s1 + $0xd8] sm:$0xff]
        %v3751 = vld [vmem:[%s1 + $0xe0] sm:$0xff]
        %v3752 = vld [vmem:[%s1 + $0xe8] sm:$0xff]
        %v3753 = vld [vmem:[%s1 + $0xf0] sm:$0xff]
        %v3754 = vld [vmem:[%s1 + $0xf8] sm:$0xff]
        %3756 = vset.pattern.permute.xlu0 0
        %3757 = vperm.xlu0 %3756, %v3691
        %v3758 = vpop.permute.xlu0 %3757
        %3761 = vset.pattern.permute.xlu0 0
        %3762 = vperm.xlu0 %3761, %v3692
        %v3763 = vpop.permute.xlu0 %3762
        %3766 = vset.pattern.permute.xlu0 0
        %3767 = vperm.xlu0 %3766, %v3693
        %v3768 = vpop.permute.xlu0 %3767
        %3771 = vset.pattern.permute.xlu0 0
        %3772 = vperm.xlu0 %3771, %v3694
        %v3773 = vpop.permute.xlu0 %3772
        %3776 = vset.pattern.permute.xlu0 0
        %3777 = vperm.xlu0 %3776, %v3695
        %v3778 = vpop.permute.xlu0 %3777
        %3781 = vset.pattern.permute.xlu0 0
        %3782 = vperm.xlu0 %3781, %v3696
        %v3783 = vpop.permute.xlu0 %3782
        %3786 = vset.pattern.permute.xlu0 0
        %3787 = vperm.xlu0 %3786, %v3697
        %v3788 = vpop.permute.xlu0 %3787
        %3791 = vset.pattern.permute.xlu0 0
        %3792 = vperm.xlu0 %3791, %v3698
        %v3793 = vpop.permute.xlu0 %3792
        %3796 = vset.pattern.permute.xlu0 0
        %3797 = vperm.xlu0 %3796, %v3699
        %v3798 = vpop.permute.xlu0 %3797
        %3801 = vset.pattern.permute.xlu0 0
        %3802 = vperm.xlu0 %3801, %v3700
        %v3803 = vpop.permute.xlu0 %3802
        %3806 = vset.pattern.permute.xlu0 0
        %3807 = vperm.xlu0 %3806, %v3701
        %v3808 = vpop.permute.xlu0 %3807
        %3811 = vset.pattern.permute.xlu0 0
        %3812 = vperm.xlu0 %3811, %v3702
        %v3813 = vpop.permute.xlu0 %3812
        %3816 = vset.pattern.permute.xlu0 0
        %3817 = vperm.xlu0 %3816, %v3703
        %v3818 = vpop.permute.xlu0 %3817
        %3821 = vset.pattern.permute.xlu0 0
        %3822 = vperm.xlu0 %3821, %v3704
        %v3823 = vpop.permute.xlu0 %3822
        %3826 = vset.pattern.permute.xlu0 0
        %3827 = vperm.xlu0 %3826, %v3705
        %v3828 = vpop.permute.xlu0 %3827
        %3831 = vset.pattern.permute.xlu0 0
        %3832 = vperm.xlu0 %3831, %v3706
        %v3833 = vpop.permute.xlu0 %3832
        %3836 = vset.pattern.permute.xlu0 0
        %3837 = vperm.xlu0 %3836, %v3707
        %v3838 = vpop.permute.xlu0 %3837
        %3841 = vset.pattern.permute.xlu0 0
        %3842 = vperm.xlu0 %3841, %v3708
        %v3843 = vpop.permute.xlu0 %3842
        %3846 = vset.pattern.permute.xlu0 0
        %3847 = vperm.xlu0 %3846, %v3709
        %v3848 = vpop.permute.xlu0 %3847
        %3851 = vset.pattern.permute.xlu0 0
        %3852 = vperm.xlu0 %3851, %v3710
        %v3853 = vpop.permute.xlu0 %3852
        %3856 = vset.pattern.permute.xlu0 0
        %3857 = vperm.xlu0 %3856, %v3711
        %v3858 = vpop.permute.xlu0 %3857
        %3861 = vset.pattern.permute.xlu0 0
        %3862 = vperm.xlu0 %3861, %v3712
        %v3863 = vpop.permute.xlu0 %3862
        %3866 = vset.pattern.permute.xlu0 0
        %3867 = vperm.xlu0 %3866, %v3713
        %v3868 = vpop.permute.xlu0 %3867
        %3871 = vset.pattern.permute.xlu0 0
        %3872 = vperm.xlu0 %3871, %v3714
        %v3873 = vpop.permute.xlu0 %3872
        %3876 = vset.pattern.permute.xlu0 0
        %3877 = vperm.xlu0 %3876, %v3715
        %v3878 = vpop.permute.xlu0 %3877
        %3881 = vset.pattern.permute.xlu0 0
        %3882 = vperm.xlu0 %3881, %v3716
        %v3883 = vpop.permute.xlu0 %3882
        %3886 = vset.pattern.permute.xlu0 0
        %3887 = vperm.xlu0 %3886, %v3717
        %v3888 = vpop.permute.xlu0 %3887
        %3891 = vset.pattern.permute.xlu0 0
        %3892 = vperm.xlu0 %3891, %v3718
        %v3893 = vpop.permute.xlu0 %3892
        %3896 = vset.pattern.permute.xlu0 0
        %3897 = vperm.xlu0 %3896, %v3719
        %v3898 = vpop.permute.xlu0 %3897
        %3901 = vset.pattern.permute.xlu0 0
        %3902 = vperm.xlu0 %3901, %v3720
        %v3903 = vpop.permute.xlu0 %3902
        %3906 = vset.pattern.permute.xlu0 0
        %3907 = vperm.xlu0 %3906, %v3721
        %v3908 = vpop.permute.xlu0 %3907
        %3911 = vset.pattern.permute.xlu0 0
        %3912 = vperm.xlu0 %3911, %v3722
        %v3913 = vpop.permute.xlu0 %3912
        %v3915 = vmul.f32 %v3758, %v3723
        %v3916 = vmul.f32 %v3763, %v3724
        %v3917 = vmul.f32 %v3768, %v3725
        %v3918 = vmul.f32 %v3773, %v3726
        %v3919 = vmul.f32 %v3778, %v3727
        %v3920 = vmul.f32 %v3783, %v3728
        %v3921 = vmul.f32 %v3788, %v3729
        %v3922 = vmul.f32 %v3793, %v3730
        %v3923 = vmul.f32 %v3798, %v3731
        %v3924 = vmul.f32 %v3803, %v3732
        %v3925 = vmul.f32 %v3808, %v3733
        %v3926 = vmul.f32 %v3813, %v3734
        %v3927 = vmul.f32 %v3818, %v3735
        %v3928 = vmul.f32 %v3823, %v3736
        %v3929 = vmul.f32 %v3828, %v3737
        %v3930 = vmul.f32 %v3833, %v3738
        %v3931 = vmul.f32 %v3838, %v3739
        %v3932 = vmul.f32 %v3843, %v3740
        %v3933 = vmul.f32 %v3848, %v3741
        %v3934 = vmul.f32 %v3853, %v3742
        %v3935 = vmul.f32 %v3858, %v3743
        %v3936 = vmul.f32 %v3863, %v3744
        %v3937 = vmul.f32 %v3868, %v3745
        %v3938 = vmul.f32 %v3873, %v3746
        %v3939 = vmul.f32 %v3878, %v3747
        %v3940 = vmul.f32 %v3883, %v3748
        %v3941 = vmul.f32 %v3888, %v3749
        %v3942 = vmul.f32 %v3893, %v3750
        %v3943 = vmul.f32 %v3898, %v3751
        %v3944 = vmul.f32 %v3903, %v3752
        %v3945 = vmul.f32 %v3908, %v3753
        %v3946 = vmul.f32 %v3913, %v3754
        %v3947 = vsel %vm481, %v3915, 0.0
        %v3948 = vsel %vm481, %v3916, 0.0
        %v3949 = vadd.f32 %v3947, %v3948
        %v3950 = vsel %vm481, %v3917, 0.0
        %v3951 = vadd.f32 %v3949, %v3950
        %v3952 = vsel %vm481, %v3918, 0.0
        %v3953 = vadd.f32 %v3951, %v3952
        %v3954 = vsel %vm481, %v3919, 0.0
        %v3955 = vadd.f32 %v3953, %v3954
        %v3956 = vsel %vm481, %v3920, 0.0
        %v3957 = vadd.f32 %v3955, %v3956
        %v3958 = vsel %vm481, %v3921, 0.0
        %v3959 = vadd.f32 %v3957, %v3958
        %v3960 = vsel %vm481, %v3922, 0.0
        %v3961 = vadd.f32 %v3959, %v3960
        %v3962 = vsel %vm481, %v3923, 0.0
        %v3963 = vadd.f32 %v3961, %v3962
        %v3964 = vsel %vm481, %v3924, 0.0
        %v3965 = vadd.f32 %v3963, %v3964
        %v3966 = vsel %vm481, %v3925, 0.0
        %v3967 = vadd.f32 %v3965, %v3966
        %v3968 = vsel %vm481, %v3926, 0.0
        %v3969 = vadd.f32 %v3967, %v3968
        %v3970 = vsel %vm481, %v3927, 0.0
        %v3971 = vadd.f32 %v3969, %v3970
        %v3972 = vsel %vm481, %v3928, 0.0
        %v3973 = vadd.f32 %v3971, %v3972
        %v3974 = vsel %vm481, %v3929, 0.0
        %v3975 = vadd.f32 %v3973, %v3974
        %v3976 = vsel %vm481, %v3930, 0.0
        %v3977 = vadd.f32 %v3975, %v3976
        %v3978 = vrot.slane %v3977, 4
        %v3979 = vadd.f32 %v3977, %v3978
        %v3980 = vrot.slane %v3979, 2
        %v3981 = vadd.f32 %v3979, %v3980
        %v3982 = vrot.slane %v3981, 1
        %v3983 = vadd.f32 %v3981, %v3982
        %v3984 = vsel %vm481, %v3931, 0.0
        %v3985 = vsel %vm481, %v3932, 0.0
        %v3986 = vadd.f32 %v3984, %v3985
        %v3987 = vsel %vm481, %v3933, 0.0
        %v3988 = vadd.f32 %v3986, %v3987
        %v3989 = vsel %vm481, %v3934, 0.0
        %v3990 = vadd.f32 %v3988, %v3989
        %v3991 = vsel %vm481, %v3935, 0.0
        %v3992 = vadd.f32 %v3990, %v3991
        %v3993 = vsel %vm481, %v3936, 0.0
        %v3994 = vadd.f32 %v3992, %v3993
        %v3995 = vsel %vm481, %v3937, 0.0
        %v3996 = vadd.f32 %v3994, %v3995
        %v3997 = vsel %vm481, %v3938, 0.0
        %v3998 = vadd.f32 %v3996, %v3997
        %v3999 = vsel %vm481, %v3939, 0.0
        %v4000 = vadd.f32 %v3998, %v3999
        %v4001 = vsel %vm481, %v3940, 0.0
        %v4002 = vadd.f32 %v4000, %v4001
        %v4003 = vsel %vm481, %v3941, 0.0
        %v4004 = vadd.f32 %v4002, %v4003
        %v4005 = vsel %vm481, %v3942, 0.0
        %v4006 = vadd.f32 %v4004, %v4005
        %v4007 = vsel %vm481, %v3943, 0.0
        %v4008 = vadd.f32 %v4006, %v4007
        %v4009 = vsel %vm481, %v3944, 0.0
        %v4010 = vadd.f32 %v4008, %v4009
        %v4011 = vsel %vm481, %v3945, 0.0
        %v4012 = vadd.f32 %v4010, %v4011
        %v4013 = vsel %vm481, %v3946, 0.0
        %v4014 = vadd.f32 %v4012, %v4013
        %v4015 = vrot.slane %v4014, 4
        %v4016 = vadd.f32 %v4014, %v4015
        %v4017 = vrot.slane %v4016, 2
        %v4018 = vadd.f32 %v4016, %v4017
        %v4019 = vrot.slane %v4018, 1
        %v4020 = vadd.f32 %v4018, %v4019
        %s4022 = scalar_lea.vmem %s438, 2 [#allocation4]
        %4023 = vst.msk [vmem:[%s4022] sm:$0x3] %vm2275, %v2628
        %v4026 = vsel %vm1527, %v4020, %v3983
        %s4028 = scalar_lea.vmem %s445, 2 [#allocation6]
        %4029 = vst.msk [vmem:[%s4028] sm:$0x3] %vm2275, %v4026
        %v4030 = vlaneseq
        %v4031 = vshrl.u32 %v4030, 7
        %v4032 = vsub.s32 %v1338, %v4031
        %v4033 = vrot.slane %v3758, %v4032
        %v4034 = vlaneseq
        %v4035 = vshrl.u32 %v4034, 7
        %v4036 = vsub.s32 %v1343, %v4035
        %v4037 = vrot.slane %v3763, %v4036
        %v4038 = vsel %vm1348, %v4037, %v4033
        %v4039 = vlaneseq
        %v4040 = vshrl.u32 %v4039, 7
        %v4041 = vsub.s32 %v1350, %v4040
        %v4042 = vrot.slane %v3768, %v4041
        %v4043 = vsel %vm1355, %v4042, %v4038
        %v4044 = vlaneseq
        %v4045 = vshrl.u32 %v4044, 7
        %v4046 = vsub.s32 %v1357, %v4045
        %v4047 = vrot.slane %v3773, %v4046
        %v4048 = vsel %vm1362, %v4047, %v4043
        %v4049 = vlaneseq
        %v4050 = vshrl.u32 %v4049, 7
        %v4051 = vsub.s32 %v1364, %v4050
        %v4052 = vrot.slane %v3778, %v4051
        %v4053 = vsel %vm1369, %v4052, %v4048
        %v4054 = vlaneseq
        %v4055 = vshrl.u32 %v4054, 7
        %v4056 = vsub.s32 %v1371, %v4055
        %v4057 = vrot.slane %v3783, %v4056
        %v4058 = vsel %vm1376, %v4057, %v4053
        %v4059 = vlaneseq
        %v4060 = vshrl.u32 %v4059, 7
        %v4061 = vsub.s32 %v1378, %v4060
        %v4062 = vrot.slane %v3788, %v4061
        %v4063 = vsel %vm1383, %v4062, %v4058
        %v4064 = vlaneseq
        %v4065 = vshrl.u32 %v4064, 7
        %v4066 = vsub.s32 %v1385, %v4065
        %v4067 = vrot.slane %v3793, %v4066
        %v4068 = vsel %vm1390, %v4067, %v4063
        %v4069 = vlaneseq
        %v4070 = vshrl.u32 %v4069, 7
        %v4071 = vsub.s32 %v1392, %v4070
        %v4072 = vrot.slane %v3798, %v4071
        %v4073 = vsel %vm1397, %v4072, %v4068
        %v4074 = vlaneseq
        %v4075 = vshrl.u32 %v4074, 7
        %v4076 = vsub.s32 %v1399, %v4075
        %v4077 = vrot.slane %v3803, %v4076
        %v4078 = vsel %vm1404, %v4077, %v4073
        %v4079 = vlaneseq
        %v4080 = vshrl.u32 %v4079, 7
        %v4081 = vsub.s32 %v1406, %v4080
        %v4082 = vrot.slane %v3808, %v4081
        %v4083 = vsel %vm1411, %v4082, %v4078
        %v4084 = vlaneseq
        %v4085 = vshrl.u32 %v4084, 7
        %v4086 = vsub.s32 %v1413, %v4085
        %v4087 = vrot.slane %v3813, %v4086
        %v4088 = vsel %vm1418, %v4087, %v4083
        %v4089 = vlaneseq
        %v4090 = vshrl.u32 %v4089, 7
        %v4091 = vsub.s32 %v1420, %v4090
        %v4092 = vrot.slane %v3818, %v4091
        %v4093 = vsel %vm1425, %v4092, %v4088
        %v4094 = vlaneseq
        %v4095 = vshrl.u32 %v4094, 7
        %v4096 = vsub.s32 %v1427, %v4095
        %v4097 = vrot.slane %v3823, %v4096
        %v4098 = vsel %vm1432, %v4097, %v4093
        %v4099 = vlaneseq
        %v4100 = vshrl.u32 %v4099, 7
        %v4101 = vsub.s32 %v1434, %v4100
        %v4102 = vrot.slane %v3828, %v4101
        %v4103 = vsel %vm1439, %v4102, %v4098
        %v4104 = vlaneseq
        %v4105 = vshrl.u32 %v4104, 7
        %v4106 = vsub.s32 %v1441, %v4105
        %v4107 = vrot.slane %v3833, %v4106
        %v4108 = vsel %vm1446, %v4107, %v4103
        %v4109 = vlaneseq
        %v4110 = vshrl.u32 %v4109, 7
        %v4111 = vsub.s32 %v1338, %v4110
        %v4112 = vrot.slane %v3838, %v4111
        %v4113 = vlaneseq
        %v4114 = vshrl.u32 %v4113, 7
        %v4115 = vsub.s32 %v1343, %v4114
        %v4116 = vrot.slane %v3843, %v4115
        %v4117 = vsel %vm1348, %v4116, %v4112
        %v4118 = vlaneseq
        %v4119 = vshrl.u32 %v4118, 7
        %v4120 = vsub.s32 %v1350, %v4119
        %v4121 = vrot.slane %v3848, %v4120
        %v4122 = vsel %vm1355, %v4121, %v4117
        %v4123 = vlaneseq
        %v4124 = vshrl.u32 %v4123, 7
        %v4125 = vsub.s32 %v1357, %v4124
        %v4126 = vrot.slane %v3853, %v4125
        %v4127 = vsel %vm1362, %v4126, %v4122
        %v4128 = vlaneseq
        %v4129 = vshrl.u32 %v4128, 7
        %v4130 = vsub.s32 %v1364, %v4129
        %v4131 = vrot.slane %v3858, %v4130
        %v4132 = vsel %vm1369, %v4131, %v4127
        %v4133 = vlaneseq
        %v4134 = vshrl.u32 %v4133, 7
        %v4135 = vsub.s32 %v1371, %v4134
        %v4136 = vrot.slane %v3863, %v4135
        %v4137 = vsel %vm1376, %v4136, %v4132
        %v4138 = vlaneseq
        %v4139 = vshrl.u32 %v4138, 7
        %v4140 = vsub.s32 %v1378, %v4139
        %v4141 = vrot.slane %v3868, %v4140
        %v4142 = vsel %vm1383, %v4141, %v4137
        %v4143 = vlaneseq
        %v4144 = vshrl.u32 %v4143, 7
        %v4145 = vsub.s32 %v1385, %v4144
        %v4146 = vrot.slane %v3873, %v4145
        %v4147 = vsel %vm1390, %v4146, %v4142
        %v4148 = vlaneseq
        %v4149 = vshrl.u32 %v4148, 7
        %v4150 = vsub.s32 %v1392, %v4149
        %v4151 = vrot.slane %v3878, %v4150
        %v4152 = vsel %vm1397, %v4151, %v4147
        %v4153 = vlaneseq
        %v4154 = vshrl.u32 %v4153, 7
        %v4155 = vsub.s32 %v1399, %v4154
        %v4156 = vrot.slane %v3883, %v4155
        %v4157 = vsel %vm1404, %v4156, %v4152
        %v4158 = vlaneseq
        %v4159 = vshrl.u32 %v4158, 7
        %v4160 = vsub.s32 %v1406, %v4159
        %v4161 = vrot.slane %v3888, %v4160
        %v4162 = vsel %vm1411, %v4161, %v4157
        %v4163 = vlaneseq
        %v4164 = vshrl.u32 %v4163, 7
        %v4165 = vsub.s32 %v1413, %v4164
        %v4166 = vrot.slane %v3893, %v4165
        %v4167 = vsel %vm1418, %v4166, %v4162
        %v4168 = vlaneseq
        %v4169 = vshrl.u32 %v4168, 7
        %v4170 = vsub.s32 %v1420, %v4169
        %v4171 = vrot.slane %v3898, %v4170
        %v4172 = vsel %vm1425, %v4171, %v4167
        %v4173 = vlaneseq
        %v4174 = vshrl.u32 %v4173, 7
        %v4175 = vsub.s32 %v1427, %v4174
        %v4176 = vrot.slane %v3903, %v4175
        %v4177 = vsel %vm1432, %v4176, %v4172
        %v4178 = vlaneseq
        %v4179 = vshrl.u32 %v4178, 7
        %v4180 = vsub.s32 %v1434, %v4179
        %v4181 = vrot.slane %v3908, %v4180
        %v4182 = vsel %vm1439, %v4181, %v4177
        %v4183 = vlaneseq
        %v4184 = vshrl.u32 %v4183, 7
        %v4185 = vsub.s32 %v1441, %v4184
        %v4186 = vrot.slane %v3913, %v4185
        %v4187 = vsel %vm1446, %v4186, %v4182
        %v4188 = vsel %vm1527, %v4187, %v4108
        %s4190 = scalar_lea.vmem %s452, 2 [#allocation8]
        %4191 = vst [vmem:[%s4190] sm:$0x3] %v4188
        %4192 = vst.msk [vmem:[#allocation2] sm:$0x3] %vm2275, %v2628
        %4193 = vst.msk [vmem:[#allocation3] sm:$0x3] %vm2275, %v4026
        %s4194 = sand.u32 %s275, 1
        %s4195 = scalar_lea.sflag [#allocation5], %s4194
        %s4196 = sand.u32 %s275, 1
        %s4197 = smul.addr %s4196, 4
        %s4198 = scalar_lea.vmem [#allocation4], %s4197
        %s4199 = sand.u32 %s31, 1
        %s4200 = scalar_lea.sflag [#allocation7], %s4199
        %s4201 = sand.u32 %s301, 1
        %s4202 = smul.addr %s4201, 4
        %s4203 = scalar_lea.vmem [#allocation6], %s4202
        %s4204 = sand.u32 %s31, 1
        %s4205 = scalar_lea.sflag [#allocation7], %s4204
        %s4206 = sand.u32 %s327, 1
        %s4207 = smul.addr %s4206, 4
        %s4208 = scalar_lea.vmem [#allocation8], %s4207
        // Predicated region
        $region69: #{tpu_custom_call.1} parent=63 // pred_check
          %p4209 = pneg %p285
        $region70: #{tpu_custom_call.1} parent=63 // pred_check_branch
          %4211 = sbr.rel (%p4209) target = $region72
        $region71: #{tpu_custom_call.1} parent=63 // pred_region
          %s4212 = smul.u32 2, %s31
          %s4214 = ssub.s32 64, 64
          %4215 = vsyncadd %s4195, %s4214
          %s4216 = smul.addr %s4212, 32
          %s4217 = scalar_lea.hbm %s11, %s4216
          %s4218 = sshll.u32 %s4198, 4
          %s4219 = int_to_ptr.vmem [resolvable:$true] %s4218
          %4224 = dma.vmem_to_hbm [thread:$0]  %s4219, 64, %s4217, %s4195, 32, 32, 2
        $region72: #{tpu_custom_call.1} parent=63 // pred_fallthru
          _
        // Predicated region
        $region73: #{tpu_custom_call.1} parent=63 // pred_check
          %p4225 = pneg %p311
        $region74: #{tpu_custom_call.1} parent=63 // pred_check_branch
          %4227 = sbr.rel (%p4225) target = $region76
        $region75: #{tpu_custom_call.1} parent=63 // pred_region
          %s4228 = smul.u32 2, %s31
          %s4230 = ssub.s32 64, 64
          %4231 = vsyncadd %s4200, %s4230
          %s4232 = smul.addr %s4228, 32
          %s4233 = scalar_lea.hbm %s12, %s4232
          %s4234 = sshll.u32 %s4203, 4
          %s4235 = int_to_ptr.vmem [resolvable:$true] %s4234
          %4240 = dma.vmem_to_hbm [thread:$0]  %s4235, 64, %s4233, %s4200, 32, 32, 2
        $region76: #{tpu_custom_call.1} parent=63 // pred_fallthru
          _
        // Predicated region
        $region77: #{tpu_custom_call.1} parent=63 // pred_check
          %p4241 = pneg %p337
        $region78: #{tpu_custom_call.1} parent=63 // pred_check_branch
          %4243 = sbr.rel (%p4241) target = $region80
        $region79: #{tpu_custom_call.1} parent=63 // pred_region
          %s4244 = smul.u32 2, %s31
          %s4246 = ssub.s32 64, 64
          %4247 = vsyncadd %s4205, %s4246
          %s4248 = smul.addr %s4244, 32
          %s4249 = scalar_lea.hbm %s13, %s4248
          %s4250 = sshll.u32 %s4208, 4
          %s4251 = int_to_ptr.vmem [resolvable:$true] %s4250
          %4256 = dma.vmem_to_hbm [thread:$0]  %s4251, 64, %s4249, %s4205, 32, 32, 2
        $region80: #{tpu_custom_call.1} parent=63 // pred_fallthru
          _
      $region64: #{tpu_custom_call.1} parent=5 // pred_fallthru
        _
      %p4257 = scmp.le.s32.totalorder 2, %s26
      // Predicated region
      $region81: #{tpu_custom_call.1} parent=5 // pred_check
        %p4258 = pneg %p4257
      $region82: #{tpu_custom_call.1} parent=5 // pred_check_branch
        %4260 = sbr.rel (%p4258) target = $region84
      $region83: #{tpu_custom_call.1} parent=5 // pred_region
        %s4261 = ssub.s32 %s26, 2
        // Predicated region
        $region85: #{tpu_custom_call.1} parent=83 // pred_check
          %p4262 = pneg %p291
        $region86: #{tpu_custom_call.1} parent=83 // pred_check_branch
          %4264 = sbr.rel (%p4262) target = $region88
        $region87: #{tpu_custom_call.1} parent=83 // pred_region
          %s4265 = sand.u32 %s276, 1
          %s4266 = scalar_lea.sflag [#allocation5], %s4265
          %s4267 = sand.u32 %s276, 1
          %s4268 = smul.addr %s4267, 4
          %s4269 = scalar_lea.vmem [#allocation4], %s4268
          %4270 = dma.done %s4266, 64
        $region88: #{tpu_custom_call.1} parent=83 // pred_fallthru
          _
        // Predicated region
        $region89: #{tpu_custom_call.1} parent=83 // pred_check
          %p4271 = pneg %p317
        $region90: #{tpu_custom_call.1} parent=83 // pred_check_branch
          %4273 = sbr.rel (%p4271) target = $region92
        $region91: #{tpu_custom_call.1} parent=83 // pred_region
          %s4274 = sand.u32 %s32, 1
          %s4275 = scalar_lea.sflag [#allocation7], %s4274
          %s4276 = sand.u32 %s302, 1
          %s4277 = smul.addr %s4276, 4
          %s4278 = scalar_lea.vmem [#allocation6], %s4277
          %4279 = dma.done %s4275, 64
        $region92: #{tpu_custom_call.1} parent=83 // pred_fallthru
          _
        // Predicated region
        $region93: #{tpu_custom_call.1} parent=83 // pred_check
          %p4280 = pneg %p343
        $region94: #{tpu_custom_call.1} parent=83 // pred_check_branch
          %4282 = sbr.rel (%p4280) target = $region96
        $region95: #{tpu_custom_call.1} parent=83 // pred_region
          %s4283 = sand.u32 %s32, 1
          %s4284 = scalar_lea.sflag [#allocation7], %s4283
          %s4285 = sand.u32 %s328, 1
          %s4286 = smul.addr %s4285, 4
          %s4287 = scalar_lea.vmem [#allocation8], %s4286
          %4288 = dma.done %s4284, 64
        $region96: #{tpu_custom_call.1} parent=83 // pred_fallthru
          _
      $region84: #{tpu_custom_call.1} parent=5 // pred_fallthru
        _
    $region6: #{tpu_custom_call.1} parent=1 // loop_footer
      %s30 = sadd.s32 1, %s26
    $region7: #{tpu_custom_call.1} parent=1 // loop_footer_branch
      %25 = sbr.rel target = $region3
    $region8: #{tpu_custom_call.1} parent=1 // loop_exit
      _
    %4289 = vsyncpa [#allocation5], 1
    %s4290 = scalar_lea.sflag [#allocation5], 1
    %4291 = vsyncpa %s4290, 1
    %4292 = vsyncpa [#allocation7], 1
    %s4293 = scalar_lea.sflag [#allocation7], 1
    %4294 = vsyncpa %s4293, 1

// kernel: tpu_custom_call.1
$region0: #{tpu_custom_call.1}
  #allocation0 [shape = 'u32[]', space=smem, size = 0x4, offset = 0x4, fixed_abs, tag = 'smem constant byte address 0x4 - core index']
  #allocation1 [shape = 'u32[144,128]{1,0:T(1,128)}', space=vmem, size = 0x12000, scoped, tag = 'internal scratch']
  #allocation2 [shape = 'f32[2,32]{1,0:T(2,128)}', space=vmem, size = 0x400, scoped, tag = 'scratch operand']
  #allocation3 [shape = 'f32[2,32]{1,0:T(2,128)}', space=vmem, size = 0x400, scoped, tag = 'scratch operand']
  %s0 = inlined_call_operand.vmem [shape: f32[4,2,96], index: 0, kind: input, shape index: {}]
  %s1 = inlined_call_operand.vmem [shape: f32[2,128,32], index: 1, kind: input, shape index: {}]
  %s2 = inlined_call_operand.vmem [shape: f32[2,128,32], index: 2, kind: input, shape index: {}]
  %s3 = inlined_call_operand.vmem [shape: f32[2,128], index: 3, kind: input, shape index: {}]
  %s4 = inlined_call_operand.vmem [shape: f32[2,32], index: 4, kind: input, shape index: {}]
  %s5 = inlined_call_operand.vmem [shape: f32[2,32], index: 5, kind: input, shape index: {}]
  %s6 = inlined_call_operand.vmem [shape: f32[32,96], index: 6, kind: input, shape index: {}]
  %s7 = inlined_call_operand.vmem [shape: f32[32,96], index: 7, kind: input, shape index: {}]
  %s8 = inlined_call_operand.vmem [shape: f32[1,96], index: 8, kind: input, shape index: {}]
  %s9 = inlined_call_operand.vmem [shape: f32[32,32], index: 9, kind: input, shape index: {}]
  %s10 = inlined_call_operand.vmem [shape: f32[1,32], index: 10, kind: input, shape index: {}]
  %s11 = inlined_call_operand.hbm [shape: f32[4,2,32], index: 11, kind: output, shape index: {0}]
  %s12 = inlined_call_operand.hbm [shape: f32[4,2,32], index: 12, kind: output, shape index: {1}]
  %s13 = inlined_call_operand.hbm [shape: f32[4,2,128], index: 13, kind: output, shape index: {2}]
  %14 = xla_tuple %s11, %s12, %s13
  %s15 = sld [smem:[#allocation0]]
  $region97: #{tpu_custom_call.1} parent=0
    _
  %s17 = ssub.s32 1, %s15
  %s18 = scalar_select 0, %s17, %s15
  $region1: #{tpu_custom_call.1} parent=0
    #allocation4 [shape = 'u8[4096]{0}', space=vmem, size = 0x1000, scoped, tag = 'output window, operand 0']
    #allocation5 [shape = 's32[2]{0}', space=sflag, size = 0x8, scoped, tag = 'scoped memory for tpu_custom_call.1']
    #allocation6 [shape = 'u8[4096]{0}', space=vmem, size = 0x1000, scoped, tag = 'output window, operand 1']
    #allocation7 [shape = 's32[2]{0}', space=sflag, size = 0x8, scoped, tag = 'scoped memory for tpu_custom_call.1']
    #allocation8 [shape = 'u8[4096]{0}', space=vmem, size = 0x1000, scoped, tag = 'output window, operand 2']
    %19 = vsyncpa [#allocation5], 0
    %s20 = scalar_lea.sflag [#allocation5], 1
    %21 = vsyncpa %s20, 0
    %22 = vsyncpa [#allocation7], 0
    %s23 = scalar_lea.sflag [#allocation7], 1
    %24 = vsyncpa %s23, 0
    loop: start=0, step=1, limit=4
    $region2: #{tpu_custom_call.1} parent=1 // loop_pre_header
      _
    $region3: #{tpu_custom_call.1} parent=1 // loop_header
      %s26 = sphi 0, %s30
      %p27 = scmp.ge.s32.totalorder %s26, 4
      %s36 = sphi 0, %s38
      %s39 = sphi 0, %s36
      %s40 = sphi 0, %s39
      %s56 = sphi 0, %s40
      %s60 = sphi 0, %s60
      %s62 = sphi 0, %s60
      %s63 = sphi 0, %s62
      %s77 = sphi 0, %s63
      %s81 = sphi 0, %s81
      %s83 = sphi 0, %s81
      %s84 = sphi 0, %s83
      %s98 = sphi 0, %s84
      %s102 = sphi 0, %s102
      %s104 = sphi 0, %s102
      %s105 = sphi 0, %s104
      %s119 = sphi 0, %s105
      %s123 = sphi 0, %s123
      %s125 = sphi 0, %s123
      %s126 = sphi 0, %s125
      %s140 = sphi 0, %s126
      %s144 = sphi 0, %s144
      %s146 = sphi 0, %s144
      %s147 = sphi 0, %s146
      %s161 = sphi 0, %s147
      %s165 = sphi 0, %s165
      %s167 = sphi 0, %s165
      %s168 = sphi 0, %s167
      %s182 = sphi 0, %s168
      %s186 = sphi 0, %s186
      %s188 = sphi 0, %s186
      %s189 = sphi 0, %s188
      %s203 = sphi 0, %s189
      %s207 = sphi 0, %s207
      %s209 = sphi 0, %s207
      %s210 = sphi 0, %s209
      %s224 = sphi 0, %s210
      %s228 = sphi 0, %s228
      %s230 = sphi 0, %s228
      %s231 = sphi 0, %s230
      %s245 = sphi 0, %s231
      %s249 = sphi 0, %s249
      %s251 = sphi 0, %s249
      %s252 = sphi 0, %s251
      %s266 = sphi 0, %s252
      %s272 = sphi 0, %s274
      %s275 = sphi 0, %s272
      %s276 = sphi 0, %s275
      %s292 = sphi 0, %s276
      %s298 = sphi 0, %s300
      %s301 = sphi 0, %s298
      %s302 = sphi 0, %s301
      %s318 = sphi 0, %s302
      %s324 = sphi 0, %s326
      %s327 = sphi 0, %s324
      %s328 = sphi 0, %s327
      %s344 = sphi 0, %s328
    $region4: #{tpu_custom_call.1} parent=1 // loop_header_branch
      %29 = sbr.rel (%p27) target = $region8
    $region5: #{tpu_custom_call.1} parent=1 // loop_body
      %s31 = ssub.s32 %s26, 1
      %s32 = ssub.s32 %s26, 2
      %s33 = sadd.s32 %s26, 1
      %s34 = ssub.s32 %s26, %s33
      %p35 = scmp.eq.s32.totalorder %s34, 0
      %s37 = sadd.s32 %s36, 1
      %s38 = scalar_select %p35, %s36, %s37
      %p41 = pneg %p35
      %p42 = scmp.eq.s32.totalorder %s26, 1
      %p43 = por %p41, %p42
      %p44 = scmp.ne.s32.totalorder %s36, %s39
      %p45 = scmp.eq.s32.totalorder %s26, 0
      %p46 = por %p44, %p45
      %p47 = scmp.ne.s32.totalorder %s36, %s39
      %p48 = scmp.eq.s32.totalorder %s31, 1
      %p49 = por %p47, %p48
      %p50 = scmp.ne.s32.totalorder %s39, %s40
      %p51 = scmp.eq.s32.totalorder %s31, 0
      %p52 = por %p50, %p51
      %p53 = scmp.ne.s32.totalorder %s39, %s40
      %p54 = scmp.eq.s32.totalorder %s32, 1
      %p55 = por %p53, %p54
      %p57 = scmp.ne.s32.totalorder %s40, %s56
      %p58 = scmp.eq.s32.totalorder %s32, 0
      %p59 = por %p57, %p58
      %s61 = sadd.s32 %s60, 1
      %p64 = scmp.eq.s32.totalorder %s26, 1
      %p65 = scmp.ne.s32.totalorder %s60, %s62
      %p66 = scmp.eq.s32.totalorder %s26, 0
      %p67 = por %p65, %p66
      %p68 = scmp.ne.s32.totalorder %s60, %s62
      %p69 = scmp.eq.s32.totalorder %s31, 1
      %p70 = por %p68, %p69
      %p71 = scmp.ne.s32.totalorder %s62, %s63
      %p72 = scmp.eq.s32.totalorder %s31, 0
      %p73 = por %p71, %p72
      %p74 = scmp.ne.s32.totalorder %s62, %s63
      %p75 = scmp.eq.s32.totalorder %s32, 1
      %p76 = por %p74, %p75
      %p78 = scmp.ne.s32.totalorder %s63, %s77
      %p79 = scmp.eq.s32.totalorder %s32, 0
      %p80 = por %p78, %p79
      %s82 = sadd.s32 %s81, 1
      %p85 = scmp.eq.s32.totalorder %s26, 1
      %p86 = scmp.ne.s32.totalorder %s81, %s83
      %p87 = scmp.eq.s32.totalorder %s26, 0
      %p88 = por %p86, %p87
      %p89 = scmp.ne.s32.totalorder %s81, %s83
      %p90 = scmp.eq.s32.totalorder %s31, 1
      %p91 = por %p89, %p90
      %p92 = scmp.ne.s32.totalorder %s83, %s84
      %p93 = scmp.eq.s32.totalorder %s31, 0
      %p94 = por %p92, %p93
      %p95 = scmp.ne.s32.totalorder %s83, %s84
      %p96 = scmp.eq.s32.totalorder %s32, 1
      %p97 = por %p95, %p96
      %p99 = scmp.ne.s32.totalorder %s84, %s98
      %p100 = scmp.eq.s32.totalorder %s32, 0
      %p101 = por %p99, %p100
      %s103 = sadd.s32 %s102, 1
      %p106 = scmp.eq.s32.totalorder %s26, 1
      %p107 = scmp.ne.s32.totalorder %s102, %s104
      %p108 = scmp.eq.s32.totalorder %s26, 0
      %p109 = por %p107, %p108
      %p110 = scmp.ne.s32.totalorder %s102, %s104
      %p111 = scmp.eq.s32.totalorder %s31, 1
      %p112 = por %p110, %p111
      %p113 = scmp.ne.s32.totalorder %s104, %s105
      %p114 = scmp.eq.s32.totalorder %s31, 0
      %p115 = por %p113, %p114
      %p116 = scmp.ne.s32.totalorder %s104, %s105
      %p117 = scmp.eq.s32.totalorder %s32, 1
      %p118 = por %p116, %p117
      %p120 = scmp.ne.s32.totalorder %s105, %s119
      %p121 = scmp.eq.s32.totalorder %s32, 0
      %p122 = por %p120, %p121
      %s124 = sadd.s32 %s123, 1
      %p127 = scmp.eq.s32.totalorder %s26, 1
      %p128 = scmp.ne.s32.totalorder %s123, %s125
      %p129 = scmp.eq.s32.totalorder %s26, 0
      %p130 = por %p128, %p129
      %p131 = scmp.ne.s32.totalorder %s123, %s125
      %p132 = scmp.eq.s32.totalorder %s31, 1
      %p133 = por %p131, %p132
      %p134 = scmp.ne.s32.totalorder %s125, %s126
      %p135 = scmp.eq.s32.totalorder %s31, 0
      %p136 = por %p134, %p135
      %p137 = scmp.ne.s32.totalorder %s125, %s126
      %p138 = scmp.eq.s32.totalorder %s32, 1
      %p139 = por %p137, %p138
      %p141 = scmp.ne.s32.totalorder %s126, %s140
      %p142 = scmp.eq.s32.totalorder %s32, 0
      %p143 = por %p141, %p142
      %s145 = sadd.s32 %s144, 1
      %p148 = scmp.eq.s32.totalorder %s26, 1
      %p149 = scmp.ne.s32.totalorder %s144, %s146
      %p150 = scmp.eq.s32.totalorder %s26, 0
      %p151 = por %p149, %p150
      %p152 = scmp.ne.s32.totalorder %s144, %s146
      %p153 = scmp.eq.s32.totalorder %s31, 1
      %p154 = por %p152, %p153
      %p155 = scmp.ne.s32.totalorder %s146, %s147
      %p156 = scmp.eq.s32.totalorder %s31, 0
      %p157 = por %p155, %p156
      %p158 = scmp.ne.s32.totalorder %s146, %s147
      %p159 = scmp.eq.s32.totalorder %s32, 1
      %p160 = por %p158, %p159
      %p162 = scmp.ne.s32.totalorder %s147, %s161
      %p163 = scmp.eq.s32.totalorder %s32, 0
      %p164 = por %p162, %p163
      %s166 = sadd.s32 %s165, 1
      %p169 = scmp.eq.s32.totalorder %s26, 1
      %p170 = scmp.ne.s32.totalorder %s165, %s167
      %p171 = scmp.eq.s32.totalorder %s26, 0
      %p172 = por %p170, %p171
      %p173 = scmp.ne.s32.totalorder %s165, %s167
      %p174 = scmp.eq.s32.totalorder %s31, 1
      %p175 = por %p173, %p174
      %p176 = scmp.ne.s32.totalorder %s167, %s168
      %p177 = scmp.eq.s32.totalorder %s31, 0
      %p178 = por %p176, %p177
      %p179 = scmp.ne.s32.totalorder %s167, %s168
      %p180 = scmp.eq.s32.totalorder %s32, 1
      %p181 = por %p179, %p180
      %p183 = scmp.ne.s32.totalorder %s168, %s182
      %p184 = scmp.eq.s32.totalorder %s32, 0
      %p185 = por %p183, %p184
      %s187 = sadd.s32 %s186, 1
      %p190 = scmp.eq.s32.totalorder %s26, 1
      %p191 = scmp.ne.s32.totalorder %s186, %s188
      %p192 = scmp.eq.s32.totalorder %s26, 0
      %p193 = por %p191, %p192
      %p194 = scmp.ne.s32.totalorder %s186, %s188
      %p195 = scmp.eq.s32.totalorder %s31, 1
      %p196 = por %p194, %p195
      %p197 = scmp.ne.s32.totalorder %s188, %s189
      %p198 = scmp.eq.s32.totalorder %s31, 0
      %p199 = por %p197, %p198
      %p200 = scmp.ne.s32.totalorder %s188, %s189
      %p201 = scmp.eq.s32.totalorder %s32, 1
      %p202 = por %p200, %p201
      %p204 = scmp.ne.s32.totalorder %s189, %s203
      %p205 = scmp.eq.s32.totalorder %s32, 0
      %p206 = por %p204, %p205
      %s208 = sadd.s32 %s207, 1
      %p211 = scmp.eq.s32.totalorder %s26, 1
      %p212 = scmp.ne.s32.totalorder %s207, %s209
      %p213 = scmp.eq.s32.totalorder %s26, 0
      %p214 = por %p212, %p213
      %p215 = scmp.ne.s32.totalorder %s207, %s209
      %p216 = scmp.eq.s32.totalorder %s31, 1
      %p217 = por %p215, %p216
      %p218 = scmp.ne.s32.totalorder %s209, %s210
      %p219 = scmp.eq.s32.totalorder %s31, 0
      %p220 = por %p218, %p219
      %p221 = scmp.ne.s32.totalorder %s209, %s210
      %p222 = scmp.eq.s32.totalorder %s32, 1
      %p223 = por %p221, %p222
      %p225 = scmp.ne.s32.totalorder %s210, %s224
      %p226 = scmp.eq.s32.totalorder %s32, 0
      %p227 = por %p225, %p226
      %s229 = sadd.s32 %s228, 1
      %p232 = scmp.eq.s32.totalorder %s26, 1
      %p233 = scmp.ne.s32.totalorder %s228, %s230
      %p234 = scmp.eq.s32.totalorder %s26, 0
      %p235 = por %p233, %p234
      %p236 = scmp.ne.s32.totalorder %s228, %s230
      %p237 = scmp.eq.s32.totalorder %s31, 1
      %p238 = por %p236, %p237
      %p239 = scmp.ne.s32.totalorder %s230, %s231
      %p240 = scmp.eq.s32.totalorder %s31, 0
      %p241 = por %p239, %p240
      %p242 = scmp.ne.s32.totalorder %s230, %s231
      %p243 = scmp.eq.s32.totalorder %s32, 1
      %p244 = por %p242, %p243
      %p246 = scmp.ne.s32.totalorder %s231, %s245
      %p247 = scmp.eq.s32.totalorder %s32, 0
      %p248 = por %p246, %p247
      %s250 = sadd.s32 %s249, 1
      %p253 = scmp.eq.s32.totalorder %s26, 1
      %p254 = scmp.ne.s32.totalorder %s249, %s251
      %p255 = scmp.eq.s32.totalorder %s26, 0
      %p256 = por %p254, %p255
      %p257 = scmp.ne.s32.totalorder %s249, %s251
      %p258 = scmp.eq.s32.totalorder %s31, 1
      %p259 = por %p257, %p258
      %p260 = scmp.ne.s32.totalorder %s251, %s252
      %p261 = scmp.eq.s32.totalorder %s31, 0
      %p262 = por %p260, %p261
      %p263 = scmp.ne.s32.totalorder %s251, %s252
      %p264 = scmp.eq.s32.totalorder %s32, 1
      %p265 = por %p263, %p264
      %p267 = scmp.ne.s32.totalorder %s252, %s266
      %p268 = scmp.eq.s32.totalorder %s32, 0
      %p269 = por %p267, %p268
      %s270 = ssub.s32 %s26, %s33
      %p271 = scmp.eq.s32.totalorder %s270, 0
      %s273 = sadd.s32 %s272, 1
      %s274 = scalar_select %p271, %s272, %s273
      %p277 = pneg %p271
      %p278 = scmp.eq.s32.totalorder %s26, 1
      %p279 = por %p277, %p278
      %p280 = scmp.ne.s32.totalorder %s272, %s275
      %p281 = scmp.eq.s32.totalorder %s26, 0
      %p282 = por %p280, %p281
      %p283 = scmp.ne.s32.totalorder %s272, %s275
      %p284 = scmp.eq.s32.totalorder %s31, 1
      %p285 = por %p283, %p284
      %p286 = scmp.ne.s32.totalorder %s275, %s276
      %p287 = scmp.eq.s32.totalorder %s31, 0
      %p288 = por %p286, %p287
      %p289 = scmp.ne.s32.totalorder %s275, %s276
      %p290 = scmp.eq.s32.totalorder %s32, 1
      %p291 = por %p289, %p290
      %p293 = scmp.ne.s32.totalorder %s276, %s292
      %p294 = scmp.eq.s32.totalorder %s32, 0
      %p295 = por %p293, %p294
      %s296 = ssub.s32 %s26, %s33
      %p297 = scmp.eq.s32.totalorder %s296, 0
      %s299 = sadd.s32 %s298, 1
      %s300 = scalar_select %p297, %s298, %s299
      %p303 = pneg %p297
      %p304 = scmp.eq.s32.totalorder %s26, 1
      %p305 = por %p303, %p304
      %p306 = scmp.ne.s32.totalorder %s298, %s301
      %p307 = scmp.eq.s32.totalorder %s26, 0
      %p308 = por %p306, %p307
      %p309 = scmp.ne.s32.totalorder %s298, %s301
      %p310 = scmp.eq.s32.totalorder %s31, 1
      %p311 = por %p309, %p310
      %p312 = scmp.ne.s32.totalorder %s301, %s302
      %p313 = scmp.eq.s32.totalorder %s31, 0
      %p314 = por %p312, %p313
      %p315 = scmp.ne.s32.totalorder %s301, %s302
      %p316 = scmp.eq.s32.totalorder %s32, 1
      %p317 = por %p315, %p316
      %p319 = scmp.ne.s32.totalorder %s302, %s318
      %p320 = scmp.eq.s32.totalorder %s32, 0
      %p321 = por %p319, %p320
      %s322 = ssub.s32 %s26, %s33
      %p323 = scmp.eq.s32.totalorder %s322, 0
      %s325 = sadd.s32 %s324, 1
      %s326 = scalar_select %p323, %s324, %s325
      %p329 = pneg %p323
      %p330 = scmp.eq.s32.totalorder %s26, 1
      %p331 = por %p329, %p330
      %p332 = scmp.ne.s32.totalorder %s324, %s327
      %p333 = scmp.eq.s32.totalorder %s26, 0
      %p334 = por %p332, %p333
      %p335 = scmp.ne.s32.totalorder %s324, %s327
      %p336 = scmp.eq.s32.totalorder %s31, 1
      %p337 = por %p335, %p336
      %p338 = scmp.ne.s32.totalorder %s327, %s328
      %p339 = scmp.eq.s32.totalorder %s31, 0
      %p340 = por %p338, %p339
      %p341 = scmp.ne.s32.totalorder %s327, %s328
      %p342 = scmp.eq.s32.totalorder %s32, 1
      %p343 = por %p341, %p342
      %p345 = scmp.ne.s32.totalorder %s328, %s344
      %p346 = scmp.eq.s32.totalorder %s32, 0
      %p347 = por %p345, %p346
      %p348 = scmp.le.s32.totalorder 1, %s26
      %p349 = scmp.lt.s32.totalorder %s26, 3
      %p350 = pnand %p348, %p349
      %p351 = pneg %p350
      // Predicated region
      $region9: #{tpu_custom_call.1} parent=5 // pred_check
        _
      $region10: #{tpu_custom_call.1} parent=5 // pred_check_branch
        %353 = sbr.rel (%p350) target = $region12
      $region11: #{tpu_custom_call.1} parent=5 // pred_region
        %s354 = ssub.s32 %s26, 1
        // Predicated region
        $region13: #{tpu_custom_call.1} parent=11 // pred_check
          %p355 = pneg %p73
        $region14: #{tpu_custom_call.1} parent=11 // pred_check_branch
          %357 = sbr.rel (%p355) target = $region16
        $region15: #{tpu_custom_call.1} parent=11 // pred_region
          _
        $region16: #{tpu_custom_call.1} parent=11 // pred_fallthru
          _
        // Predicated region
        $region17: #{tpu_custom_call.1} parent=11 // pred_check
          %p358 = pneg %p94
        $region18: #{tpu_custom_call.1} parent=11 // pred_check_branch
          %360 = sbr.rel (%p358) target = $region20
        $region19: #{tpu_custom_call.1} parent=11 // pred_region
          _
        $region20: #{tpu_custom_call.1} parent=11 // pred_fallthru
          _
        // Predicated region
        $region21: #{tpu_custom_call.1} parent=11 // pred_check
          %p361 = pneg %p115
        $region22: #{tpu_custom_call.1} parent=11 // pred_check_branch
          %363 = sbr.rel (%p361) target = $region24
        $region23: #{tpu_custom_call.1} parent=11 // pred_region
          _
        $region24: #{tpu_custom_call.1} parent=11 // pred_fallthru
          _
        // Predicated region
        $region25: #{tpu_custom_call.1} parent=11 // pred_check
          %p364 = pneg %p136
        $region26: #{tpu_custom_call.1} parent=11 // pred_check_branch
          %366 = sbr.rel (%p364) target = $region28
        $region27: #{tpu_custom_call.1} parent=11 // pred_region
          _
        $region28: #{tpu_custom_call.1} parent=11 // pred_fallthru
          _
        // Predicated region
        $region29: #{tpu_custom_call.1} parent=11 // pred_check
          %p367 = pneg %p157
        $region30: #{tpu_custom_call.1} parent=11 // pred_check_branch
          %369 = sbr.rel (%p367) target = $region32
        $region31: #{tpu_custom_call.1} parent=11 // pred_region
          _
        $region32: #{tpu_custom_call.1} parent=11 // pred_fallthru
          _
        // Predicated region
        $region33: #{tpu_custom_call.1} parent=11 // pred_check
          %p370 = pneg %p178
        $region34: #{tpu_custom_call.1} parent=11 // pred_check_branch
          %372 = sbr.rel (%p370) target = $region36
        $region35: #{tpu_custom_call.1} parent=11 // pred_region
          _
        $region36: #{tpu_custom_call.1} parent=11 // pred_fallthru
          _
        // Predicated region
        $region37: #{tpu_custom_call.1} parent=11 // pred_check
          %p373 = pneg %p199
        $region38: #{tpu_custom_call.1} parent=11 // pred_check_branch
          %375 = sbr.rel (%p373) target = $region40
        $region39: #{tpu_custom_call.1} parent=11 // pred_region
          _
        $region40: #{tpu_custom_call.1} parent=11 // pred_fallthru
          _
        // Predicated region
        $region41: #{tpu_custom_call.1} parent=11 // pred_check
          %p376 = pneg %p220
        $region42: #{tpu_custom_call.1} parent=11 // pred_check_branch
          %378 = sbr.rel (%p376) target = $region44
        $region43: #{tpu_custom_call.1} parent=11 // pred_region
          _
        $region44: #{tpu_custom_call.1} parent=11 // pred_fallthru
          _
        // Predicated region
        $region45: #{tpu_custom_call.1} parent=11 // pred_check
          %p379 = pneg %p241
        $region46: #{tpu_custom_call.1} parent=11 // pred_check_branch
          %381 = sbr.rel (%p379) target = $region48
        $region47: #{tpu_custom_call.1} parent=11 // pred_region
          _
        $region48: #{tpu_custom_call.1} parent=11 // pred_fallthru
          _
        // Predicated region
        $region49: #{tpu_custom_call.1} parent=11 // pred_check
          %p382 = pneg %p262
        $region50: #{tpu_custom_call.1} parent=11 // pred_check_branch
          %384 = sbr.rel (%p382) target = $region52
        $region51: #{tpu_custom_call.1} parent=11 // pred_region
          _
        $region52: #{tpu_custom_call.1} parent=11 // pred_fallthru
          _
      $region12: #{tpu_custom_call.1} parent=5 // pred_fallthru
        _
      %p385 = scmp.lt.s32.totalorder %s26, 2
      // Predicated region
      $region53: #{tpu_custom_call.1} parent=5 // pred_check
        %p386 = pneg %p385
      $region54: #{tpu_custom_call.1} parent=5 // pred_check_branch
        %388 = sbr.rel (%p386) target = $region56
      $region55: #{tpu_custom_call.1} parent=5 // pred_region
        // Predicated region
        $region57: #{tpu_custom_call.1} parent=55 // pred_check
          %p389 = pneg %p46
        $region58: #{tpu_custom_call.1} parent=55 // pred_check_branch
          %391 = sbr.rel (%p389) target = $region60
        $region59: #{tpu_custom_call.1} parent=55 // pred_region
          %s392 = smul.u32 2, %s26
          %p393 = scmp.lt.s32.totalorder %s392, 3
          %s394 = scalar_select %p393, %s392, 3
          %s395 = smul.addr %s394, 2
          %s396 = scalar_lea.vmem %s0, %s395
          %s397 = smul.u32 2, %s26
        $region60: #{tpu_custom_call.1} parent=55 // pred_fallthru
          _
      $region56: #{tpu_custom_call.1} parent=5 // pred_fallthru
        _
      %p398 = scmp.le.s32.totalorder 1, %s26
      %p399 = scmp.lt.s32.totalorder %s26, 3
      %p400 = pnand %p398, %p399
      %p401 = pneg %p400
      // Predicated region
      $region61: #{tpu_custom_call.1} parent=5 // pred_check
        _
      $region62: #{tpu_custom_call.1} parent=5 // pred_check_branch
        %403 = sbr.rel (%p400) target = $region64
      $region63: #{tpu_custom_call.1} parent=5 // pred_region
        %s404 = ssub.s32 %s26, 1
        %s405 = smul.u32 2, %s31
        %p406 = scmp.lt.s32.totalorder %s405, 3
        %s407 = scalar_select %p406, %s405, 3
        %s408 = smul.addr %s407, 2
        %s409 = scalar_lea.vmem %s0, %s408
        %p410 = pneg %p52
        %p411 = pneg %p49
        %p412 = pneg %p73
        %p413 = pneg %p70
        %p414 = pneg %p94
        %p415 = pneg %p91
        %p416 = pneg %p115
        %p417 = pneg %p112
        %p418 = pneg %p136
        %p419 = pneg %p133
        %p420 = pneg %p157
        %p421 = pneg %p154
        %p422 = pneg %p178
        %p423 = pneg %p175
        %p424 = pneg %p199
        %p425 = pneg %p196
        %p426 = pneg %p220
        %p427 = pneg %p217
        %p428 = pneg %p241
        %p429 = pneg %p238
        %p430 = pneg %p262
        %p431 = pneg %p259
        %p432 = pneg %p288
        %p433 = pneg %p285
        %s434 = sand.u32 %s275, 1
        %s435 = scalar_lea.sflag [#allocation5], %s434
        %s436 = sand.u32 %s275, 1
        %s437 = smul.addr %s436, 4
        %s438 = scalar_lea.vmem [#allocation4], %s437
        %p439 = pneg %p314
        %p440 = pneg %p311
        %s441 = sand.u32 %s31, 1
        %s442 = scalar_lea.sflag [#allocation7], %s441
        %s443 = sand.u32 %s301, 1
        %s444 = smul.addr %s443, 4
        %s445 = scalar_lea.vmem [#allocation6], %s444
        %p446 = pneg %p340
        %p447 = pneg %p337
        %s448 = sand.u32 %s31, 1
        %s449 = scalar_lea.sflag [#allocation7], %s448
        %s450 = sand.u32 %s327, 1
        %s451 = smul.addr %s450, 4
        %s452 = scalar_lea.vmem [#allocation8], %s451
        %s453 = smul.u32 2, %s31
        %p454 = scmp.lt.s32.totalorder %s453, 3
        %s455 = scalar_select %p454, %s453, 3
        %s456 = smul.addr %s455, 2
        %s457 = scalar_lea.vmem %s0, %s456
        %s458 = smul.u32 2, %s31
        %s459 = smul.u32 2, %s31
        %s460 = smul.u32 2, %s31
        %s461 = smul.u32 2, %s31
        %p462 = scmp.eq.s32.totalorder %s31, 0
        // Predicated region
        $region65: #{tpu_custom_call.1} parent=63 // pred_check
          %p463 = pneg %p462
        $region66: #{tpu_custom_call.1} parent=63 // pred_check_branch
          %465 = sbr.rel (%p463) target = $region68
        $region67: #{tpu_custom_call.1} parent=63 // pred_region
          %v466 = vld [vmem:[%s4] sm:$0x3]
          %vm467 = vcmask 254976
          %468 = vst.msk [vmem:[#allocation2] sm:$0x3] %vm467, %v466
          %v469 = vld [vmem:[%s5] sm:$0x3]
          %470 = vst.msk [vmem:[#allocation3] sm:$0x3] %vm467, %v469
        $region68: #{tpu_custom_call.1} parent=63 // pred_fallthru
          _
        %v471 = vld [vmem:[%s3] sm:$0x3]
        %v472 = vld [vmem:[%s8] sm:$0x1]
        %v473 = vld [vmem:[%s10] sm:$0x1]
        %v474 = vld [vmem:[#allocation2] sm:$0x3]
        %v475 = vld [vmem:[#allocation3] sm:$0x3]
        %v476 = vld [vmem:[%s457] sm:$0x3]
        %v477 = vld [vmem:[%s6] sm:$0xff]
        %v478 = vld [vmem:[%s6 + $0x8] sm:$0xff]
        %v479 = vld [vmem:[%s6 + $0x10] sm:$0xff]
        %v480 = vld [vmem:[%s6 + $0x18] sm:$0xff]
        %vm481 = vcmask 261120
        %v483 = vsel %vm481, %v475, 0
        %485 = vmatprep.subr.mxu0 0.0
        %486 = vmatpush1.msra.mxu0 %v477
        %487 = vmatprep.subr.mxu0 0.0
        %488 = vmatpush1.msra.mxu0 %v478
        %489 = vmatprep.subr.mxu0 0.0
        %490 = vmatpush1.msra.mxu0 %v479
        %491 = vmatprep.subr.mxu0 0.0
        %492 = vmatpush1.msra.mxu0 %v480
        %493 = vmatprep.subr.mxu0 0.0
        %494 = vmatpush1.msra.mxu0 0.0
        %495 = vmatprep.subr.mxu0 0.0
        %496 = vmatpush1.msra.mxu0 0.0
        %497 = vmatprep.subr.mxu0 0.0
        %498 = vmatpush1.msra.mxu0 0.0
        %499 = vmatprep.subr.mxu0 0.0
        %500 = vmatpush1.msra.mxu0 0.0
        %501 = vmatprep.subr.mxu0 0.0
        %502 = vmatpush1.msra.mxu0 0.0
        %503 = vmatprep.subr.mxu0 0.0
        %504 = vmatpush1.msra.mxu0 0.0
        %505 = vmatprep.subr.mxu0 0.0
        %506 = vmatpush1.msra.mxu0 0.0
        %507 = vmatprep.subr.mxu0 0.0
        %508 = vmatpush1.msra.mxu0 0.0
        %509 = vmatprep.subr.mxu0 0.0
        %510 = vmatpush1.msra.mxu0 0.0
        %511 = vmatprep.subr.mxu0 0.0
        %512 = vmatpush1.msra.mxu0 0.0
        %513 = vmatprep.subr.mxu0 0.0
        %514 = vmatpush1.msra.mxu0 0.0
        %515 = vmatprep.subr.mxu0 0.0
        %516 = vmatpush1.msra.mxu0 0.0
        %517 = vmatprep.subr.mxu0 0.0
        %518 = vmatpush1.msra.mxu0 0.0
        %519 = vmatprep.subr.mxu0 0.0
        %520 = vmatpush1.msra.mxu0 0.0
        %521 = vmatprep.subr.mxu0 0.0
        %522 = vmatpush1.msra.mxu0 0.0
        %523 = vmatprep.subr.mxu0 0.0
        %524 = vmatpush1.msra.mxu0 0.0
        %525 = vmatprep.subr.mxu0 0.0
        %526 = vmatpush1.msra.mxu0 0.0
        %527 = vmatprep.subr.mxu0 0.0
        %528 = vmatpush1.msra.mxu0 0.0
        %529 = vmatprep.subr.mxu0 0.0
        %530 = vmatpush1.msra.mxu0 0.0
        %531 = vmatprep.subr.mxu0 0.0
        %532 = vmatpush1.msra.mxu0 0.0
        %533 = vmatprep.subr.mxu0 0.0
        %534 = vmatpush1.msra.mxu0 0.0
        %535 = vmatprep.subr.mxu0 0.0
        %536 = vmatpush1.msra.mxu0 0.0
        %537 = vmatprep.subr.mxu0 0.0
        %538 = vmatpush1.msra.mxu0 0.0
        %539 = vmatprep.subr.mxu0 0.0
        %540 = vmatpush1.msra.mxu0 0.0
        %541 = vmatprep.subr.mxu0 0.0
        %542 = vmatpush1.msra.mxu0 0.0
        %543 = vmatprep.subr.mxu0 0.0
        %544 = vmatpush1.msra.mxu0 0.0
        %545 = vmatprep.subr.mxu0 0.0
        %546 = vmatpush1.msra.mxu0 0.0
        %547 = vmatprep.subr.mxu0 0.0
        %548 = vmatpush1.msra.mxu0 0.0
        %549 = vmatprep.mubr.f32.mxu0 0.0
        %550 = vmatmul.mubr.f32.gmra.mrb[0].mxu0 %v483
        %v551 = vpop.f32.mrb[0].mxu0
        %v552 = vadd.f32 0.0, %v551
        %v553 = vpop.f32.mrb[0].mxu0
        %554 = vdwg.mxu0
        %v555 = vadd.f32 %v476, %v552
        %v556 = vld [vmem:[%s7] sm:$0xff]
        %v557 = vld [vmem:[%s7 + $0x8] sm:$0xff]
        %v558 = vld [vmem:[%s7 + $0x10] sm:$0xff]
        %v559 = vld [vmem:[%s7 + $0x18] sm:$0xff]
        %v561 = vlaneseq
        %v562 = vshrl.u32 %v561, 7
        %v563 = vsub.s32 0, %v562
        %v564 = vrot.slane %v472, %v563
        %v567 = vsel %vm481, %v474, 0
        %569 = vmatprep.subr.mxu0 0.0
        %570 = vmatpush1.msra.mxu0 %v556
        %571 = vmatprep.subr.mxu0 0.0
        %572 = vmatpush1.msra.mxu0 %v557
        %573 = vmatprep.subr.mxu0 0.0
        %574 = vmatpush1.msra.mxu0 %v558
        %575 = vmatprep.subr.mxu0 0.0
        %576 = vmatpush1.msra.mxu0 %v559
        %577 = vmatprep.subr.mxu0 0.0
        %578 = vmatpush1.msra.mxu0 0.0
        %579 = vmatprep.subr.mxu0 0.0
        %580 = vmatpush1.msra.mxu0 0.0
        %581 = vmatprep.subr.mxu0 0.0
        %582 = vmatpush1.msra.mxu0 0.0
        %583 = vmatprep.subr.mxu0 0.0
        %584 = vmatpush1.msra.mxu0 0.0
        %585 = vmatprep.subr.mxu0 0.0
        %586 = vmatpush1.msra.mxu0 0.0
        %587 = vmatprep.subr.mxu0 0.0
        %588 = vmatpush1.msra.mxu0 0.0
        %589 = vmatprep.subr.mxu0 0.0
        %590 = vmatpush1.msra.mxu0 0.0
        %591 = vmatprep.subr.mxu0 0.0
        %592 = vmatpush1.msra.mxu0 0.0
        %593 = vmatprep.subr.mxu0 0.0
        %594 = vmatpush1.msra.mxu0 0.0
        %595 = vmatprep.subr.mxu0 0.0
        %596 = vmatpush1.msra.mxu0 0.0
        %597 = vmatprep.subr.mxu0 0.0
        %598 = vmatpush1.msra.mxu0 0.0
        %599 = vmatprep.subr.mxu0 0.0
        %600 = vmatpush1.msra.mxu0 0.0
        %601 = vmatprep.subr.mxu0 0.0
        %602 = vmatpush1.msra.mxu0 0.0
        %603 = vmatprep.subr.mxu0 0.0
        %604 = vmatpush1.msra.mxu0 0.0
        %605 = vmatprep.subr.mxu0 0.0
        %606 = vmatpush1.msra.mxu0 0.0
        %607 = vmatprep.subr.mxu0 0.0
        %608 = vmatpush1.msra.mxu0 0.0
        %609 = vmatprep.subr.mxu0 0.0
        %610 = vmatpush1.msra.mxu0 0.0
        %611 = vmatprep.subr.mxu0 0.0
        %612 = vmatpush1.msra.mxu0 0.0
        %613 = vmatprep.subr.mxu0 0.0
        %614 = vmatpush1.msra.mxu0 0.0
        %615 = vmatprep.subr.mxu0 0.0
        %616 = vmatpush1.msra.mxu0 0.0
        %617 = vmatprep.subr.mxu0 0.0
        %618 = vmatpush1.msra.mxu0 0.0
        %619 = vmatprep.subr.mxu0 0.0
        %620 = vmatpush1.msra.mxu0 0.0
        %621 = vmatprep.subr.mxu0 0.0
        %622 = vmatpush1.msra.mxu0 0.0
        %623 = vmatprep.subr.mxu0 0.0
        %624 = vmatpush1.msra.mxu0 0.0
        %625 = vmatprep.subr.mxu0 0.0
        %626 = vmatpush1.msra.mxu0 0.0
        %627 = vmatprep.subr.mxu0 0.0
        %628 = vmatpush1.msra.mxu0 0.0
        %629 = vmatprep.subr.mxu0 0.0
        %630 = vmatpush1.msra.mxu0 0.0
        %631 = vmatprep.subr.mxu0 0.0
        %632 = vmatpush1.msra.mxu0 0.0
        %633 = vmatprep.mubr.f32.mxu0 0.0
        %634 = vmatmul.mubr.f32.gmra.mrb[0].mxu0 %v567
        %v635 = vpop.f32.mrb[0].mxu0
        %v636 = vadd.f32 %v564, %v635
        %v637 = vpop.f32.mrb[0].mxu0
        %638 = vdwg.mxu0
        %v639 = vadd.f32 %v555, %v636
        %v640 = vxor.u32 %v639, 2147483648
        %v641 = vmul.f32 %v640, 1.442695
        %v642 = vpow.pop %v641
        %v643 = vadd.f32 %v642, 1.0
        %v644 = vrcp.pop %v643
        %v645 = vmul.f32 1.0, %v644
        %647 = vrot.lane.b32.xlu0 %v636, 64
        %v648 = vpop.permute.xlu0 %647
        %v650 = vmul.f32 %v645, %v648
        %652 = vrot.lane.b32.xlu0 %v650, 64
        %v653 = vpop.permute.xlu0 %652
        %v655 = vadd.f32 %v555, %v653
        %v656 = vtanh.pop %v655
        %v657 = vsub.f32 1.0, %v645
        %659 = vrot.lane.b32.xlu0 %v656, 96
        %v660 = vpop.permute.xlu0 %659
        %v662 = vmul.f32 %v657, %v660
        %663 = vrot.lane.b32.xlu0 %v474, 32
        %v664 = vpop.permute.xlu0 %663
        %v666 = vmul.f32 %v645, %v664
        %v667 = vadd.f32 %v662, %v666
        %v668 = vld [vmem:[%s9] sm:$0xff]
        %v669 = vld [vmem:[%s9 + $0x8] sm:$0xff]
        %v670 = vld [vmem:[%s9 + $0x10] sm:$0xff]
        %v671 = vld [vmem:[%s9 + $0x18] sm:$0xff]
        %673 = vrot.lane.b32.xlu0 %v667, 96
        %v674 = vpop.permute.xlu0 %673
        %v675 = vsel %vm481, %v674, 0
        %677 = vmatprep.subr.mxu0 0.0
        %678 = vmatpush1.msra.mxu0 %v668
        %679 = vmatprep.subr.mxu0 0.0
        %680 = vmatpush1.msra.mxu0 %v669
        %681 = vmatprep.subr.mxu0 0.0
        %682 = vmatpush1.msra.mxu0 %v670
        %683 = vmatprep.subr.mxu0 0.0
        %684 = vmatpush1.msra.mxu0 %v671
        %685 = vmatprep.subr.mxu0 0.0
        %686 = vmatpush1.msra.mxu0 0.0
        %687 = vmatprep.subr.mxu0 0.0
        %688 = vmatpush1.msra.mxu0 0.0
        %689 = vmatprep.subr.mxu0 0.0
        %690 = vmatpush1.msra.mxu0 0.0
        %691 = vmatprep.subr.mxu0 0.0
        %692 = vmatpush1.msra.mxu0 0.0
        %693 = vmatprep.subr.mxu0 0.0
        %694 = vmatpush1.msra.mxu0 0.0
        %695 = vmatprep.subr.mxu0 0.0
        %696 = vmatpush1.msra.mxu0 0.0
        %697 = vmatprep.subr.mxu0 0.0
        %698 = vmatpush1.msra.mxu0 0.0
        %699 = vmatprep.subr.mxu0 0.0
        %700 = vmatpush1.msra.mxu0 0.0
        %701 = vmatprep.subr.mxu0 0.0
        %702 = vmatpush1.msra.mxu0 0.0
        %703 = vmatprep.subr.mxu0 0.0
        %704 = vmatpush1.msra.mxu0 0.0
        %705 = vmatprep.subr.mxu0 0.0
        %706 = vmatpush1.msra.mxu0 0.0
        %707 = vmatprep.subr.mxu0 0.0
        %708 = vmatpush1.msra.mxu0 0.0
        %709 = vmatprep.subr.mxu0 0.0
        %710 = vmatpush1.msra.mxu0 0.0
        %711 = vmatprep.subr.mxu0 0.0
        %712 = vmatpush1.msra.mxu0 0.0
        %713 = vmatprep.subr.mxu0 0.0
        %714 = vmatpush1.msra.mxu0 0.0
        %715 = vmatprep.subr.mxu0 0.0
        %716 = vmatpush1.msra.mxu0 0.0
        %717 = vmatprep.subr.mxu0 0.0
        %718 = vmatpush1.msra.mxu0 0.0
        %719 = vmatprep.subr.mxu0 0.0
        %720 = vmatpush1.msra.mxu0 0.0
        %721 = vmatprep.subr.mxu0 0.0
        %722 = vmatpush1.msra.mxu0 0.0
        %723 = vmatprep.subr.mxu0 0.0
        %724 = vmatpush1.msra.mxu0 0.0
        %725 = vmatprep.subr.mxu0 0.0
        %726 = vmatpush1.msra.mxu0 0.0
        %727 = vmatprep.subr.mxu0 0.0
        %728 = vmatpush1.msra.mxu0 0.0
        %729 = vmatprep.subr.mxu0 0.0
        %730 = vmatpush1.msra.mxu0 0.0
        %731 = vmatprep.subr.mxu0 0.0
        %732 = vmatpush1.msra.mxu0 0.0
        %733 = vmatprep.subr.mxu0 0.0
        %734 = vmatpush1.msra.mxu0 0.0
        %735 = vmatprep.subr.mxu0 0.0
        %736 = vmatpush1.msra.mxu0 0.0
        %737 = vmatprep.subr.mxu0 0.0
        %738 = vmatpush1.msra.mxu0 0.0
        %739 = vmatprep.subr.mxu0 0.0
        %740 = vmatpush1.msra.mxu0 0.0
        %741 = vmatprep.mubr.f32.mxu0 0.0
        %742 = vmatmul.mubr.f32.gmra.mrb[0].mxu0 %v675
        %v743 = vpop.f32.mrb[0].mxu0
        %v744 = vadd.f32 0.0, %v743
        %v745 = vpop.f32.mrb[0].mxu0
        %746 = vdwg.mxu0
        %v749 = vunpack.c.l.s4 1966171168
        %v750 = vunpack.c.0.s8 %v749
        %v751 = vlaneseq
        %v752 = vshrl.u32 %v751, 7
        %v753 = vsub.s32 %v750, %v752
        %v754 = vrot.slane %v744, %v753
        %v755 = vcombine.high %v754, %v754
        %v757 = vunpack.c.l.s4 1966171168
        %v758 = vunpack.c.0.s8 %v757
        %v759 = vlaneseq
        %v760 = vshrl.u32 %v759, 7
        %v761 = vsub.s32 %v758, %v760
        %v762 = vrot.slane %v754, %v761
        %v764 = vunpack.c.l.s4 1966171168
        %v765 = vunpack.c.0.s8 %v764
        %v766 = vlaneseq
        %v767 = vshrl.u32 %v766, 7
        %v768 = vsub.s32 %v765, %v767
        %v769 = vrot.slane %v755, %v768
        %v770 = vld [vmem:[%s2] sm:$0xff]
        %v771 = vld [vmem:[%s2 + $0x8] sm:$0xff]
        %v772 = vld [vmem:[%s2 + $0x10] sm:$0xff]
        %v773 = vld [vmem:[%s2 + $0x18] sm:$0xff]
        %v774 = vld [vmem:[%s2 + $0x20] sm:$0xff]
        %v775 = vld [vmem:[%s2 + $0x28] sm:$0xff]
        %v776 = vld [vmem:[%s2 + $0x30] sm:$0xff]
        %v777 = vld [vmem:[%s2 + $0x38] sm:$0xff]
        %v778 = vld [vmem:[%s2 + $0x40] sm:$0xff]
        %v779 = vld [vmem:[%s2 + $0x48] sm:$0xff]
        %v780 = vld [vmem:[%s2 + $0x50] sm:$0xff]
        %v781 = vld [vmem:[%s2 + $0x58] sm:$0xff]
        %v782 = vld [vmem:[%s2 + $0x60] sm:$0xff]
        %v783 = vld [vmem:[%s2 + $0x68] sm:$0xff]
        %v784 = vld [vmem:[%s2 + $0x70] sm:$0xff]
        %v785 = vld [vmem:[%s2 + $0x78] sm:$0xff]
        %v786 = vld [vmem:[%s2 + $0x80] sm:$0xff]
        %v787 = vld [vmem:[%s2 + $0x88] sm:$0xff]
        %v788 = vld [vmem:[%s2 + $0x90] sm:$0xff]
        %v789 = vld [vmem:[%s2 + $0x98] sm:$0xff]
        %v790 = vld [vmem:[%s2 + $0xa0] sm:$0xff]
        %v791 = vld [vmem:[%s2 + $0xa8] sm:$0xff]
        %v792 = vld [vmem:[%s2 + $0xb0] sm:$0xff]
        %v793 = vld [vmem:[%s2 + $0xb8] sm:$0xff]
        %v794 = vld [vmem:[%s2 + $0xc0] sm:$0xff]
        %v795 = vld [vmem:[%s2 + $0xc8] sm:$0xff]
        %v796 = vld [vmem:[%s2 + $0xd0] sm:$0xff]
        %v797 = vld [vmem:[%s2 + $0xd8] sm:$0xff]
        %v798 = vld [vmem:[%s2 + $0xe0] sm:$0xff]
        %v799 = vld [vmem:[%s2 + $0xe8] sm:$0xff]
        %v800 = vld [vmem:[%s2 + $0xf0] sm:$0xff]
        %v801 = vld [vmem:[%s2 + $0xf8] sm:$0xff]
        %v802 = vlaneseq
        %v803 = vshrl.u32 %v802, 7
        %v804 = vsub.s32 0, %v803
        %v805 = vrot.slane %v762, %v804
        %v806 = vlaneseq
        %v807 = vshrl.u32 %v806, 7
        %v808 = vsub.s32 0, %v807
        %v809 = vrot.slane %v769, %v808
        %v812 = vadd.f32 %v805, %v770
        %v813 = vadd.f32 %v805, %v771
        %v814 = vadd.f32 %v805, %v772
        %v815 = vadd.f32 %v805, %v773
        %v816 = vadd.f32 %v805, %v774
        %v817 = vadd.f32 %v805, %v775
        %v818 = vadd.f32 %v805, %v776
        %v819 = vadd.f32 %v805, %v777
        %v820 = vadd.f32 %v805, %v778
        %v821 = vadd.f32 %v805, %v779
        %v822 = vadd.f32 %v805, %v780
        %v823 = vadd.f32 %v805, %v781
        %v824 = vadd.f32 %v805, %v782
        %v825 = vadd.f32 %v805, %v783
        %v826 = vadd.f32 %v805, %v784
        %v827 = vadd.f32 %v805, %v785
        %v828 = vadd.f32 %v809, %v786
        %v829 = vadd.f32 %v809, %v787
        %v830 = vadd.f32 %v809, %v788
        %v831 = vadd.f32 %v809, %v789
        %v832 = vadd.f32 %v809, %v790
        %v833 = vadd.f32 %v809, %v791
        %v834 = vadd.f32 %v809, %v792
        %v835 = vadd.f32 %v809, %v793
        %v836 = vadd.f32 %v809, %v794
        %v837 = vadd.f32 %v809, %v795
        %v838 = vadd.f32 %v809, %v796
        %v839 = vadd.f32 %v809, %v797
        %v840 = vadd.f32 %v809, %v798
        %v841 = vadd.f32 %v809, %v799
        %v842 = vadd.f32 %v809, %v800
        %v843 = vadd.f32 %v809, %v801
        %v844 = vtanh.pop %v812
        %v845 = vtanh.pop %v813
        %v846 = vtanh.pop %v814
        %v847 = vtanh.pop %v815
        %v848 = vtanh.pop %v816
        %v849 = vtanh.pop %v817
        %v850 = vtanh.pop %v818
        %v851 = vtanh.pop %v819
        %v852 = vtanh.pop %v820
        %v853 = vtanh.pop %v821
        %v854 = vtanh.pop %v822
        %v855 = vtanh.pop %v823
        %v856 = vtanh.pop %v824
        %v857 = vtanh.pop %v825
        %v858 = vtanh.pop %v826
        %v859 = vtanh.pop %v827
        %v860 = vtanh.pop %v828
        %v861 = vtanh.pop %v829
        %v862 = vtanh.pop %v830
        %v863 = vtanh.pop %v831
        %v864 = vtanh.pop %v832
        %v865 = vtanh.pop %v833
        %v866 = vtanh.pop %v834
        %v867 = vtanh.pop %v835
        %v868 = vtanh.pop %v836
        %v869 = vtanh.pop %v837
        %v870 = vtanh.pop %v838
        %v871 = vtanh.pop %v839
        %v872 = vtanh.pop %v840
        %v873 = vtanh.pop %v841
        %v874 = vtanh.pop %v842
        %v875 = vtanh.pop %v843
        %v877 = vlaneseq
        %v878 = vshrl.u32 %v877, 7
        %v879 = vsub.s32 0, %v878
        %v880 = vrot.slane %v473, %v879
        %v882 = vmul.f32 %v844, %v880
        %v883 = vmul.f32 %v845, %v880
        %v884 = vmul.f32 %v846, %v880
        %v885 = vmul.f32 %v847, %v880
        %v886 = vmul.f32 %v848, %v880
        %v887 = vmul.f32 %v849, %v880
        %v888 = vmul.f32 %v850, %v880
        %v889 = vmul.f32 %v851, %v880
        %v890 = vmul.f32 %v852, %v880
        %v891 = vmul.f32 %v853, %v880
        %v892 = vmul.f32 %v854, %v880
        %v893 = vmul.f32 %v855, %v880
        %v894 = vmul.f32 %v856, %v880
        %v895 = vmul.f32 %v857, %v880
        %v896 = vmul.f32 %v858, %v880
        %v897 = vmul.f32 %v859, %v880
        %v898 = vmul.f32 %v860, %v880
        %v899 = vmul.f32 %v861, %v880
        %v900 = vmul.f32 %v862, %v880
        %v901 = vmul.f32 %v863, %v880
        %v902 = vmul.f32 %v864, %v880
        %v903 = vmul.f32 %v865, %v880
        %v904 = vmul.f32 %v866, %v880
        %v905 = vmul.f32 %v867, %v880
        %v906 = vmul.f32 %v868, %v880
        %v907 = vmul.f32 %v869, %v880
        %v908 = vmul.f32 %v870, %v880
        %v909 = vmul.f32 %v871, %v880
        %v910 = vmul.f32 %v872, %v880
        %v911 = vmul.f32 %v873, %v880
        %v912 = vmul.f32 %v874, %v880
        %v913 = vmul.f32 %v875, %v880
        %v914 = vsel %vm481, %v882, 0.0
        %915 = vadd.xlane.f32.xlu0 %v914
        %v916 = vpop.xlane.xlu0 %915
        %v917 = vsel %vm481, %v883, 0.0
        %918 = vadd.xlane.f32.xlu0 %v917
        %v919 = vpop.xlane.xlu0 %918
        %v920 = vsel %vm481, %v884, 0.0
        %921 = vadd.xlane.f32.xlu0 %v920
        %v922 = vpop.xlane.xlu0 %921
        %v923 = vsel %vm481, %v885, 0.0
        %924 = vadd.xlane.f32.xlu0 %v923
        %v925 = vpop.xlane.xlu0 %924
        %v926 = vsel %vm481, %v886, 0.0
        %927 = vadd.xlane.f32.xlu0 %v926
        %v928 = vpop.xlane.xlu0 %927
        %v929 = vsel %vm481, %v887, 0.0
        %930 = vadd.xlane.f32.xlu0 %v929
        %v931 = vpop.xlane.xlu0 %930
        %v932 = vsel %vm481, %v888, 0.0
        %933 = vadd.xlane.f32.xlu0 %v932
        %v934 = vpop.xlane.xlu0 %933
        %v935 = vsel %vm481, %v889, 0.0
        %936 = vadd.xlane.f32.xlu0 %v935
        %v937 = vpop.xlane.xlu0 %936
        %v938 = vsel %vm481, %v890, 0.0
        %939 = vadd.xlane.f32.xlu0 %v938
        %v940 = vpop.xlane.xlu0 %939
        %v941 = vsel %vm481, %v891, 0.0
        %942 = vadd.xlane.f32.xlu0 %v941
        %v943 = vpop.xlane.xlu0 %942
        %v944 = vsel %vm481, %v892, 0.0
        %945 = vadd.xlane.f32.xlu0 %v944
        %v946 = vpop.xlane.xlu0 %945
        %v947 = vsel %vm481, %v893, 0.0
        %948 = vadd.xlane.f32.xlu0 %v947
        %v949 = vpop.xlane.xlu0 %948
        %v950 = vsel %vm481, %v894, 0.0
        %951 = vadd.xlane.f32.xlu0 %v950
        %v952 = vpop.xlane.xlu0 %951
        %v953 = vsel %vm481, %v895, 0.0
        %954 = vadd.xlane.f32.xlu0 %v953
        %v955 = vpop.xlane.xlu0 %954
        %v956 = vsel %vm481, %v896, 0.0
        %957 = vadd.xlane.f32.xlu0 %v956
        %v958 = vpop.xlane.xlu0 %957
        %v959 = vsel %vm481, %v897, 0.0
        %960 = vadd.xlane.f32.xlu0 %v959
        %v961 = vpop.xlane.xlu0 %960
        %v962 = vsel %vm481, %v898, 0.0
        %963 = vadd.xlane.f32.xlu0 %v962
        %v964 = vpop.xlane.xlu0 %963
        %v965 = vsel %vm481, %v899, 0.0
        %966 = vadd.xlane.f32.xlu0 %v965
        %v967 = vpop.xlane.xlu0 %966
        %v968 = vsel %vm481, %v900, 0.0
        %969 = vadd.xlane.f32.xlu0 %v968
        %v970 = vpop.xlane.xlu0 %969
        %v971 = vsel %vm481, %v901, 0.0
        %972 = vadd.xlane.f32.xlu0 %v971
        %v973 = vpop.xlane.xlu0 %972
        %v974 = vsel %vm481, %v902, 0.0
        %975 = vadd.xlane.f32.xlu0 %v974
        %v976 = vpop.xlane.xlu0 %975
        %v977 = vsel %vm481, %v903, 0.0
        %978 = vadd.xlane.f32.xlu0 %v977
        %v979 = vpop.xlane.xlu0 %978
        %v980 = vsel %vm481, %v904, 0.0
        %981 = vadd.xlane.f32.xlu0 %v980
        %v982 = vpop.xlane.xlu0 %981
        %v983 = vsel %vm481, %v905, 0.0
        %984 = vadd.xlane.f32.xlu0 %v983
        %v985 = vpop.xlane.xlu0 %984
        %v986 = vsel %vm481, %v906, 0.0
        %987 = vadd.xlane.f32.xlu0 %v986
        %v988 = vpop.xlane.xlu0 %987
        %v989 = vsel %vm481, %v907, 0.0
        %990 = vadd.xlane.f32.xlu0 %v989
        %v991 = vpop.xlane.xlu0 %990
        %v992 = vsel %vm481, %v908, 0.0
        %993 = vadd.xlane.f32.xlu0 %v992
        %v994 = vpop.xlane.xlu0 %993
        %v995 = vsel %vm481, %v909, 0.0
        %996 = vadd.xlane.f32.xlu0 %v995
        %v997 = vpop.xlane.xlu0 %996
        %v998 = vsel %vm481, %v910, 0.0
        %999 = vadd.xlane.f32.xlu0 %v998
        %v1000 = vpop.xlane.xlu0 %999
        %v1001 = vsel %vm481, %v911, 0.0
        %1002 = vadd.xlane.f32.xlu0 %v1001
        %v1003 = vpop.xlane.xlu0 %1002
        %v1004 = vsel %vm481, %v912, 0.0
        %1005 = vadd.xlane.f32.xlu0 %v1004
        %v1006 = vpop.xlane.xlu0 %1005
        %v1007 = vsel %vm481, %v913, 0.0
        %1008 = vadd.xlane.f32.xlu0 %v1007
        %v1009 = vpop.xlane.xlu0 %1008
        %v1011 = vlaneseq
        %v1012 = vshrl.u32 %v1011, 7
        %v1013 = vsub.s32 0, %v1012
        %v1014 = vrot.slane %v471, %v1013
        %1016 = vbcast.lane.b32.xlu0 %v1014, 256
        %v1017 = vpop.permute.xlu0 %1016
        %s1019 = sor.u32 256, 8
        %1020 = vbcast.lane.b32.xlu0 %v1014, %s1019
        %v1021 = vpop.permute.xlu0 %1020
        %s1023 = sor.u32 256, 16
        %1024 = vbcast.lane.b32.xlu0 %v1014, %s1023
        %v1025 = vpop.permute.xlu0 %1024
        %s1027 = sor.u32 256, 24
        %1028 = vbcast.lane.b32.xlu0 %v1014, %s1027
        %v1029 = vpop.permute.xlu0 %1028
        %s1031 = sor.u32 256, 32
        %1032 = vbcast.lane.b32.xlu0 %v1014, %s1031
        %v1033 = vpop.permute.xlu0 %1032
        %s1035 = sor.u32 256, 40
        %1036 = vbcast.lane.b32.xlu0 %v1014, %s1035
        %v1037 = vpop.permute.xlu0 %1036
        %s1039 = sor.u32 256, 48
        %1040 = vbcast.lane.b32.xlu0 %v1014, %s1039
        %v1041 = vpop.permute.xlu0 %1040
        %s1043 = sor.u32 256, 56
        %1044 = vbcast.lane.b32.xlu0 %v1014, %s1043
        %v1045 = vpop.permute.xlu0 %1044
        %s1047 = sor.u32 256, 64
        %1048 = vbcast.lane.b32.xlu0 %v1014, %s1047
        %v1049 = vpop.permute.xlu0 %1048
        %s1051 = sor.u32 256, 72
        %1052 = vbcast.lane.b32.xlu0 %v1014, %s1051
        %v1053 = vpop.permute.xlu0 %1052
        %s1055 = sor.u32 256, 80
        %1056 = vbcast.lane.b32.xlu0 %v1014, %s1055
        %v1057 = vpop.permute.xlu0 %1056
        %s1059 = sor.u32 256, 88
        %1060 = vbcast.lane.b32.xlu0 %v1014, %s1059
        %v1061 = vpop.permute.xlu0 %1060
        %s1063 = sor.u32 256, 96
        %1064 = vbcast.lane.b32.xlu0 %v1014, %s1063
        %v1065 = vpop.permute.xlu0 %1064
        %s1067 = sor.u32 256, 104
        %1068 = vbcast.lane.b32.xlu0 %v1014, %s1067
        %v1069 = vpop.permute.xlu0 %1068
        %s1071 = sor.u32 256, 112
        %1072 = vbcast.lane.b32.xlu0 %v1014, %s1071
        %v1073 = vpop.permute.xlu0 %1072
        %s1075 = sor.u32 256, 120
        %1076 = vbcast.lane.b32.xlu0 %v1014, %s1075
        %v1077 = vpop.permute.xlu0 %1076
        %v1078 = vlaneseq
        %v1079 = vshrl.u32 %v1078, 7
        %v1080 = vsub.s32 1, %v1079
        %v1081 = vrot.slane %v471, %v1080
        %1083 = vbcast.lane.b32.xlu0 %v1081, 256
        %v1084 = vpop.permute.xlu0 %1083
        %s1086 = sor.u32 256, 8
        %1087 = vbcast.lane.b32.xlu0 %v1081, %s1086
        %v1088 = vpop.permute.xlu0 %1087
        %s1090 = sor.u32 256, 16
        %1091 = vbcast.lane.b32.xlu0 %v1081, %s1090
        %v1092 = vpop.permute.xlu0 %1091
        %s1094 = sor.u32 256, 24
        %1095 = vbcast.lane.b32.xlu0 %v1081, %s1094
        %v1096 = vpop.permute.xlu0 %1095
        %s1098 = sor.u32 256, 32
        %1099 = vbcast.lane.b32.xlu0 %v1081, %s1098
        %v1100 = vpop.permute.xlu0 %1099
        %s1102 = sor.u32 256, 40
        %1103 = vbcast.lane.b32.xlu0 %v1081, %s1102
        %v1104 = vpop.permute.xlu0 %1103
        %s1106 = sor.u32 256, 48
        %1107 = vbcast.lane.b32.xlu0 %v1081, %s1106
        %v1108 = vpop.permute.xlu0 %1107
        %s1110 = sor.u32 256, 56
        %1111 = vbcast.lane.b32.xlu0 %v1081, %s1110
        %v1112 = vpop.permute.xlu0 %1111
        %s1114 = sor.u32 256, 64
        %1115 = vbcast.lane.b32.xlu0 %v1081, %s1114
        %v1116 = vpop.permute.xlu0 %1115
        %s1118 = sor.u32 256, 72
        %1119 = vbcast.lane.b32.xlu0 %v1081, %s1118
        %v1120 = vpop.permute.xlu0 %1119
        %s1122 = sor.u32 256, 80
        %1123 = vbcast.lane.b32.xlu0 %v1081, %s1122
        %v1124 = vpop.permute.xlu0 %1123
        %s1126 = sor.u32 256, 88
        %1127 = vbcast.lane.b32.xlu0 %v1081, %s1126
        %v1128 = vpop.permute.xlu0 %1127
        %s1130 = sor.u32 256, 96
        %1131 = vbcast.lane.b32.xlu0 %v1081, %s1130
        %v1132 = vpop.permute.xlu0 %1131
        %s1134 = sor.u32 256, 104
        %1135 = vbcast.lane.b32.xlu0 %v1081, %s1134
        %v1136 = vpop.permute.xlu0 %1135
        %s1138 = sor.u32 256, 112
        %1139 = vbcast.lane.b32.xlu0 %v1081, %s1138
        %v1140 = vpop.permute.xlu0 %1139
        %s1142 = sor.u32 256, 120
        %1143 = vbcast.lane.b32.xlu0 %v1081, %s1142
        %v1144 = vpop.permute.xlu0 %1143
        %v1177 = vadd.f32 %v916, %v1017
        %v1178 = vadd.f32 %v919, %v1021
        %v1179 = vadd.f32 %v922, %v1025
        %v1180 = vadd.f32 %v925, %v1029
        %v1181 = vadd.f32 %v928, %v1033
        %v1182 = vadd.f32 %v931, %v1037
        %v1183 = vadd.f32 %v934, %v1041
        %v1184 = vadd.f32 %v937, %v1045
        %v1185 = vadd.f32 %v940, %v1049
        %v1186 = vadd.f32 %v943, %v1053
        %v1187 = vadd.f32 %v946, %v1057
        %v1188 = vadd.f32 %v949, %v1061
        %v1189 = vadd.f32 %v952, %v1065
        %v1190 = vadd.f32 %v955, %v1069
        %v1191 = vadd.f32 %v958, %v1073
        %v1192 = vadd.f32 %v961, %v1077
        %v1193 = vadd.f32 %v964, %v1084
        %v1194 = vadd.f32 %v967, %v1088
        %v1195 = vadd.f32 %v970, %v1092
        %v1196 = vadd.f32 %v973, %v1096
        %v1197 = vadd.f32 %v976, %v1100
        %v1198 = vadd.f32 %v979, %v1104
        %v1199 = vadd.f32 %v982, %v1108
        %v1200 = vadd.f32 %v985, %v1112
        %v1201 = vadd.f32 %v988, %v1116
        %v1202 = vadd.f32 %v991, %v1120
        %v1203 = vadd.f32 %v994, %v1124
        %v1204 = vadd.f32 %v997, %v1128
        %v1205 = vadd.f32 %v1000, %v1132
        %v1206 = vadd.f32 %v1003, %v1136
        %v1207 = vadd.f32 %v1006, %v1140
        %v1208 = vadd.f32 %v1009, %v1144
        %1241 = vset.pattern.permute.xlu0 0
        %1242 = vperm.xlu0 %1241, %v1177
        %v1243 = vpop.permute.xlu0 %1242
        %1244 = vset.pattern.permute.xlu0 0
        %1245 = vperm.xlu0 %1244, %v1178
        %v1246 = vpop.permute.xlu0 %1245
        %1247 = vset.pattern.permute.xlu0 0
        %1248 = vperm.xlu0 %1247, %v1179
        %v1249 = vpop.permute.xlu0 %1248
        %1250 = vset.pattern.permute.xlu0 0
        %1251 = vperm.xlu0 %1250, %v1180
        %v1252 = vpop.permute.xlu0 %1251
        %1253 = vset.pattern.permute.xlu0 0
        %1254 = vperm.xlu0 %1253, %v1181
        %v1255 = vpop.permute.xlu0 %1254
        %1256 = vset.pattern.permute.xlu0 0
        %1257 = vperm.xlu0 %1256, %v1182
        %v1258 = vpop.permute.xlu0 %1257
        %1259 = vset.pattern.permute.xlu0 0
        %1260 = vperm.xlu0 %1259, %v1183
        %v1261 = vpop.permute.xlu0 %1260
        %1262 = vset.pattern.permute.xlu0 0
        %1263 = vperm.xlu0 %1262, %v1184
        %v1264 = vpop.permute.xlu0 %1263
        %1265 = vset.pattern.permute.xlu0 0
        %1266 = vperm.xlu0 %1265, %v1185
        %v1267 = vpop.permute.xlu0 %1266
        %1268 = vset.pattern.permute.xlu0 0
        %1269 = vperm.xlu0 %1268, %v1186
        %v1270 = vpop.permute.xlu0 %1269
        %1271 = vset.pattern.permute.xlu0 0
        %1272 = vperm.xlu0 %1271, %v1187
        %v1273 = vpop.permute.xlu0 %1272
        %1274 = vset.pattern.permute.xlu0 0
        %1275 = vperm.xlu0 %1274, %v1188
        %v1276 = vpop.permute.xlu0 %1275
        %1277 = vset.pattern.permute.xlu0 0
        %1278 = vperm.xlu0 %1277, %v1189
        %v1279 = vpop.permute.xlu0 %1278
        %1280 = vset.pattern.permute.xlu0 0
        %1281 = vperm.xlu0 %1280, %v1190
        %v1282 = vpop.permute.xlu0 %1281
        %1283 = vset.pattern.permute.xlu0 0
        %1284 = vperm.xlu0 %1283, %v1191
        %v1285 = vpop.permute.xlu0 %1284
        %1286 = vset.pattern.permute.xlu0 0
        %1287 = vperm.xlu0 %1286, %v1192
        %v1288 = vpop.permute.xlu0 %1287
        %1289 = vset.pattern.permute.xlu0 0
        %1290 = vperm.xlu0 %1289, %v1193
        %v1291 = vpop.permute.xlu0 %1290
        %1292 = vset.pattern.permute.xlu0 0
        %1293 = vperm.xlu0 %1292, %v1194
        %v1294 = vpop.permute.xlu0 %1293
        %1295 = vset.pattern.permute.xlu0 0
        %1296 = vperm.xlu0 %1295, %v1195
        %v1297 = vpop.permute.xlu0 %1296
        %1298 = vset.pattern.permute.xlu0 0
        %1299 = vperm.xlu0 %1298, %v1196
        %v1300 = vpop.permute.xlu0 %1299
        %1301 = vset.pattern.permute.xlu0 0
        %1302 = vperm.xlu0 %1301, %v1197
        %v1303 = vpop.permute.xlu0 %1302
        %1304 = vset.pattern.permute.xlu0 0
        %1305 = vperm.xlu0 %1304, %v1198
        %v1306 = vpop.permute.xlu0 %1305
        %1307 = vset.pattern.permute.xlu0 0
        %1308 = vperm.xlu0 %1307, %v1199
        %v1309 = vpop.permute.xlu0 %1308
        %1310 = vset.pattern.permute.xlu0 0
        %1311 = vperm.xlu0 %1310, %v1200
        %v1312 = vpop.permute.xlu0 %1311
        %1313 = vset.pattern.permute.xlu0 0
        %1314 = vperm.xlu0 %1313, %v1201
        %v1315 = vpop.permute.xlu0 %1314
        %1316 = vset.pattern.permute.xlu0 0
        %1317 = vperm.xlu0 %1316, %v1202
        %v1318 = vpop.permute.xlu0 %1317
        %1319 = vset.pattern.permute.xlu0 0
        %1320 = vperm.xlu0 %1319, %v1203
        %v1321 = vpop.permute.xlu0 %1320
        %1322 = vset.pattern.permute.xlu0 0
        %1323 = vperm.xlu0 %1322, %v1204
        %v1324 = vpop.permute.xlu0 %1323
        %1325 = vset.pattern.permute.xlu0 0
        %1326 = vperm.xlu0 %1325, %v1205
        %v1327 = vpop.permute.xlu0 %1326
        %1328 = vset.pattern.permute.xlu0 0
        %1329 = vperm.xlu0 %1328, %v1206
        %v1330 = vpop.permute.xlu0 %1329
        %1331 = vset.pattern.permute.xlu0 0
        %1332 = vperm.xlu0 %1331, %v1207
        %v1333 = vpop.permute.xlu0 %1332
        %1334 = vset.pattern.permute.xlu0 0
        %1335 = vperm.xlu0 %1334, %v1208
        %v1336 = vpop.permute.xlu0 %1335
        %v1337 = vlaneseq
        %v1338 = vand.u32 %v1337, 127
        %v1339 = vlaneseq
        %v1340 = vshrl.u32 %v1339, 7
        %v1341 = vsub.s32 %v1338, %v1340
        %v1342 = vrot.slane %v1243, %v1341
        %v1343 = vadd.s32 %v1338, 4294967288
        %v1344 = vlaneseq
        %v1345 = vshrl.u32 %v1344, 7
        %v1346 = vsub.s32 %v1343, %v1345
        %v1347 = vrot.slane %v1246, %v1346
        %vm1348 = vcmask 130112
        %v1349 = vsel %vm1348, %v1347, %v1342
        %v1350 = vadd.s32 %v1338, 4294967280
        %v1351 = vlaneseq
        %v1352 = vshrl.u32 %v1351, 7
        %v1353 = vsub.s32 %v1350, %v1352
        %v1354 = vrot.slane %v1249, %v1353
        %vm1355 = vcmask 195712
        %v1356 = vsel %vm1355, %v1354, %v1349
        %v1357 = vadd.s32 %v1338, 4294967272
        %v1358 = vlaneseq
        %v1359 = vshrl.u32 %v1358, 7
        %v1360 = vsub.s32 %v1357, %v1359
        %v1361 = vrot.slane %v1252, %v1360
        %vm1362 = vcmask 261312
        %v1363 = vsel %vm1362, %v1361, %v1356
        %v1364 = vadd.s32 %v1338, 4294967264
        %v1365 = vlaneseq
        %v1366 = vshrl.u32 %v1365, 7
        %v1367 = vsub.s32 %v1364, %v1366
        %v1368 = vrot.slane %v1255, %v1367
        %vm1369 = vcmask 326912
        %v1370 = vsel %vm1369, %v1368, %v1363
        %v1371 = vadd.s32 %v1338, 4294967256
        %v1372 = vlaneseq
        %v1373 = vshrl.u32 %v1372, 7
        %v1374 = vsub.s32 %v1371, %v1373
        %v1375 = vrot.slane %v1258, %v1374
        %vm1376 = vcmask 392512
        %v1377 = vsel %vm1376, %v1375, %v1370
        %v1378 = vadd.s32 %v1338, 4294967248
        %v1379 = vlaneseq
        %v1380 = vshrl.u32 %v1379, 7
        %v1381 = vsub.s32 %v1378, %v1380
        %v1382 = vrot.slane %v1261, %v1381
        %vm1383 = vcmask 458112
        %v1384 = vsel %vm1383, %v1382, %v1377
        %v1385 = vadd.s32 %v1338, 4294967240
        %v1386 = vlaneseq
        %v1387 = vshrl.u32 %v1386, 7
        %v1388 = vsub.s32 %v1385, %v1387
        %v1389 = vrot.slane %v1264, %v1388
        %vm1390 = vcmask 523712
        %v1391 = vsel %vm1390, %v1389, %v1384
        %v1392 = vadd.s32 %v1338, 4294967232
        %v1393 = vlaneseq
        %v1394 = vshrl.u32 %v1393, 7
        %v1395 = vsub.s32 %v1392, %v1394
        %v1396 = vrot.slane %v1267, %v1395
        %vm1397 = vcmask 589312
        %v1398 = vsel %vm1397, %v1396, %v1391
        %v1399 = vadd.s32 %v1338, 4294967224
        %v1400 = vlaneseq
        %v1401 = vshrl.u32 %v1400, 7
        %v1402 = vsub.s32 %v1399, %v1401
        %v1403 = vrot.slane %v1270, %v1402
        %vm1404 = vcmask 654912
        %v1405 = vsel %vm1404, %v1403, %v1398
        %v1406 = vadd.s32 %v1338, 4294967216
        %v1407 = vlaneseq
        %v1408 = vshrl.u32 %v1407, 7
        %v1409 = vsub.s32 %v1406, %v1408
        %v1410 = vrot.slane %v1273, %v1409
        %vm1411 = vcmask 720512
        %v1412 = vsel %vm1411, %v1410, %v1405
        %v1413 = vadd.s32 %v1338, 4294967208
        %v1414 = vlaneseq
        %v1415 = vshrl.u32 %v1414, 7
        %v1416 = vsub.s32 %v1413, %v1415
        %v1417 = vrot.slane %v1276, %v1416
        %vm1418 = vcmask 786112
        %v1419 = vsel %vm1418, %v1417, %v1412
        %v1420 = vadd.s32 %v1338, 4294967200
        %v1421 = vlaneseq
        %v1422 = vshrl.u32 %v1421, 7
        %v1423 = vsub.s32 %v1420, %v1422
        %v1424 = vrot.slane %v1279, %v1423
        %vm1425 = vcmask 851712
        %v1426 = vsel %vm1425, %v1424, %v1419
        %v1427 = vadd.s32 %v1338, 4294967192
        %v1428 = vlaneseq
        %v1429 = vshrl.u32 %v1428, 7
        %v1430 = vsub.s32 %v1427, %v1429
        %v1431 = vrot.slane %v1282, %v1430
        %vm1432 = vcmask 917312
        %v1433 = vsel %vm1432, %v1431, %v1426
        %v1434 = vadd.s32 %v1338, 4294967184
        %v1435 = vlaneseq
        %v1436 = vshrl.u32 %v1435, 7
        %v1437 = vsub.s32 %v1434, %v1436
        %v1438 = vrot.slane %v1285, %v1437
        %vm1439 = vcmask 982912
        %v1440 = vsel %vm1439, %v1438, %v1433
        %v1441 = vadd.s32 %v1338, 4294967176
        %v1442 = vlaneseq
        %v1443 = vshrl.u32 %v1442, 7
        %v1444 = vsub.s32 %v1441, %v1443
        %v1445 = vrot.slane %v1288, %v1444
        %vm1446 = vcmask 1048512
        %v1447 = vsel %vm1446, %v1445, %v1440
        %v1448 = vlaneseq
        %v1449 = vshrl.u32 %v1448, 7
        %v1450 = vsub.s32 %v1338, %v1449
        %v1451 = vrot.slane %v1291, %v1450
        %v1452 = vlaneseq
        %v1453 = vshrl.u32 %v1452, 7
        %v1454 = vsub.s32 %v1343, %v1453
        %v1455 = vrot.slane %v1294, %v1454
        %v1456 = vsel %vm1348, %v1455, %v1451
        %v1457 = vlaneseq
        %v1458 = vshrl.u32 %v1457, 7
        %v1459 = vsub.s32 %v1350, %v1458
        %v1460 = vrot.slane %v1297, %v1459
        %v1461 = vsel %vm1355, %v1460, %v1456
        %v1462 = vlaneseq
        %v1463 = vshrl.u32 %v1462, 7
        %v1464 = vsub.s32 %v1357, %v1463
        %v1465 = vrot.slane %v1300, %v1464
        %v1466 = vsel %vm1362, %v1465, %v1461
        %v1467 = vlaneseq
        %v1468 = vshrl.u32 %v1467, 7
        %v1469 = vsub.s32 %v1364, %v1468
        %v1470 = vrot.slane %v1303, %v1469
        %v1471 = vsel %vm1369, %v1470, %v1466
        %v1472 = vlaneseq
        %v1473 = vshrl.u32 %v1472, 7
        %v1474 = vsub.s32 %v1371, %v1473
        %v1475 = vrot.slane %v1306, %v1474
        %v1476 = vsel %vm1376, %v1475, %v1471
        %v1477 = vlaneseq
        %v1478 = vshrl.u32 %v1477, 7
        %v1479 = vsub.s32 %v1378, %v1478
        %v1480 = vrot.slane %v1309, %v1479
        %v1481 = vsel %vm1383, %v1480, %v1476
        %v1482 = vlaneseq
        %v1483 = vshrl.u32 %v1482, 7
        %v1484 = vsub.s32 %v1385, %v1483
        %v1485 = vrot.slane %v1312, %v1484
        %v1486 = vsel %vm1390, %v1485, %v1481
        %v1487 = vlaneseq
        %v1488 = vshrl.u32 %v1487, 7
        %v1489 = vsub.s32 %v1392, %v1488
        %v1490 = vrot.slane %v1315, %v1489
        %v1491 = vsel %vm1397, %v1490, %v1486
        %v1492 = vlaneseq
        %v1493 = vshrl.u32 %v1492, 7
        %v1494 = vsub.s32 %v1399, %v1493
        %v1495 = vrot.slane %v1318, %v1494
        %v1496 = vsel %vm1404, %v1495, %v1491
        %v1497 = vlaneseq
        %v1498 = vshrl.u32 %v1497, 7
        %v1499 = vsub.s32 %v1406, %v1498
        %v1500 = vrot.slane %v1321, %v1499
        %v1501 = vsel %vm1411, %v1500, %v1496
        %v1502 = vlaneseq
        %v1503 = vshrl.u32 %v1502, 7
        %v1504 = vsub.s32 %v1413, %v1503
        %v1505 = vrot.slane %v1324, %v1504
        %v1506 = vsel %vm1418, %v1505, %v1501
        %v1507 = vlaneseq
        %v1508 = vshrl.u32 %v1507, 7
        %v1509 = vsub.s32 %v1420, %v1508
        %v1510 = vrot.slane %v1327, %v1509
        %v1511 = vsel %vm1425, %v1510, %v1506
        %v1512 = vlaneseq
        %v1513 = vshrl.u32 %v1512, 7
        %v1514 = vsub.s32 %v1427, %v1513
        %v1515 = vrot.slane %v1330, %v1514
        %v1516 = vsel %vm1432, %v1515, %v1511
        %v1517 = vlaneseq
        %v1518 = vshrl.u32 %v1517, 7
        %v1519 = vsub.s32 %v1434, %v1518
        %v1520 = vrot.slane %v1333, %v1519
        %v1521 = vsel %vm1439, %v1520, %v1516
        %v1522 = vlaneseq
        %v1523 = vshrl.u32 %v1522, 7
        %v1524 = vsub.s32 %v1441, %v1523
        %v1525 = vrot.slane %v1336, %v1524
        %v1526 = vsel %vm1446, %v1525, %v1521
        %vm1527 = vcmask 1041409
        %v1528 = vsel %vm1527, %v1526, %v1447
        %vm1530 = vcmask 1041408
        %v1531 = vsel %vm1530, %v1528, -inf
        %1532 = vmax.xlane.f32.xlu0 %v1531
        %v1533 = vpop.xlane.xlu0 %1532
        %v1535 = vlaneseq
        %v1536 = vshrl.u32 %v1535, 7
        %v1537 = vsub.s32 0, %v1536
        %v1538 = vrot.slane %v1533, %v1537
        %v1539 = vlaneseq
        %v1540 = vshrl.u32 %v1539, 7
        %v1541 = vsub.s32 1, %v1540
        %v1542 = vrot.slane %v1533, %v1541
        %v1545 = vsub.f32 %v1177, %v1538
        %v1546 = vsub.f32 %v1178, %v1538
        %v1547 = vsub.f32 %v1179, %v1538
        %v1548 = vsub.f32 %v1180, %v1538
        %v1549 = vsub.f32 %v1181, %v1538
        %v1550 = vsub.f32 %v1182, %v1538
        %v1551 = vsub.f32 %v1183, %v1538
        %v1552 = vsub.f32 %v1184, %v1538
        %v1553 = vsub.f32 %v1185, %v1538
        %v1554 = vsub.f32 %v1186, %v1538
        %v1555 = vsub.f32 %v1187, %v1538
        %v1556 = vsub.f32 %v1188, %v1538
        %v1557 = vsub.f32 %v1189, %v1538
        %v1558 = vsub.f32 %v1190, %v1538
        %v1559 = vsub.f32 %v1191, %v1538
        %v1560 = vsub.f32 %v1192, %v1538
        %v1561 = vsub.f32 %v1193, %v1542
        %v1562 = vsub.f32 %v1194, %v1542
        %v1563 = vsub.f32 %v1195, %v1542
        %v1564 = vsub.f32 %v1196, %v1542
        %v1565 = vsub.f32 %v1197, %v1542
        %v1566 = vsub.f32 %v1198, %v1542
        %v1567 = vsub.f32 %v1199, %v1542
        %v1568 = vsub.f32 %v1200, %v1542
        %v1569 = vsub.f32 %v1201, %v1542
        %v1570 = vsub.f32 %v1202, %v1542
        %v1571 = vsub.f32 %v1203, %v1542
        %v1572 = vsub.f32 %v1204, %v1542
        %v1573 = vsub.f32 %v1205, %v1542
        %v1574 = vsub.f32 %v1206, %v1542
        %v1575 = vsub.f32 %v1207, %v1542
        %v1576 = vsub.f32 %v1208, %v1542
        %v1577 = vmul.f32 %v1545, 1.442695
        %v1578 = vpow.pop %v1577
        %v1579 = vmul.f32 %v1546, 1.442695
        %v1580 = vpow.pop %v1579
        %v1581 = vmul.f32 %v1547, 1.442695
        %v1582 = vpow.pop %v1581
        %v1583 = vmul.f32 %v1548, 1.442695
        %v1584 = vpow.pop %v1583
        %v1585 = vmul.f32 %v1549, 1.442695
        %v1586 = vpow.pop %v1585
        %v1587 = vmul.f32 %v1550, 1.442695
        %v1588 = vpow.pop %v1587
        %v1589 = vmul.f32 %v1551, 1.442695
        %v1590 = vpow.pop %v1589
        %v1591 = vmul.f32 %v1552, 1.442695
        %v1592 = vpow.pop %v1591
        %v1593 = vmul.f32 %v1553, 1.442695
        %v1594 = vpow.pop %v1593
        %v1595 = vmul.f32 %v1554, 1.442695
        %v1596 = vpow.pop %v1595
        %v1597 = vmul.f32 %v1555, 1.442695
        %v1598 = vpow.pop %v1597
        %v1599 = vmul.f32 %v1556, 1.442695
        %v1600 = vpow.pop %v1599
        %v1601 = vmul.f32 %v1557, 1.442695
        %v1602 = vpow.pop %v1601
        %v1603 = vmul.f32 %v1558, 1.442695
        %v1604 = vpow.pop %v1603
        %v1605 = vmul.f32 %v1559, 1.442695
        %v1606 = vpow.pop %v1605
        %v1607 = vmul.f32 %v1560, 1.442695
        %v1608 = vpow.pop %v1607
        %v1609 = vmul.f32 %v1561, 1.442695
        %v1610 = vpow.pop %v1609
        %v1611 = vmul.f32 %v1562, 1.442695
        %v1612 = vpow.pop %v1611
        %v1613 = vmul.f32 %v1563, 1.442695
        %v1614 = vpow.pop %v1613
        %v1615 = vmul.f32 %v1564, 1.442695
        %v1616 = vpow.pop %v1615
        %v1617 = vmul.f32 %v1565, 1.442695
        %v1618 = vpow.pop %v1617
        %v1619 = vmul.f32 %v1566, 1.442695
        %v1620 = vpow.pop %v1619
        %v1621 = vmul.f32 %v1567, 1.442695
        %v1622 = vpow.pop %v1621
        %v1623 = vmul.f32 %v1568, 1.442695
        %v1624 = vpow.pop %v1623
        %v1625 = vmul.f32 %v1569, 1.442695
        %v1626 = vpow.pop %v1625
        %v1627 = vmul.f32 %v1570, 1.442695
        %v1628 = vpow.pop %v1627
        %v1629 = vmul.f32 %v1571, 1.442695
        %v1630 = vpow.pop %v1629
        %v1631 = vmul.f32 %v1572, 1.442695
        %v1632 = vpow.pop %v1631
        %v1633 = vmul.f32 %v1573, 1.442695
        %v1634 = vpow.pop %v1633
        %v1635 = vmul.f32 %v1574, 1.442695
        %v1636 = vpow.pop %v1635
        %v1637 = vmul.f32 %v1575, 1.442695
        %v1638 = vpow.pop %v1637
        %v1639 = vmul.f32 %v1576, 1.442695
        %v1640 = vpow.pop %v1639
        %1673 = vset.pattern.permute.xlu0 0
        %1674 = vperm.xlu0 %1673, %v1578
        %v1675 = vpop.permute.xlu0 %1674
        %1676 = vset.pattern.permute.xlu0 0
        %1677 = vperm.xlu0 %1676, %v1580
        %v1678 = vpop.permute.xlu0 %1677
        %1679 = vset.pattern.permute.xlu0 0
        %1680 = vperm.xlu0 %1679, %v1582
        %v1681 = vpop.permute.xlu0 %1680
        %1682 = vset.pattern.permute.xlu0 0
        %1683 = vperm.xlu0 %1682, %v1584
        %v1684 = vpop.permute.xlu0 %1683
        %1685 = vset.pattern.permute.xlu0 0
        %1686 = vperm.xlu0 %1685, %v1586
        %v1687 = vpop.permute.xlu0 %1686
        %1688 = vset.pattern.permute.xlu0 0
        %1689 = vperm.xlu0 %1688, %v1588
        %v1690 = vpop.permute.xlu0 %1689
        %1691 = vset.pattern.permute.xlu0 0
        %1692 = vperm.xlu0 %1691, %v1590
        %v1693 = vpop.permute.xlu0 %1692
        %1694 = vset.pattern.permute.xlu0 0
        %1695 = vperm.xlu0 %1694, %v1592
        %v1696 = vpop.permute.xlu0 %1695
        %1697 = vset.pattern.permute.xlu0 0
        %1698 = vperm.xlu0 %1697, %v1594
        %v1699 = vpop.permute.xlu0 %1698
        %1700 = vset.pattern.permute.xlu0 0
        %1701 = vperm.xlu0 %1700, %v1596
        %v1702 = vpop.permute.xlu0 %1701
        %1703 = vset.pattern.permute.xlu0 0
        %1704 = vperm.xlu0 %1703, %v1598
        %v1705 = vpop.permute.xlu0 %1704
        %1706 = vset.pattern.permute.xlu0 0
        %1707 = vperm.xlu0 %1706, %v1600
        %v1708 = vpop.permute.xlu0 %1707
        %1709 = vset.pattern.permute.xlu0 0
        %1710 = vperm.xlu0 %1709, %v1602
        %v1711 = vpop.permute.xlu0 %1710
        %1712 = vset.pattern.permute.xlu0 0
        %1713 = vperm.xlu0 %1712, %v1604
        %v1714 = vpop.permute.xlu0 %1713
        %1715 = vset.pattern.permute.xlu0 0
        %1716 = vperm.xlu0 %1715, %v1606
        %v1717 = vpop.permute.xlu0 %1716
        %1718 = vset.pattern.permute.xlu0 0
        %1719 = vperm.xlu0 %1718, %v1608
        %v1720 = vpop.permute.xlu0 %1719
        %1721 = vset.pattern.permute.xlu0 0
        %1722 = vperm.xlu0 %1721, %v1610
        %v1723 = vpop.permute.xlu0 %1722
        %1724 = vset.pattern.permute.xlu0 0
        %1725 = vperm.xlu0 %1724, %v1612
        %v1726 = vpop.permute.xlu0 %1725
        %1727 = vset.pattern.permute.xlu0 0
        %1728 = vperm.xlu0 %1727, %v1614
        %v1729 = vpop.permute.xlu0 %1728
        %1730 = vset.pattern.permute.xlu0 0
        %1731 = vperm.xlu0 %1730, %v1616
        %v1732 = vpop.permute.xlu0 %1731
        %1733 = vset.pattern.permute.xlu0 0
        %1734 = vperm.xlu0 %1733, %v1618
        %v1735 = vpop.permute.xlu0 %1734
        %1736 = vset.pattern.permute.xlu0 0
        %1737 = vperm.xlu0 %1736, %v1620
        %v1738 = vpop.permute.xlu0 %1737
        %1739 = vset.pattern.permute.xlu0 0
        %1740 = vperm.xlu0 %1739, %v1622
        %v1741 = vpop.permute.xlu0 %1740
        %1742 = vset.pattern.permute.xlu0 0
        %1743 = vperm.xlu0 %1742, %v1624
        %v1744 = vpop.permute.xlu0 %1743
        %1745 = vset.pattern.permute.xlu0 0
        %1746 = vperm.xlu0 %1745, %v1626
        %v1747 = vpop.permute.xlu0 %1746
        %1748 = vset.pattern.permute.xlu0 0
        %1749 = vperm.xlu0 %1748, %v1628
        %v1750 = vpop.permute.xlu0 %1749
        %1751 = vset.pattern.permute.xlu0 0
        %1752 = vperm.xlu0 %1751, %v1630
        %v1753 = vpop.permute.xlu0 %1752
        %1754 = vset.pattern.permute.xlu0 0
        %1755 = vperm.xlu0 %1754, %v1632
        %v1756 = vpop.permute.xlu0 %1755
        %1757 = vset.pattern.permute.xlu0 0
        %1758 = vperm.xlu0 %1757, %v1634
        %v1759 = vpop.permute.xlu0 %1758
        %1760 = vset.pattern.permute.xlu0 0
        %1761 = vperm.xlu0 %1760, %v1636
        %v1762 = vpop.permute.xlu0 %1761
        %1763 = vset.pattern.permute.xlu0 0
        %1764 = vperm.xlu0 %1763, %v1638
        %v1765 = vpop.permute.xlu0 %1764
        %1766 = vset.pattern.permute.xlu0 0
        %1767 = vperm.xlu0 %1766, %v1640
        %v1768 = vpop.permute.xlu0 %1767
        %v1769 = vlaneseq
        %v1770 = vshrl.u32 %v1769, 7
        %v1771 = vsub.s32 %v1338, %v1770
        %v1772 = vrot.slane %v1675, %v1771
        %v1773 = vlaneseq
        %v1774 = vshrl.u32 %v1773, 7
        %v1775 = vsub.s32 %v1343, %v1774
        %v1776 = vrot.slane %v1678, %v1775
        %v1777 = vsel %vm1348, %v1776, %v1772
        %v1778 = vlaneseq
        %v1779 = vshrl.u32 %v1778, 7
        %v1780 = vsub.s32 %v1350, %v1779
        %v1781 = vrot.slane %v1681, %v1780
        %v1782 = vsel %vm1355, %v1781, %v1777
        %v1783 = vlaneseq
        %v1784 = vshrl.u32 %v1783, 7
        %v1785 = vsub.s32 %v1357, %v1784
        %v1786 = vrot.slane %v1684, %v1785
        %v1787 = vsel %vm1362, %v1786, %v1782
        %v1788 = vlaneseq
        %v1789 = vshrl.u32 %v1788, 7
        %v1790 = vsub.s32 %v1364, %v1789
        %v1791 = vrot.slane %v1687, %v1790
        %v1792 = vsel %vm1369, %v1791, %v1787
        %v1793 = vlaneseq
        %v1794 = vshrl.u32 %v1793, 7
        %v1795 = vsub.s32 %v1371, %v1794
        %v1796 = vrot.slane %v1690, %v1795
        %v1797 = vsel %vm1376, %v1796, %v1792
        %v1798 = vlaneseq
        %v1799 = vshrl.u32 %v1798, 7
        %v1800 = vsub.s32 %v1378, %v1799
        %v1801 = vrot.slane %v1693, %v1800
        %v1802 = vsel %vm1383, %v1801, %v1797
        %v1803 = vlaneseq
        %v1804 = vshrl.u32 %v1803, 7
        %v1805 = vsub.s32 %v1385, %v1804
        %v1806 = vrot.slane %v1696, %v1805
        %v1807 = vsel %vm1390, %v1806, %v1802
        %v1808 = vlaneseq
        %v1809 = vshrl.u32 %v1808, 7
        %v1810 = vsub.s32 %v1392, %v1809
        %v1811 = vrot.slane %v1699, %v1810
        %v1812 = vsel %vm1397, %v1811, %v1807
        %v1813 = vlaneseq
        %v1814 = vshrl.u32 %v1813, 7
        %v1815 = vsub.s32 %v1399, %v1814
        %v1816 = vrot.slane %v1702, %v1815
        %v1817 = vsel %vm1404, %v1816, %v1812
        %v1818 = vlaneseq
        %v1819 = vshrl.u32 %v1818, 7
        %v1820 = vsub.s32 %v1406, %v1819
        %v1821 = vrot.slane %v1705, %v1820
        %v1822 = vsel %vm1411, %v1821, %v1817
        %v1823 = vlaneseq
        %v1824 = vshrl.u32 %v1823, 7
        %v1825 = vsub.s32 %v1413, %v1824
        %v1826 = vrot.slane %v1708, %v1825
        %v1827 = vsel %vm1418, %v1826, %v1822
        %v1828 = vlaneseq
        %v1829 = vshrl.u32 %v1828, 7
        %v1830 = vsub.s32 %v1420, %v1829
        %v1831 = vrot.slane %v1711, %v1830
        %v1832 = vsel %vm1425, %v1831, %v1827
        %v1833 = vlaneseq
        %v1834 = vshrl.u32 %v1833, 7
        %v1835 = vsub.s32 %v1427, %v1834
        %v1836 = vrot.slane %v1714, %v1835
        %v1837 = vsel %vm1432, %v1836, %v1832
        %v1838 = vlaneseq
        %v1839 = vshrl.u32 %v1838, 7
        %v1840 = vsub.s32 %v1434, %v1839
        %v1841 = vrot.slane %v1717, %v1840
        %v1842 = vsel %vm1439, %v1841, %v1837
        %v1843 = vlaneseq
        %v1844 = vshrl.u32 %v1843, 7
        %v1845 = vsub.s32 %v1441, %v1844
        %v1846 = vrot.slane %v1720, %v1845
        %v1847 = vsel %vm1446, %v1846, %v1842
        %v1848 = vlaneseq
        %v1849 = vshrl.u32 %v1848, 7
        %v1850 = vsub.s32 %v1338, %v1849
        %v1851 = vrot.slane %v1723, %v1850
        %v1852 = vlaneseq
        %v1853 = vshrl.u32 %v1852, 7
        %v1854 = vsub.s32 %v1343, %v1853
        %v1855 = vrot.slane %v1726, %v1854
        %v1856 = vsel %vm1348, %v1855, %v1851
        %v1857 = vlaneseq
        %v1858 = vshrl.u32 %v1857, 7
        %v1859 = vsub.s32 %v1350, %v1858
        %v1860 = vrot.slane %v1729, %v1859
        %v1861 = vsel %vm1355, %v1860, %v1856
        %v1862 = vlaneseq
        %v1863 = vshrl.u32 %v1862, 7
        %v1864 = vsub.s32 %v1357, %v1863
        %v1865 = vrot.slane %v1732, %v1864
        %v1866 = vsel %vm1362, %v1865, %v1861
        %v1867 = vlaneseq
        %v1868 = vshrl.u32 %v1867, 7
        %v1869 = vsub.s32 %v1364, %v1868
        %v1870 = vrot.slane %v1735, %v1869
        %v1871 = vsel %vm1369, %v1870, %v1866
        %v1872 = vlaneseq
        %v1873 = vshrl.u32 %v1872, 7
        %v1874 = vsub.s32 %v1371, %v1873
        %v1875 = vrot.slane %v1738, %v1874
        %v1876 = vsel %vm1376, %v1875, %v1871
        %v1877 = vlaneseq
        %v1878 = vshrl.u32 %v1877, 7
        %v1879 = vsub.s32 %v1378, %v1878
        %v1880 = vrot.slane %v1741, %v1879
        %v1881 = vsel %vm1383, %v1880, %v1876
        %v1882 = vlaneseq
        %v1883 = vshrl.u32 %v1882, 7
        %v1884 = vsub.s32 %v1385, %v1883
        %v1885 = vrot.slane %v1744, %v1884
        %v1886 = vsel %vm1390, %v1885, %v1881
        %v1887 = vlaneseq
        %v1888 = vshrl.u32 %v1887, 7
        %v1889 = vsub.s32 %v1392, %v1888
        %v1890 = vrot.slane %v1747, %v1889
        %v1891 = vsel %vm1397, %v1890, %v1886
        %v1892 = vlaneseq
        %v1893 = vshrl.u32 %v1892, 7
        %v1894 = vsub.s32 %v1399, %v1893
        %v1895 = vrot.slane %v1750, %v1894
        %v1896 = vsel %vm1404, %v1895, %v1891
        %v1897 = vlaneseq
        %v1898 = vshrl.u32 %v1897, 7
        %v1899 = vsub.s32 %v1406, %v1898
        %v1900 = vrot.slane %v1753, %v1899
        %v1901 = vsel %vm1411, %v1900, %v1896
        %v1902 = vlaneseq
        %v1903 = vshrl.u32 %v1902, 7
        %v1904 = vsub.s32 %v1413, %v1903
        %v1905 = vrot.slane %v1756, %v1904
        %v1906 = vsel %vm1418, %v1905, %v1901
        %v1907 = vlaneseq
        %v1908 = vshrl.u32 %v1907, 7
        %v1909 = vsub.s32 %v1420, %v1908
        %v1910 = vrot.slane %v1759, %v1909
        %v1911 = vsel %vm1425, %v1910, %v1906
        %v1912 = vlaneseq
        %v1913 = vshrl.u32 %v1912, 7
        %v1914 = vsub.s32 %v1427, %v1913
        %v1915 = vrot.slane %v1762, %v1914
        %v1916 = vsel %vm1432, %v1915, %v1911
        %v1917 = vlaneseq
        %v1918 = vshrl.u32 %v1917, 7
        %v1919 = vsub.s32 %v1434, %v1918
        %v1920 = vrot.slane %v1765, %v1919
        %v1921 = vsel %vm1439, %v1920, %v1916
        %v1922 = vlaneseq
        %v1923 = vshrl.u32 %v1922, 7
        %v1924 = vsub.s32 %v1441, %v1923
        %v1925 = vrot.slane %v1768, %v1924
        %v1926 = vsel %vm1446, %v1925, %v1921
        %v1927 = vsel %vm1527, %v1926, %v1847
        %v1929 = vsel %vm1530, %v1927, 0.0
        %1930 = vadd.xlane.f32.xlu0 %v1929
        %v1931 = vpop.xlane.xlu0 %1930
        %v1932 = vrcp.pop %v1931
        %v1934 = vlaneseq
        %v1935 = vshrl.u32 %v1934, 7
        %v1936 = vsub.s32 0, %v1935
        %v1937 = vrot.slane %v1932, %v1936
        %v1938 = vlaneseq
        %v1939 = vshrl.u32 %v1938, 7
        %v1940 = vsub.s32 1, %v1939
        %v1941 = vrot.slane %v1932, %v1940
        %v1944 = vmul.f32 %v1578, %v1937
        %v1945 = vmul.f32 %v1580, %v1937
        %v1946 = vmul.f32 %v1582, %v1937
        %v1947 = vmul.f32 %v1584, %v1937
        %v1948 = vmul.f32 %v1586, %v1937
        %v1949 = vmul.f32 %v1588, %v1937
        %v1950 = vmul.f32 %v1590, %v1937
        %v1951 = vmul.f32 %v1592, %v1937
        %v1952 = vmul.f32 %v1594, %v1937
        %v1953 = vmul.f32 %v1596, %v1937
        %v1954 = vmul.f32 %v1598, %v1937
        %v1955 = vmul.f32 %v1600, %v1937
        %v1956 = vmul.f32 %v1602, %v1937
        %v1957 = vmul.f32 %v1604, %v1937
        %v1958 = vmul.f32 %v1606, %v1937
        %v1959 = vmul.f32 %v1608, %v1937
        %v1960 = vmul.f32 %v1610, %v1941
        %v1961 = vmul.f32 %v1612, %v1941
        %v1962 = vmul.f32 %v1614, %v1941
        %v1963 = vmul.f32 %v1616, %v1941
        %v1964 = vmul.f32 %v1618, %v1941
        %v1965 = vmul.f32 %v1620, %v1941
        %v1966 = vmul.f32 %v1622, %v1941
        %v1967 = vmul.f32 %v1624, %v1941
        %v1968 = vmul.f32 %v1626, %v1941
        %v1969 = vmul.f32 %v1628, %v1941
        %v1970 = vmul.f32 %v1630, %v1941
        %v1971 = vmul.f32 %v1632, %v1941
        %v1972 = vmul.f32 %v1634, %v1941
        %v1973 = vmul.f32 %v1636, %v1941
        %v1974 = vmul.f32 %v1638, %v1941
        %v1975 = vmul.f32 %v1640, %v1941
        %v1976 = vld [vmem:[%s1] sm:$0xff]
        %v1977 = vld [vmem:[%s1 + $0x8] sm:$0xff]
        %v1978 = vld [vmem:[%s1 + $0x10] sm:$0xff]
        %v1979 = vld [vmem:[%s1 + $0x18] sm:$0xff]
        %v1980 = vld [vmem:[%s1 + $0x20] sm:$0xff]
        %v1981 = vld [vmem:[%s1 + $0x28] sm:$0xff]
        %v1982 = vld [vmem:[%s1 + $0x30] sm:$0xff]
        %v1983 = vld [vmem:[%s1 + $0x38] sm:$0xff]
        %v1984 = vld [vmem:[%s1 + $0x40] sm:$0xff]
        %v1985 = vld [vmem:[%s1 + $0x48] sm:$0xff]
        %v1986 = vld [vmem:[%s1 + $0x50] sm:$0xff]
        %v1987 = vld [vmem:[%s1 + $0x58] sm:$0xff]
        %v1988 = vld [vmem:[%s1 + $0x60] sm:$0xff]
        %v1989 = vld [vmem:[%s1 + $0x68] sm:$0xff]
        %v1990 = vld [vmem:[%s1 + $0x70] sm:$0xff]
        %v1991 = vld [vmem:[%s1 + $0x78] sm:$0xff]
        %v1992 = vld [vmem:[%s1 + $0x80] sm:$0xff]
        %v1993 = vld [vmem:[%s1 + $0x88] sm:$0xff]
        %v1994 = vld [vmem:[%s1 + $0x90] sm:$0xff]
        %v1995 = vld [vmem:[%s1 + $0x98] sm:$0xff]
        %v1996 = vld [vmem:[%s1 + $0xa0] sm:$0xff]
        %v1997 = vld [vmem:[%s1 + $0xa8] sm:$0xff]
        %v1998 = vld [vmem:[%s1 + $0xb0] sm:$0xff]
        %v1999 = vld [vmem:[%s1 + $0xb8] sm:$0xff]
        %v2000 = vld [vmem:[%s1 + $0xc0] sm:$0xff]
        %v2001 = vld [vmem:[%s1 + $0xc8] sm:$0xff]
        %v2002 = vld [vmem:[%s1 + $0xd0] sm:$0xff]
        %v2003 = vld [vmem:[%s1 + $0xd8] sm:$0xff]
        %v2004 = vld [vmem:[%s1 + $0xe0] sm:$0xff]
        %v2005 = vld [vmem:[%s1 + $0xe8] sm:$0xff]
        %v2006 = vld [vmem:[%s1 + $0xf0] sm:$0xff]
        %v2007 = vld [vmem:[%s1 + $0xf8] sm:$0xff]
        %2009 = vset.pattern.permute.xlu0 0
        %2010 = vperm.xlu0 %2009, %v1944
        %v2011 = vpop.permute.xlu0 %2010
        %2014 = vset.pattern.permute.xlu0 0
        %2015 = vperm.xlu0 %2014, %v1945
        %v2016 = vpop.permute.xlu0 %2015
        %2019 = vset.pattern.permute.xlu0 0
        %2020 = vperm.xlu0 %2019, %v1946
        %v2021 = vpop.permute.xlu0 %2020
        %2024 = vset.pattern.permute.xlu0 0
        %2025 = vperm.xlu0 %2024, %v1947
        %v2026 = vpop.permute.xlu0 %2025
        %2029 = vset.pattern.permute.xlu0 0
        %2030 = vperm.xlu0 %2029, %v1948
        %v2031 = vpop.permute.xlu0 %2030
        %2034 = vset.pattern.permute.xlu0 0
        %2035 = vperm.xlu0 %2034, %v1949
        %v2036 = vpop.permute.xlu0 %2035
        %2039 = vset.pattern.permute.xlu0 0
        %2040 = vperm.xlu0 %2039, %v1950
        %v2041 = vpop.permute.xlu0 %2040
        %2044 = vset.pattern.permute.xlu0 0
        %2045 = vperm.xlu0 %2044, %v1951
        %v2046 = vpop.permute.xlu0 %2045
        %2049 = vset.pattern.permute.xlu0 0
        %2050 = vperm.xlu0 %2049, %v1952
        %v2051 = vpop.permute.xlu0 %2050
        %2054 = vset.pattern.permute.xlu0 0
        %2055 = vperm.xlu0 %2054, %v1953
        %v2056 = vpop.permute.xlu0 %2055
        %2059 = vset.pattern.permute.xlu0 0
        %2060 = vperm.xlu0 %2059, %v1954
        %v2061 = vpop.permute.xlu0 %2060
        %2064 = vset.pattern.permute.xlu0 0
        %2065 = vperm.xlu0 %2064, %v1955
        %v2066 = vpop.permute.xlu0 %2065
        %2069 = vset.pattern.permute.xlu0 0
        %2070 = vperm.xlu0 %2069, %v1956
        %v2071 = vpop.permute.xlu0 %2070
        %2074 = vset.pattern.permute.xlu0 0
        %2075 = vperm.xlu0 %2074, %v1957
        %v2076 = vpop.permute.xlu0 %2075
        %2079 = vset.pattern.permute.xlu0 0
        %2080 = vperm.xlu0 %2079, %v1958
        %v2081 = vpop.permute.xlu0 %2080
        %2084 = vset.pattern.permute.xlu0 0
        %2085 = vperm.xlu0 %2084, %v1959
        %v2086 = vpop.permute.xlu0 %2085
        %2089 = vset.pattern.permute.xlu0 0
        %2090 = vperm.xlu0 %2089, %v1960
        %v2091 = vpop.permute.xlu0 %2090
        %2094 = vset.pattern.permute.xlu0 0
        %2095 = vperm.xlu0 %2094, %v1961
        %v2096 = vpop.permute.xlu0 %2095
        %2099 = vset.pattern.permute.xlu0 0
        %2100 = vperm.xlu0 %2099, %v1962
        %v2101 = vpop.permute.xlu0 %2100
        %2104 = vset.pattern.permute.xlu0 0
        %2105 = vperm.xlu0 %2104, %v1963
        %v2106 = vpop.permute.xlu0 %2105
        %2109 = vset.pattern.permute.xlu0 0
        %2110 = vperm.xlu0 %2109, %v1964
        %v2111 = vpop.permute.xlu0 %2110
        %2114 = vset.pattern.permute.xlu0 0
        %2115 = vperm.xlu0 %2114, %v1965
        %v2116 = vpop.permute.xlu0 %2115
        %2119 = vset.pattern.permute.xlu0 0
        %2120 = vperm.xlu0 %2119, %v1966
        %v2121 = vpop.permute.xlu0 %2120
        %2124 = vset.pattern.permute.xlu0 0
        %2125 = vperm.xlu0 %2124, %v1967
        %v2126 = vpop.permute.xlu0 %2125
        %2129 = vset.pattern.permute.xlu0 0
        %2130 = vperm.xlu0 %2129, %v1968
        %v2131 = vpop.permute.xlu0 %2130
        %2134 = vset.pattern.permute.xlu0 0
        %2135 = vperm.xlu0 %2134, %v1969
        %v2136 = vpop.permute.xlu0 %2135
        %2139 = vset.pattern.permute.xlu0 0
        %2140 = vperm.xlu0 %2139, %v1970
        %v2141 = vpop.permute.xlu0 %2140
        %2144 = vset.pattern.permute.xlu0 0
        %2145 = vperm.xlu0 %2144, %v1971
        %v2146 = vpop.permute.xlu0 %2145
        %2149 = vset.pattern.permute.xlu0 0
        %2150 = vperm.xlu0 %2149, %v1972
        %v2151 = vpop.permute.xlu0 %2150
        %2154 = vset.pattern.permute.xlu0 0
        %2155 = vperm.xlu0 %2154, %v1973
        %v2156 = vpop.permute.xlu0 %2155
        %2159 = vset.pattern.permute.xlu0 0
        %2160 = vperm.xlu0 %2159, %v1974
        %v2161 = vpop.permute.xlu0 %2160
        %2164 = vset.pattern.permute.xlu0 0
        %2165 = vperm.xlu0 %2164, %v1975
        %v2166 = vpop.permute.xlu0 %2165
        %v2168 = vmul.f32 %v2011, %v1976
        %v2169 = vmul.f32 %v2016, %v1977
        %v2170 = vmul.f32 %v2021, %v1978
        %v2171 = vmul.f32 %v2026, %v1979
        %v2172 = vmul.f32 %v2031, %v1980
        %v2173 = vmul.f32 %v2036, %v1981
        %v2174 = vmul.f32 %v2041, %v1982
        %v2175 = vmul.f32 %v2046, %v1983
        %v2176 = vmul.f32 %v2051, %v1984
        %v2177 = vmul.f32 %v2056, %v1985
        %v2178 = vmul.f32 %v2061, %v1986
        %v2179 = vmul.f32 %v2066, %v1987
        %v2180 = vmul.f32 %v2071, %v1988
        %v2181 = vmul.f32 %v2076, %v1989
        %v2182 = vmul.f32 %v2081, %v1990
        %v2183 = vmul.f32 %v2086, %v1991
        %v2184 = vmul.f32 %v2091, %v1992
        %v2185 = vmul.f32 %v2096, %v1993
        %v2186 = vmul.f32 %v2101, %v1994
        %v2187 = vmul.f32 %v2106, %v1995
        %v2188 = vmul.f32 %v2111, %v1996
        %v2189 = vmul.f32 %v2116, %v1997
        %v2190 = vmul.f32 %v2121, %v1998
        %v2191 = vmul.f32 %v2126, %v1999
        %v2192 = vmul.f32 %v2131, %v2000
        %v2193 = vmul.f32 %v2136, %v2001
        %v2194 = vmul.f32 %v2141, %v2002
        %v2195 = vmul.f32 %v2146, %v2003
        %v2196 = vmul.f32 %v2151, %v2004
        %v2197 = vmul.f32 %v2156, %v2005
        %v2198 = vmul.f32 %v2161, %v2006
        %v2199 = vmul.f32 %v2166, %v2007
        %v2200 = vsel %vm481, %v2168, 0.0
        %v2201 = vsel %vm481, %v2169, 0.0
        %v2202 = vadd.f32 %v2200, %v2201
        %v2203 = vsel %vm481, %v2170, 0.0
        %v2204 = vadd.f32 %v2202, %v2203
        %v2205 = vsel %vm481, %v2171, 0.0
        %v2206 = vadd.f32 %v2204, %v2205
        %v2207 = vsel %vm481, %v2172, 0.0
        %v2208 = vadd.f32 %v2206, %v2207
        %v2209 = vsel %vm481, %v2173, 0.0
        %v2210 = vadd.f32 %v2208, %v2209
        %v2211 = vsel %vm481, %v2174, 0.0
        %v2212 = vadd.f32 %v2210, %v2211
        %v2213 = vsel %vm481, %v2175, 0.0
        %v2214 = vadd.f32 %v2212, %v2213
        %v2215 = vsel %vm481, %v2176, 0.0
        %v2216 = vadd.f32 %v2214, %v2215
        %v2217 = vsel %vm481, %v2177, 0.0
        %v2218 = vadd.f32 %v2216, %v2217
        %v2219 = vsel %vm481, %v2178, 0.0
        %v2220 = vadd.f32 %v2218, %v2219
        %v2221 = vsel %vm481, %v2179, 0.0
        %v2222 = vadd.f32 %v2220, %v2221
        %v2223 = vsel %vm481, %v2180, 0.0
        %v2224 = vadd.f32 %v2222, %v2223
        %v2225 = vsel %vm481, %v2181, 0.0
        %v2226 = vadd.f32 %v2224, %v2225
        %v2227 = vsel %vm481, %v2182, 0.0
        %v2228 = vadd.f32 %v2226, %v2227
        %v2229 = vsel %vm481, %v2183, 0.0
        %v2230 = vadd.f32 %v2228, %v2229
        %v2231 = vrot.slane %v2230, 4
        %v2232 = vadd.f32 %v2230, %v2231
        %v2233 = vrot.slane %v2232, 2
        %v2234 = vadd.f32 %v2232, %v2233
        %v2235 = vrot.slane %v2234, 1
        %v2236 = vadd.f32 %v2234, %v2235
        %v2237 = vsel %vm481, %v2184, 0.0
        %v2238 = vsel %vm481, %v2185, 0.0
        %v2239 = vadd.f32 %v2237, %v2238
        %v2240 = vsel %vm481, %v2186, 0.0
        %v2241 = vadd.f32 %v2239, %v2240
        %v2242 = vsel %vm481, %v2187, 0.0
        %v2243 = vadd.f32 %v2241, %v2242
        %v2244 = vsel %vm481, %v2188, 0.0
        %v2245 = vadd.f32 %v2243, %v2244
        %v2246 = vsel %vm481, %v2189, 0.0
        %v2247 = vadd.f32 %v2245, %v2246
        %v2248 = vsel %vm481, %v2190, 0.0
        %v2249 = vadd.f32 %v2247, %v2248
        %v2250 = vsel %vm481, %v2191, 0.0
        %v2251 = vadd.f32 %v2249, %v2250
        %v2252 = vsel %vm481, %v2192, 0.0
        %v2253 = vadd.f32 %v2251, %v2252
        %v2254 = vsel %vm481, %v2193, 0.0
        %v2255 = vadd.f32 %v2253, %v2254
        %v2256 = vsel %vm481, %v2194, 0.0
        %v2257 = vadd.f32 %v2255, %v2256
        %v2258 = vsel %vm481, %v2195, 0.0
        %v2259 = vadd.f32 %v2257, %v2258
        %v2260 = vsel %vm481, %v2196, 0.0
        %v2261 = vadd.f32 %v2259, %v2260
        %v2262 = vsel %vm481, %v2197, 0.0
        %v2263 = vadd.f32 %v2261, %v2262
        %v2264 = vsel %vm481, %v2198, 0.0
        %v2265 = vadd.f32 %v2263, %v2264
        %v2266 = vsel %vm481, %v2199, 0.0
        %v2267 = vadd.f32 %v2265, %v2266
        %v2268 = vrot.slane %v2267, 4
        %v2269 = vadd.f32 %v2267, %v2268
        %v2270 = vrot.slane %v2269, 2
        %v2271 = vadd.f32 %v2269, %v2270
        %v2272 = vrot.slane %v2271, 1
        %v2273 = vadd.f32 %v2271, %v2272
        %vm2275 = vcmask 254976
        %2276 = vst.msk [vmem:[%s438] sm:$0x3] %vm2275, %v674
        %v2279 = vsel %vm1527, %v2273, %v2236
        %2281 = vst.msk [vmem:[%s445] sm:$0x3] %vm2275, %v2279
        %v2282 = vlaneseq
        %v2283 = vshrl.u32 %v2282, 7
        %v2284 = vsub.s32 %v1338, %v2283
        %v2285 = vrot.slane %v2011, %v2284
        %v2286 = vlaneseq
        %v2287 = vshrl.u32 %v2286, 7
        %v2288 = vsub.s32 %v1343, %v2287
        %v2289 = vrot.slane %v2016, %v2288
        %v2290 = vsel %vm1348, %v2289, %v2285
        %v2291 = vlaneseq
        %v2292 = vshrl.u32 %v2291, 7
        %v2293 = vsub.s32 %v1350, %v2292
        %v2294 = vrot.slane %v2021, %v2293
        %v2295 = vsel %vm1355, %v2294, %v2290
        %v2296 = vlaneseq
        %v2297 = vshrl.u32 %v2296, 7
        %v2298 = vsub.s32 %v1357, %v2297
        %v2299 = vrot.slane %v2026, %v2298
        %v2300 = vsel %vm1362, %v2299, %v2295
        %v2301 = vlaneseq
        %v2302 = vshrl.u32 %v2301, 7
        %v2303 = vsub.s32 %v1364, %v2302
        %v2304 = vrot.slane %v2031, %v2303
        %v2305 = vsel %vm1369, %v2304, %v2300
        %v2306 = vlaneseq
        %v2307 = vshrl.u32 %v2306, 7
        %v2308 = vsub.s32 %v1371, %v2307
        %v2309 = vrot.slane %v2036, %v2308
        %v2310 = vsel %vm1376, %v2309, %v2305
        %v2311 = vlaneseq
        %v2312 = vshrl.u32 %v2311, 7
        %v2313 = vsub.s32 %v1378, %v2312
        %v2314 = vrot.slane %v2041, %v2313
        %v2315 = vsel %vm1383, %v2314, %v2310
        %v2316 = vlaneseq
        %v2317 = vshrl.u32 %v2316, 7
        %v2318 = vsub.s32 %v1385, %v2317
        %v2319 = vrot.slane %v2046, %v2318
        %v2320 = vsel %vm1390, %v2319, %v2315
        %v2321 = vlaneseq
        %v2322 = vshrl.u32 %v2321, 7
        %v2323 = vsub.s32 %v1392, %v2322
        %v2324 = vrot.slane %v2051, %v2323
        %v2325 = vsel %vm1397, %v2324, %v2320
        %v2326 = vlaneseq
        %v2327 = vshrl.u32 %v2326, 7
        %v2328 = vsub.s32 %v1399, %v2327
        %v2329 = vrot.slane %v2056, %v2328
        %v2330 = vsel %vm1404, %v2329, %v2325
        %v2331 = vlaneseq
        %v2332 = vshrl.u32 %v2331, 7
        %v2333 = vsub.s32 %v1406, %v2332
        %v2334 = vrot.slane %v2061, %v2333
        %v2335 = vsel %vm1411, %v2334, %v2330
        %v2336 = vlaneseq
        %v2337 = vshrl.u32 %v2336, 7
        %v2338 = vsub.s32 %v1413, %v2337
        %v2339 = vrot.slane %v2066, %v2338
        %v2340 = vsel %vm1418, %v2339, %v2335
        %v2341 = vlaneseq
        %v2342 = vshrl.u32 %v2341, 7
        %v2343 = vsub.s32 %v1420, %v2342
        %v2344 = vrot.slane %v2071, %v2343
        %v2345 = vsel %vm1425, %v2344, %v2340
        %v2346 = vlaneseq
        %v2347 = vshrl.u32 %v2346, 7
        %v2348 = vsub.s32 %v1427, %v2347
        %v2349 = vrot.slane %v2076, %v2348
        %v2350 = vsel %vm1432, %v2349, %v2345
        %v2351 = vlaneseq
        %v2352 = vshrl.u32 %v2351, 7
        %v2353 = vsub.s32 %v1434, %v2352
        %v2354 = vrot.slane %v2081, %v2353
        %v2355 = vsel %vm1439, %v2354, %v2350
        %v2356 = vlaneseq
        %v2357 = vshrl.u32 %v2356, 7
        %v2358 = vsub.s32 %v1441, %v2357
        %v2359 = vrot.slane %v2086, %v2358
        %v2360 = vsel %vm1446, %v2359, %v2355
        %v2361 = vlaneseq
        %v2362 = vshrl.u32 %v2361, 7
        %v2363 = vsub.s32 %v1338, %v2362
        %v2364 = vrot.slane %v2091, %v2363
        %v2365 = vlaneseq
        %v2366 = vshrl.u32 %v2365, 7
        %v2367 = vsub.s32 %v1343, %v2366
        %v2368 = vrot.slane %v2096, %v2367
        %v2369 = vsel %vm1348, %v2368, %v2364
        %v2370 = vlaneseq
        %v2371 = vshrl.u32 %v2370, 7
        %v2372 = vsub.s32 %v1350, %v2371
        %v2373 = vrot.slane %v2101, %v2372
        %v2374 = vsel %vm1355, %v2373, %v2369
        %v2375 = vlaneseq
        %v2376 = vshrl.u32 %v2375, 7
        %v2377 = vsub.s32 %v1357, %v2376
        %v2378 = vrot.slane %v2106, %v2377
        %v2379 = vsel %vm1362, %v2378, %v2374
        %v2380 = vlaneseq
        %v2381 = vshrl.u32 %v2380, 7
        %v2382 = vsub.s32 %v1364, %v2381
        %v2383 = vrot.slane %v2111, %v2382
        %v2384 = vsel %vm1369, %v2383, %v2379
        %v2385 = vlaneseq
        %v2386 = vshrl.u32 %v2385, 7
        %v2387 = vsub.s32 %v1371, %v2386
        %v2388 = vrot.slane %v2116, %v2387
        %v2389 = vsel %vm1376, %v2388, %v2384
        %v2390 = vlaneseq
        %v2391 = vshrl.u32 %v2390, 7
        %v2392 = vsub.s32 %v1378, %v2391
        %v2393 = vrot.slane %v2121, %v2392
        %v2394 = vsel %vm1383, %v2393, %v2389
        %v2395 = vlaneseq
        %v2396 = vshrl.u32 %v2395, 7
        %v2397 = vsub.s32 %v1385, %v2396
        %v2398 = vrot.slane %v2126, %v2397
        %v2399 = vsel %vm1390, %v2398, %v2394
        %v2400 = vlaneseq
        %v2401 = vshrl.u32 %v2400, 7
        %v2402 = vsub.s32 %v1392, %v2401
        %v2403 = vrot.slane %v2131, %v2402
        %v2404 = vsel %vm1397, %v2403, %v2399
        %v2405 = vlaneseq
        %v2406 = vshrl.u32 %v2405, 7
        %v2407 = vsub.s32 %v1399, %v2406
        %v2408 = vrot.slane %v2136, %v2407
        %v2409 = vsel %vm1404, %v2408, %v2404
        %v2410 = vlaneseq
        %v2411 = vshrl.u32 %v2410, 7
        %v2412 = vsub.s32 %v1406, %v2411
        %v2413 = vrot.slane %v2141, %v2412
        %v2414 = vsel %vm1411, %v2413, %v2409
        %v2415 = vlaneseq
        %v2416 = vshrl.u32 %v2415, 7
        %v2417 = vsub.s32 %v1413, %v2416
        %v2418 = vrot.slane %v2146, %v2417
        %v2419 = vsel %vm1418, %v2418, %v2414
        %v2420 = vlaneseq
        %v2421 = vshrl.u32 %v2420, 7
        %v2422 = vsub.s32 %v1420, %v2421
        %v2423 = vrot.slane %v2151, %v2422
        %v2424 = vsel %vm1425, %v2423, %v2419
        %v2425 = vlaneseq
        %v2426 = vshrl.u32 %v2425, 7
        %v2427 = vsub.s32 %v1427, %v2426
        %v2428 = vrot.slane %v2156, %v2427
        %v2429 = vsel %vm1432, %v2428, %v2424
        %v2430 = vlaneseq
        %v2431 = vshrl.u32 %v2430, 7
        %v2432 = vsub.s32 %v1434, %v2431
        %v2433 = vrot.slane %v2161, %v2432
        %v2434 = vsel %vm1439, %v2433, %v2429
        %v2435 = vlaneseq
        %v2436 = vshrl.u32 %v2435, 7
        %v2437 = vsub.s32 %v1441, %v2436
        %v2438 = vrot.slane %v2166, %v2437
        %v2439 = vsel %vm1446, %v2438, %v2434
        %v2440 = vsel %vm1527, %v2439, %v2360
        %2442 = vst [vmem:[%s452] sm:$0x3] %v2440
        %s2443 = scalar_lea.vmem %s457, 2
        %v2444 = vld [vmem:[%s2443] sm:$0x3]
        %v2445 = vld [vmem:[%s6] sm:$0xff]
        %v2446 = vld [vmem:[%s6 + $0x8] sm:$0xff]
        %v2447 = vld [vmem:[%s6 + $0x10] sm:$0xff]
        %v2448 = vld [vmem:[%s6 + $0x18] sm:$0xff]
        %v2449 = vsel %vm481, %v2279, 0
        %2451 = vmatprep.subr.mxu0 0.0
        %2452 = vmatpush1.msra.mxu0 %v2445
        %2453 = vmatprep.subr.mxu0 0.0
        %2454 = vmatpush1.msra.mxu0 %v2446
        %2455 = vmatprep.subr.mxu0 0.0
        %2456 = vmatpush1.msra.mxu0 %v2447
        %2457 = vmatprep.subr.mxu0 0.0
        %2458 = vmatpush1.msra.mxu0 %v2448
        %2459 = vmatprep.subr.mxu0 0.0
        %2460 = vmatpush1.msra.mxu0 0.0
        %2461 = vmatprep.subr.mxu0 0.0
        %2462 = vmatpush1.msra.mxu0 0.0
        %2463 = vmatprep.subr.mxu0 0.0
        %2464 = vmatpush1.msra.mxu0 0.0
        %2465 = vmatprep.subr.mxu0 0.0
        %2466 = vmatpush1.msra.mxu0 0.0
        %2467 = vmatprep.subr.mxu0 0.0
        %2468 = vmatpush1.msra.mxu0 0.0
        %2469 = vmatprep.subr.mxu0 0.0
        %2470 = vmatpush1.msra.mxu0 0.0
        %2471 = vmatprep.subr.mxu0 0.0
        %2472 = vmatpush1.msra.mxu0 0.0
        %2473 = vmatprep.subr.mxu0 0.0
        %2474 = vmatpush1.msra.mxu0 0.0
        %2475 = vmatprep.subr.mxu0 0.0
        %2476 = vmatpush1.msra.mxu0 0.0
        %2477 = vmatprep.subr.mxu0 0.0
        %2478 = vmatpush1.msra.mxu0 0.0
        %2479 = vmatprep.subr.mxu0 0.0
        %2480 = vmatpush1.msra.mxu0 0.0
        %2481 = vmatprep.subr.mxu0 0.0
        %2482 = vmatpush1.msra.mxu0 0.0
        %2483 = vmatprep.subr.mxu0 0.0
        %2484 = vmatpush1.msra.mxu0 0.0
        %2485 = vmatprep.subr.mxu0 0.0
        %2486 = vmatpush1.msra.mxu0 0.0
        %2487 = vmatprep.subr.mxu0 0.0
        %2488 = vmatpush1.msra.mxu0 0.0
        %2489 = vmatprep.subr.mxu0 0.0
        %2490 = vmatpush1.msra.mxu0 0.0
        %2491 = vmatprep.subr.mxu0 0.0
        %2492 = vmatpush1.msra.mxu0 0.0
        %2493 = vmatprep.subr.mxu0 0.0
        %2494 = vmatpush1.msra.mxu0 0.0
        %2495 = vmatprep.subr.mxu0 0.0
        %2496 = vmatpush1.msra.mxu0 0.0
        %2497 = vmatprep.subr.mxu0 0.0
        %2498 = vmatpush1.msra.mxu0 0.0
        %2499 = vmatprep.subr.mxu0 0.0
        %2500 = vmatpush1.msra.mxu0 0.0
        %2501 = vmatprep.subr.mxu0 0.0
        %2502 = vmatpush1.msra.mxu0 0.0
        %2503 = vmatprep.subr.mxu0 0.0
        %2504 = vmatpush1.msra.mxu0 0.0
        %2505 = vmatprep.subr.mxu0 0.0
        %2506 = vmatpush1.msra.mxu0 0.0
        %2507 = vmatprep.subr.mxu0 0.0
        %2508 = vmatpush1.msra.mxu0 0.0
        %2509 = vmatprep.subr.mxu0 0.0
        %2510 = vmatpush1.msra.mxu0 0.0
        %2511 = vmatprep.subr.mxu0 0.0
        %2512 = vmatpush1.msra.mxu0 0.0
        %2513 = vmatprep.subr.mxu0 0.0
        %2514 = vmatpush1.msra.mxu0 0.0
        %2515 = vmatprep.mubr.f32.mxu0 0.0
        %2516 = vmatmul.mubr.f32.gmra.mrb[0].mxu0 %v2449
        %v2517 = vpop.f32.mrb[0].mxu0
        %v2518 = vadd.f32 0.0, %v2517
        %v2519 = vpop.f32.mrb[0].mxu0
        %2520 = vdwg.mxu0
        %v2521 = vadd.f32 %v2444, %v2518
        %v2522 = vld [vmem:[%s7] sm:$0xff]
        %v2523 = vld [vmem:[%s7 + $0x8] sm:$0xff]
        %v2524 = vld [vmem:[%s7 + $0x10] sm:$0xff]
        %v2525 = vld [vmem:[%s7 + $0x18] sm:$0xff]
        %2526 = vmatprep.subr.mxu0 0.0
        %2527 = vmatpush1.msra.mxu0 %v2522
        %2528 = vmatprep.subr.mxu0 0.0
        %2529 = vmatpush1.msra.mxu0 %v2523
        %2530 = vmatprep.subr.mxu0 0.0
        %2531 = vmatpush1.msra.mxu0 %v2524
        %2532 = vmatprep.subr.mxu0 0.0
        %2533 = vmatpush1.msra.mxu0 %v2525
        %2534 = vmatprep.subr.mxu0 0.0
        %2535 = vmatpush1.msra.mxu0 0.0
        %2536 = vmatprep.subr.mxu0 0.0
        %2537 = vmatpush1.msra.mxu0 0.0
        %2538 = vmatprep.subr.mxu0 0.0
        %2539 = vmatpush1.msra.mxu0 0.0
        %2540 = vmatprep.subr.mxu0 0.0
        %2541 = vmatpush1.msra.mxu0 0.0
        %2542 = vmatprep.subr.mxu0 0.0
        %2543 = vmatpush1.msra.mxu0 0.0
        %2544 = vmatprep.subr.mxu0 0.0
        %2545 = vmatpush1.msra.mxu0 0.0
        %2546 = vmatprep.subr.mxu0 0.0
        %2547 = vmatpush1.msra.mxu0 0.0
        %2548 = vmatprep.subr.mxu0 0.0
        %2549 = vmatpush1.msra.mxu0 0.0
        %2550 = vmatprep.subr.mxu0 0.0
        %2551 = vmatpush1.msra.mxu0 0.0
        %2552 = vmatprep.subr.mxu0 0.0
        %2553 = vmatpush1.msra.mxu0 0.0
        %2554 = vmatprep.subr.mxu0 0.0
        %2555 = vmatpush1.msra.mxu0 0.0
        %2556 = vmatprep.subr.mxu0 0.0
        %2557 = vmatpush1.msra.mxu0 0.0
        %2558 = vmatprep.subr.mxu0 0.0
        %2559 = vmatpush1.msra.mxu0 0.0
        %2560 = vmatprep.subr.mxu0 0.0
        %2561 = vmatpush1.msra.mxu0 0.0
        %2562 = vmatprep.subr.mxu0 0.0
        %2563 = vmatpush1.msra.mxu0 0.0
        %2564 = vmatprep.subr.mxu0 0.0
        %2565 = vmatpush1.msra.mxu0 0.0
        %2566 = vmatprep.subr.mxu0 0.0
        %2567 = vmatpush1.msra.mxu0 0.0
        %2568 = vmatprep.subr.mxu0 0.0
        %2569 = vmatpush1.msra.mxu0 0.0
        %2570 = vmatprep.subr.mxu0 0.0
        %2571 = vmatpush1.msra.mxu0 0.0
        %2572 = vmatprep.subr.mxu0 0.0
        %2573 = vmatpush1.msra.mxu0 0.0
        %2574 = vmatprep.subr.mxu0 0.0
        %2575 = vmatpush1.msra.mxu0 0.0
        %2576 = vmatprep.subr.mxu0 0.0
        %2577 = vmatpush1.msra.mxu0 0.0
        %2578 = vmatprep.subr.mxu0 0.0
        %2579 = vmatpush1.msra.mxu0 0.0
        %2580 = vmatprep.subr.mxu0 0.0
        %2581 = vmatpush1.msra.mxu0 0.0
        %2582 = vmatprep.subr.mxu0 0.0
        %2583 = vmatpush1.msra.mxu0 0.0
        %2584 = vmatprep.subr.mxu0 0.0
        %2585 = vmatpush1.msra.mxu0 0.0
        %2586 = vmatprep.subr.mxu0 0.0
        %2587 = vmatpush1.msra.mxu0 0.0
        %2588 = vmatprep.subr.mxu0 0.0
        %2589 = vmatpush1.msra.mxu0 0.0
        %2590 = vmatprep.mubr.f32.mxu0 0.0
        %2591 = vmatmul.mubr.f32.gmra.mrb[0].mxu0 %v675
        %v2592 = vpop.f32.mrb[0].mxu0
        %v2593 = vadd.f32 %v564, %v2592
        %v2594 = vpop.f32.mrb[0].mxu0
        %2595 = vdwg.mxu0
        %v2596 = vadd.f32 %v2521, %v2593
        %v2597 = vxor.u32 %v2596, 2147483648
        %v2598 = vmul.f32 %v2597, 1.442695
        %v2599 = vpow.pop %v2598
        %v2600 = vadd.f32 %v2599, 1.0
        %v2601 = vrcp.pop %v2600
        %v2602 = vmul.f32 1.0, %v2601
        %2604 = vrot.lane.b32.xlu0 %v2593, 64
        %v2605 = vpop.permute.xlu0 %2604
        %v2607 = vmul.f32 %v2602, %v2605
        %2609 = vrot.lane.b32.xlu0 %v2607, 64
        %v2610 = vpop.permute.xlu0 %2609
        %v2612 = vadd.f32 %v2521, %v2610
        %v2613 = vtanh.pop %v2612
        %v2614 = vsub.f32 1.0, %v2602
        %2616 = vrot.lane.b32.xlu0 %v2613, 96
        %v2617 = vpop.permute.xlu0 %2616
        %v2619 = vmul.f32 %v2614, %v2617
        %v2620 = vmul.f32 %v2602, %v667
        %v2621 = vadd.f32 %v2619, %v2620
        %v2622 = vld [vmem:[%s9] sm:$0xff]
        %v2623 = vld [vmem:[%s9 + $0x8] sm:$0xff]
        %v2624 = vld [vmem:[%s9 + $0x10] sm:$0xff]
        %v2625 = vld [vmem:[%s9 + $0x18] sm:$0xff]
        %2627 = vrot.lane.b32.xlu0 %v2621, 96
        %v2628 = vpop.permute.xlu0 %2627
        %v2629 = vsel %vm481, %v2628, 0
        %2631 = vmatprep.subr.mxu0 0.0
        %2632 = vmatpush1.msra.mxu0 %v2622
        %2633 = vmatprep.subr.mxu0 0.0
        %2634 = vmatpush1.msra.mxu0 %v2623
        %2635 = vmatprep.subr.mxu0 0.0
        %2636 = vmatpush1.msra.mxu0 %v2624
        %2637 = vmatprep.subr.mxu0 0.0
        %2638 = vmatpush1.msra.mxu0 %v2625
        %2639 = vmatprep.subr.mxu0 0.0
        %2640 = vmatpush1.msra.mxu0 0.0
        %2641 = vmatprep.subr.mxu0 0.0
        %2642 = vmatpush1.msra.mxu0 0.0
        %2643 = vmatprep.subr.mxu0 0.0
        %2644 = vmatpush1.msra.mxu0 0.0
        %2645 = vmatprep.subr.mxu0 0.0
        %2646 = vmatpush1.msra.mxu0 0.0
        %2647 = vmatprep.subr.mxu0 0.0
        %2648 = vmatpush1.msra.mxu0 0.0
        %2649 = vmatprep.subr.mxu0 0.0
        %2650 = vmatpush1.msra.mxu0 0.0
        %2651 = vmatprep.subr.mxu0 0.0
        %2652 = vmatpush1.msra.mxu0 0.0
        %2653 = vmatprep.subr.mxu0 0.0
        %2654 = vmatpush1.msra.mxu0 0.0
        %2655 = vmatprep.subr.mxu0 0.0
        %2656 = vmatpush1.msra.mxu0 0.0
        %2657 = vmatprep.subr.mxu0 0.0
        %2658 = vmatpush1.msra.mxu0 0.0
        %2659 = vmatprep.subr.mxu0 0.0
        %2660 = vmatpush1.msra.mxu0 0.0
        %2661 = vmatprep.subr.mxu0 0.0
        %2662 = vmatpush1.msra.mxu0 0.0
        %2663 = vmatprep.subr.mxu0 0.0
        %2664 = vmatpush1.msra.mxu0 0.0
        %2665 = vmatprep.subr.mxu0 0.0
        %2666 = vmatpush1.msra.mxu0 0.0
        %2667 = vmatprep.subr.mxu0 0.0
        %2668 = vmatpush1.msra.mxu0 0.0
        %2669 = vmatprep.subr.mxu0 0.0
        %2670 = vmatpush1.msra.mxu0 0.0
        %2671 = vmatprep.subr.mxu0 0.0
        %2672 = vmatpush1.msra.mxu0 0.0
        %2673 = vmatprep.subr.mxu0 0.0
        %2674 = vmatpush1.msra.mxu0 0.0
        %2675 = vmatprep.subr.mxu0 0.0
        %2676 = vmatpush1.msra.mxu0 0.0
        %2677 = vmatprep.subr.mxu0 0.0
        %2678 = vmatpush1.msra.mxu0 0.0
        %2679 = vmatprep.subr.mxu0 0.0
        %2680 = vmatpush1.msra.mxu0 0.0
        %2681 = vmatprep.subr.mxu0 0.0
        %2682 = vmatpush1.msra.mxu0 0.0
        %2683 = vmatprep.subr.mxu0 0.0
        %2684 = vmatpush1.msra.mxu0 0.0
        %2685 = vmatprep.subr.mxu0 0.0
        %2686 = vmatpush1.msra.mxu0 0.0
        %2687 = vmatprep.subr.mxu0 0.0
        %2688 = vmatpush1.msra.mxu0 0.0
        %2689 = vmatprep.subr.mxu0 0.0
        %2690 = vmatpush1.msra.mxu0 0.0
        %2691 = vmatprep.subr.mxu0 0.0
        %2692 = vmatpush1.msra.mxu0 0.0
        %2693 = vmatprep.subr.mxu0 0.0
        %2694 = vmatpush1.msra.mxu0 0.0
        %2695 = vmatprep.mubr.f32.mxu0 0.0
        %2696 = vmatmul.mubr.f32.gmra.mrb[0].mxu0 %v2629
        %v2697 = vpop.f32.mrb[0].mxu0
        %v2698 = vadd.f32 0.0, %v2697
        %v2699 = vpop.f32.mrb[0].mxu0
        %2700 = vdwg.mxu0
        %v2703 = vunpack.c.l.s4 1966171168
        %v2704 = vunpack.c.0.s8 %v2703
        %v2705 = vlaneseq
        %v2706 = vshrl.u32 %v2705, 7
        %v2707 = vsub.s32 %v2704, %v2706
        %v2708 = vrot.slane %v2698, %v2707
        %v2709 = vcombine.high %v2708, %v2708
        %v2711 = vunpack.c.l.s4 1966171168
        %v2712 = vunpack.c.0.s8 %v2711
        %v2713 = vlaneseq
        %v2714 = vshrl.u32 %v2713, 7
        %v2715 = vsub.s32 %v2712, %v2714
        %v2716 = vrot.slane %v2708, %v2715
        %v2718 = vunpack.c.l.s4 1966171168
        %v2719 = vunpack.c.0.s8 %v2718
        %v2720 = vlaneseq
        %v2721 = vshrl.u32 %v2720, 7
        %v2722 = vsub.s32 %v2719, %v2721
        %v2723 = vrot.slane %v2709, %v2722
        %v2724 = vld [vmem:[%s2] sm:$0xff]
        %v2725 = vld [vmem:[%s2 + $0x8] sm:$0xff]
        %v2726 = vld [vmem:[%s2 + $0x10] sm:$0xff]
        %v2727 = vld [vmem:[%s2 + $0x18] sm:$0xff]
        %v2728 = vld [vmem:[%s2 + $0x20] sm:$0xff]
        %v2729 = vld [vmem:[%s2 + $0x28] sm:$0xff]
        %v2730 = vld [vmem:[%s2 + $0x30] sm:$0xff]
        %v2731 = vld [vmem:[%s2 + $0x38] sm:$0xff]
        %v2732 = vld [vmem:[%s2 + $0x40] sm:$0xff]
        %v2733 = vld [vmem:[%s2 + $0x48] sm:$0xff]
        %v2734 = vld [vmem:[%s2 + $0x50] sm:$0xff]
        %v2735 = vld [vmem:[%s2 + $0x58] sm:$0xff]
        %v2736 = vld [vmem:[%s2 + $0x60] sm:$0xff]
        %v2737 = vld [vmem:[%s2 + $0x68] sm:$0xff]
        %v2738 = vld [vmem:[%s2 + $0x70] sm:$0xff]
        %v2739 = vld [vmem:[%s2 + $0x78] sm:$0xff]
        %v2740 = vld [vmem:[%s2 + $0x80] sm:$0xff]
        %v2741 = vld [vmem:[%s2 + $0x88] sm:$0xff]
        %v2742 = vld [vmem:[%s2 + $0x90] sm:$0xff]
        %v2743 = vld [vmem:[%s2 + $0x98] sm:$0xff]
        %v2744 = vld [vmem:[%s2 + $0xa0] sm:$0xff]
        %v2745 = vld [vmem:[%s2 + $0xa8] sm:$0xff]
        %v2746 = vld [vmem:[%s2 + $0xb0] sm:$0xff]
        %v2747 = vld [vmem:[%s2 + $0xb8] sm:$0xff]
        %v2748 = vld [vmem:[%s2 + $0xc0] sm:$0xff]
        %v2749 = vld [vmem:[%s2 + $0xc8] sm:$0xff]
        %v2750 = vld [vmem:[%s2 + $0xd0] sm:$0xff]
        %v2751 = vld [vmem:[%s2 + $0xd8] sm:$0xff]
        %v2752 = vld [vmem:[%s2 + $0xe0] sm:$0xff]
        %v2753 = vld [vmem:[%s2 + $0xe8] sm:$0xff]
        %v2754 = vld [vmem:[%s2 + $0xf0] sm:$0xff]
        %v2755 = vld [vmem:[%s2 + $0xf8] sm:$0xff]
        %v2756 = vlaneseq
        %v2757 = vshrl.u32 %v2756, 7
        %v2758 = vsub.s32 0, %v2757
        %v2759 = vrot.slane %v2716, %v2758
        %v2760 = vlaneseq
        %v2761 = vshrl.u32 %v2760, 7
        %v2762 = vsub.s32 0, %v2761
        %v2763 = vrot.slane %v2723, %v2762
        %v2766 = vadd.f32 %v2759, %v2724
        %v2767 = vadd.f32 %v2759, %v2725
        %v2768 = vadd.f32 %v2759, %v2726
        %v2769 = vadd.f32 %v2759, %v2727
        %v2770 = vadd.f32 %v2759, %v2728
        %v2771 = vadd.f32 %v2759, %v2729
        %v2772 = vadd.f32 %v2759, %v2730
        %v2773 = vadd.f32 %v2759, %v2731
        %v2774 = vadd.f32 %v2759, %v2732
        %v2775 = vadd.f32 %v2759, %v2733
        %v2776 = vadd.f32 %v2759, %v2734
        %v2777 = vadd.f32 %v2759, %v2735
        %v2778 = vadd.f32 %v2759, %v2736
        %v2779 = vadd.f32 %v2759, %v2737
        %v2780 = vadd.f32 %v2759, %v2738
        %v2781 = vadd.f32 %v2759, %v2739
        %v2782 = vadd.f32 %v2763, %v2740
        %v2783 = vadd.f32 %v2763, %v2741
        %v2784 = vadd.f32 %v2763, %v2742
        %v2785 = vadd.f32 %v2763, %v2743
        %v2786 = vadd.f32 %v2763, %v2744
        %v2787 = vadd.f32 %v2763, %v2745
        %v2788 = vadd.f32 %v2763, %v2746
        %v2789 = vadd.f32 %v2763, %v2747
        %v2790 = vadd.f32 %v2763, %v2748
        %v2791 = vadd.f32 %v2763, %v2749
        %v2792 = vadd.f32 %v2763, %v2750
        %v2793 = vadd.f32 %v2763, %v2751
        %v2794 = vadd.f32 %v2763, %v2752
        %v2795 = vadd.f32 %v2763, %v2753
        %v2796 = vadd.f32 %v2763, %v2754
        %v2797 = vadd.f32 %v2763, %v2755
        %v2798 = vtanh.pop %v2766
        %v2799 = vtanh.pop %v2767
        %v2800 = vtanh.pop %v2768
        %v2801 = vtanh.pop %v2769
        %v2802 = vtanh.pop %v2770
        %v2803 = vtanh.pop %v2771
        %v2804 = vtanh.pop %v2772
        %v2805 = vtanh.pop %v2773
        %v2806 = vtanh.pop %v2774
        %v2807 = vtanh.pop %v2775
        %v2808 = vtanh.pop %v2776
        %v2809 = vtanh.pop %v2777
        %v2810 = vtanh.pop %v2778
        %v2811 = vtanh.pop %v2779
        %v2812 = vtanh.pop %v2780
        %v2813 = vtanh.pop %v2781
        %v2814 = vtanh.pop %v2782
        %v2815 = vtanh.pop %v2783
        %v2816 = vtanh.pop %v2784
        %v2817 = vtanh.pop %v2785
        %v2818 = vtanh.pop %v2786
        %v2819 = vtanh.pop %v2787
        %v2820 = vtanh.pop %v2788
        %v2821 = vtanh.pop %v2789
        %v2822 = vtanh.pop %v2790
        %v2823 = vtanh.pop %v2791
        %v2824 = vtanh.pop %v2792
        %v2825 = vtanh.pop %v2793
        %v2826 = vtanh.pop %v2794
        %v2827 = vtanh.pop %v2795
        %v2828 = vtanh.pop %v2796
        %v2829 = vtanh.pop %v2797
        %v2830 = vmul.f32 %v2798, %v880
        %v2831 = vmul.f32 %v2799, %v880
        %v2832 = vmul.f32 %v2800, %v880
        %v2833 = vmul.f32 %v2801, %v880
        %v2834 = vmul.f32 %v2802, %v880
        %v2835 = vmul.f32 %v2803, %v880
        %v2836 = vmul.f32 %v2804, %v880
        %v2837 = vmul.f32 %v2805, %v880
        %v2838 = vmul.f32 %v2806, %v880
        %v2839 = vmul.f32 %v2807, %v880
        %v2840 = vmul.f32 %v2808, %v880
        %v2841 = vmul.f32 %v2809, %v880
        %v2842 = vmul.f32 %v2810, %v880
        %v2843 = vmul.f32 %v2811, %v880
        %v2844 = vmul.f32 %v2812, %v880
        %v2845 = vmul.f32 %v2813, %v880
        %v2846 = vmul.f32 %v2814, %v880
        %v2847 = vmul.f32 %v2815, %v880
        %v2848 = vmul.f32 %v2816, %v880
        %v2849 = vmul.f32 %v2817, %v880
        %v2850 = vmul.f32 %v2818, %v880
        %v2851 = vmul.f32 %v2819, %v880
        %v2852 = vmul.f32 %v2820, %v880
        %v2853 = vmul.f32 %v2821, %v880
        %v2854 = vmul.f32 %v2822, %v880
        %v2855 = vmul.f32 %v2823, %v880
        %v2856 = vmul.f32 %v2824, %v880
        %v2857 = vmul.f32 %v2825, %v880
        %v2858 = vmul.f32 %v2826, %v880
        %v2859 = vmul.f32 %v2827, %v880
        %v2860 = vmul.f32 %v2828, %v880
        %v2861 = vmul.f32 %v2829, %v880
        %v2862 = vsel %vm481, %v2830, 0.0
        %2863 = vadd.xlane.f32.xlu0 %v2862
        %v2864 = vpop.xlane.xlu0 %2863
        %v2865 = vsel %vm481, %v2831, 0.0
        %2866 = vadd.xlane.f32.xlu0 %v2865
        %v2867 = vpop.xlane.xlu0 %2866
        %v2868 = vsel %vm481, %v2832, 0.0
        %2869 = vadd.xlane.f32.xlu0 %v2868
        %v2870 = vpop.xlane.xlu0 %2869
        %v2871 = vsel %vm481, %v2833, 0.0
        %2872 = vadd.xlane.f32.xlu0 %v2871
        %v2873 = vpop.xlane.xlu0 %2872
        %v2874 = vsel %vm481, %v2834, 0.0
        %2875 = vadd.xlane.f32.xlu0 %v2874
        %v2876 = vpop.xlane.xlu0 %2875
        %v2877 = vsel %vm481, %v2835, 0.0
        %2878 = vadd.xlane.f32.xlu0 %v2877
        %v2879 = vpop.xlane.xlu0 %2878
        %v2880 = vsel %vm481, %v2836, 0.0
        %2881 = vadd.xlane.f32.xlu0 %v2880
        %v2882 = vpop.xlane.xlu0 %2881
        %v2883 = vsel %vm481, %v2837, 0.0
        %2884 = vadd.xlane.f32.xlu0 %v2883
        %v2885 = vpop.xlane.xlu0 %2884
        %v2886 = vsel %vm481, %v2838, 0.0
        %2887 = vadd.xlane.f32.xlu0 %v2886
        %v2888 = vpop.xlane.xlu0 %2887
        %v2889 = vsel %vm481, %v2839, 0.0
        %2890 = vadd.xlane.f32.xlu0 %v2889
        %v2891 = vpop.xlane.xlu0 %2890
        %v2892 = vsel %vm481, %v2840, 0.0
        %2893 = vadd.xlane.f32.xlu0 %v2892
        %v2894 = vpop.xlane.xlu0 %2893
        %v2895 = vsel %vm481, %v2841, 0.0
        %2896 = vadd.xlane.f32.xlu0 %v2895
        %v2897 = vpop.xlane.xlu0 %2896
        %v2898 = vsel %vm481, %v2842, 0.0
        %2899 = vadd.xlane.f32.xlu0 %v2898
        %v2900 = vpop.xlane.xlu0 %2899
        %v2901 = vsel %vm481, %v2843, 0.0
        %2902 = vadd.xlane.f32.xlu0 %v2901
        %v2903 = vpop.xlane.xlu0 %2902
        %v2904 = vsel %vm481, %v2844, 0.0
        %2905 = vadd.xlane.f32.xlu0 %v2904
        %v2906 = vpop.xlane.xlu0 %2905
        %v2907 = vsel %vm481, %v2845, 0.0
        %2908 = vadd.xlane.f32.xlu0 %v2907
        %v2909 = vpop.xlane.xlu0 %2908
        %v2910 = vsel %vm481, %v2846, 0.0
        %2911 = vadd.xlane.f32.xlu0 %v2910
        %v2912 = vpop.xlane.xlu0 %2911
        %v2913 = vsel %vm481, %v2847, 0.0
        %2914 = vadd.xlane.f32.xlu0 %v2913
        %v2915 = vpop.xlane.xlu0 %2914
        %v2916 = vsel %vm481, %v2848, 0.0
        %2917 = vadd.xlane.f32.xlu0 %v2916
        %v2918 = vpop.xlane.xlu0 %2917
        %v2919 = vsel %vm481, %v2849, 0.0
        %2920 = vadd.xlane.f32.xlu0 %v2919
        %v2921 = vpop.xlane.xlu0 %2920
        %v2922 = vsel %vm481, %v2850, 0.0
        %2923 = vadd.xlane.f32.xlu0 %v2922
        %v2924 = vpop.xlane.xlu0 %2923
        %v2925 = vsel %vm481, %v2851, 0.0
        %2926 = vadd.xlane.f32.xlu0 %v2925
        %v2927 = vpop.xlane.xlu0 %2926
        %v2928 = vsel %vm481, %v2852, 0.0
        %2929 = vadd.xlane.f32.xlu0 %v2928
        %v2930 = vpop.xlane.xlu0 %2929
        %v2931 = vsel %vm481, %v2853, 0.0
        %2932 = vadd.xlane.f32.xlu0 %v2931
        %v2933 = vpop.xlane.xlu0 %2932
        %v2934 = vsel %vm481, %v2854, 0.0
        %2935 = vadd.xlane.f32.xlu0 %v2934
        %v2936 = vpop.xlane.xlu0 %2935
        %v2937 = vsel %vm481, %v2855, 0.0
        %2938 = vadd.xlane.f32.xlu0 %v2937
        %v2939 = vpop.xlane.xlu0 %2938
        %v2940 = vsel %vm481, %v2856, 0.0
        %2941 = vadd.xlane.f32.xlu0 %v2940
        %v2942 = vpop.xlane.xlu0 %2941
        %v2943 = vsel %vm481, %v2857, 0.0
        %2944 = vadd.xlane.f32.xlu0 %v2943
        %v2945 = vpop.xlane.xlu0 %2944
        %v2946 = vsel %vm481, %v2858, 0.0
        %2947 = vadd.xlane.f32.xlu0 %v2946
        %v2948 = vpop.xlane.xlu0 %2947
        %v2949 = vsel %vm481, %v2859, 0.0
        %2950 = vadd.xlane.f32.xlu0 %v2949
        %v2951 = vpop.xlane.xlu0 %2950
        %v2952 = vsel %vm481, %v2860, 0.0
        %2953 = vadd.xlane.f32.xlu0 %v2952
        %v2954 = vpop.xlane.xlu0 %2953
        %v2955 = vsel %vm481, %v2861, 0.0
        %2956 = vadd.xlane.f32.xlu0 %v2955
        %v2957 = vpop.xlane.xlu0 %2956
        %v2958 = vadd.f32 %v2864, %v1017
        %v2959 = vadd.f32 %v2867, %v1021
        %v2960 = vadd.f32 %v2870, %v1025
        %v2961 = vadd.f32 %v2873, %v1029
        %v2962 = vadd.f32 %v2876, %v1033
        %v2963 = vadd.f32 %v2879, %v1037
        %v2964 = vadd.f32 %v2882, %v1041
        %v2965 = vadd.f32 %v2885, %v1045
        %v2966 = vadd.f32 %v2888, %v1049
        %v2967 = vadd.f32 %v2891, %v1053
        %v2968 = vadd.f32 %v2894, %v1057
        %v2969 = vadd.f32 %v2897, %v1061
        %v2970 = vadd.f32 %v2900, %v1065
        %v2971 = vadd.f32 %v2903, %v1069
        %v2972 = vadd.f32 %v2906, %v1073
        %v2973 = vadd.f32 %v2909, %v1077
        %v2974 = vadd.f32 %v2912, %v1084
        %v2975 = vadd.f32 %v2915, %v1088
        %v2976 = vadd.f32 %v2918, %v1092
        %v2977 = vadd.f32 %v2921, %v1096
        %v2978 = vadd.f32 %v2924, %v1100
        %v2979 = vadd.f32 %v2927, %v1104
        %v2980 = vadd.f32 %v2930, %v1108
        %v2981 = vadd.f32 %v2933, %v1112
        %v2982 = vadd.f32 %v2936, %v1116
        %v2983 = vadd.f32 %v2939, %v1120
        %v2984 = vadd.f32 %v2942, %v1124
        %v2985 = vadd.f32 %v2945, %v1128
        %v2986 = vadd.f32 %v2948, %v1132
        %v2987 = vadd.f32 %v2951, %v1136
        %v2988 = vadd.f32 %v2954, %v1140
        %v2989 = vadd.f32 %v2957, %v1144
        %3022 = vset.pattern.permute.xlu0 0
        %3023 = vperm.xlu0 %3022, %v2958
        %v3024 = vpop.permute.xlu0 %3023
        %3025 = vset.pattern.permute.xlu0 0
        %3026 = vperm.xlu0 %3025, %v2959
        %v3027 = vpop.permute.xlu0 %3026
        %3028 = vset.pattern.permute.xlu0 0
        %3029 = vperm.xlu0 %3028, %v2960
        %v3030 = vpop.permute.xlu0 %3029
        %3031 = vset.pattern.permute.xlu0 0
        %3032 = vperm.xlu0 %3031, %v2961
        %v3033 = vpop.permute.xlu0 %3032
        %3034 = vset.pattern.permute.xlu0 0
        %3035 = vperm.xlu0 %3034, %v2962
        %v3036 = vpop.permute.xlu0 %3035
        %3037 = vset.pattern.permute.xlu0 0
        %3038 = vperm.xlu0 %3037, %v2963
        %v3039 = vpop.permute.xlu0 %3038
        %3040 = vset.pattern.permute.xlu0 0
        %3041 = vperm.xlu0 %3040, %v2964
        %v3042 = vpop.permute.xlu0 %3041
        %3043 = vset.pattern.permute.xlu0 0
        %3044 = vperm.xlu0 %3043, %v2965
        %v3045 = vpop.permute.xlu0 %3044
        %3046 = vset.pattern.permute.xlu0 0
        %3047 = vperm.xlu0 %3046, %v2966
        %v3048 = vpop.permute.xlu0 %3047
        %3049 = vset.pattern.permute.xlu0 0
        %3050 = vperm.xlu0 %3049, %v2967
        %v3051 = vpop.permute.xlu0 %3050
        %3052 = vset.pattern.permute.xlu0 0
        %3053 = vperm.xlu0 %3052, %v2968
        %v3054 = vpop.permute.xlu0 %3053
        %3055 = vset.pattern.permute.xlu0 0
        %3056 = vperm.xlu0 %3055, %v2969
        %v3057 = vpop.permute.xlu0 %3056
        %3058 = vset.pattern.permute.xlu0 0
        %3059 = vperm.xlu0 %3058, %v2970
        %v3060 = vpop.permute.xlu0 %3059
        %3061 = vset.pattern.permute.xlu0 0
        %3062 = vperm.xlu0 %3061, %v2971
        %v3063 = vpop.permute.xlu0 %3062
        %3064 = vset.pattern.permute.xlu0 0
        %3065 = vperm.xlu0 %3064, %v2972
        %v3066 = vpop.permute.xlu0 %3065
        %3067 = vset.pattern.permute.xlu0 0
        %3068 = vperm.xlu0 %3067, %v2973
        %v3069 = vpop.permute.xlu0 %3068
        %3070 = vset.pattern.permute.xlu0 0
        %3071 = vperm.xlu0 %3070, %v2974
        %v3072 = vpop.permute.xlu0 %3071
        %3073 = vset.pattern.permute.xlu0 0
        %3074 = vperm.xlu0 %3073, %v2975
        %v3075 = vpop.permute.xlu0 %3074
        %3076 = vset.pattern.permute.xlu0 0
        %3077 = vperm.xlu0 %3076, %v2976
        %v3078 = vpop.permute.xlu0 %3077
        %3079 = vset.pattern.permute.xlu0 0
        %3080 = vperm.xlu0 %3079, %v2977
        %v3081 = vpop.permute.xlu0 %3080
        %3082 = vset.pattern.permute.xlu0 0
        %3083 = vperm.xlu0 %3082, %v2978
        %v3084 = vpop.permute.xlu0 %3083
        %3085 = vset.pattern.permute.xlu0 0
        %3086 = vperm.xlu0 %3085, %v2979
        %v3087 = vpop.permute.xlu0 %3086
        %3088 = vset.pattern.permute.xlu0 0
        %3089 = vperm.xlu0 %3088, %v2980
        %v3090 = vpop.permute.xlu0 %3089
        %3091 = vset.pattern.permute.xlu0 0
        %3092 = vperm.xlu0 %3091, %v2981
        %v3093 = vpop.permute.xlu0 %3092
        %3094 = vset.pattern.permute.xlu0 0
        %3095 = vperm.xlu0 %3094, %v2982
        %v3096 = vpop.permute.xlu0 %3095
        %3097 = vset.pattern.permute.xlu0 0
        %3098 = vperm.xlu0 %3097, %v2983
        %v3099 = vpop.permute.xlu0 %3098
        %3100 = vset.pattern.permute.xlu0 0
        %3101 = vperm.xlu0 %3100, %v2984
        %v3102 = vpop.permute.xlu0 %3101
        %3103 = vset.pattern.permute.xlu0 0
        %3104 = vperm.xlu0 %3103, %v2985
        %v3105 = vpop.permute.xlu0 %3104
        %3106 = vset.pattern.permute.xlu0 0
        %3107 = vperm.xlu0 %3106, %v2986
        %v3108 = vpop.permute.xlu0 %3107
        %3109 = vset.pattern.permute.xlu0 0
        %3110 = vperm.xlu0 %3109, %v2987
        %v3111 = vpop.permute.xlu0 %3110
        %3112 = vset.pattern.permute.xlu0 0
        %3113 = vperm.xlu0 %3112, %v2988
        %v3114 = vpop.permute.xlu0 %3113
        %3115 = vset.pattern.permute.xlu0 0
        %3116 = vperm.xlu0 %3115, %v2989
        %v3117 = vpop.permute.xlu0 %3116
        %v3118 = vlaneseq
        %v3119 = vshrl.u32 %v3118, 7
        %v3120 = vsub.s32 %v1338, %v3119
        %v3121 = vrot.slane %v3024, %v3120
        %v3122 = vlaneseq
        %v3123 = vshrl.u32 %v3122, 7
        %v3124 = vsub.s32 %v1343, %v3123
        %v3125 = vrot.slane %v3027, %v3124
        %v3126 = vsel %vm1348, %v3125, %v3121
        %v3127 = vlaneseq
        %v3128 = vshrl.u32 %v3127, 7
        %v3129 = vsub.s32 %v1350, %v3128
        %v3130 = vrot.slane %v3030, %v3129
        %v3131 = vsel %vm1355, %v3130, %v3126
        %v3132 = vlaneseq
        %v3133 = vshrl.u32 %v3132, 7
        %v3134 = vsub.s32 %v1357, %v3133
        %v3135 = vrot.slane %v3033, %v3134
        %v3136 = vsel %vm1362, %v3135, %v3131
        %v3137 = vlaneseq
        %v3138 = vshrl.u32 %v3137, 7
        %v3139 = vsub.s32 %v1364, %v3138
        %v3140 = vrot.slane %v3036, %v3139
        %v3141 = vsel %vm1369, %v3140, %v3136
        %v3142 = vlaneseq
        %v3143 = vshrl.u32 %v3142, 7
        %v3144 = vsub.s32 %v1371, %v3143
        %v3145 = vrot.slane %v3039, %v3144
        %v3146 = vsel %vm1376, %v3145, %v3141
        %v3147 = vlaneseq
        %v3148 = vshrl.u32 %v3147, 7
        %v3149 = vsub.s32 %v1378, %v3148
        %v3150 = vrot.slane %v3042, %v3149
        %v3151 = vsel %vm1383, %v3150, %v3146
        %v3152 = vlaneseq
        %v3153 = vshrl.u32 %v3152, 7
        %v3154 = vsub.s32 %v1385, %v3153
        %v3155 = vrot.slane %v3045, %v3154
        %v3156 = vsel %vm1390, %v3155, %v3151
        %v3157 = vlaneseq
        %v3158 = vshrl.u32 %v3157, 7
        %v3159 = vsub.s32 %v1392, %v3158
        %v3160 = vrot.slane %v3048, %v3159
        %v3161 = vsel %vm1397, %v3160, %v3156
        %v3162 = vlaneseq
        %v3163 = vshrl.u32 %v3162, 7
        %v3164 = vsub.s32 %v1399, %v3163
        %v3165 = vrot.slane %v3051, %v3164
        %v3166 = vsel %vm1404, %v3165, %v3161
        %v3167 = vlaneseq
        %v3168 = vshrl.u32 %v3167, 7
        %v3169 = vsub.s32 %v1406, %v3168
        %v3170 = vrot.slane %v3054, %v3169
        %v3171 = vsel %vm1411, %v3170, %v3166
        %v3172 = vlaneseq
        %v3173 = vshrl.u32 %v3172, 7
        %v3174 = vsub.s32 %v1413, %v3173
        %v3175 = vrot.slane %v3057, %v3174
        %v3176 = vsel %vm1418, %v3175, %v3171
        %v3177 = vlaneseq
        %v3178 = vshrl.u32 %v3177, 7
        %v3179 = vsub.s32 %v1420, %v3178
        %v3180 = vrot.slane %v3060, %v3179
        %v3181 = vsel %vm1425, %v3180, %v3176
        %v3182 = vlaneseq
        %v3183 = vshrl.u32 %v3182, 7
        %v3184 = vsub.s32 %v1427, %v3183
        %v3185 = vrot.slane %v3063, %v3184
        %v3186 = vsel %vm1432, %v3185, %v3181
        %v3187 = vlaneseq
        %v3188 = vshrl.u32 %v3187, 7
        %v3189 = vsub.s32 %v1434, %v3188
        %v3190 = vrot.slane %v3066, %v3189
        %v3191 = vsel %vm1439, %v3190, %v3186
        %v3192 = vlaneseq
        %v3193 = vshrl.u32 %v3192, 7
        %v3194 = vsub.s32 %v1441, %v3193
        %v3195 = vrot.slane %v3069, %v3194
        %v3196 = vsel %vm1446, %v3195, %v3191
        %v3197 = vlaneseq
        %v3198 = vshrl.u32 %v3197, 7
        %v3199 = vsub.s32 %v1338, %v3198
        %v3200 = vrot.slane %v3072, %v3199
        %v3201 = vlaneseq
        %v3202 = vshrl.u32 %v3201, 7
        %v3203 = vsub.s32 %v1343, %v3202
        %v3204 = vrot.slane %v3075, %v3203
        %v3205 = vsel %vm1348, %v3204, %v3200
        %v3206 = vlaneseq
        %v3207 = vshrl.u32 %v3206, 7
        %v3208 = vsub.s32 %v1350, %v3207
        %v3209 = vrot.slane %v3078, %v3208
        %v3210 = vsel %vm1355, %v3209, %v3205
        %v3211 = vlaneseq
        %v3212 = vshrl.u32 %v3211, 7
        %v3213 = vsub.s32 %v1357, %v3212
        %v3214 = vrot.slane %v3081, %v3213
        %v3215 = vsel %vm1362, %v3214, %v3210
        %v3216 = vlaneseq
        %v3217 = vshrl.u32 %v3216, 7
        %v3218 = vsub.s32 %v1364, %v3217
        %v3219 = vrot.slane %v3084, %v3218
        %v3220 = vsel %vm1369, %v3219, %v3215
        %v3221 = vlaneseq
        %v3222 = vshrl.u32 %v3221, 7
        %v3223 = vsub.s32 %v1371, %v3222
        %v3224 = vrot.slane %v3087, %v3223
        %v3225 = vsel %vm1376, %v3224, %v3220
        %v3226 = vlaneseq
        %v3227 = vshrl.u32 %v3226, 7
        %v3228 = vsub.s32 %v1378, %v3227
        %v3229 = vrot.slane %v3090, %v3228
        %v3230 = vsel %vm1383, %v3229, %v3225
        %v3231 = vlaneseq
        %v3232 = vshrl.u32 %v3231, 7
        %v3233 = vsub.s32 %v1385, %v3232
        %v3234 = vrot.slane %v3093, %v3233
        %v3235 = vsel %vm1390, %v3234, %v3230
        %v3236 = vlaneseq
        %v3237 = vshrl.u32 %v3236, 7
        %v3238 = vsub.s32 %v1392, %v3237
        %v3239 = vrot.slane %v3096, %v3238
        %v3240 = vsel %vm1397, %v3239, %v3235
        %v3241 = vlaneseq
        %v3242 = vshrl.u32 %v3241, 7
        %v3243 = vsub.s32 %v1399, %v3242
        %v3244 = vrot.slane %v3099, %v3243
        %v3245 = vsel %vm1404, %v3244, %v3240
        %v3246 = vlaneseq
        %v3247 = vshrl.u32 %v3246, 7
        %v3248 = vsub.s32 %v1406, %v3247
        %v3249 = vrot.slane %v3102, %v3248
        %v3250 = vsel %vm1411, %v3249, %v3245
        %v3251 = vlaneseq
        %v3252 = vshrl.u32 %v3251, 7
        %v3253 = vsub.s32 %v1413, %v3252
        %v3254 = vrot.slane %v3105, %v3253
        %v3255 = vsel %vm1418, %v3254, %v3250
        %v3256 = vlaneseq
        %v3257 = vshrl.u32 %v3256, 7
        %v3258 = vsub.s32 %v1420, %v3257
        %v3259 = vrot.slane %v3108, %v3258
        %v3260 = vsel %vm1425, %v3259, %v3255
        %v3261 = vlaneseq
        %v3262 = vshrl.u32 %v3261, 7
        %v3263 = vsub.s32 %v1427, %v3262
        %v3264 = vrot.slane %v3111, %v3263
        %v3265 = vsel %vm1432, %v3264, %v3260
        %v3266 = vlaneseq
        %v3267 = vshrl.u32 %v3266, 7
        %v3268 = vsub.s32 %v1434, %v3267
        %v3269 = vrot.slane %v3114, %v3268
        %v3270 = vsel %vm1439, %v3269, %v3265
        %v3271 = vlaneseq
        %v3272 = vshrl.u32 %v3271, 7
        %v3273 = vsub.s32 %v1441, %v3272
        %v3274 = vrot.slane %v3117, %v3273
        %v3275 = vsel %vm1446, %v3274, %v3270
        %v3276 = vsel %vm1527, %v3275, %v3196
        %v3278 = vsel %vm1530, %v3276, -inf
        %3279 = vmax.xlane.f32.xlu0 %v3278
        %v3280 = vpop.xlane.xlu0 %3279
        %v3282 = vlaneseq
        %v3283 = vshrl.u32 %v3282, 7
        %v3284 = vsub.s32 0, %v3283
        %v3285 = vrot.slane %v3280, %v3284
        %v3286 = vlaneseq
        %v3287 = vshrl.u32 %v3286, 7
        %v3288 = vsub.s32 1, %v3287
        %v3289 = vrot.slane %v3280, %v3288
        %v3292 = vsub.f32 %v2958, %v3285
        %v3293 = vsub.f32 %v2959, %v3285
        %v3294 = vsub.f32 %v2960, %v3285
        %v3295 = vsub.f32 %v2961, %v3285
        %v3296 = vsub.f32 %v2962, %v3285
        %v3297 = vsub.f32 %v2963, %v3285
        %v3298 = vsub.f32 %v2964, %v3285
        %v3299 = vsub.f32 %v2965, %v3285
        %v3300 = vsub.f32 %v2966, %v3285
        %v3301 = vsub.f32 %v2967, %v3285
        %v3302 = vsub.f32 %v2968, %v3285
        %v3303 = vsub.f32 %v2969, %v3285
        %v3304 = vsub.f32 %v2970, %v3285
        %v3305 = vsub.f32 %v2971, %v3285
        %v3306 = vsub.f32 %v2972, %v3285
        %v3307 = vsub.f32 %v2973, %v3285
        %v3308 = vsub.f32 %v2974, %v3289
        %v3309 = vsub.f32 %v2975, %v3289
        %v3310 = vsub.f32 %v2976, %v3289
        %v3311 = vsub.f32 %v2977, %v3289
        %v3312 = vsub.f32 %v2978, %v3289
        %v3313 = vsub.f32 %v2979, %v3289
        %v3314 = vsub.f32 %v2980, %v3289
        %v3315 = vsub.f32 %v2981, %v3289
        %v3316 = vsub.f32 %v2982, %v3289
        %v3317 = vsub.f32 %v2983, %v3289
        %v3318 = vsub.f32 %v2984, %v3289
        %v3319 = vsub.f32 %v2985, %v3289
        %v3320 = vsub.f32 %v2986, %v3289
        %v3321 = vsub.f32 %v2987, %v3289
        %v3322 = vsub.f32 %v2988, %v3289
        %v3323 = vsub.f32 %v2989, %v3289
        %v3324 = vmul.f32 %v3292, 1.442695
        %v3325 = vpow.pop %v3324
        %v3326 = vmul.f32 %v3293, 1.442695
        %v3327 = vpow.pop %v3326
        %v3328 = vmul.f32 %v3294, 1.442695
        %v3329 = vpow.pop %v3328
        %v3330 = vmul.f32 %v3295, 1.442695
        %v3331 = vpow.pop %v3330
        %v3332 = vmul.f32 %v3296, 1.442695
        %v3333 = vpow.pop %v3332
        %v3334 = vmul.f32 %v3297, 1.442695
        %v3335 = vpow.pop %v3334
        %v3336 = vmul.f32 %v3298, 1.442695
        %v3337 = vpow.pop %v3336
        %v3338 = vmul.f32 %v3299, 1.442695
        %v3339 = vpow.pop %v3338
        %v3340 = vmul.f32 %v3300, 1.442695
        %v3341 = vpow.pop %v3340
        %v3342 = vmul.f32 %v3301, 1.442695
        %v3343 = vpow.pop %v3342
        %v3344 = vmul.f32 %v3302, 1.442695
        %v3345 = vpow.pop %v3344
        %v3346 = vmul.f32 %v3303, 1.442695
        %v3347 = vpow.pop %v3346
        %v3348 = vmul.f32 %v3304, 1.442695
        %v3349 = vpow.pop %v3348
        %v3350 = vmul.f32 %v3305, 1.442695
        %v3351 = vpow.pop %v3350
        %v3352 = vmul.f32 %v3306, 1.442695
        %v3353 = vpow.pop %v3352
        %v3354 = vmul.f32 %v3307, 1.442695
        %v3355 = vpow.pop %v3354
        %v3356 = vmul.f32 %v3308, 1.442695
        %v3357 = vpow.pop %v3356
        %v3358 = vmul.f32 %v3309, 1.442695
        %v3359 = vpow.pop %v3358
        %v3360 = vmul.f32 %v3310, 1.442695
        %v3361 = vpow.pop %v3360
        %v3362 = vmul.f32 %v3311, 1.442695
        %v3363 = vpow.pop %v3362
        %v3364 = vmul.f32 %v3312, 1.442695
        %v3365 = vpow.pop %v3364
        %v3366 = vmul.f32 %v3313, 1.442695
        %v3367 = vpow.pop %v3366
        %v3368 = vmul.f32 %v3314, 1.442695
        %v3369 = vpow.pop %v3368
        %v3370 = vmul.f32 %v3315, 1.442695
        %v3371 = vpow.pop %v3370
        %v3372 = vmul.f32 %v3316, 1.442695
        %v3373 = vpow.pop %v3372
        %v3374 = vmul.f32 %v3317, 1.442695
        %v3375 = vpow.pop %v3374
        %v3376 = vmul.f32 %v3318, 1.442695
        %v3377 = vpow.pop %v3376
        %v3378 = vmul.f32 %v3319, 1.442695
        %v3379 = vpow.pop %v3378
        %v3380 = vmul.f32 %v3320, 1.442695
        %v3381 = vpow.pop %v3380
        %v3382 = vmul.f32 %v3321, 1.442695
        %v3383 = vpow.pop %v3382
        %v3384 = vmul.f32 %v3322, 1.442695
        %v3385 = vpow.pop %v3384
        %v3386 = vmul.f32 %v3323, 1.442695
        %v3387 = vpow.pop %v3386
        %3420 = vset.pattern.permute.xlu0 0
        %3421 = vperm.xlu0 %3420, %v3325
        %v3422 = vpop.permute.xlu0 %3421
        %3423 = vset.pattern.permute.xlu0 0
        %3424 = vperm.xlu0 %3423, %v3327
        %v3425 = vpop.permute.xlu0 %3424
        %3426 = vset.pattern.permute.xlu0 0
        %3427 = vperm.xlu0 %3426, %v3329
        %v3428 = vpop.permute.xlu0 %3427
        %3429 = vset.pattern.permute.xlu0 0
        %3430 = vperm.xlu0 %3429, %v3331
        %v3431 = vpop.permute.xlu0 %3430
        %3432 = vset.pattern.permute.xlu0 0
        %3433 = vperm.xlu0 %3432, %v3333
        %v3434 = vpop.permute.xlu0 %3433
        %3435 = vset.pattern.permute.xlu0 0
        %3436 = vperm.xlu0 %3435, %v3335
        %v3437 = vpop.permute.xlu0 %3436
        %3438 = vset.pattern.permute.xlu0 0
        %3439 = vperm.xlu0 %3438, %v3337
        %v3440 = vpop.permute.xlu0 %3439
        %3441 = vset.pattern.permute.xlu0 0
        %3442 = vperm.xlu0 %3441, %v3339
        %v3443 = vpop.permute.xlu0 %3442
        %3444 = vset.pattern.permute.xlu0 0
        %3445 = vperm.xlu0 %3444, %v3341
        %v3446 = vpop.permute.xlu0 %3445
        %3447 = vset.pattern.permute.xlu0 0
        %3448 = vperm.xlu0 %3447, %v3343
        %v3449 = vpop.permute.xlu0 %3448
        %3450 = vset.pattern.permute.xlu0 0
        %3451 = vperm.xlu0 %3450, %v3345
        %v3452 = vpop.permute.xlu0 %3451
        %3453 = vset.pattern.permute.xlu0 0
        %3454 = vperm.xlu0 %3453, %v3347
        %v3455 = vpop.permute.xlu0 %3454
        %3456 = vset.pattern.permute.xlu0 0
        %3457 = vperm.xlu0 %3456, %v3349
        %v3458 = vpop.permute.xlu0 %3457
        %3459 = vset.pattern.permute.xlu0 0
        %3460 = vperm.xlu0 %3459, %v3351
        %v3461 = vpop.permute.xlu0 %3460
        %3462 = vset.pattern.permute.xlu0 0
        %3463 = vperm.xlu0 %3462, %v3353
        %v3464 = vpop.permute.xlu0 %3463
        %3465 = vset.pattern.permute.xlu0 0
        %3466 = vperm.xlu0 %3465, %v3355
        %v3467 = vpop.permute.xlu0 %3466
        %3468 = vset.pattern.permute.xlu0 0
        %3469 = vperm.xlu0 %3468, %v3357
        %v3470 = vpop.permute.xlu0 %3469
        %3471 = vset.pattern.permute.xlu0 0
        %3472 = vperm.xlu0 %3471, %v3359
        %v3473 = vpop.permute.xlu0 %3472
        %3474 = vset.pattern.permute.xlu0 0
        %3475 = vperm.xlu0 %3474, %v3361
        %v3476 = vpop.permute.xlu0 %3475
        %3477 = vset.pattern.permute.xlu0 0
        %3478 = vperm.xlu0 %3477, %v3363
        %v3479 = vpop.permute.xlu0 %3478
        %3480 = vset.pattern.permute.xlu0 0
        %3481 = vperm.xlu0 %3480, %v3365
        %v3482 = vpop.permute.xlu0 %3481
        %3483 = vset.pattern.permute.xlu0 0
        %3484 = vperm.xlu0 %3483, %v3367
        %v3485 = vpop.permute.xlu0 %3484
        %3486 = vset.pattern.permute.xlu0 0
        %3487 = vperm.xlu0 %3486, %v3369
        %v3488 = vpop.permute.xlu0 %3487
        %3489 = vset.pattern.permute.xlu0 0
        %3490 = vperm.xlu0 %3489, %v3371
        %v3491 = vpop.permute.xlu0 %3490
        %3492 = vset.pattern.permute.xlu0 0
        %3493 = vperm.xlu0 %3492, %v3373
        %v3494 = vpop.permute.xlu0 %3493
        %3495 = vset.pattern.permute.xlu0 0
        %3496 = vperm.xlu0 %3495, %v3375
        %v3497 = vpop.permute.xlu0 %3496
        %3498 = vset.pattern.permute.xlu0 0
        %3499 = vperm.xlu0 %3498, %v3377
        %v3500 = vpop.permute.xlu0 %3499
        %3501 = vset.pattern.permute.xlu0 0
        %3502 = vperm.xlu0 %3501, %v3379
        %v3503 = vpop.permute.xlu0 %3502
        %3504 = vset.pattern.permute.xlu0 0
        %3505 = vperm.xlu0 %3504, %v3381
        %v3506 = vpop.permute.xlu0 %3505
        %3507 = vset.pattern.permute.xlu0 0
        %3508 = vperm.xlu0 %3507, %v3383
        %v3509 = vpop.permute.xlu0 %3508
        %3510 = vset.pattern.permute.xlu0 0
        %3511 = vperm.xlu0 %3510, %v3385
        %v3512 = vpop.permute.xlu0 %3511
        %3513 = vset.pattern.permute.xlu0 0
        %3514 = vperm.xlu0 %3513, %v3387
        %v3515 = vpop.permute.xlu0 %3514
        %v3516 = vlaneseq
        %v3517 = vshrl.u32 %v3516, 7
        %v3518 = vsub.s32 %v1338, %v3517
        %v3519 = vrot.slane %v3422, %v3518
        %v3520 = vlaneseq
        %v3521 = vshrl.u32 %v3520, 7
        %v3522 = vsub.s32 %v1343, %v3521
        %v3523 = vrot.slane %v3425, %v3522
        %v3524 = vsel %vm1348, %v3523, %v3519
        %v3525 = vlaneseq
        %v3526 = vshrl.u32 %v3525, 7
        %v3527 = vsub.s32 %v1350, %v3526
        %v3528 = vrot.slane %v3428, %v3527
        %v3529 = vsel %vm1355, %v3528, %v3524
        %v3530 = vlaneseq
        %v3531 = vshrl.u32 %v3530, 7
        %v3532 = vsub.s32 %v1357, %v3531
        %v3533 = vrot.slane %v3431, %v3532
        %v3534 = vsel %vm1362, %v3533, %v3529
        %v3535 = vlaneseq
        %v3536 = vshrl.u32 %v3535, 7
        %v3537 = vsub.s32 %v1364, %v3536
        %v3538 = vrot.slane %v3434, %v3537
        %v3539 = vsel %vm1369, %v3538, %v3534
        %v3540 = vlaneseq
        %v3541 = vshrl.u32 %v3540, 7
        %v3542 = vsub.s32 %v1371, %v3541
        %v3543 = vrot.slane %v3437, %v3542
        %v3544 = vsel %vm1376, %v3543, %v3539
        %v3545 = vlaneseq
        %v3546 = vshrl.u32 %v3545, 7
        %v3547 = vsub.s32 %v1378, %v3546
        %v3548 = vrot.slane %v3440, %v3547
        %v3549 = vsel %vm1383, %v3548, %v3544
        %v3550 = vlaneseq
        %v3551 = vshrl.u32 %v3550, 7
        %v3552 = vsub.s32 %v1385, %v3551
        %v3553 = vrot.slane %v3443, %v3552
        %v3554 = vsel %vm1390, %v3553, %v3549
        %v3555 = vlaneseq
        %v3556 = vshrl.u32 %v3555, 7
        %v3557 = vsub.s32 %v1392, %v3556
        %v3558 = vrot.slane %v3446, %v3557
        %v3559 = vsel %vm1397, %v3558, %v3554
        %v3560 = vlaneseq
        %v3561 = vshrl.u32 %v3560, 7
        %v3562 = vsub.s32 %v1399, %v3561
        %v3563 = vrot.slane %v3449, %v3562
        %v3564 = vsel %vm1404, %v3563, %v3559
        %v3565 = vlaneseq
        %v3566 = vshrl.u32 %v3565, 7
        %v3567 = vsub.s32 %v1406, %v3566
        %v3568 = vrot.slane %v3452, %v3567
        %v3569 = vsel %vm1411, %v3568, %v3564
        %v3570 = vlaneseq
        %v3571 = vshrl.u32 %v3570, 7
        %v3572 = vsub.s32 %v1413, %v3571
        %v3573 = vrot.slane %v3455, %v3572
        %v3574 = vsel %vm1418, %v3573, %v3569
        %v3575 = vlaneseq
        %v3576 = vshrl.u32 %v3575, 7
        %v3577 = vsub.s32 %v1420, %v3576
        %v3578 = vrot.slane %v3458, %v3577
        %v3579 = vsel %vm1425, %v3578, %v3574
        %v3580 = vlaneseq
        %v3581 = vshrl.u32 %v3580, 7
        %v3582 = vsub.s32 %v1427, %v3581
        %v3583 = vrot.slane %v3461, %v3582
        %v3584 = vsel %vm1432, %v3583, %v3579
        %v3585 = vlaneseq
        %v3586 = vshrl.u32 %v3585, 7
        %v3587 = vsub.s32 %v1434, %v3586
        %v3588 = vrot.slane %v3464, %v3587
        %v3589 = vsel %vm1439, %v3588, %v3584
        %v3590 = vlaneseq
        %v3591 = vshrl.u32 %v3590, 7
        %v3592 = vsub.s32 %v1441, %v3591
        %v3593 = vrot.slane %v3467, %v3592
        %v3594 = vsel %vm1446, %v3593, %v3589
        %v3595 = vlaneseq
        %v3596 = vshrl.u32 %v3595, 7
        %v3597 = vsub.s32 %v1338, %v3596
        %v3598 = vrot.slane %v3470, %v3597
        %v3599 = vlaneseq
        %v3600 = vshrl.u32 %v3599, 7
        %v3601 = vsub.s32 %v1343, %v3600
        %v3602 = vrot.slane %v3473, %v3601
        %v3603 = vsel %vm1348, %v3602, %v3598
        %v3604 = vlaneseq
        %v3605 = vshrl.u32 %v3604, 7
        %v3606 = vsub.s32 %v1350, %v3605
        %v3607 = vrot.slane %v3476, %v3606
        %v3608 = vsel %vm1355, %v3607, %v3603
        %v3609 = vlaneseq
        %v3610 = vshrl.u32 %v3609, 7
        %v3611 = vsub.s32 %v1357, %v3610
        %v3612 = vrot.slane %v3479, %v3611
        %v3613 = vsel %vm1362, %v3612, %v3608
        %v3614 = vlaneseq
        %v3615 = vshrl.u32 %v3614, 7
        %v3616 = vsub.s32 %v1364, %v3615
        %v3617 = vrot.slane %v3482, %v3616
        %v3618 = vsel %vm1369, %v3617, %v3613
        %v3619 = vlaneseq
        %v3620 = vshrl.u32 %v3619, 7
        %v3621 = vsub.s32 %v1371, %v3620
        %v3622 = vrot.slane %v3485, %v3621
        %v3623 = vsel %vm1376, %v3622, %v3618
        %v3624 = vlaneseq
        %v3625 = vshrl.u32 %v3624, 7
        %v3626 = vsub.s32 %v1378, %v3625
        %v3627 = vrot.slane %v3488, %v3626
        %v3628 = vsel %vm1383, %v3627, %v3623
        %v3629 = vlaneseq
        %v3630 = vshrl.u32 %v3629, 7
        %v3631 = vsub.s32 %v1385, %v3630
        %v3632 = vrot.slane %v3491, %v3631
        %v3633 = vsel %vm1390, %v3632, %v3628
        %v3634 = vlaneseq
        %v3635 = vshrl.u32 %v3634, 7
        %v3636 = vsub.s32 %v1392, %v3635
        %v3637 = vrot.slane %v3494, %v3636
        %v3638 = vsel %vm1397, %v3637, %v3633
        %v3639 = vlaneseq
        %v3640 = vshrl.u32 %v3639, 7
        %v3641 = vsub.s32 %v1399, %v3640
        %v3642 = vrot.slane %v3497, %v3641
        %v3643 = vsel %vm1404, %v3642, %v3638
        %v3644 = vlaneseq
        %v3645 = vshrl.u32 %v3644, 7
        %v3646 = vsub.s32 %v1406, %v3645
        %v3647 = vrot.slane %v3500, %v3646
        %v3648 = vsel %vm1411, %v3647, %v3643
        %v3649 = vlaneseq
        %v3650 = vshrl.u32 %v3649, 7
        %v3651 = vsub.s32 %v1413, %v3650
        %v3652 = vrot.slane %v3503, %v3651
        %v3653 = vsel %vm1418, %v3652, %v3648
        %v3654 = vlaneseq
        %v3655 = vshrl.u32 %v3654, 7
        %v3656 = vsub.s32 %v1420, %v3655
        %v3657 = vrot.slane %v3506, %v3656
        %v3658 = vsel %vm1425, %v3657, %v3653
        %v3659 = vlaneseq
        %v3660 = vshrl.u32 %v3659, 7
        %v3661 = vsub.s32 %v1427, %v3660
        %v3662 = vrot.slane %v3509, %v3661
        %v3663 = vsel %vm1432, %v3662, %v3658
        %v3664 = vlaneseq
        %v3665 = vshrl.u32 %v3664, 7
        %v3666 = vsub.s32 %v1434, %v3665
        %v3667 = vrot.slane %v3512, %v3666
        %v3668 = vsel %vm1439, %v3667, %v3663
        %v3669 = vlaneseq
        %v3670 = vshrl.u32 %v3669, 7
        %v3671 = vsub.s32 %v1441, %v3670
        %v3672 = vrot.slane %v3515, %v3671
        %v3673 = vsel %vm1446, %v3672, %v3668
        %v3674 = vsel %vm1527, %v3673, %v3594
        %v3676 = vsel %vm1530, %v3674, 0.0
        %3677 = vadd.xlane.f32.xlu0 %v3676
        %v3678 = vpop.xlane.xlu0 %3677
        %v3679 = vrcp.pop %v3678
        %v3681 = vlaneseq
        %v3682 = vshrl.u32 %v3681, 7
        %v3683 = vsub.s32 0, %v3682
        %v3684 = vrot.slane %v3679, %v3683
        %v3685 = vlaneseq
        %v3686 = vshrl.u32 %v3685, 7
        %v3687 = vsub.s32 1, %v3686
        %v3688 = vrot.slane %v3679, %v3687
        %v3691 = vmul.f32 %v3325, %v3684
        %v3692 = vmul.f32 %v3327, %v3684
        %v3693 = vmul.f32 %v3329, %v3684
        %v3694 = vmul.f32 %v3331, %v3684
        %v3695 = vmul.f32 %v3333, %v3684
        %v3696 = vmul.f32 %v3335, %v3684
        %v3697 = vmul.f32 %v3337, %v3684
        %v3698 = vmul.f32 %v3339, %v3684
        %v3699 = vmul.f32 %v3341, %v3684
        %v3700 = vmul.f32 %v3343, %v3684
        %v3701 = vmul.f32 %v3345, %v3684
        %v3702 = vmul.f32 %v3347, %v3684
        %v3703 = vmul.f32 %v3349, %v3684
        %v3704 = vmul.f32 %v3351, %v3684
        %v3705 = vmul.f32 %v3353, %v3684
        %v3706 = vmul.f32 %v3355, %v3684
        %v3707 = vmul.f32 %v3357, %v3688
        %v3708 = vmul.f32 %v3359, %v3688
        %v3709 = vmul.f32 %v3361, %v3688
        %v3710 = vmul.f32 %v3363, %v3688
        %v3711 = vmul.f32 %v3365, %v3688
        %v3712 = vmul.f32 %v3367, %v3688
        %v3713 = vmul.f32 %v3369, %v3688
        %v3714 = vmul.f32 %v3371, %v3688
        %v3715 = vmul.f32 %v3373, %v3688
        %v3716 = vmul.f32 %v3375, %v3688
        %v3717 = vmul.f32 %v3377, %v3688
        %v3718 = vmul.f32 %v3379, %v3688
        %v3719 = vmul.f32 %v3381, %v3688
        %v3720 = vmul.f32 %v3383, %v3688
        %v3721 = vmul.f32 %v3385, %v3688
        %v3722 = vmul.f32 %v3387, %v3688
        %v3723 = vld [vmem:[%s1] sm:$0xff]
        %v3724 = vld [vmem:[%s1 + $0x8] sm:$0xff]
        %v3725 = vld [vmem:[%s1 + $0x10] sm:$0xff]
        %v3726 = vld [vmem:[%s1 + $0x18] sm:$0xff]
        %v3727 = vld [vmem:[%s1 + $0x20] sm:$0xff]
        %v3728 = vld [vmem:[%s1 + $0x28] sm:$0xff]
        %v3729 = vld [vmem:[%s1 + $0x30] sm:$0xff]
        %v3730 = vld [vmem:[%s1 + $0x38] sm:$0xff]
        %v3731 = vld [vmem:[%s1 + $0x40] sm:$0xff]
        %v3732 = vld [vmem:[%s1 + $0x48] sm:$0xff]
        %v3733 = vld [vmem:[%s1 + $0x50] sm:$0xff]
        %v3734 = vld [vmem:[%s1 + $0x58] sm:$0xff]
        %v3735 = vld [vmem:[%s1 + $0x60] sm:$0xff]
        %v3736 = vld [vmem:[%s1 + $0x68] sm:$0xff]
        %v3737 = vld [vmem:[%s1 + $0x70] sm:$0xff]
        %v3738 = vld [vmem:[%s1 + $0x78] sm:$0xff]
        %v3739 = vld [vmem:[%s1 + $0x80] sm:$0xff]
        %v3740 = vld [vmem:[%s1 + $0x88] sm:$0xff]
        %v3741 = vld [vmem:[%s1 + $0x90] sm:$0xff]
        %v3742 = vld [vmem:[%s1 + $0x98] sm:$0xff]
        %v3743 = vld [vmem:[%s1 + $0xa0] sm:$0xff]
        %v3744 = vld [vmem:[%s1 + $0xa8] sm:$0xff]
        %v3745 = vld [vmem:[%s1 + $0xb0] sm:$0xff]
        %v3746 = vld [vmem:[%s1 + $0xb8] sm:$0xff]
        %v3747 = vld [vmem:[%s1 + $0xc0] sm:$0xff]
        %v3748 = vld [vmem:[%s1 + $0xc8] sm:$0xff]
        %v3749 = vld [vmem:[%s1 + $0xd0] sm:$0xff]
        %v3750 = vld [vmem:[%s1 + $0xd8] sm:$0xff]
        %v3751 = vld [vmem:[%s1 + $0xe0] sm:$0xff]
        %v3752 = vld [vmem:[%s1 + $0xe8] sm:$0xff]
        %v3753 = vld [vmem:[%s1 + $0xf0] sm:$0xff]
        %v3754 = vld [vmem:[%s1 + $0xf8] sm:$0xff]
        %3756 = vset.pattern.permute.xlu0 0
        %3757 = vperm.xlu0 %3756, %v3691
        %v3758 = vpop.permute.xlu0 %3757
        %3761 = vset.pattern.permute.xlu0 0
        %3762 = vperm.xlu0 %3761, %v3692
        %v3763 = vpop.permute.xlu0 %3762
        %3766 = vset.pattern.permute.xlu0 0
        %3767 = vperm.xlu0 %3766, %v3693
        %v3768 = vpop.permute.xlu0 %3767
        %3771 = vset.pattern.permute.xlu0 0
        %3772 = vperm.xlu0 %3771, %v3694
        %v3773 = vpop.permute.xlu0 %3772
        %3776 = vset.pattern.permute.xlu0 0
        %3777 = vperm.xlu0 %3776, %v3695
        %v3778 = vpop.permute.xlu0 %3777
        %3781 = vset.pattern.permute.xlu0 0
        %3782 = vperm.xlu0 %3781, %v3696
        %v3783 = vpop.permute.xlu0 %3782
        %3786 = vset.pattern.permute.xlu0 0
        %3787 = vperm.xlu0 %3786, %v3697
        %v3788 = vpop.permute.xlu0 %3787
        %3791 = vset.pattern.permute.xlu0 0
        %3792 = vperm.xlu0 %3791, %v3698
        %v3793 = vpop.permute.xlu0 %3792
        %3796 = vset.pattern.permute.xlu0 0
        %3797 = vperm.xlu0 %3796, %v3699
        %v3798 = vpop.permute.xlu0 %3797
        %3801 = vset.pattern.permute.xlu0 0
        %3802 = vperm.xlu0 %3801, %v3700
        %v3803 = vpop.permute.xlu0 %3802
        %3806 = vset.pattern.permute.xlu0 0
        %3807 = vperm.xlu0 %3806, %v3701
        %v3808 = vpop.permute.xlu0 %3807
        %3811 = vset.pattern.permute.xlu0 0
        %3812 = vperm.xlu0 %3811, %v3702
        %v3813 = vpop.permute.xlu0 %3812
        %3816 = vset.pattern.permute.xlu0 0
        %3817 = vperm.xlu0 %3816, %v3703
        %v3818 = vpop.permute.xlu0 %3817
        %3821 = vset.pattern.permute.xlu0 0
        %3822 = vperm.xlu0 %3821, %v3704
        %v3823 = vpop.permute.xlu0 %3822
        %3826 = vset.pattern.permute.xlu0 0
        %3827 = vperm.xlu0 %3826, %v3705
        %v3828 = vpop.permute.xlu0 %3827
        %3831 = vset.pattern.permute.xlu0 0
        %3832 = vperm.xlu0 %3831, %v3706
        %v3833 = vpop.permute.xlu0 %3832
        %3836 = vset.pattern.permute.xlu0 0
        %3837 = vperm.xlu0 %3836, %v3707
        %v3838 = vpop.permute.xlu0 %3837
        %3841 = vset.pattern.permute.xlu0 0
        %3842 = vperm.xlu0 %3841, %v3708
        %v3843 = vpop.permute.xlu0 %3842
        %3846 = vset.pattern.permute.xlu0 0
        %3847 = vperm.xlu0 %3846, %v3709
        %v3848 = vpop.permute.xlu0 %3847
        %3851 = vset.pattern.permute.xlu0 0
        %3852 = vperm.xlu0 %3851, %v3710
        %v3853 = vpop.permute.xlu0 %3852
        %3856 = vset.pattern.permute.xlu0 0
        %3857 = vperm.xlu0 %3856, %v3711
        %v3858 = vpop.permute.xlu0 %3857
        %3861 = vset.pattern.permute.xlu0 0
        %3862 = vperm.xlu0 %3861, %v3712
        %v3863 = vpop.permute.xlu0 %3862
        %3866 = vset.pattern.permute.xlu0 0
        %3867 = vperm.xlu0 %3866, %v3713
        %v3868 = vpop.permute.xlu0 %3867
        %3871 = vset.pattern.permute.xlu0 0
        %3872 = vperm.xlu0 %3871, %v3714
        %v3873 = vpop.permute.xlu0 %3872
        %3876 = vset.pattern.permute.xlu0 0
        %3877 = vperm.xlu0 %3876, %v3715
        %v3878 = vpop.permute.xlu0 %3877
        %3881 = vset.pattern.permute.xlu0 0
        %3882 = vperm.xlu0 %3881, %v3716
        %v3883 = vpop.permute.xlu0 %3882
        %3886 = vset.pattern.permute.xlu0 0
        %3887 = vperm.xlu0 %3886, %v3717
        %v3888 = vpop.permute.xlu0 %3887
        %3891 = vset.pattern.permute.xlu0 0
        %3892 = vperm.xlu0 %3891, %v3718
        %v3893 = vpop.permute.xlu0 %3892
        %3896 = vset.pattern.permute.xlu0 0
        %3897 = vperm.xlu0 %3896, %v3719
        %v3898 = vpop.permute.xlu0 %3897
        %3901 = vset.pattern.permute.xlu0 0
        %3902 = vperm.xlu0 %3901, %v3720
        %v3903 = vpop.permute.xlu0 %3902
        %3906 = vset.pattern.permute.xlu0 0
        %3907 = vperm.xlu0 %3906, %v3721
        %v3908 = vpop.permute.xlu0 %3907
        %3911 = vset.pattern.permute.xlu0 0
        %3912 = vperm.xlu0 %3911, %v3722
        %v3913 = vpop.permute.xlu0 %3912
        %v3915 = vmul.f32 %v3758, %v3723
        %v3916 = vmul.f32 %v3763, %v3724
        %v3917 = vmul.f32 %v3768, %v3725
        %v3918 = vmul.f32 %v3773, %v3726
        %v3919 = vmul.f32 %v3778, %v3727
        %v3920 = vmul.f32 %v3783, %v3728
        %v3921 = vmul.f32 %v3788, %v3729
        %v3922 = vmul.f32 %v3793, %v3730
        %v3923 = vmul.f32 %v3798, %v3731
        %v3924 = vmul.f32 %v3803, %v3732
        %v3925 = vmul.f32 %v3808, %v3733
        %v3926 = vmul.f32 %v3813, %v3734
        %v3927 = vmul.f32 %v3818, %v3735
        %v3928 = vmul.f32 %v3823, %v3736
        %v3929 = vmul.f32 %v3828, %v3737
        %v3930 = vmul.f32 %v3833, %v3738
        %v3931 = vmul.f32 %v3838, %v3739
        %v3932 = vmul.f32 %v3843, %v3740
        %v3933 = vmul.f32 %v3848, %v3741
        %v3934 = vmul.f32 %v3853, %v3742
        %v3935 = vmul.f32 %v3858, %v3743
        %v3936 = vmul.f32 %v3863, %v3744
        %v3937 = vmul.f32 %v3868, %v3745
        %v3938 = vmul.f32 %v3873, %v3746
        %v3939 = vmul.f32 %v3878, %v3747
        %v3940 = vmul.f32 %v3883, %v3748
        %v3941 = vmul.f32 %v3888, %v3749
        %v3942 = vmul.f32 %v3893, %v3750
        %v3943 = vmul.f32 %v3898, %v3751
        %v3944 = vmul.f32 %v3903, %v3752
        %v3945 = vmul.f32 %v3908, %v3753
        %v3946 = vmul.f32 %v3913, %v3754
        %v3947 = vsel %vm481, %v3915, 0.0
        %v3948 = vsel %vm481, %v3916, 0.0
        %v3949 = vadd.f32 %v3947, %v3948
        %v3950 = vsel %vm481, %v3917, 0.0
        %v3951 = vadd.f32 %v3949, %v3950
        %v3952 = vsel %vm481, %v3918, 0.0
        %v3953 = vadd.f32 %v3951, %v3952
        %v3954 = vsel %vm481, %v3919, 0.0
        %v3955 = vadd.f32 %v3953, %v3954
        %v3956 = vsel %vm481, %v3920, 0.0
        %v3957 = vadd.f32 %v3955, %v3956
        %v3958 = vsel %vm481, %v3921, 0.0
        %v3959 = vadd.f32 %v3957, %v3958
        %v3960 = vsel %vm481, %v3922, 0.0
        %v3961 = vadd.f32 %v3959, %v3960
        %v3962 = vsel %vm481, %v3923, 0.0
        %v3963 = vadd.f32 %v3961, %v3962
        %v3964 = vsel %vm481, %v3924, 0.0
        %v3965 = vadd.f32 %v3963, %v3964
        %v3966 = vsel %vm481, %v3925, 0.0
        %v3967 = vadd.f32 %v3965, %v3966
        %v3968 = vsel %vm481, %v3926, 0.0
        %v3969 = vadd.f32 %v3967, %v3968
        %v3970 = vsel %vm481, %v3927, 0.0
        %v3971 = vadd.f32 %v3969, %v3970
        %v3972 = vsel %vm481, %v3928, 0.0
        %v3973 = vadd.f32 %v3971, %v3972
        %v3974 = vsel %vm481, %v3929, 0.0
        %v3975 = vadd.f32 %v3973, %v3974
        %v3976 = vsel %vm481, %v3930, 0.0
        %v3977 = vadd.f32 %v3975, %v3976
        %v3978 = vrot.slane %v3977, 4
        %v3979 = vadd.f32 %v3977, %v3978
        %v3980 = vrot.slane %v3979, 2
        %v3981 = vadd.f32 %v3979, %v3980
        %v3982 = vrot.slane %v3981, 1
        %v3983 = vadd.f32 %v3981, %v3982
        %v3984 = vsel %vm481, %v3931, 0.0
        %v3985 = vsel %vm481, %v3932, 0.0
        %v3986 = vadd.f32 %v3984, %v3985
        %v3987 = vsel %vm481, %v3933, 0.0
        %v3988 = vadd.f32 %v3986, %v3987
        %v3989 = vsel %vm481, %v3934, 0.0
        %v3990 = vadd.f32 %v3988, %v3989
        %v3991 = vsel %vm481, %v3935, 0.0
        %v3992 = vadd.f32 %v3990, %v3991
        %v3993 = vsel %vm481, %v3936, 0.0
        %v3994 = vadd.f32 %v3992, %v3993
        %v3995 = vsel %vm481, %v3937, 0.0
        %v3996 = vadd.f32 %v3994, %v3995
        %v3997 = vsel %vm481, %v3938, 0.0
        %v3998 = vadd.f32 %v3996, %v3997
        %v3999 = vsel %vm481, %v3939, 0.0
        %v4000 = vadd.f32 %v3998, %v3999
        %v4001 = vsel %vm481, %v3940, 0.0
        %v4002 = vadd.f32 %v4000, %v4001
        %v4003 = vsel %vm481, %v3941, 0.0
        %v4004 = vadd.f32 %v4002, %v4003
        %v4005 = vsel %vm481, %v3942, 0.0
        %v4006 = vadd.f32 %v4004, %v4005
        %v4007 = vsel %vm481, %v3943, 0.0
        %v4008 = vadd.f32 %v4006, %v4007
        %v4009 = vsel %vm481, %v3944, 0.0
        %v4010 = vadd.f32 %v4008, %v4009
        %v4011 = vsel %vm481, %v3945, 0.0
        %v4012 = vadd.f32 %v4010, %v4011
        %v4013 = vsel %vm481, %v3946, 0.0
        %v4014 = vadd.f32 %v4012, %v4013
        %v4015 = vrot.slane %v4014, 4
        %v4016 = vadd.f32 %v4014, %v4015
        %v4017 = vrot.slane %v4016, 2
        %v4018 = vadd.f32 %v4016, %v4017
        %v4019 = vrot.slane %v4018, 1
        %v4020 = vadd.f32 %v4018, %v4019
        %s4022 = scalar_lea.vmem %s438, 2 [#allocation4]
        %4023 = vst.msk [vmem:[%s4022] sm:$0x3] %vm2275, %v2628
        %v4026 = vsel %vm1527, %v4020, %v3983
        %s4028 = scalar_lea.vmem %s445, 2 [#allocation6]
        %4029 = vst.msk [vmem:[%s4028] sm:$0x3] %vm2275, %v4026
        %v4030 = vlaneseq
        %v4031 = vshrl.u32 %v4030, 7
        %v4032 = vsub.s32 %v1338, %v4031
        %v4033 = vrot.slane %v3758, %v4032
        %v4034 = vlaneseq
        %v4035 = vshrl.u32 %v4034, 7
        %v4036 = vsub.s32 %v1343, %v4035
        %v4037 = vrot.slane %v3763, %v4036
        %v4038 = vsel %vm1348, %v4037, %v4033
        %v4039 = vlaneseq
        %v4040 = vshrl.u32 %v4039, 7
        %v4041 = vsub.s32 %v1350, %v4040
        %v4042 = vrot.slane %v3768, %v4041
        %v4043 = vsel %vm1355, %v4042, %v4038
        %v4044 = vlaneseq
        %v4045 = vshrl.u32 %v4044, 7
        %v4046 = vsub.s32 %v1357, %v4045
        %v4047 = vrot.slane %v3773, %v4046
        %v4048 = vsel %vm1362, %v4047, %v4043
        %v4049 = vlaneseq
        %v4050 = vshrl.u32 %v4049, 7
        %v4051 = vsub.s32 %v1364, %v4050
        %v4052 = vrot.slane %v3778, %v4051
        %v4053 = vsel %vm1369, %v4052, %v4048
        %v4054 = vlaneseq
        %v4055 = vshrl.u32 %v4054, 7
        %v4056 = vsub.s32 %v1371, %v4055
        %v4057 = vrot.slane %v3783, %v4056
        %v4058 = vsel %vm1376, %v4057, %v4053
        %v4059 = vlaneseq
        %v4060 = vshrl.u32 %v4059, 7
        %v4061 = vsub.s32 %v1378, %v4060
        %v4062 = vrot.slane %v3788, %v4061
        %v4063 = vsel %vm1383, %v4062, %v4058
        %v4064 = vlaneseq
        %v4065 = vshrl.u32 %v4064, 7
        %v4066 = vsub.s32 %v1385, %v4065
        %v4067 = vrot.slane %v3793, %v4066
        %v4068 = vsel %vm1390, %v4067, %v4063
        %v4069 = vlaneseq
        %v4070 = vshrl.u32 %v4069, 7
        %v4071 = vsub.s32 %v1392, %v4070
        %v4072 = vrot.slane %v3798, %v4071
        %v4073 = vsel %vm1397, %v4072, %v4068
        %v4074 = vlaneseq
        %v4075 = vshrl.u32 %v4074, 7
        %v4076 = vsub.s32 %v1399, %v4075
        %v4077 = vrot.slane %v3803, %v4076
        %v4078 = vsel %vm1404, %v4077, %v4073
        %v4079 = vlaneseq
        %v4080 = vshrl.u32 %v4079, 7
        %v4081 = vsub.s32 %v1406, %v4080
        %v4082 = vrot.slane %v3808, %v4081
        %v4083 = vsel %vm1411, %v4082, %v4078
        %v4084 = vlaneseq
        %v4085 = vshrl.u32 %v4084, 7
        %v4086 = vsub.s32 %v1413, %v4085
        %v4087 = vrot.slane %v3813, %v4086
        %v4088 = vsel %vm1418, %v4087, %v4083
        %v4089 = vlaneseq
        %v4090 = vshrl.u32 %v4089, 7
        %v4091 = vsub.s32 %v1420, %v4090
        %v4092 = vrot.slane %v3818, %v4091
        %v4093 = vsel %vm1425, %v4092, %v4088
        %v4094 = vlaneseq
        %v4095 = vshrl.u32 %v4094, 7
        %v4096 = vsub.s32 %v1427, %v4095
        %v4097 = vrot.slane %v3823, %v4096
        %v4098 = vsel %vm1432, %v4097, %v4093
        %v4099 = vlaneseq
        %v4100 = vshrl.u32 %v4099, 7
        %v4101 = vsub.s32 %v1434, %v4100
        %v4102 = vrot.slane %v3828, %v4101
        %v4103 = vsel %vm1439, %v4102, %v4098
        %v4104 = vlaneseq
        %v4105 = vshrl.u32 %v4104, 7
        %v4106 = vsub.s32 %v1441, %v4105
        %v4107 = vrot.slane %v3833, %v4106
        %v4108 = vsel %vm1446, %v4107, %v4103
        %v4109 = vlaneseq
        %v4110 = vshrl.u32 %v4109, 7
        %v4111 = vsub.s32 %v1338, %v4110
        %v4112 = vrot.slane %v3838, %v4111
        %v4113 = vlaneseq
        %v4114 = vshrl.u32 %v4113, 7
        %v4115 = vsub.s32 %v1343, %v4114
        %v4116 = vrot.slane %v3843, %v4115
        %v4117 = vsel %vm1348, %v4116, %v4112
        %v4118 = vlaneseq
        %v4119 = vshrl.u32 %v4118, 7
        %v4120 = vsub.s32 %v1350, %v4119
        %v4121 = vrot.slane %v3848, %v4120
        %v4122 = vsel %vm1355, %v4121, %v4117
        %v4123 = vlaneseq
        %v4124 = vshrl.u32 %v4123, 7
        %v4125 = vsub.s32 %v1357, %v4124
        %v4126 = vrot.slane %v3853, %v4125
        %v4127 = vsel %vm1362, %v4126, %v4122
        %v4128 = vlaneseq
        %v4129 = vshrl.u32 %v4128, 7
        %v4130 = vsub.s32 %v1364, %v4129
        %v4131 = vrot.slane %v3858, %v4130
        %v4132 = vsel %vm1369, %v4131, %v4127
        %v4133 = vlaneseq
        %v4134 = vshrl.u32 %v4133, 7
        %v4135 = vsub.s32 %v1371, %v4134
        %v4136 = vrot.slane %v3863, %v4135
        %v4137 = vsel %vm1376, %v4136, %v4132
        %v4138 = vlaneseq
        %v4139 = vshrl.u32 %v4138, 7
        %v4140 = vsub.s32 %v1378, %v4139
        %v4141 = vrot.slane %v3868, %v4140
        %v4142 = vsel %vm1383, %v4141, %v4137
        %v4143 = vlaneseq
        %v4144 = vshrl.u32 %v4143, 7
        %v4145 = vsub.s32 %v1385, %v4144
        %v4146 = vrot.slane %v3873, %v4145
        %v4147 = vsel %vm1390, %v4146, %v4142
        %v4148 = vlaneseq
        %v4149 = vshrl.u32 %v4148, 7
        %v4150 = vsub.s32 %v1392, %v4149
        %v4151 = vrot.slane %v3878, %v4150
        %v4152 = vsel %vm1397, %v4151, %v4147
        %v4153 = vlaneseq
        %v4154 = vshrl.u32 %v4153, 7
        %v4155 = vsub.s32 %v1399, %v4154
        %v4156 = vrot.slane %v3883, %v4155
        %v4157 = vsel %vm1404, %v4156, %v4152
        %v4158 = vlaneseq
        %v4159 = vshrl.u32 %v4158, 7
        %v4160 = vsub.s32 %v1406, %v4159
        %v4161 = vrot.slane %v3888, %v4160
        %v4162 = vsel %vm1411, %v4161, %v4157
        %v4163 = vlaneseq
        %v4164 = vshrl.u32 %v4163, 7
        %v4165 = vsub.s32 %v1413, %v4164
        %v4166 = vrot.slane %v3893, %v4165
        %v4167 = vsel %vm1418, %v4166, %v4162
        %v4168 = vlaneseq
        %v4169 = vshrl.u32 %v4168, 7
        %v4170 = vsub.s32 %v1420, %v4169
        %v4171 = vrot.slane %v3898, %v4170
        %v4172 = vsel %vm1425, %v4171, %v4167
        %v4173 = vlaneseq
        %v4174 = vshrl.u32 %v4173, 7
        %v4175 = vsub.s32 %v1427, %v4174
        %v4176 = vrot.slane %v3903, %v4175
        %v4177 = vsel %vm1432, %v4176, %v4172
        %v4178 = vlaneseq
        %v4179 = vshrl.u32 %v4178, 7
        %v4180 = vsub.s32 %v1434, %v4179
        %v4181 = vrot.slane %v3908, %v4180
        %v4182 = vsel %vm1439, %v4181, %v4177
        %v4183 = vlaneseq
        %v4184 = vshrl.u32 %v4183, 7
        %v4185 = vsub.s32 %v1441, %v4184
        %v4186 = vrot.slane %v3913, %v4185
        %v4187 = vsel %vm1446, %v4186, %v4182
        %v4188 = vsel %vm1527, %v4187, %v4108
        %s4190 = scalar_lea.vmem %s452, 2 [#allocation8]
        %4191 = vst [vmem:[%s4190] sm:$0x3] %v4188
        %4192 = vst.msk [vmem:[#allocation2] sm:$0x3] %vm2275, %v2628
        %4193 = vst.msk [vmem:[#allocation3] sm:$0x3] %vm2275, %v4026
        %s4194 = sand.u32 %s275, 1
        %s4195 = scalar_lea.sflag [#allocation5], %s4194
        %s4196 = sand.u32 %s275, 1
        %s4197 = smul.addr %s4196, 4
        %s4198 = scalar_lea.vmem [#allocation4], %s4197
        %s4199 = sand.u32 %s31, 1
        %s4200 = scalar_lea.sflag [#allocation7], %s4199
        %s4201 = sand.u32 %s301, 1
        %s4202 = smul.addr %s4201, 4
        %s4203 = scalar_lea.vmem [#allocation6], %s4202
        %s4204 = sand.u32 %s31, 1
        %s4205 = scalar_lea.sflag [#allocation7], %s4204
        %s4206 = sand.u32 %s327, 1
        %s4207 = smul.addr %s4206, 4
        %s4208 = scalar_lea.vmem [#allocation8], %s4207
        // Predicated region
        $region69: #{tpu_custom_call.1} parent=63 // pred_check
          %p4209 = pneg %p285
        $region70: #{tpu_custom_call.1} parent=63 // pred_check_branch
          %4211 = sbr.rel (%p4209) target = $region72
        $region71: #{tpu_custom_call.1} parent=63 // pred_region
          %s4212 = smul.u32 2, %s31
          %s4214 = ssub.s32 64, 64
          %4215 = vsyncadd %s4195, %s4214
          %s4216 = smul.addr %s4212, 32
          %s4217 = scalar_lea.hbm %s11, %s4216
          %s4218 = sshll.u32 %s4198, 4
          %s4219 = int_to_ptr.vmem [resolvable:$true] %s4218
          %4224 = dma.vmem_to_hbm [thread:$0]  %s4219, 64, %s4217, %s4195, 32, 32, 2
        $region72: #{tpu_custom_call.1} parent=63 // pred_fallthru
          _
        // Predicated region
        $region73: #{tpu_custom_call.1} parent=63 // pred_check
          %p4225 = pneg %p311
        $region74: #{tpu_custom_call.1} parent=63 // pred_check_branch
          %4227 = sbr.rel (%p4225) target = $region76
        $region75: #{tpu_custom_call.1} parent=63 // pred_region
          %s4228 = smul.u32 2, %s31
          %s4230 = ssub.s32 64, 64
          %4231 = vsyncadd %s4200, %s4230
          %s4232 = smul.addr %s4228, 32
          %s4233 = scalar_lea.hbm %s12, %s4232
          %s4234 = sshll.u32 %s4203, 4
          %s4235 = int_to_ptr.vmem [resolvable:$true] %s4234
          %4240 = dma.vmem_to_hbm [thread:$0]  %s4235, 64, %s4233, %s4200, 32, 32, 2
        $region76: #{tpu_custom_call.1} parent=63 // pred_fallthru
          _
        // Predicated region
        $region77: #{tpu_custom_call.1} parent=63 // pred_check
          %p4241 = pneg %p337
        $region78: #{tpu_custom_call.1} parent=63 // pred_check_branch
          %4243 = sbr.rel (%p4241) target = $region80
        $region79: #{tpu_custom_call.1} parent=63 // pred_region
          %s4244 = smul.u32 2, %s31
          %s4246 = ssub.s32 64, 64
          %4247 = vsyncadd %s4205, %s4246
          %s4248 = smul.addr %s4244, 32
          %s4249 = scalar_lea.hbm %s13, %s4248
          %s4250 = sshll.u32 %s4208, 4
          %s4251 = int_to_ptr.vmem [resolvable:$true] %s4250
          %4256 = dma.vmem_to_hbm [thread:$0]  %s4251, 64, %s4249, %s4205, 32, 32, 2
        $region80: #{tpu_custom_call.1} parent=63 // pred_fallthru
          _
      $region64: #{tpu_custom_call.1} parent=5 // pred_fallthru
        _
      %p4257 = scmp.le.s32.totalorder 2, %s26
      // Predicated region
      $region81: #{tpu_custom_call.1} parent=5 // pred_check
        %p4258 = pneg %p4257
      $region82: #{tpu_custom_call.1} parent=5 // pred_check_branch
        %4260 = sbr.rel (%p4258) target = $region84
      $region83: #{tpu_custom_call.1} parent=5 // pred_region
        %s4261 = ssub.s32 %s26, 2
        // Predicated region
        $region85: #{tpu_custom_call.1} parent=83 // pred_check
          %p4262 = pneg %p291
        $region86: #{tpu_custom_call.1} parent=83 // pred_check_branch
          %4264 = sbr.rel (%p4262) target = $region88
        $region87: #{tpu_custom_call.1} parent=83 // pred_region
          %s4265 = sand.u32 %s276, 1
          %s4266 = scalar_lea.sflag [#allocation5], %s4265
          %s4267 = sand.u32 %s276, 1
          %s4268 = smul.addr %s4267, 4
          %s4269 = scalar_lea.vmem [#allocation4], %s4268
          %4270 = dma.done %s4266, 64
        $region88: #{tpu_custom_call.1} parent=83 // pred_fallthru
          _
        // Predicated region
        $region89: #{tpu_custom_call.1} parent=83 // pred_check
          %p4271 = pneg %p317
        $region90: #{tpu_custom_call.1} parent=83 // pred_check_branch
          %4273 = sbr.rel (%p4271) target = $region92
        $region91: #{tpu_custom_call.1} parent=83 // pred_region
          %s4274 = sand.u32 %s32, 1
          %s4275 = scalar_lea.sflag [#allocation7], %s4274
          %s4276 = sand.u32 %s302, 1
          %s4277 = smul.addr %s4276, 4
          %s4278 = scalar_lea.vmem [#allocation6], %s4277
          %4279 = dma.done %s4275, 64
        $region92: #{tpu_custom_call.1} parent=83 // pred_fallthru
          _
        // Predicated region
        $region93: #{tpu_custom_call.1} parent=83 // pred_check
          %p4280 = pneg %p343
        $region94: #{tpu_custom_call.1} parent=83 // pred_check_branch
          %4282 = sbr.rel (%p4280) target = $region96
        $region95: #{tpu_custom_call.1} parent=83 // pred_region
          %s4283 = sand.u32 %s32, 1
          %s4284 = scalar_lea.sflag [#allocation7], %s4283
          %s4285 = sand.u32 %s328, 1
          %s4286 = smul.addr %s4285, 4
          %s4287 = scalar_lea.vmem [#allocation8], %s4286
          %4288 = dma.done %s4284, 64
        $region96: #{tpu_custom_call.1} parent=83 // pred_fallthru
          _
      $region84: #{tpu_custom_call.1} parent=5 // pred_fallthru
        _
    $region6: #{tpu_custom_call.1} parent=1 // loop_footer
      %s30 = sadd.s32 1, %s26
    $region7: #{tpu_custom_call.1} parent=1 // loop_footer_branch
      %25 = sbr.rel target = $region3
    $region8: #{tpu_custom_call.1} parent=1 // loop_exit
      _
    %4289 = vsyncpa [#allocation5], 1
    %s4290 = scalar_lea.sflag [#allocation5], 1
    %4291 = vsyncpa %s4290, 1
    %4292 = vsyncpa [#allocation7], 1
    %s4293 = scalar_lea.sflag [#allocation7], 1
    %4294 = vsyncpa %s4293, 1

</llo_original>
